<compile_context>
chip_gen: v7x
topology: tpu7x:2x2x1
jax: 0.10.0
libtpu: 0.0.40
codegen_flags: <defaults>
</compile_context>

<pallas_src>
import math

import jax
import jax.numpy as jnp
from jax.experimental import pallas as pl
from jax.experimental.pallas import tpu as pltpu

# ----------------------------- small synthetic config -----------------------------
B = 2                    # batch
IMG_C, IMG_HW = 3, 16    # image channels / resolution
PATCH = 8                # conv1 kernel == stride  -> 2x2 = 4 patches
VIS_WIDTH = 32           # visual transformer width (stands in for 768)
VIS_LAYERS = 2
VIS_HEADS = 4
EMBED_DIM = 32           # visual.output_dim == text embed dim (stands in for 512)
TXT_WIDTH = 32           # ln_final width == ctx_dim (stands in for 512)
TXT_LAYERS = 2
TXT_HEADS = 4
N_CLS = 4                # number of classes
N_CTX = 4                # context tokens
SEQ_LEN = 8              # tokenized prompt length
ADAPTER_START, ADAPTER_END, ADAPTER_DIM = 0, 1, 8
ADAPTER_SCALE = 0.1

MATMUL_DTYPE = jnp.bfloat16      # MXU operand dtype; accumulation stays f32
ENC_VMEM_LIMIT = 48 * 1024 * 1024  # explicit scoped-VMEM budget (fits v7x's 64 MiB)


# ----------------------------- in-kernel helpers -----------------------------


def _ln(x, g, b, eps=1e-5):
    """LayerNorm over the last dim, f32 statistics."""
    mu = jnp.mean(x, axis=-1, keepdims=True)
    var = jnp.mean((x - mu) * (x - mu), axis=-1, keepdims=True)
    return (x - mu) * jax.lax.rsqrt(var + eps) * g + b


def _mm(x, w, b=None):
    """x @ W (+ b). Operands bf16 on the MXU, accumulate f32. Skips bias when absent."""
    y = jnp.dot(x.astype(MATMUL_DTYPE), w, preferred_element_type=jnp.float32)
    if b is not None:
        y = y + b
    return y


def _rep_spec(shape):
    """BlockSpec covering the whole array, identical block for every grid step."""
    nd = len(shape)
    return pl.BlockSpec(shape, lambda *_: (0,) * nd)


def _layer_spec(arr):
    """BlockSpec selecting one layer's slice of a (n_layers, ...) stacked weight."""
    shape = (1,) + arr.shape[1:]
    zeros = (0,) * (arr.ndim - 1)
    return pl.BlockSpec(shape, lambda b, l, _z=zeros: (l,) + _z)


# ----------------------------- kernel 1: patch-embed stem -----------------------------


def _stem_kernel(patch_ref, w_ref, cls_ref, pos_ref, g_ref, b_ref, o_ref):
    g = g_ref[...]
    b = b_ref[...]
    # conv1 (stride == kernel, bias=False) as a matmul over flattened patches
    pe = _mm(patch_ref[0], w_ref[...])                              # (P, Dv)
    # no concatenate: class row and patch rows go to disjoint static slices of the output
    o_ref[0, 1:, :] = _ln(pe + pos_ref[1:, :], g, b)                # patch rows, ln_pre
    o_ref[0, 0:1, :] = _ln(cls_ref[...] + pos_ref[0:1, :], g, b)    # class row,  ln_pre


def patch_embed(p, image):
    Bn, C, H, W = image.shape
    gh, gw = H // PATCH, W // PATCH
    P = gh * gw
    cpp = C * PATCH * PATCH
    patches = image.astype(jnp.float32).reshape(Bn, C, gh, PATCH, gw, PATCH)
    patches = patches.transpose(0, 2, 4, 1, 3, 5).reshape(Bn, P, cpp)
    Dv = p["conv1_w"].shape[1]
    return pl.pallas_call(
        _stem_kernel,
        out_shape=jax.ShapeDtypeStruct((Bn, P + 1, Dv), jnp.float32),
        grid=(Bn,),
        in_specs=[
            pl.BlockSpec((1, P, cpp), lambda b: (b, 0, 0)),
            _rep_spec(p["conv1_w"].shape),
            _rep_spec(p["class_embedding"].shape),
            _rep_spec(p["vis_pos_emb"].shape),
            _rep_spec(p["ln_pre_g"].shape),
            _rep_spec(p["ln_pre_b"].shape),
        ],
        out_specs=pl.BlockSpec((1, P + 1, Dv), lambda b: (b, 0, 0)),
        compiler_params=pltpu.CompilerParams(dimension_semantics=("parallel",)),
    )(patches, p["conv1_w"], p["class_embedding"], p["vis_pos_emb"],
      p["ln_pre_g"], p["ln_pre_b"])


# ----------------------------- kernel 2: fused transformer encoder -----------------------------
# One pallas_call per encoder.  Grid = (batch, layer).  The activation block is resident
# in the output ref across the layer axis; per-layer weights stream through the pipeline.

_ENC_KEYS = ("ln1_g", "ln1_b", "wq", "wk", "wv", "bq", "bk", "bv", "wo", "bo",
             "ln2_g", "ln2_b", "fc_w", "fc_b", "pj_w", "pj_b",
             "ad_dw", "ad_db", "ad_sw", "ad_sb", "ad_uw", "ad_ub")


def _encoder_kernel(num_heads, causal, adapter_scale):
    H = num_heads

    def kernel(x_ref, ln1g, ln1b, wq, wk, wv, bq, bk, bv, wo, bo,
               ln2g, ln2b, fcw, fcb, pjw, pjb,
               adw, adb, asw, asb, auw, aub, o_ref):
        # ---- init the resident activation from the input at layer 0 ----
        @pl.when(pl.program_id(1) == 0)
        def _():
            o_ref[...] = x_ref[...]

        x = o_ref[0]                                   # (L, D) f32, carried across layers
        L, D = x.shape
        dh = D // H
        inv_sqrt_dh = 1.0 / math.sqrt(dh)

        # ---- MHSA: LN1 + head-major batched QKV + SDPA + out-proj ----
        y = _ln(x, ln1g[0], ln1b[0]).astype(MATMUL_DTYPE)
        yb = jnp.broadcast_to(y[None], (H, L, D))      # leading-batch view for batched dots
        q = jnp.einsum("hld,hde->hle", yb, wq[0],
                       preferred_element_type=jnp.float32) + bq[0]   # (H, L, dh)
        k = jnp.einsum("hld,hde->hle", yb, wk[0],
                       preferred_element_type=jnp.float32) + bk[0]
        v = jnp.einsum("hld,hde->hle", yb, wv[0],
                       preferred_element_type=jnp.float32) + bv[0]
        s = jnp.einsum("hqd,hkd->hqk", q.astype(MATMUL_DTYPE), k.astype(MATMUL_DTYPE),
                       preferred_element_type=jnp.float32) * inv_sqrt_dh   # (H, L, L)
        if causal:
            row = jax.lax.broadcasted_iota(jnp.int32, (L, L), 0)
            col = jax.lax.broadcasted_iota(jnp.int32, (L, L), 1)
            s = jnp.where((col <= row)[None], s, -1e30)
        s = s - jnp.max(s, axis=-1, keepdims=True)     # softmax stays f32
        e = jnp.exp(s)
        probs = e * pl.reciprocal(jnp.sum(e, axis=-1, keepdims=True), approx=True)
        ctxv = jnp.einsum("hqk,hkd->hqd", probs.astype(MATMUL_DTYPE), v.astype(MATMUL_DTYPE),
                          preferred_element_type=jnp.float32)          # (H, L, dh)
        # out-proj: per-head partials (leading-batch) summed over heads == concat-heads @ Wo
        attn = jnp.sum(jnp.einsum("hqd,hde->hqe", ctxv.astype(MATMUL_DTYPE), wo[0],
                                  preferred_element_type=jnp.float32), axis=0) + bo[0]
        x = x + attn

        # ---- MLP: LN2 + fc + QuickGELU + proj ----
        y2 = _ln(x, ln2g[0], ln2b[0])
        hmid = _mm(y2, fcw[0], fcb[0])
        hmid = hmid * jax.nn.sigmoid(1.702 * hmid)     # QuickGELU in f32
        x = x + _mm(hmid, pjw[0], pjb[0])

        # ---- MMA residual adapter: down -> relu -> shared -> relu -> up, scaled ----
        # Layers outside [ADAPTER_START, ADAPTER_END] carry zero adapter weights -> no-op.
        # TODO(synk): the exact TCP_MOD_MMA adapter injection point lives inside the
        # modified clip.build_model(design_details) resblocks (not provided); the standard
        # MMA residual adapter is applied after the MLP residual here.
        a = jnp.maximum(_mm(x, adw[0], adb[0]), 0.0)
        a = jnp.maximum(_mm(a, asw[0], asb[0]), 0.0)
        a = _mm(a, auw[0], aub[0])
        o_ref[0] = x + adapter_scale * a

    return kernel


def encoder_forward(enc, x, num_heads, causal):
    Bn, L, D = x.shape
    n_layers = enc["ln1_g"].shape[0]
    args = [x] + [enc[k] for k in _ENC_KEYS]
    in_specs = [pl.BlockSpec((1, L, D), lambda b, l: (b, 0, 0))]
    in_specs += [_layer_spec(enc[k]) for k in _ENC_KEYS]
    return pl.pallas_call(
        _encoder_kernel(num_heads, causal, ADAPTER_SCALE),
        out_shape=jax.ShapeDtypeStruct((Bn, L, D), jnp.float32),
        grid=(Bn, n_layers),
        in_specs=in_specs,
        out_specs=pl.BlockSpec((1, L, D), lambda b, l: (b, 0, 0)),
        compiler_params=pltpu.CompilerParams(
            dimension_semantics=("parallel", "arbitrary"),
            vmem_limit_bytes=ENC_VMEM_LIMIT),
    )(*args)


# ----------------------------- kernel 3: visual head -----------------------------


def _vis_head_kernel(x_ref, g_ref, b_ref, w_ref, o_ref):
    y = _ln(x_ref[...], g_ref[...], b_ref[...])               # ln_post
    z = _mm(y, w_ref[...])                                    # cls @ visual.proj (no bias)
    # rsqrt-multiply L2 norm (no eps, matching torch x / x.norm())
    o_ref[...] = z * jax.lax.rsqrt(jnp.sum(z * z, axis=-1, keepdims=True))


def visual_head(p, cls_tok):
    Bn, Dv = cls_tok.shape
    E = p["visual_proj"].shape[1]
    # TODO(synk): tiny kernel kept at grid=(1,); on v7x it could grid over batch / fold
    # into the last resblock step for 2-core use, but the win is negligible at these sizes.
    return pl.pallas_call(
        _vis_head_kernel,
        out_shape=jax.ShapeDtypeStruct((Bn, E), jnp.float32),
        grid=(1,),
        in_specs=[_rep_spec((Bn, Dv)), _rep_spec(p["ln_post_g"].shape),
                  _rep_spec(p["ln_post_b"].shape), _rep_spec(p["visual_proj"].shape)],
        out_specs=_rep_spec((Bn, E)),
    )(cls_tok, p["ln_post_g"], p["ln_post_b"], p["visual_proj"])


# ----------------------------- kernel 4: text head + logits -----------------------------


def _text_head_kernel(eot_ref, g_ref, b_ref, w_ref, cls_ref, ls_ref, tf_ref, lg_ref):
    y = _ln(eot_ref[...], g_ref[...], b_ref[...])             # ln_final (per-token, EOT-gathered)
    t = _mm(y, w_ref[...])                                    # @ text_projection (no bias)
    tn = t * jax.lax.rsqrt(jnp.sum(t * t, axis=-1, keepdims=True))
    tf_ref[...] = tn
    # logits = logit_scale * cls_norm @ text_norm.T  (f32 contraction of last dims)
    lg = jax.lax.dot_general(cls_ref[...], tn, (((1,), (1,)), ((), ())),
                             preferred_element_type=jnp.float32)
    lg_ref[...] = ls_ref[0, 0] * lg                           # scalar read from SMEM


def text_head(p, tx_eot, cls_norm, logit_scale):
    n_cls, D = tx_eot.shape
    E = p["text_projection"].shape[1]
    Bn = cls_norm.shape[0]
    return pl.pallas_call(
        _text_head_kernel,
        out_shape=(jax.ShapeDtypeStruct((n_cls, E), jnp.float32),
                   jax.ShapeDtypeStruct((Bn, n_cls), jnp.float32)),
        grid=(1,),
        in_specs=[_rep_spec((n_cls, D)), _rep_spec(p["ln_final_g"].shape),
                  _rep_spec(p["ln_final_b"].shape), _rep_spec(p["text_projection"].shape),
                  _rep_spec((Bn, E)),
                  pl.BlockSpec(memory_space=pltpu.MemorySpace.SMEM)],   # scalar in SMEM
        out_specs=(_rep_spec((n_cls, E)), _rep_spec((Bn, n_cls))),
    )(tx_eot, p["ln_final_g"], p["ln_final_b"], p["text_projection"], cls_norm, logit_scale)


# ----------------------------- parameters (deterministic synthetic init) -----------------------------


def init_params(key):
    keys = iter(jax.random.split(key, 64))
    MM = MATMUL_DTYPE

    def nrm(shape, scale=0.02):
        return scale * jax.random.normal(next(keys), shape, dtype=jnp.float32)

    # shared adapter weights (shared between the text and visual encoders at each layer)
    shared_w = {i: nrm((ADAPTER_DIM, ADAPTER_DIM))
                for i in range(ADAPTER_START, ADAPTER_END + 1)}

    def encoder_params(d, n_layers, n_heads, mid, ad_start, ad_end):
        dh = d // n_heads
        # fused in-proj weight (wq|wk|wv) exactly like nn.MultiheadAttention, then
        # re-laid out head-major: (NL, d, d) -> (NL, H, d, dh) per q/k/v.
        wqkv = nrm((n_layers, d, 3 * d))

        def head_major(w):
            return jnp.transpose(w.reshape(n_layers, d, n_heads, dh), (0, 2, 1, 3)).astype(MM)

        wo = nrm((n_layers, d, d))                      # rows = concat-head input features
        wo_hm = wo.reshape(n_layers, n_heads, dh, d).astype(MM)

        def adapter_stack(shape_per_layer, src=None):
            full = jnp.zeros((n_layers,) + shape_per_layer, jnp.float32)
            for i in range(ad_start, min(ad_end, n_layers - 1) + 1):
                val = src[i] if src is not None else nrm(shape_per_layer)
                full = full.at[i].set(val)
            return full.astype(MM)

        return {
            "ln1_g": jnp.ones((n_layers, 1, d), jnp.float32),
            "ln1_b": jnp.zeros((n_layers, 1, d), jnp.float32),
            "wq": head_major(wqkv[:, :, 0 * d:1 * d]),
            "wk": head_major(wqkv[:, :, 1 * d:2 * d]),
            "wv": head_major(wqkv[:, :, 2 * d:3 * d]),
            "bq": jnp.zeros((n_layers, n_heads, 1, dh), jnp.float32),
            "bk": jnp.zeros((n_layers, n_heads, 1, dh), jnp.float32),
            "bv": jnp.zeros((n_layers, n_heads, 1, dh), jnp.float32),
            "wo": wo_hm,
            "bo": jnp.zeros((n_layers, 1, d), jnp.float32),
            "ln2_g": jnp.ones((n_layers, 1, d), jnp.float32),
            "ln2_b": jnp.zeros((n_layers, 1, d), jnp.float32),
            "fc_w": nrm((n_layers, d, 4 * d)).astype(MM),
            "fc_b": jnp.zeros((n_layers, 1, 4 * d), jnp.float32),
            "pj_w": nrm((n_layers, 4 * d, d)).astype(MM),
            "pj_b": jnp.zeros((n_layers, 1, d), jnp.float32),
            "ad_dw": adapter_stack((d, mid)),
            "ad_db": jnp.zeros((n_layers, 1, mid), jnp.float32),
            "ad_sw": adapter_stack((mid, mid), src=shared_w),
            "ad_sb": jnp.zeros((n_layers, 1, mid), jnp.float32),
            "ad_uw": adapter_stack((mid, d)),
            "ad_ub": jnp.zeros((n_layers, 1, d), jnp.float32),
        }

    n_patch = (IMG_HW // PATCH) ** 2
    p = {}
    # ---- visual encoder ----
    p["conv1_w"] = nrm((IMG_C * PATCH * PATCH, VIS_WIDTH)).astype(MM)   # conv1 (bias=False)
    p["class_embedding"] = nrm((1, VIS_WIDTH))
    p["vis_pos_emb"] = nrm((n_patch + 1, VIS_WIDTH))
    p["ln_pre_g"] = jnp.ones((1, VIS_WIDTH), jnp.float32)
    p["ln_pre_b"] = jnp.zeros((1, VIS_WIDTH), jnp.float32)
    p["vis_enc"] = encoder_params(VIS_WIDTH, VIS_LAYERS, VIS_HEADS,
                                  ADAPTER_DIM, ADAPTER_START, ADAPTER_END)
    p["ln_post_g"] = jnp.ones((1, VIS_WIDTH), jnp.float32)
    p["ln_post_b"] = jnp.zeros((1, VIS_WIDTH), jnp.float32)
    p["visual_proj"] = nrm((VIS_WIDTH, EMBED_DIM)).astype(MM)
    # ---- text encoder ----
    p["txt_enc"] = encoder_params(TXT_WIDTH, TXT_LAYERS, TXT_HEADS,
                                  ADAPTER_DIM, ADAPTER_START, ADAPTER_END)
    p["txt_pos_emb"] = nrm((SEQ_LEN, TXT_WIDTH))
    p["ln_final_g"] = jnp.ones((1, TXT_WIDTH), jnp.float32)
    p["ln_final_b"] = jnp.zeros((1, TXT_WIDTH), jnp.float32)
    p["text_projection"] = nrm((TXT_WIDTH, EMBED_DIM)).astype(MM)
    p["logit_scale"] = jnp.full((1, 1), math.log(1.0 / 0.07), jnp.float32)
    # ---- PromptLearner buffers (frozen-CLIP text features replaced by synthetic, normalized) ----
    tf = jax.random.normal(next(keys), (N_CLS, EMBED_DIM), dtype=jnp.float32)
    p["text_features"] = tf / jnp.linalg.norm(tf, axis=-1, keepdims=True)   # ori_embedding
    p["ctx"] = nrm((N_CTX, TXT_WIDTH))
    p["token_prefix"] = nrm((N_CLS, 1, TXT_WIDTH))
    p["token_suffix"] = nrm((N_CLS, SEQ_LEN - 1 - N_CTX, TXT_WIDTH))
    tok = jnp.tile(jnp.arange(SEQ_LEN, dtype=jnp.int32)[None], (N_CLS, 1))
    tok = tok.at[:, SEQ_LEN - 2].set(100)                                   # EOT position (argmax)
    p["tokenized_prompts"] = tok
    return p


# ----------------------------- CustomCLIP.forward -----------------------------


def custom_clip_forward(p, image, label=None, training=False):
    # ---------------- ImageEncoder ----------------
    x = patch_embed(p, image)                                  # (B, P+1, Dv)
    x = encoder_forward(p["vis_enc"], x, VIS_HEADS, causal=False)
    cls_token = x[:, 0, :]
    cls_norm = visual_head(p, cls_token)                       # ln_post + proj + L2 norm, (B, E)
    # NOTE: the reference also L2-normalizes patch tokens and runs cross_attn_text_img +
    # meta_net; on the flag=True text path those results never reach the logits (dead code),
    # so that branch is omitted (perf-review recommendation).

    # ---------------- PromptLearner (prompt assembly only) ----------------
    ctx = jnp.broadcast_to(p["ctx"][None], (N_CLS, N_CTX, TXT_WIDTH))
    prompts = jnp.concatenate([p["token_prefix"], ctx, p["token_suffix"]], axis=1)  # (n_cls, L, D)

    # ---------------- TextEncoder (flag=True path) ----------------
    tx = prompts + p["txt_pos_emb"][None]
    tx = encoder_forward(p["txt_enc"], tx, TXT_HEADS, causal=True)
    # LayerNorm is per-token, so gathering the EOT rows before ln_final is exactly equivalent.
    eot = jnp.argmax(p["tokenized_prompts"], axis=-1)
    tx_eot = tx[jnp.arange(N_CLS), eot]                        # (n_cls, D)

    logit_scale = jnp.exp(p["logit_scale"])                    # (1, 1)
    text_features_norm, logits = text_head(p, tx_eot, cls_norm, logit_scale)

    if training and label is not None:
        tf_old = p["text_features"]
        tf_old = tf_old / jnp.linalg.norm(tf_old, axis=-1, keepdims=True)
        denom = jnp.linalg.norm(text_features_norm, axis=1) * jnp.linalg.norm(tf_old, axis=1)
        score = jnp.sum(text_features_norm * tf_old, axis=1) / jnp.maximum(denom, 1e-7)
        score = 1.0 - jnp.mean(score)
        logp = jax.nn.log_softmax(logits, axis=-1)
        ce = -jnp.mean(jnp.take_along_axis(logp, label[:, None], axis=-1))
        return logits, ce + 8.0 * score
    return logits


# ----------------------------- main -----------------------------

if __name__ == "__main__":
    key = jax.random.PRNGKey(0)
    pkey, ikey = jax.random.split(key)
    params = init_params(pkey)
    image = jax.random.normal(ikey, (B, IMG_C, IMG_HW, IMG_HW), dtype=jnp.float32)

    fwd = jax.jit(lambda prm, img: custom_clip_forward(prm, img))
    logits = fwd(params, image)
    jax.block_until_ready(logits)

    assert logits.shape == (B, N_CLS), logits.shape
    assert bool(jnp.all(jnp.isfinite(logits)))
    print("KERNEL_OK")
</pallas_src>

<mosaic_0001>
module attributes {stable_mosaic.version = 11 : i64} {
  func.func @kernel(%arg0: i32, %arg1: i32, %arg2: memref<1x8x32xf32, #tpu.memory_space<vmem>>, %arg3: memref<1x1x32xf32, #tpu.memory_space<vmem>>, %arg4: memref<1x1x32xf32, #tpu.memory_space<vmem>>, %arg5: memref<1x4x32x8xbf16, #tpu.memory_space<vmem>>, %arg6: memref<1x4x32x8xbf16, #tpu.memory_space<vmem>>, %arg7: memref<1x4x32x8xbf16, #tpu.memory_space<vmem>>, %arg8: memref<1x4x1x8xf32, #tpu.memory_space<vmem>>, %arg9: memref<1x4x1x8xf32, #tpu.memory_space<vmem>>, %arg10: memref<1x4x1x8xf32, #tpu.memory_space<vmem>>, %arg11: memref<1x4x8x32xbf16, #tpu.memory_space<vmem>>, %arg12: memref<1x1x32xf32, #tpu.memory_space<vmem>>, %arg13: memref<1x1x32xf32, #tpu.memory_space<vmem>>, %arg14: memref<1x1x32xf32, #tpu.memory_space<vmem>>, %arg15: memref<1x32x128xbf16, #tpu.memory_space<vmem>>, %arg16: memref<1x1x128xf32, #tpu.memory_space<vmem>>, %arg17: memref<1x128x32xbf16, #tpu.memory_space<vmem>>, %arg18: memref<1x1x32xf32, #tpu.memory_space<vmem>>, %arg19: memref<1x32x8xbf16, #tpu.memory_space<vmem>>, %arg20: memref<1x1x8xf32, #tpu.memory_space<vmem>>, %arg21: memref<1x8x8xbf16, #tpu.memory_space<vmem>>, %arg22: memref<1x1x8xf32, #tpu.memory_space<vmem>>, %arg23: memref<1x8x32xbf16, #tpu.memory_space<vmem>>, %arg24: memref<1x1x32xf32, #tpu.memory_space<vmem>>, %arg25: memref<1x8x32xf32, #tpu.memory_space<vmem>>) attributes {dimension_semantics = [#tpu.dimension_semantics<parallel>, #tpu.dimension_semantics<arbitrary>], iteration_bounds = array<i64: 4, 2>, scalar_prefetch = 0 : i64, scratch_operands = 0 : i64, tpu.core_type = #tpu.core_type<tc>, window_params = [{transform_indices = @transform_0, window_bounds = array<i64: 1, 8, 32>}, {transform_indices = @transform_1, window_bounds = array<i64: 1, 1, 32>}, {transform_indices = @transform_2, window_bounds = array<i64: 1, 1, 32>}, {transform_indices = @transform_3, window_bounds = array<i64: 1, 4, 32, 8>}, {transform_indices = @transform_4, window_bounds = array<i64: 1, 4, 32, 8>}, {transform_indices = @transform_5, window_bounds = array<i64: 1, 4, 32, 8>}, {transform_indices = @transform_6, window_bounds = array<i64: 1, 4, 1, 8>}, {transform_indices = @transform_7, window_bounds = array<i64: 1, 4, 1, 8>}, {transform_indices = @transform_8, window_bounds = array<i64: 1, 4, 1, 8>}, {transform_indices = @transform_9, window_bounds = array<i64: 1, 4, 8, 32>}, {transform_indices = @transform_10, window_bounds = array<i64: 1, 1, 32>}, {transform_indices = @transform_11, window_bounds = array<i64: 1, 1, 32>}, {transform_indices = @transform_12, window_bounds = array<i64: 1, 1, 32>}, {transform_indices = @transform_13, window_bounds = array<i64: 1, 32, 128>}, {transform_indices = @transform_14, window_bounds = array<i64: 1, 1, 128>}, {transform_indices = @transform_15, window_bounds = array<i64: 1, 128, 32>}, {transform_indices = @transform_16, window_bounds = array<i64: 1, 1, 32>}, {transform_indices = @transform_17, window_bounds = array<i64: 1, 32, 8>}, {transform_indices = @transform_18, window_bounds = array<i64: 1, 1, 8>}, {transform_indices = @transform_19, window_bounds = array<i64: 1, 8, 8>}, {transform_indices = @transform_20, window_bounds = array<i64: 1, 1, 8>}, {transform_indices = @transform_21, window_bounds = array<i64: 1, 8, 32>}, {transform_indices = @transform_22, window_bounds = array<i64: 1, 1, 32>}, {transform_indices = @transform_23, window_bounds = array<i64: 1, 8, 32>}]} {
    %c0_i32 = arith.constant 0 : i32
    %0 = arith.cmpi eq, %arg1, %c0_i32 : i32
    %1 = arith.extui %0 : i1 to i32
    %c0_i32_0 = arith.constant 0 : i32
    %2 = arith.cmpi ne, %1, %c0_i32_0 : i32
    scf.if %2 {
      %c0_109 = arith.constant 0 : index
      %c0_110 = arith.constant 0 : index
      %c0_111 = arith.constant 0 : index
      %181 = vector.load %arg2[%c0_109, %c0_110, %c0_111] : memref<1x8x32xf32, #tpu.memory_space<vmem>>, vector<1x8x32xf32>
      %c0_112 = arith.constant 0 : index
      %c0_113 = arith.constant 0 : index
      %c0_114 = arith.constant 0 : index
      %182 = vector.load %arg25[%c0_112, %c0_113, %c0_114] : memref<1x8x32xf32, #tpu.memory_space<vmem>>, vector<1x8x32xf32>
      tpu.vector_store %arg25[%c0_112, %c0_113, %c0_114], %181 {strides = array<i32>} : memref<1x8x32xf32, #tpu.memory_space<vmem>>, vector<1x8x32xf32>,
    } else {
    }
    %c0 = arith.constant 0 : index
    %c0_1 = arith.constant 0 : index
    %c0_2 = arith.constant 0 : index
    %3 = vector.load %arg25[%c0, %c0_1, %c0_2] : memref<1x8x32xf32, #tpu.memory_space<vmem>>, vector<1x8x32xf32>
    %4 = vector.shape_cast %3 : vector<1x8x32xf32> to vector<8x32xf32>
    %c0_3 = arith.constant 0 : index
    %c0_4 = arith.constant 0 : index
    %c0_5 = arith.constant 0 : index
    %5 = vector.load %arg3[%c0_3, %c0_4, %c0_5] : memref<1x1x32xf32, #tpu.memory_space<vmem>>, vector<1x1x32xf32>
    %6 = vector.shape_cast %5 : vector<1x1x32xf32> to vector<1x32xf32>
    %c0_6 = arith.constant 0 : index
    %c0_7 = arith.constant 0 : index
    %c0_8 = arith.constant 0 : index
    %7 = vector.load %arg4[%c0_6, %c0_7, %c0_8] : memref<1x1x32xf32, #tpu.memory_space<vmem>>, vector<1x1x32xf32>
    %8 = vector.shape_cast %7 : vector<1x1x32xf32> to vector<1x32xf32>
    %cst = arith.constant dense<0.000000e+00> : vector<8xf32>
    %9 = vector.multi_reduction <add>, %4, %cst [1] : vector<8x32xf32> to vector<8xf32>
    %10 = vector.shape_cast %9 : vector<8xf32> to vector<8x1xf32>
    %cst_9 = arith.constant 3.200000e+01 : f32
    %11 = vector.broadcast %cst_9 : f32 to vector<8x1xf32>
    %12 = arith.divf %10, %11 : vector<8x1xf32>
    %13 = vector.broadcast %12 : vector<8x1xf32> to vector<8x32xf32>
    %14 = arith.subf %4, %13 : vector<8x32xf32>
    %15 = vector.broadcast %12 : vector<8x1xf32> to vector<8x32xf32>
    %16 = arith.subf %4, %15 : vector<8x32xf32>
    %17 = arith.mulf %14, %16 : vector<8x32xf32>
    %cst_10 = arith.constant dense<0.000000e+00> : vector<8xf32>
    %18 = vector.multi_reduction <add>, %17, %cst_10 [1] : vector<8x32xf32> to vector<8xf32>
    %19 = vector.shape_cast %18 : vector<8xf32> to vector<8x1xf32>
    %cst_11 = arith.constant 3.200000e+01 : f32
    %20 = vector.broadcast %cst_11 : f32 to vector<8x1xf32>
    %21 = arith.divf %19, %20 : vector<8x1xf32>
    %22 = vector.broadcast %12 : vector<8x1xf32> to vector<8x32xf32>
    %23 = arith.subf %4, %22 : vector<8x32xf32>
    %cst_12 = arith.constant 9.99999974E-6 : f32
    %24 = vector.broadcast %cst_12 : f32 to vector<8x1xf32>
    %25 = arith.addf %21, %24 : vector<8x1xf32>
    %26 = math.rsqrt %25 : vector<8x1xf32>
    %27 = vector.broadcast %26 : vector<8x1xf32> to vector<8x32xf32>
    %28 = arith.mulf %23, %27 : vector<8x32xf32>
    %29 = vector.broadcast %6 : vector<1x32xf32> to vector<8x32xf32>
    %30 = arith.mulf %28, %29 : vector<8x32xf32>
    %31 = vector.broadcast %8 : vector<1x32xf32> to vector<8x32xf32>
    %32 = arith.addf %30, %31 : vector<8x32xf32>
    %33 = arith.truncf %32 : vector<8x32xf32> to vector<8x32xbf16>
    %34 = vector.shape_cast %33 : vector<8x32xbf16> to vector<1x8x32xbf16>
    %35 = vector.shape_cast %34 : vector<1x8x32xbf16> to vector<1x8x32xbf16>
    %36 = vector.broadcast %35 : vector<1x8x32xbf16> to vector<4x8x32xbf16>
    %c0_13 = arith.constant 0 : index
    %c0_14 = arith.constant 0 : index
    %c0_15 = arith.constant 0 : index
    %c0_16 = arith.constant 0 : index
    %37 = vector.load %arg5[%c0_13, %c0_14, %c0_15, %c0_16] : memref<1x4x32x8xbf16, #tpu.memory_space<vmem>>, vector<1x4x32x8xbf16>
    %38 = vector.shape_cast %37 : vector<1x4x32x8xbf16> to vector<4x32x8xbf16>
    "tpu.trace_start"() <{level = 10 : i32, message = "hld,hde->hle"}> : () -> ()
    %cst_17 = arith.constant dense<0.000000e+00> : vector<4x8x8xf32>
    %39 = tpu.matmul %36, %38, %cst_17 {dimension_numbers = #tpu.dot_dimension_numbers<[2], [1], [1], [2], [0, 0, 0, 1, 1, 2], [0], [0]>} : vector<4x8x32xbf16>, vector<4x32x8xbf16>, vector<4x8x8xf32> -> vector<4x8x8xf32>
    "tpu.trace_stop"() : () -> ()
    %c0_18 = arith.constant 0 : index
    %c0_19 = arith.constant 0 : index
    %c0_20 = arith.constant 0 : index
    %c0_21 = arith.constant 0 : index
    %40 = vector.load %arg8[%c0_18, %c0_19, %c0_20, %c0_21] : memref<1x4x1x8xf32, #tpu.memory_space<vmem>>, vector<1x4x1x8xf32>
    %41 = vector.shape_cast %40 : vector<1x4x1x8xf32> to vector<4x1x8xf32>
    %42 = vector.broadcast %41 : vector<4x1x8xf32> to vector<4x8x8xf32>
    %43 = arith.addf %39, %42 : vector<4x8x8xf32>
    %c0_22 = arith.constant 0 : index
    %c0_23 = arith.constant 0 : index
    %c0_24 = arith.constant 0 : index
    %c0_25 = arith.constant 0 : index
    %44 = vector.load %arg6[%c0_22, %c0_23, %c0_24, %c0_25] : memref<1x4x32x8xbf16, #tpu.memory_space<vmem>>, vector<1x4x32x8xbf16>
    %45 = vector.shape_cast %44 : vector<1x4x32x8xbf16> to vector<4x32x8xbf16>
    "tpu.trace_start"() <{level = 10 : i32, message = "hld,hde->hle"}> : () -> ()
    %cst_26 = arith.constant dense<0.000000e+00> : vector<4x8x8xf32>
    %46 = tpu.matmul %36, %45, %cst_26 {dimension_numbers = #tpu.dot_dimension_numbers<[2], [1], [1], [2], [0, 0, 0, 1, 1, 2], [0], [0]>} : vector<4x8x32xbf16>, vector<4x32x8xbf16>, vector<4x8x8xf32> -> vector<4x8x8xf32>
    "tpu.trace_stop"() : () -> ()
    %c0_27 = arith.constant 0 : index
    %c0_28 = arith.constant 0 : index
    %c0_29 = arith.constant 0 : index
    %c0_30 = arith.constant 0 : index
    %47 = vector.load %arg9[%c0_27, %c0_28, %c0_29, %c0_30] : memref<1x4x1x8xf32, #tpu.memory_space<vmem>>, vector<1x4x1x8xf32>
    %48 = vector.shape_cast %47 : vector<1x4x1x8xf32> to vector<4x1x8xf32>
    %49 = vector.broadcast %48 : vector<4x1x8xf32> to vector<4x8x8xf32>
    %50 = arith.addf %46, %49 : vector<4x8x8xf32>
    %c0_31 = arith.constant 0 : index
    %c0_32 = arith.constant 0 : index
    %c0_33 = arith.constant 0 : index
    %c0_34 = arith.constant 0 : index
    %51 = vector.load %arg7[%c0_31, %c0_32, %c0_33, %c0_34] : memref<1x4x32x8xbf16, #tpu.memory_space<vmem>>, vector<1x4x32x8xbf16>
    %52 = vector.shape_cast %51 : vector<1x4x32x8xbf16> to vector<4x32x8xbf16>
    "tpu.trace_start"() <{level = 10 : i32, message = "hld,hde->hle"}> : () -> ()
    %cst_35 = arith.constant dense<0.000000e+00> : vector<4x8x8xf32>
    %53 = tpu.matmul %36, %52, %cst_35 {dimension_numbers = #tpu.dot_dimension_numbers<[2], [1], [1], [2], [0, 0, 0, 1, 1, 2], [0], [0]>} : vector<4x8x32xbf16>, vector<4x32x8xbf16>, vector<4x8x8xf32> -> vector<4x8x8xf32>
    "tpu.trace_stop"() : () -> ()
    %c0_36 = arith.constant 0 : index
    %c0_37 = arith.constant 0 : index
    %c0_38 = arith.constant 0 : index
    %c0_39 = arith.constant 0 : index
    %54 = vector.load %arg10[%c0_36, %c0_37, %c0_38, %c0_39] : memref<1x4x1x8xf32, #tpu.memory_space<vmem>>, vector<1x4x1x8xf32>
    %55 = vector.shape_cast %54 : vector<1x4x1x8xf32> to vector<4x1x8xf32>
    %56 = vector.broadcast %55 : vector<4x1x8xf32> to vector<4x8x8xf32>
    %57 = arith.addf %53, %56 : vector<4x8x8xf32>
    %58 = arith.truncf %43 : vector<4x8x8xf32> to vector<4x8x8xbf16>
    %59 = arith.truncf %50 : vector<4x8x8xf32> to vector<4x8x8xbf16>
    "tpu.trace_start"() <{level = 10 : i32, message = "hqd,hkd->hqk"}> : () -> ()
    %cst_40 = arith.constant dense<0.000000e+00> : vector<4x8x8xf32>
    %60 = tpu.matmul %58, %59, %cst_40 {dimension_numbers = #tpu.dot_dimension_numbers<[2], [2], [1], [1], [0, 0, 0, 1, 1, 1], [0], [0]>} : vector<4x8x8xbf16>, vector<4x8x8xbf16>, vector<4x8x8xf32> -> vector<4x8x8xf32>
    "tpu.trace_stop"() : () -> ()
    %cst_41 = arith.constant 0.353553385 : f32
    %61 = vector.broadcast %cst_41 : f32 to vector<4x8x8xf32>
    %62 = arith.mulf %60, %61 : vector<4x8x8xf32>
    %63 = tpu.iota {dimensions = array<i32: 0>} : vector<8x8xi32>
    %64 = tpu.iota {dimensions = array<i32: 1>} : vector<8x8xi32>
    %65 = arith.cmpi sle, %64, %63 : vector<8x8xi32>
    %66 = vector.shape_cast %65 : vector<8x8xi1> to vector<1x8x8xi1>
    %cst_42 = arith.constant -1.000000e+30 : f32
    %67 = vector.shape_cast %66 : vector<1x8x8xi1> to vector<1x8x8xi1>
    %68 = vector.broadcast %67 : vector<1x8x8xi1> to vector<4x8x8xi1>
    %69 = vector.broadcast %cst_42 : f32 to vector<4x8x8xf32>
    %70 = arith.select %68, %62, %69 : vector<4x8x8xi1>, vector<4x8x8xf32>
    %cst_43 = arith.constant dense<0xFF800000> : vector<4x8xf32>
    %71 = vector.multi_reduction <maximumf>, %70, %cst_43 [2] : vector<4x8x8xf32> to vector<4x8xf32>
    %72 = vector.shape_cast %71 : vector<4x8xf32> to vector<4x8x1xf32>
    %73 = vector.broadcast %72 : vector<4x8x1xf32> to vector<4x8x8xf32>
    %74 = arith.subf %70, %73 : vector<4x8x8xf32>
    %75 = math.exp %74 : vector<4x8x8xf32>
    %cst_44 = arith.constant dense<0.000000e+00> : vector<4x8xf32>
    %76 = vector.multi_reduction <add>, %75, %cst_44 [2] : vector<4x8x8xf32> to vector<4x8xf32>
    %77 = vector.shape_cast %76 : vector<4x8xf32> to vector<4x8x1xf32>
    %78 = tpu.reciprocal %77 {approx = true} : vector<4x8x1xf32> -> vector<4x8x1xf32>
    %79 = vector.broadcast %78 : vector<4x8x1xf32> to vector<4x8x8xf32>
    %80 = arith.mulf %75, %79 : vector<4x8x8xf32>
    %81 = arith.truncf %80 : vector<4x8x8xf32> to vector<4x8x8xbf16>
    %82 = arith.truncf %57 : vector<4x8x8xf32> to vector<4x8x8xbf16>
    "tpu.trace_start"() <{level = 10 : i32, message = "hqk,hkd->hqd"}> : () -> ()
    %cst_45 = arith.constant dense<0.000000e+00> : vector<4x8x8xf32>
    %83 = tpu.matmul %81, %82, %cst_45 {dimension_numbers = #tpu.dot_dimension_numbers<[2], [1], [1], [2], [0, 0, 0, 1, 1, 2], [0], [0]>} : vector<4x8x8xbf16>, vector<4x8x8xbf16>, vector<4x8x8xf32> -> vector<4x8x8xf32>
    "tpu.trace_stop"() : () -> ()
    %84 = arith.truncf %83 : vector<4x8x8xf32> to vector<4x8x8xbf16>
    %c0_46 = arith.constant 0 : index
    %c0_47 = arith.constant 0 : index
    %c0_48 = arith.constant 0 : index
    %c0_49 = arith.constant 0 : index
    %85 = vector.load %arg11[%c0_46, %c0_47, %c0_48, %c0_49] : memref<1x4x8x32xbf16, #tpu.memory_space<vmem>>, vector<1x4x8x32xbf16>
    %86 = vector.shape_cast %85 : vector<1x4x8x32xbf16> to vector<4x8x32xbf16>
    "tpu.trace_start"() <{level = 10 : i32, message = "hqd,hde->hqe"}> : () -> ()
    %cst_50 = arith.constant dense<0.000000e+00> : vector<4x8x32xf32>
    %87 = tpu.matmul %84, %86, %cst_50 {dimension_numbers = #tpu.dot_dimension_numbers<[2], [1], [1], [2], [0, 0, 0, 1, 1, 2], [0], [0]>} : vector<4x8x8xbf16>, vector<4x8x32xbf16>, vector<4x8x32xf32> -> vector<4x8x32xf32>
    "tpu.trace_stop"() : () -> ()
    %cst_51 = arith.constant dense<0.000000e+00> : vector<8x32xf32>
    %88 = vector.multi_reduction <add>, %87, %cst_51 [0] : vector<4x8x32xf32> to vector<8x32xf32>
    %c0_52 = arith.constant 0 : index
    %c0_53 = arith.constant 0 : index
    %c0_54 = arith.constant 0 : index
    %89 = vector.load %arg12[%c0_52, %c0_53, %c0_54] : memref<1x1x32xf32, #tpu.memory_space<vmem>>, vector<1x1x32xf32>
    %90 = vector.shape_cast %89 : vector<1x1x32xf32> to vector<1x32xf32>
    %91 = vector.broadcast %90 : vector<1x32xf32> to vector<8x32xf32>
    %92 = arith.addf %88, %91 : vector<8x32xf32>
    %93 = arith.addf %4, %92 : vector<8x32xf32>
    %c0_55 = arith.constant 0 : index
    %c0_56 = arith.constant 0 : index
    %c0_57 = arith.constant 0 : index
    %94 = vector.load %arg13[%c0_55, %c0_56, %c0_57] : memref<1x1x32xf32, #tpu.memory_space<vmem>>, vector<1x1x32xf32>
    %95 = vector.shape_cast %94 : vector<1x1x32xf32> to vector<1x32xf32>
    %c0_58 = arith.constant 0 : index
    %c0_59 = arith.constant 0 : index
    %c0_60 = arith.constant 0 : index
    %96 = vector.load %arg14[%c0_58, %c0_59, %c0_60] : memref<1x1x32xf32, #tpu.memory_space<vmem>>, vector<1x1x32xf32>
    %97 = vector.shape_cast %96 : vector<1x1x32xf32> to vector<1x32xf32>
    %cst_61 = arith.constant dense<0.000000e+00> : vector<8xf32>
    %98 = vector.multi_reduction <add>, %93, %cst_61 [1] : vector<8x32xf32> to vector<8xf32>
    %99 = vector.shape_cast %98 : vector<8xf32> to vector<8x1xf32>
    %cst_62 = arith.constant 3.200000e+01 : f32
    %100 = vector.broadcast %cst_62 : f32 to vector<8x1xf32>
    %101 = arith.divf %99, %100 : vector<8x1xf32>
    %102 = vector.broadcast %101 : vector<8x1xf32> to vector<8x32xf32>
    %103 = arith.subf %93, %102 : vector<8x32xf32>
    %104 = vector.broadcast %101 : vector<8x1xf32> to vector<8x32xf32>
    %105 = arith.subf %93, %104 : vector<8x32xf32>
    %106 = arith.mulf %103, %105 : vector<8x32xf32>
    %cst_63 = arith.constant dense<0.000000e+00> : vector<8xf32>
    %107 = vector.multi_reduction <add>, %106, %cst_63 [1] : vector<8x32xf32> to vector<8xf32>
    %108 = vector.shape_cast %107 : vector<8xf32> to vector<8x1xf32>
    %cst_64 = arith.constant 3.200000e+01 : f32
    %109 = vector.broadcast %cst_64 : f32 to vector<8x1xf32>
    %110 = arith.divf %108, %109 : vector<8x1xf32>
    %111 = vector.broadcast %101 : vector<8x1xf32> to vector<8x32xf32>
    %112 = arith.subf %93, %111 : vector<8x32xf32>
    %cst_65 = arith.constant 9.99999974E-6 : f32
    %113 = vector.broadcast %cst_65 : f32 to vector<8x1xf32>
    %114 = arith.addf %110, %113 : vector<8x1xf32>
    %115 = math.rsqrt %114 : vector<8x1xf32>
    %116 = vector.broadcast %115 : vector<8x1xf32> to vector<8x32xf32>
    %117 = arith.mulf %112, %116 : vector<8x32xf32>
    %118 = vector.broadcast %95 : vector<1x32xf32> to vector<8x32xf32>
    %119 = arith.mulf %117, %118 : vector<8x32xf32>
    %120 = vector.broadcast %97 : vector<1x32xf32> to vector<8x32xf32>
    %121 = arith.addf %119, %120 : vector<8x32xf32>
    %c0_66 = arith.constant 0 : index
    %c0_67 = arith.constant 0 : index
    %c0_68 = arith.constant 0 : index
    %122 = vector.load %arg15[%c0_66, %c0_67, %c0_68] : memref<1x32x128xbf16, #tpu.memory_space<vmem>>, vector<1x32x128xbf16>
    %123 = vector.shape_cast %122 : vector<1x32x128xbf16> to vector<32x128xbf16>
    %c0_69 = arith.constant 0 : index
    %c0_70 = arith.constant 0 : index
    %c0_71 = arith.constant 0 : index
    %124 = vector.load %arg16[%c0_69, %c0_70, %c0_71] : memref<1x1x128xf32, #tpu.memory_space<vmem>>, vector<1x1x128xf32>
    %125 = vector.shape_cast %124 : vector<1x1x128xf32> to vector<1x128xf32>
    %126 = arith.truncf %121 : vector<8x32xf32> to vector<8x32xbf16>
    %cst_72 = arith.constant dense<0.000000e+00> : vector<8x128xf32>
    %127 = tpu.matmul %126, %123, %cst_72 {dimension_numbers = #tpu.dot_dimension_numbers<[1], [0], [0], [1], [0, 0, 1, 1], [], []>} : vector<8x32xbf16>, vector<32x128xbf16>, vector<8x128xf32> -> vector<8x128xf32>
    %128 = vector.broadcast %125 : vector<1x128xf32> to vector<8x128xf32>
    %129 = arith.addf %127, %128 : vector<8x128xf32>
    %cst_73 = arith.constant 1.702000e+00 : f32
    %130 = vector.broadcast %cst_73 : f32 to vector<8x128xf32>
    %131 = arith.mulf %130, %129 : vector<8x128xf32>
    %132 = arith.negf %131 : vector<8x128xf32>
    %133 = math.exp %132 : vector<8x128xf32>
    %cst_74 = arith.constant 1.000000e+00 : f32
    %134 = vector.broadcast %cst_74 : f32 to vector<8x128xf32>
    %135 = arith.addf %134, %133 : vector<8x128xf32>
    %136 = arith.divf %134, %135 : vector<8x128xf32>
    %137 = arith.mulf %129, %136 : vector<8x128xf32>
    %c0_75 = arith.constant 0 : index
    %c0_76 = arith.constant 0 : index
    %c0_77 = arith.constant 0 : index
    %138 = vector.load %arg17[%c0_75, %c0_76, %c0_77] : memref<1x128x32xbf16, #tpu.memory_space<vmem>>, vector<1x128x32xbf16>
    %139 = vector.shape_cast %138 : vector<1x128x32xbf16> to vector<128x32xbf16>
    %c0_78 = arith.constant 0 : index
    %c0_79 = arith.constant 0 : index
    %c0_80 = arith.constant 0 : index
    %140 = vector.load %arg18[%c0_78, %c0_79, %c0_80] : memref<1x1x32xf32, #tpu.memory_space<vmem>>, vector<1x1x32xf32>
    %141 = vector.shape_cast %140 : vector<1x1x32xf32> to vector<1x32xf32>
    %142 = arith.truncf %137 : vector<8x128xf32> to vector<8x128xbf16>
    %cst_81 = arith.constant dense<0.000000e+00> : vector<8x32xf32>
    %143 = tpu.matmul %142, %139, %cst_81 {dimension_numbers = #tpu.dot_dimension_numbers<[1], [0], [0], [1], [0, 0, 1, 1], [], []>} : vector<8x128xbf16>, vector<128x32xbf16>, vector<8x32xf32> -> vector<8x32xf32>
    %144 = vector.broadcast %141 : vector<1x32xf32> to vector<8x32xf32>
    %145 = arith.addf %143, %144 : vector<8x32xf32>
    %146 = arith.addf %93, %145 : vector<8x32xf32>
    %c0_82 = arith.constant 0 : index
    %c0_83 = arith.constant 0 : index
    %c0_84 = arith.constant 0 : index
    %147 = vector.load %arg19[%c0_82, %c0_83, %c0_84] : memref<1x32x8xbf16, #tpu.memory_space<vmem>>, vector<1x32x8xbf16>
    %148 = vector.shape_cast %147 : vector<1x32x8xbf16> to vector<32x8xbf16>
    %c0_85 = arith.constant 0 : index
    %c0_86 = arith.constant 0 : index
    %c0_87 = arith.constant 0 : index
    %149 = vector.load %arg20[%c0_85, %c0_86, %c0_87] : memref<1x1x8xf32, #tpu.memory_space<vmem>>, vector<1x1x8xf32>
    %150 = vector.shape_cast %149 : vector<1x1x8xf32> to vector<1x8xf32>
    %151 = arith.truncf %146 : vector<8x32xf32> to vector<8x32xbf16>
    %cst_88 = arith.constant dense<0.000000e+00> : vector<8x8xf32>
    %152 = tpu.matmul %151, %148, %cst_88 {dimension_numbers = #tpu.dot_dimension_numbers<[1], [0], [0], [1], [0, 0, 1, 1], [], []>} : vector<8x32xbf16>, vector<32x8xbf16>, vector<8x8xf32> -> vector<8x8xf32>
    %153 = vector.broadcast %150 : vector<1x8xf32> to vector<8x8xf32>
    %154 = arith.addf %152, %153 : vector<8x8xf32>
    %cst_89 = arith.constant 0.000000e+00 : f32
    %155 = vector.broadcast %cst_89 : f32 to vector<8x8xf32>
    %156 = arith.maximumf %154, %155 : vector<8x8xf32>
    %c0_90 = arith.constant 0 : index
    %c0_91 = arith.constant 0 : index
    %c0_92 = arith.constant 0 : index
    %157 = vector.load %arg21[%c0_90, %c0_91, %c0_92] : memref<1x8x8xbf16, #tpu.memory_space<vmem>>, vector<1x8x8xbf16>
    %158 = vector.shape_cast %157 : vector<1x8x8xbf16> to vector<8x8xbf16>
    %c0_93 = arith.constant 0 : index
    %c0_94 = arith.constant 0 : index
    %c0_95 = arith.constant 0 : index
    %159 = vector.load %arg22[%c0_93, %c0_94, %c0_95] : memref<1x1x8xf32, #tpu.memory_space<vmem>>, vector<1x1x8xf32>
    %160 = vector.shape_cast %159 : vector<1x1x8xf32> to vector<1x8xf32>
    %161 = arith.truncf %156 : vector<8x8xf32> to vector<8x8xbf16>
    %cst_96 = arith.constant dense<0.000000e+00> : vector<8x8xf32>
    %162 = tpu.matmul %161, %158, %cst_96 {dimension_numbers = #tpu.dot_dimension_numbers<[1], [0], [0], [1], [0, 0, 1, 1], [], []>} : vector<8x8xbf16>, vector<8x8xbf16>, vector<8x8xf32> -> vector<8x8xf32>
    %163 = vector.broadcast %160 : vector<1x8xf32> to vector<8x8xf32>
    %164 = arith.addf %162, %163 : vector<8x8xf32>
    %cst_97 = arith.constant 0.000000e+00 : f32
    %165 = vector.broadcast %cst_97 : f32 to vector<8x8xf32>
    %166 = arith.maximumf %164, %165 : vector<8x8xf32>
    %c0_98 = arith.constant 0 : index
    %c0_99 = arith.constant 0 : index
    %c0_100 = arith.constant 0 : index
    %167 = vector.load %arg23[%c0_98, %c0_99, %c0_100] : memref<1x8x32xbf16, #tpu.memory_space<vmem>>, vector<1x8x32xbf16>
    %168 = vector.shape_cast %167 : vector<1x8x32xbf16> to vector<8x32xbf16>
    %c0_101 = arith.constant 0 : index
    %c0_102 = arith.constant 0 : index
    %c0_103 = arith.constant 0 : index
    %169 = vector.load %arg24[%c0_101, %c0_102, %c0_103] : memref<1x1x32xf32, #tpu.memory_space<vmem>>, vector<1x1x32xf32>
    %170 = vector.shape_cast %169 : vector<1x1x32xf32> to vector<1x32xf32>
    %171 = arith.truncf %166 : vector<8x8xf32> to vector<8x8xbf16>
    %cst_104 = arith.constant dense<0.000000e+00> : vector<8x32xf32>
    %172 = tpu.matmul %171, %168, %cst_104 {dimension_numbers = #tpu.dot_dimension_numbers<[1], [0], [0], [1], [0, 0, 1, 1], [], []>} : vector<8x8xbf16>, vector<8x32xbf16>, vector<8x32xf32> -> vector<8x32xf32>
    %173 = vector.broadcast %170 : vector<1x32xf32> to vector<8x32xf32>
    %174 = arith.addf %172, %173 : vector<8x32xf32>
    %cst_105 = arith.constant 1.000000e-01 : f32
    %175 = vector.broadcast %cst_105 : f32 to vector<8x32xf32>
    %176 = arith.mulf %175, %174 : vector<8x32xf32>
    %177 = arith.addf %146, %176 : vector<8x32xf32>
    %c0_106 = arith.constant 0 : index
    %c0_107 = arith.constant 0 : index
    %c0_108 = arith.constant 0 : index
    %178 = vector.load %arg25[%c0_106, %c0_107, %c0_108] : memref<1x8x32xf32, #tpu.memory_space<vmem>>, vector<1x8x32xf32>
    %179 = vector.shape_cast %178 : vector<1x8x32xf32> to vector<8x32xf32>
    %180 = vector.shape_cast %177 : vector<8x32xf32> to vector<1x8x32xf32>
    tpu.vector_store %arg25[%c0_106, %c0_107, %c0_108], %180 {strides = array<i32>} : memref<1x8x32xf32, #tpu.memory_space<vmem>>, vector<1x8x32xf32>,
    return
  }
  func.func @transform_0(%arg0: i32, %arg1: i32) -> (i32, i32, i32) {
    %c0_i32 = arith.constant 0 : i32
    %c0_i32_0 = arith.constant 0 : i32
    %c0_i32_1 = arith.constant 0 : i32
    return %arg0, %c0_i32, %c0_i32_0 : i32, i32, i32
  }
  func.func @transform_1(%arg0: i32, %arg1: i32) -> (i32, i32, i32) {
    %c0_i32 = arith.constant 0 : i32
    %c0_i32_0 = arith.constant 0 : i32
    %c0_i32_1 = arith.constant 0 : i32
    return %arg1, %c0_i32, %c0_i32_0 : i32, i32, i32
  }
  func.func @transform_2(%arg0: i32, %arg1: i32) -> (i32, i32, i32) {
    %c0_i32 = arith.constant 0 : i32
    %c0_i32_0 = arith.constant 0 : i32
    %c0_i32_1 = arith.constant 0 : i32
    return %arg1, %c0_i32, %c0_i32_0 : i32, i32, i32
  }
  func.func @transform_3(%arg0: i32, %arg1: i32) -> (i32, i32, i32, i32) {
    %c0_i32 = arith.constant 0 : i32
    %c0_i32_0 = arith.constant 0 : i32
    %c0_i32_1 = arith.constant 0 : i32
    %c0_i32_2 = arith.constant 0 : i32
    return %arg1, %c0_i32, %c0_i32_0, %c0_i32_1 : i32, i32, i32, i32
  }
  func.func @transform_4(%arg0: i32, %arg1: i32) -> (i32, i32, i32, i32) {
    %c0_i32 = arith.constant 0 : i32
    %c0_i32_0 = arith.constant 0 : i32
    %c0_i32_1 = arith.constant 0 : i32
    %c0_i32_2 = arith.constant 0 : i32
    return %arg1, %c0_i32, %c0_i32_0, %c0_i32_1 : i32, i32, i32, i32
  }
  func.func @transform_5(%arg0: i32, %arg1: i32) -> (i32, i32, i32, i32) {
    %c0_i32 = arith.constant 0 : i32
    %c0_i32_0 = arith.constant 0 : i32
    %c0_i32_1 = arith.constant 0 : i32
    %c0_i32_2 = arith.constant 0 : i32
    return %arg1, %c0_i32, %c0_i32_0, %c0_i32_1 : i32, i32, i32, i32
  }
  func.func @transform_6(%arg0: i32, %arg1: i32) -> (i32, i32, i32, i32) {
    %c0_i32 = arith.constant 0 : i32
    %c0_i32_0 = arith.constant 0 : i32
    %c0_i32_1 = arith.constant 0 : i32
    %c0_i32_2 = arith.constant 0 : i32
    return %arg1, %c0_i32, %c0_i32_0, %c0_i32_1 : i32, i32, i32, i32
  }
  func.func @transform_7(%arg0: i32, %arg1: i32) -> (i32, i32, i32, i32) {
    %c0_i32 = arith.constant 0 : i32
    %c0_i32_0 = arith.constant 0 : i32
    %c0_i32_1 = arith.constant 0 : i32
    %c0_i32_2 = arith.constant 0 : i32
    return %arg1, %c0_i32, %c0_i32_0, %c0_i32_1 : i32, i32, i32, i32
  }
  func.func @transform_8(%arg0: i32, %arg1: i32) -> (i32, i32, i32, i32) {
    %c0_i32 = arith.constant 0 : i32
    %c0_i32_0 = arith.constant 0 : i32
    %c0_i32_1 = arith.constant 0 : i32
    %c0_i32_2 = arith.constant 0 : i32
    return %arg1, %c0_i32, %c0_i32_0, %c0_i32_1 : i32, i32, i32, i32
  }
  func.func @transform_9(%arg0: i32, %arg1: i32) -> (i32, i32, i32, i32) {
    %c0_i32 = arith.constant 0 : i32
    %c0_i32_0 = arith.constant 0 : i32
    %c0_i32_1 = arith.constant 0 : i32
    %c0_i32_2 = arith.constant 0 : i32
    return %arg1, %c0_i32, %c0_i32_0, %c0_i32_1 : i32, i32, i32, i32
  }
  func.func @transform_10(%arg0: i32, %arg1: i32) -> (i32, i32, i32) {
    %c0_i32 = arith.constant 0 : i32
    %c0_i32_0 = arith.constant 0 : i32
    %c0_i32_1 = arith.constant 0 : i32
    return %arg1, %c0_i32, %c0_i32_0 : i32, i32, i32
  }
  func.func @transform_11(%arg0: i32, %arg1: i32) -> (i32, i32, i32) {
    %c0_i32 = arith.constant 0 : i32
    %c0_i32_0 = arith.constant 0 : i32
    %c0_i32_1 = arith.constant 0 : i32
    return %arg1, %c0_i32, %c0_i32_0 : i32, i32, i32
  }
  func.func @transform_12(%arg0: i32, %arg1: i32) -> (i32, i32, i32) {
    %c0_i32 = arith.constant 0 : i32
    %c0_i32_0 = arith.constant 0 : i32
    %c0_i32_1 = arith.constant 0 : i32
    return %arg1, %c0_i32, %c0_i32_0 : i32, i32, i32
  }
  func.func @transform_13(%arg0: i32, %arg1: i32) -> (i32, i32, i32) {
    %c0_i32 = arith.constant 0 : i32
    %c0_i32_0 = arith.constant 0 : i32
    %c0_i32_1 = arith.constant 0 : i32
    return %arg1, %c0_i32, %c0_i32_0 : i32, i32, i32
  }
  func.func @transform_14(%arg0: i32, %arg1: i32) -> (i32, i32, i32) {
    %c0_i32 = arith.constant 0 : i32
    %c0_i32_0 = arith.constant 0 : i32
    %c0_i32_1 = arith.constant 0 : i32
    return %arg1, %c0_i32, %c0_i32_0 : i32, i32, i32
  }
  func.func @transform_15(%arg0: i32, %arg1: i32) -> (i32, i32, i32) {
    %c0_i32 = arith.constant 0 : i32
    %c0_i32_0 = arith.constant 0 : i32
    %c0_i32_1 = arith.constant 0 : i32
    return %arg1, %c0_i32, %c0_i32_0 : i32, i32, i32
  }
  func.func @transform_16(%arg0: i32, %arg1: i32) -> (i32, i32, i32) {
    %c0_i32 = arith.constant 0 : i32
    %c0_i32_0 = arith.constant 0 : i32
    %c0_i32_1 = arith.constant 0 : i32
    return %arg1, %c0_i32, %c0_i32_0 : i32, i32, i32
  }
  func.func @transform_17(%arg0: i32, %arg1: i32) -> (i32, i32, i32) {
    %c0_i32 = arith.constant 0 : i32
    %c0_i32_0 = arith.constant 0 : i32
    %c0_i32_1 = arith.constant 0 : i32
    return %arg1, %c0_i32, %c0_i32_0 : i32, i32, i32
  }
  func.func @transform_18(%arg0: i32, %arg1: i32) -> (i32, i32, i32) {
    %c0_i32 = arith.constant 0 : i32
    %c0_i32_0 = arith.constant 0 : i32
    %c0_i32_1 = arith.constant 0 : i32
    return %arg1, %c0_i32, %c0_i32_0 : i32, i32, i32
  }
  func.func @transform_19(%arg0: i32, %arg1: i32) -> (i32, i32, i32) {
    %c0_i32 = arith.constant 0 : i32
    %c0_i32_0 = arith.constant 0 : i32
    %c0_i32_1 = arith.constant 0 : i32
    return %arg1, %c0_i32, %c0_i32_0 : i32, i32, i32
  }
  func.func @transform_20(%arg0: i32, %arg1: i32) -> (i32, i32, i32) {
    %c0_i32 = arith.constant 0 : i32
    %c0_i32_0 = arith.constant 0 : i32
    %c0_i32_1 = arith.constant 0 : i32
    return %arg1, %c0_i32, %c0_i32_0 : i32, i32, i32
  }
  func.func @transform_21(%arg0: i32, %arg1: i32) -> (i32, i32, i32) {
    %c0_i32 = arith.constant 0 : i32
    %c0_i32_0 = arith.constant 0 : i32
    %c0_i32_1 = arith.constant 0 : i32
    return %arg1, %c0_i32, %c0_i32_0 : i32, i32, i32
  }
  func.func @transform_22(%arg0: i32, %arg1: i32) -> (i32, i32, i32) {
    %c0_i32 = arith.constant 0 : i32
    %c0_i32_0 = arith.constant 0 : i32
    %c0_i32_1 = arith.constant 0 : i32
    return %arg1, %c0_i32, %c0_i32_0 : i32, i32, i32
  }
  func.func @transform_23(%arg0: i32, %arg1: i32) -> (i32, i32, i32) {
    %c0_i32 = arith.constant 0 : i32
    %c0_i32_0 = arith.constant 0 : i32
    %c0_i32_1 = arith.constant 0 : i32
    return %arg0, %c0_i32, %c0_i32_0 : i32, i32, i32
  }
}

module attributes {stable_mosaic.version = 11 : i64} {
  func.func @_stem_kernel(%arg0: i32, %arg1: memref<1x4x192xf32, #tpu.memory_space<vmem>>, %arg2: memref<192x32xbf16, #tpu.memory_space<vmem>>, %arg3: memref<1x32xf32, #tpu.memory_space<vmem>>, %arg4: memref<5x32xf32, #tpu.memory_space<vmem>>, %arg5: memref<1x32xf32, #tpu.memory_space<vmem>>, %arg6: memref<1x32xf32, #tpu.memory_space<vmem>>, %arg7: memref<1x5x32xf32, #tpu.memory_space<vmem>>) attributes {dimension_semantics = [#tpu.dimension_semantics<parallel>], iteration_bounds = array<i64: 2>, scalar_prefetch = 0 : i64, scratch_operands = 0 : i64, tpu.core_type = #tpu.core_type<tc>, window_params = [{transform_indices = @transform_0, window_bounds = array<i64: 1, 4, 192>}, {pipeline_mode = #tpu.pipeline_mode<synchronous>, transform_indices = @transform_1, window_bounds = array<i64: 192, 32>}, {pipeline_mode = #tpu.pipeline_mode<synchronous>, transform_indices = @transform_2, window_bounds = array<i64: 1, 32>}, {pipeline_mode = #tpu.pipeline_mode<synchronous>, transform_indices = @transform_3, window_bounds = array<i64: 5, 32>}, {pipeline_mode = #tpu.pipeline_mode<synchronous>, transform_indices = @transform_4, window_bounds = array<i64: 1, 32>}, {pipeline_mode = #tpu.pipeline_mode<synchronous>, transform_indices = @transform_5, window_bounds = array<i64: 1, 32>}, {transform_indices = @transform_6, window_bounds = array<i64: 1, 5, 32>}]} {
    %c0 = arith.constant 0 : index
    %c0_0 = arith.constant 0 : index
    %0 = vector.load %arg5[%c0, %c0_0] : memref<1x32xf32, #tpu.memory_space<vmem>>, vector<1x32xf32>
    %c0_1 = arith.constant 0 : index
    %c0_2 = arith.constant 0 : index
    %1 = vector.load %arg6[%c0_1, %c0_2] : memref<1x32xf32, #tpu.memory_space<vmem>>, vector<1x32xf32>
    %c0_3 = arith.constant 0 : index
    %c0_4 = arith.constant 0 : index
    %c0_5 = arith.constant 0 : index
    %2 = vector.load %arg1[%c0_3, %c0_4, %c0_5] : memref<1x4x192xf32, #tpu.memory_space<vmem>>, vector<1x4x192xf32>
    %3 = vector.shape_cast %2 : vector<1x4x192xf32> to vector<4x192xf32>
    %c0_6 = arith.constant 0 : index
    %c0_7 = arith.constant 0 : index
    %4 = vector.load %arg2[%c0_6, %c0_7] : memref<192x32xbf16, #tpu.memory_space<vmem>>, vector<192x32xbf16>
    %5 = arith.truncf %3 : vector<4x192xf32> to vector<4x192xbf16>
    %cst = arith.constant dense<0.000000e+00> : vector<4x32xf32>
    %6 = tpu.matmul %5, %4, %cst {dimension_numbers = #tpu.dot_dimension_numbers<[1], [0], [0], [1], [0, 0, 1, 1], [], []>} : vector<4x192xbf16>, vector<192x32xbf16>, vector<4x32xf32> -> vector<4x32xf32>
    %c1 = arith.constant 1 : index
    %c0_8 = arith.constant 0 : index
    %7 = vector.load %arg4[%c1, %c0_8] : memref<5x32xf32, #tpu.memory_space<vmem>>, vector<4x32xf32>
    %8 = arith.addf %6, %7 : vector<4x32xf32>
    %cst_9 = arith.constant dense<0.000000e+00> : vector<4xf32>
    %9 = vector.multi_reduction <add>, %8, %cst_9 [1] : vector<4x32xf32> to vector<4xf32>
    %10 = vector.shape_cast %9 : vector<4xf32> to vector<4x1xf32>
    %cst_10 = arith.constant 3.200000e+01 : f32
    %11 = vector.broadcast %cst_10 : f32 to vector<4x1xf32>
    %12 = arith.divf %10, %11 : vector<4x1xf32>
    %13 = vector.broadcast %12 : vector<4x1xf32> to vector<4x32xf32>
    %14 = arith.subf %8, %13 : vector<4x32xf32>
    %15 = vector.broadcast %12 : vector<4x1xf32> to vector<4x32xf32>
    %16 = arith.subf %8, %15 : vector<4x32xf32>
    %17 = arith.mulf %14, %16 : vector<4x32xf32>
    %cst_11 = arith.constant dense<0.000000e+00> : vector<4xf32>
    %18 = vector.multi_reduction <add>, %17, %cst_11 [1] : vector<4x32xf32> to vector<4xf32>
    %19 = vector.shape_cast %18 : vector<4xf32> to vector<4x1xf32>
    %cst_12 = arith.constant 3.200000e+01 : f32
    %20 = vector.broadcast %cst_12 : f32 to vector<4x1xf32>
    %21 = arith.divf %19, %20 : vector<4x1xf32>
    %22 = vector.broadcast %12 : vector<4x1xf32> to vector<4x32xf32>
    %23 = arith.subf %8, %22 : vector<4x32xf32>
    %cst_13 = arith.constant 9.99999974E-6 : f32
    %24 = vector.broadcast %cst_13 : f32 to vector<4x1xf32>
    %25 = arith.addf %21, %24 : vector<4x1xf32>
    %26 = math.rsqrt %25 : vector<4x1xf32>
    %27 = vector.broadcast %26 : vector<4x1xf32> to vector<4x32xf32>
    %28 = arith.mulf %23, %27 : vector<4x32xf32>
    %29 = vector.broadcast %0 : vector<1x32xf32> to vector<4x32xf32>
    %30 = arith.mulf %28, %29 : vector<4x32xf32>
    %31 = vector.broadcast %1 : vector<1x32xf32> to vector<4x32xf32>
    %32 = arith.addf %30, %31 : vector<4x32xf32>
    %c0_14 = arith.constant 0 : index
    %c1_15 = arith.constant 1 : index
    %c0_16 = arith.constant 0 : index
    %33 = vector.load %arg7[%c0_14, %c1_15, %c0_16] : memref<1x5x32xf32, #tpu.memory_space<vmem>>, vector<1x4x32xf32>
    %34 = vector.shape_cast %33 : vector<1x4x32xf32> to vector<4x32xf32>
    %35 = vector.shape_cast %32 : vector<4x32xf32> to vector<1x4x32xf32>
    tpu.vector_store %arg7[%c0_14, %c1_15, %c0_16], %35 {strides = array<i32>} : memref<1x5x32xf32, #tpu.memory_space<vmem>>, vector<1x4x32xf32>,
    %c0_17 = arith.constant 0 : index
    %c0_18 = arith.constant 0 : index
    %36 = vector.load %arg3[%c0_17, %c0_18] : memref<1x32xf32, #tpu.memory_space<vmem>>, vector<1x32xf32>
    %c0_19 = arith.constant 0 : index
    %c0_20 = arith.constant 0 : index
    %37 = vector.load %arg4[%c0_19, %c0_20] : memref<5x32xf32, #tpu.memory_space<vmem>>, vector<1x32xf32>
    %38 = arith.addf %36, %37 : vector<1x32xf32>
    %cst_21 = arith.constant dense<0.000000e+00> : vector<1xf32>
    %39 = vector.multi_reduction <add>, %38, %cst_21 [1] : vector<1x32xf32> to vector<1xf32>
    %40 = vector.shape_cast %39 : vector<1xf32> to vector<1x1xf32>
    %cst_22 = arith.constant 3.200000e+01 : f32
    %41 = vector.broadcast %cst_22 : f32 to vector<1x1xf32>
    %42 = arith.divf %40, %41 : vector<1x1xf32>
    %43 = vector.broadcast %42 : vector<1x1xf32> to vector<1x32xf32>
    %44 = arith.subf %38, %43 : vector<1x32xf32>
    %45 = vector.broadcast %42 : vector<1x1xf32> to vector<1x32xf32>
    %46 = arith.subf %38, %45 : vector<1x32xf32>
    %47 = arith.mulf %44, %46 : vector<1x32xf32>
    %cst_23 = arith.constant dense<0.000000e+00> : vector<1xf32>
    %48 = vector.multi_reduction <add>, %47, %cst_23 [1] : vector<1x32xf32> to vector<1xf32>
    %49 = vector.shape_cast %48 : vector<1xf32> to vector<1x1xf32>
    %cst_24 = arith.constant 3.200000e+01 : f32
    %50 = vector.broadcast %cst_24 : f32 to vector<1x1xf32>
    %51 = arith.divf %49, %50 : vector<1x1xf32>
    %52 = vector.broadcast %42 : vector<1x1xf32> to vector<1x32xf32>
    %53 = arith.subf %38, %52 : vector<1x32xf32>
    %cst_25 = arith.constant 9.99999974E-6 : f32
    %54 = vector.broadcast %cst_25 : f32 to vector<1x1xf32>
    %55 = arith.addf %51, %54 : vector<1x1xf32>
    %56 = math.rsqrt %55 : vector<1x1xf32>
    %57 = vector.broadcast %56 : vector<1x1xf32> to vector<1x32xf32>
    %58 = arith.mulf %53, %57 : vector<1x32xf32>
    %59 = arith.mulf %58, %0 : vector<1x32xf32>
    %60 = arith.addf %59, %1 : vector<1x32xf32>
    %c0_26 = arith.constant 0 : index
    %c0_27 = arith.constant 0 : index
    %c0_28 = arith.constant 0 : index
    %61 = vector.load %arg7[%c0_26, %c0_27, %c0_28] : memref<1x5x32xf32, #tpu.memory_space<vmem>>, vector<1x1x32xf32>
    %62 = vector.shape_cast %61 : vector<1x1x32xf32> to vector<1x32xf32>
    %63 = vector.shape_cast %60 : vector<1x32xf32> to vector<1x1x32xf32>
    tpu.vector_store %arg7[%c0_26, %c0_27, %c0_28], %63 {strides = array<i32>} : memref<1x5x32xf32, #tpu.memory_space<vmem>>, vector<1x1x32xf32>,
    return
  }
  func.func @transform_0(%arg0: i32) -> (i32, i32, i32) {
    %c0_i32 = arith.constant 0 : i32
    %c0_i32_0 = arith.constant 0 : i32
    %c0_i32_1 = arith.constant 0 : i32
    return %arg0, %c0_i32, %c0_i32_0 : i32, i32, i32
  }
  func.func @transform_1(%arg0: i32) -> (i32, i32) {
    %c0_i32 = arith.constant 0 : i32
    %c0_i32_0 = arith.constant 0 : i32
    %c0_i32_1 = arith.constant 0 : i32
    return %c0_i32, %c0_i32_0 : i32, i32
  }
  func.func @transform_2(%arg0: i32) -> (i32, i32) {
    %c0_i32 = arith.constant 0 : i32
    %c0_i32_0 = arith.constant 0 : i32
    %c0_i32_1 = arith.constant 0 : i32
    return %c0_i32, %c0_i32_0 : i32, i32
  }
  func.func @transform_3(%arg0: i32) -> (i32, i32) {
    %c0_i32 = arith.constant 0 : i32
    %c0_i32_0 = arith.constant 0 : i32
    %c0_i32_1 = arith.constant 0 : i32
    return %c0_i32, %c0_i32_0 : i32, i32
  }
  func.func @transform_4(%arg0: i32) -> (i32, i32) {
    %c0_i32 = arith.constant 0 : i32
    %c0_i32_0 = arith.constant 0 : i32
    %c0_i32_1 = arith.constant 0 : i32
    return %c0_i32, %c0_i32_0 : i32, i32
  }
  func.func @transform_5(%arg0: i32) -> (i32, i32) {
    %c0_i32 = arith.constant 0 : i32
    %c0_i32_0 = arith.constant 0 : i32
    %c0_i32_1 = arith.constant 0 : i32
    return %c0_i32, %c0_i32_0 : i32, i32
  }
  func.func @transform_6(%arg0: i32) -> (i32, i32, i32) {
    %c0_i32 = arith.constant 0 : i32
    %c0_i32_0 = arith.constant 0 : i32
    %c0_i32_1 = arith.constant 0 : i32
    return %arg0, %c0_i32, %c0_i32_0 : i32, i32, i32
  }
}

module attributes {stable_mosaic.version = 11 : i64} {
  func.func @_vis_head_kernel(%arg0: i32, %arg1: memref<2x32xf32, #tpu.memory_space<vmem>>, %arg2: memref<1x32xf32, #tpu.memory_space<vmem>>, %arg3: memref<1x32xf32, #tpu.memory_space<vmem>>, %arg4: memref<32x32xbf16, #tpu.memory_space<vmem>>, %arg5: memref<2x32xf32, #tpu.memory_space<vmem>>) attributes {dimension_semantics = [#tpu.dimension_semantics<arbitrary>], iteration_bounds = array<i64: 1>, scalar_prefetch = 0 : i64, scratch_operands = 0 : i64, tpu.core_type = #tpu.core_type<tc>, window_params = [{pipeline_mode = #tpu.pipeline_mode<synchronous>, transform_indices = @transform_0, window_bounds = array<i64: 2, 32>}, {pipeline_mode = #tpu.pipeline_mode<synchronous>, transform_indices = @transform_1, window_bounds = array<i64: 1, 32>}, {pipeline_mode = #tpu.pipeline_mode<synchronous>, transform_indices = @transform_2, window_bounds = array<i64: 1, 32>}, {pipeline_mode = #tpu.pipeline_mode<synchronous>, transform_indices = @transform_3, window_bounds = array<i64: 32, 32>}, {pipeline_mode = #tpu.pipeline_mode<synchronous>, transform_indices = @transform_4, window_bounds = array<i64: 2, 32>}]} {
    %c0 = arith.constant 0 : index
    %c0_0 = arith.constant 0 : index
    %0 = vector.load %arg1[%c0, %c0_0] : memref<2x32xf32, #tpu.memory_space<vmem>>, vector<2x32xf32>
    %c0_1 = arith.constant 0 : index
    %c0_2 = arith.constant 0 : index
    %1 = vector.load %arg2[%c0_1, %c0_2] : memref<1x32xf32, #tpu.memory_space<vmem>>, vector<1x32xf32>
    %c0_3 = arith.constant 0 : index
    %c0_4 = arith.constant 0 : index
    %2 = vector.load %arg3[%c0_3, %c0_4] : memref<1x32xf32, #tpu.memory_space<vmem>>, vector<1x32xf32>
    %cst = arith.constant dense<0.000000e+00> : vector<2xf32>
    %3 = vector.multi_reduction <add>, %0, %cst [1] : vector<2x32xf32> to vector<2xf32>
    %4 = vector.shape_cast %3 : vector<2xf32> to vector<2x1xf32>
    %cst_5 = arith.constant 3.200000e+01 : f32
    %5 = vector.broadcast %cst_5 : f32 to vector<2x1xf32>
    %6 = arith.divf %4, %5 : vector<2x1xf32>
    %7 = vector.broadcast %6 : vector<2x1xf32> to vector<2x32xf32>
    %8 = arith.subf %0, %7 : vector<2x32xf32>
    %9 = vector.broadcast %6 : vector<2x1xf32> to vector<2x32xf32>
    %10 = arith.subf %0, %9 : vector<2x32xf32>
    %11 = arith.mulf %8, %10 : vector<2x32xf32>
    %cst_6 = arith.constant dense<0.000000e+00> : vector<2xf32>
    %12 = vector.multi_reduction <add>, %11, %cst_6 [1] : vector<2x32xf32> to vector<2xf32>
    %13 = vector.shape_cast %12 : vector<2xf32> to vector<2x1xf32>
    %cst_7 = arith.constant 3.200000e+01 : f32
    %14 = vector.broadcast %cst_7 : f32 to vector<2x1xf32>
    %15 = arith.divf %13, %14 : vector<2x1xf32>
    %16 = vector.broadcast %6 : vector<2x1xf32> to vector<2x32xf32>
    %17 = arith.subf %0, %16 : vector<2x32xf32>
    %cst_8 = arith.constant 9.99999974E-6 : f32
    %18 = vector.broadcast %cst_8 : f32 to vector<2x1xf32>
    %19 = arith.addf %15, %18 : vector<2x1xf32>
    %20 = math.rsqrt %19 : vector<2x1xf32>
    %21 = vector.broadcast %20 : vector<2x1xf32> to vector<2x32xf32>
    %22 = arith.mulf %17, %21 : vector<2x32xf32>
    %23 = vector.broadcast %1 : vector<1x32xf32> to vector<2x32xf32>
    %24 = arith.mulf %22, %23 : vector<2x32xf32>
    %25 = vector.broadcast %2 : vector<1x32xf32> to vector<2x32xf32>
    %26 = arith.addf %24, %25 : vector<2x32xf32>
    %c0_9 = arith.constant 0 : index
    %c0_10 = arith.constant 0 : index
    %27 = vector.load %arg4[%c0_9, %c0_10] : memref<32x32xbf16, #tpu.memory_space<vmem>>, vector<32x32xbf16>
    %28 = arith.truncf %26 : vector<2x32xf32> to vector<2x32xbf16>
    %cst_11 = arith.constant dense<0.000000e+00> : vector<2x32xf32>
    %29 = tpu.matmul %28, %27, %cst_11 {dimension_numbers = #tpu.dot_dimension_numbers<[1], [0], [0], [1], [0, 0, 1, 1], [], []>} : vector<2x32xbf16>, vector<32x32xbf16>, vector<2x32xf32> -> vector<2x32xf32>
    %30 = arith.mulf %29, %29 : vector<2x32xf32>
    %cst_12 = arith.constant dense<0.000000e+00> : vector<2xf32>
    %31 = vector.multi_reduction <add>, %30, %cst_12 [1] : vector<2x32xf32> to vector<2xf32>
    %32 = vector.shape_cast %31 : vector<2xf32> to vector<2x1xf32>
    %33 = math.rsqrt %32 : vector<2x1xf32>
    %34 = vector.broadcast %33 : vector<2x1xf32> to vector<2x32xf32>
    %35 = arith.mulf %29, %34 : vector<2x32xf32>
    %c0_13 = arith.constant 0 : index
    %c0_14 = arith.constant 0 : index
    %36 = vector.load %arg5[%c0_13, %c0_14] : memref<2x32xf32, #tpu.memory_space<vmem>>, vector<2x32xf32>
    tpu.vector_store %arg5[%c0_13, %c0_14], %35 {strides = array<i32>} : memref<2x32xf32, #tpu.memory_space<vmem>>, vector<2x32xf32>,
    return
  }
  func.func @transform_0(%arg0: i32) -> (i32, i32) {
    %c0_i32 = arith.constant 0 : i32
    %c0_i32_0 = arith.constant 0 : i32
    %c0_i32_1 = arith.constant 0 : i32
    return %c0_i32, %c0_i32_0 : i32, i32
  }
  func.func @transform_1(%arg0: i32) -> (i32, i32) {
    %c0_i32 = arith.constant 0 : i32
    %c0_i32_0 = arith.constant 0 : i32
    %c0_i32_1 = arith.constant 0 : i32
    return %c0_i32, %c0_i32_0 : i32, i32
  }
  func.func @transform_2(%arg0: i32) -> (i32, i32) {
    %c0_i32 = arith.constant 0 : i32
    %c0_i32_0 = arith.constant 0 : i32
    %c0_i32_1 = arith.constant 0 : i32
    return %c0_i32, %c0_i32_0 : i32, i32
  }
  func.func @transform_3(%arg0: i32) -> (i32, i32) {
    %c0_i32 = arith.constant 0 : i32
    %c0_i32_0 = arith.constant 0 : i32
    %c0_i32_1 = arith.constant 0 : i32
    return %c0_i32, %c0_i32_0 : i32, i32
  }
  func.func @transform_4(%arg0: i32) -> (i32, i32) {
    %c0_i32 = arith.constant 0 : i32
    %c0_i32_0 = arith.constant 0 : i32
    %c0_i32_1 = arith.constant 0 : i32
    return %c0_i32, %c0_i32_0 : i32, i32
  }
}

module attributes {stable_mosaic.version = 11 : i64} {
  func.func @kernel(%arg0: i32, %arg1: i32, %arg2: memref<1x5x32xf32, #tpu.memory_space<vmem>>, %arg3: memref<1x1x32xf32, #tpu.memory_space<vmem>>, %arg4: memref<1x1x32xf32, #tpu.memory_space<vmem>>, %arg5: memref<1x4x32x8xbf16, #tpu.memory_space<vmem>>, %arg6: memref<1x4x32x8xbf16, #tpu.memory_space<vmem>>, %arg7: memref<1x4x32x8xbf16, #tpu.memory_space<vmem>>, %arg8: memref<1x4x1x8xf32, #tpu.memory_space<vmem>>, %arg9: memref<1x4x1x8xf32, #tpu.memory_space<vmem>>, %arg10: memref<1x4x1x8xf32, #tpu.memory_space<vmem>>, %arg11: memref<1x4x8x32xbf16, #tpu.memory_space<vmem>>, %arg12: memref<1x1x32xf32, #tpu.memory_space<vmem>>, %arg13: memref<1x1x32xf32, #tpu.memory_space<vmem>>, %arg14: memref<1x1x32xf32, #tpu.memory_space<vmem>>, %arg15: memref<1x32x128xbf16, #tpu.memory_space<vmem>>, %arg16: memref<1x1x128xf32, #tpu.memory_space<vmem>>, %arg17: memref<1x128x32xbf16, #tpu.memory_space<vmem>>, %arg18: memref<1x1x32xf32, #tpu.memory_space<vmem>>, %arg19: memref<1x32x8xbf16, #tpu.memory_space<vmem>>, %arg20: memref<1x1x8xf32, #tpu.memory_space<vmem>>, %arg21: memref<1x8x8xbf16, #tpu.memory_space<vmem>>, %arg22: memref<1x1x8xf32, #tpu.memory_space<vmem>>, %arg23: memref<1x8x32xbf16, #tpu.memory_space<vmem>>, %arg24: memref<1x1x32xf32, #tpu.memory_space<vmem>>, %arg25: memref<1x5x32xf32, #tpu.memory_space<vmem>>) attributes {dimension_semantics = [#tpu.dimension_semantics<parallel>, #tpu.dimension_semantics<arbitrary>], iteration_bounds = array<i64: 2, 2>, scalar_prefetch = 0 : i64, scratch_operands = 0 : i64, tpu.core_type = #tpu.core_type<tc>, window_params = [{transform_indices = @transform_0, window_bounds = array<i64: 1, 5, 32>}, {transform_indices = @transform_1, window_bounds = array<i64: 1, 1, 32>}, {transform_indices = @transform_2, window_bounds = array<i64: 1, 1, 32>}, {transform_indices = @transform_3, window_bounds = array<i64: 1, 4, 32, 8>}, {transform_indices = @transform_4, window_bounds = array<i64: 1, 4, 32, 8>}, {transform_indices = @transform_5, window_bounds = array<i64: 1, 4, 32, 8>}, {transform_indices = @transform_6, window_bounds = array<i64: 1, 4, 1, 8>}, {transform_indices = @transform_7, window_bounds = array<i64: 1, 4, 1, 8>}, {transform_indices = @transform_8, window_bounds = array<i64: 1, 4, 1, 8>}, {transform_indices = @transform_9, window_bounds = array<i64: 1, 4, 8, 32>}, {transform_indices = @transform_10, window_bounds = array<i64: 1, 1, 32>}, {transform_indices = @transform_11, window_bounds = array<i64: 1, 1, 32>}, {transform_indices = @transform_12, window_bounds = array<i64: 1, 1, 32>}, {transform_indices = @transform_13, window_bounds = array<i64: 1, 32, 128>}, {transform_indices = @transform_14, window_bounds = array<i64: 1, 1, 128>}, {transform_indices = @transform_15, window_bounds = array<i64: 1, 128, 32>}, {transform_indices = @transform_16, window_bounds = array<i64: 1, 1, 32>}, {transform_indices = @transform_17, window_bounds = array<i64: 1, 32, 8>}, {transform_indices = @transform_18, window_bounds = array<i64: 1, 1, 8>}, {transform_indices = @transform_19, window_bounds = array<i64: 1, 8, 8>}, {transform_indices = @transform_20, window_bounds = array<i64: 1, 1, 8>}, {transform_indices = @transform_21, window_bounds = array<i64: 1, 8, 32>}, {transform_indices = @transform_22, window_bounds = array<i64: 1, 1, 32>}, {transform_indices = @transform_23, window_bounds = array<i64: 1, 5, 32>}]} {
    %c0_i32 = arith.constant 0 : i32
    %0 = arith.cmpi eq, %arg1, %c0_i32 : i32
    %1 = arith.extui %0 : i1 to i32
    %c0_i32_0 = arith.constant 0 : i32
    %2 = arith.cmpi ne, %1, %c0_i32_0 : i32
    scf.if %2 {
      %c0_108 = arith.constant 0 : index
      %c0_109 = arith.constant 0 : index
      %c0_110 = arith.constant 0 : index
      %173 = vector.load %arg2[%c0_108, %c0_109, %c0_110] : memref<1x5x32xf32, #tpu.memory_space<vmem>>, vector<1x5x32xf32>
      %c0_111 = arith.constant 0 : index
      %c0_112 = arith.constant 0 : index
      %c0_113 = arith.constant 0 : index
      %174 = vector.load %arg25[%c0_111, %c0_112, %c0_113] : memref<1x5x32xf32, #tpu.memory_space<vmem>>, vector<1x5x32xf32>
      tpu.vector_store %arg25[%c0_111, %c0_112, %c0_113], %173 {strides = array<i32>} : memref<1x5x32xf32, #tpu.memory_space<vmem>>, vector<1x5x32xf32>,
    } else {
    }
    %c0 = arith.constant 0 : index
    %c0_1 = arith.constant 0 : index
    %c0_2 = arith.constant 0 : index
    %3 = vector.load %arg25[%c0, %c0_1, %c0_2] : memref<1x5x32xf32, #tpu.memory_space<vmem>>, vector<1x5x32xf32>
    %4 = vector.shape_cast %3 : vector<1x5x32xf32> to vector<5x32xf32>
    %c0_3 = arith.constant 0 : index
    %c0_4 = arith.constant 0 : index
    %c0_5 = arith.constant 0 : index
    %5 = vector.load %arg3[%c0_3, %c0_4, %c0_5] : memref<1x1x32xf32, #tpu.memory_space<vmem>>, vector<1x1x32xf32>
    %6 = vector.shape_cast %5 : vector<1x1x32xf32> to vector<1x32xf32>
    %c0_6 = arith.constant 0 : index
    %c0_7 = arith.constant 0 : index
    %c0_8 = arith.constant 0 : index
    %7 = vector.load %arg4[%c0_6, %c0_7, %c0_8] : memref<1x1x32xf32, #tpu.memory_space<vmem>>, vector<1x1x32xf32>
    %8 = vector.shape_cast %7 : vector<1x1x32xf32> to vector<1x32xf32>
    %cst = arith.constant dense<0.000000e+00> : vector<5xf32>
    %9 = vector.multi_reduction <add>, %4, %cst [1] : vector<5x32xf32> to vector<5xf32>
    %10 = vector.shape_cast %9 : vector<5xf32> to vector<5x1xf32>
    %cst_9 = arith.constant 3.200000e+01 : f32
    %11 = vector.broadcast %cst_9 : f32 to vector<5x1xf32>
    %12 = arith.divf %10, %11 : vector<5x1xf32>
    %13 = vector.broadcast %12 : vector<5x1xf32> to vector<5x32xf32>
    %14 = arith.subf %4, %13 : vector<5x32xf32>
    %15 = vector.broadcast %12 : vector<5x1xf32> to vector<5x32xf32>
    %16 = arith.subf %4, %15 : vector<5x32xf32>
    %17 = arith.mulf %14, %16 : vector<5x32xf32>
    %cst_10 = arith.constant dense<0.000000e+00> : vector<5xf32>
    %18 = vector.multi_reduction <add>, %17, %cst_10 [1] : vector<5x32xf32> to vector<5xf32>
    %19 = vector.shape_cast %18 : vector<5xf32> to vector<5x1xf32>
    %cst_11 = arith.constant 3.200000e+01 : f32
    %20 = vector.broadcast %cst_11 : f32 to vector<5x1xf32>
    %21 = arith.divf %19, %20 : vector<5x1xf32>
    %22 = vector.broadcast %12 : vector<5x1xf32> to vector<5x32xf32>
    %23 = arith.subf %4, %22 : vector<5x32xf32>
    %cst_12 = arith.constant 9.99999974E-6 : f32
    %24 = vector.broadcast %cst_12 : f32 to vector<5x1xf32>
    %25 = arith.addf %21, %24 : vector<5x1xf32>
    %26 = math.rsqrt %25 : vector<5x1xf32>
    %27 = vector.broadcast %26 : vector<5x1xf32> to vector<5x32xf32>
    %28 = arith.mulf %23, %27 : vector<5x32xf32>
    %29 = vector.broadcast %6 : vector<1x32xf32> to vector<5x32xf32>
    %30 = arith.mulf %28, %29 : vector<5x32xf32>
    %31 = vector.broadcast %8 : vector<1x32xf32> to vector<5x32xf32>
    %32 = arith.addf %30, %31 : vector<5x32xf32>
    %33 = arith.truncf %32 : vector<5x32xf32> to vector<5x32xbf16>
    %34 = vector.shape_cast %33 : vector<5x32xbf16> to vector<1x5x32xbf16>
    %35 = vector.shape_cast %34 : vector<1x5x32xbf16> to vector<1x5x32xbf16>
    %36 = vector.broadcast %35 : vector<1x5x32xbf16> to vector<4x5x32xbf16>
    %c0_13 = arith.constant 0 : index
    %c0_14 = arith.constant 0 : index
    %c0_15 = arith.constant 0 : index
    %c0_16 = arith.constant 0 : index
    %37 = vector.load %arg5[%c0_13, %c0_14, %c0_15, %c0_16] : memref<1x4x32x8xbf16, #tpu.memory_space<vmem>>, vector<1x4x32x8xbf16>
    %38 = vector.shape_cast %37 : vector<1x4x32x8xbf16> to vector<4x32x8xbf16>
    "tpu.trace_start"() <{level = 10 : i32, message = "hld,hde->hle"}> : () -> ()
    %cst_17 = arith.constant dense<0.000000e+00> : vector<4x5x8xf32>
    %39 = tpu.matmul %36, %38, %cst_17 {dimension_numbers = #tpu.dot_dimension_numbers<[2], [1], [1], [2], [0, 0, 0, 1, 1, 2], [0], [0]>} : vector<4x5x32xbf16>, vector<4x32x8xbf16>, vector<4x5x8xf32> -> vector<4x5x8xf32>
    "tpu.trace_stop"() : () -> ()
    %c0_18 = arith.constant 0 : index
    %c0_19 = arith.constant 0 : index
    %c0_20 = arith.constant 0 : index
    %c0_21 = arith.constant 0 : index
    %40 = vector.load %arg8[%c0_18, %c0_19, %c0_20, %c0_21] : memref<1x4x1x8xf32, #tpu.memory_space<vmem>>, vector<1x4x1x8xf32>
    %41 = vector.shape_cast %40 : vector<1x4x1x8xf32> to vector<4x1x8xf32>
    %42 = vector.broadcast %41 : vector<4x1x8xf32> to vector<4x5x8xf32>
    %43 = arith.addf %39, %42 : vector<4x5x8xf32>
    %c0_22 = arith.constant 0 : index
    %c0_23 = arith.constant 0 : index
    %c0_24 = arith.constant 0 : index
    %c0_25 = arith.constant 0 : index
    %44 = vector.load %arg6[%c0_22, %c0_23, %c0_24, %c0_25] : memref<1x4x32x8xbf16, #tpu.memory_space<vmem>>, vector<1x4x32x8xbf16>
    %45 = vector.shape_cast %44 : vector<1x4x32x8xbf16> to vector<4x32x8xbf16>
    "tpu.trace_start"() <{level = 10 : i32, message = "hld,hde->hle"}> : () -> ()
    %cst_26 = arith.constant dense<0.000000e+00> : vector<4x5x8xf32>
    %46 = tpu.matmul %36, %45, %cst_26 {dimension_numbers = #tpu.dot_dimension_numbers<[2], [1], [1], [2], [0, 0, 0, 1, 1, 2], [0], [0]>} : vector<4x5x32xbf16>, vector<4x32x8xbf16>, vector<4x5x8xf32> -> vector<4x5x8xf32>
    "tpu.trace_stop"() : () -> ()
    %c0_27 = arith.constant 0 : index
    %c0_28 = arith.constant 0 : index
    %c0_29 = arith.constant 0 : index
    %c0_30 = arith.constant 0 : index
    %47 = vector.load %arg9[%c0_27, %c0_28, %c0_29, %c0_30] : memref<1x4x1x8xf32, #tpu.memory_space<vmem>>, vector<1x4x1x8xf32>
    %48 = vector.shape_cast %47 : vector<1x4x1x8xf32> to vector<4x1x8xf32>
    %49 = vector.broadcast %48 : vector<4x1x8xf32> to vector<4x5x8xf32>
    %50 = arith.addf %46, %49 : vector<4x5x8xf32>
    %c0_31 = arith.constant 0 : index
    %c0_32 = arith.constant 0 : index
    %c0_33 = arith.constant 0 : index
    %c0_34 = arith.constant 0 : index
    %51 = vector.load %arg7[%c0_31, %c0_32, %c0_33, %c0_34] : memref<1x4x32x8xbf16, #tpu.memory_space<vmem>>, vector<1x4x32x8xbf16>
    %52 = vector.shape_cast %51 : vector<1x4x32x8xbf16> to vector<4x32x8xbf16>
    "tpu.trace_start"() <{level = 10 : i32, message = "hld,hde->hle"}> : () -> ()
    %cst_35 = arith.constant dense<0.000000e+00> : vector<4x5x8xf32>
    %53 = tpu.matmul %36, %52, %cst_35 {dimension_numbers = #tpu.dot_dimension_numbers<[2], [1], [1], [2], [0, 0, 0, 1, 1, 2], [0], [0]>} : vector<4x5x32xbf16>, vector<4x32x8xbf16>, vector<4x5x8xf32> -> vector<4x5x8xf32>
    "tpu.trace_stop"() : () -> ()
    %c0_36 = arith.constant 0 : index
    %c0_37 = arith.constant 0 : index
    %c0_38 = arith.constant 0 : index
    %c0_39 = arith.constant 0 : index
    %54 = vector.load %arg10[%c0_36, %c0_37, %c0_38, %c0_39] : memref<1x4x1x8xf32, #tpu.memory_space<vmem>>, vector<1x4x1x8xf32>
    %55 = vector.shape_cast %54 : vector<1x4x1x8xf32> to vector<4x1x8xf32>
    %56 = vector.broadcast %55 : vector<4x1x8xf32> to vector<4x5x8xf32>
    %57 = arith.addf %53, %56 : vector<4x5x8xf32>
    %58 = arith.truncf %43 : vector<4x5x8xf32> to vector<4x5x8xbf16>
    %59 = arith.truncf %50 : vector<4x5x8xf32> to vector<4x5x8xbf16>
    "tpu.trace_start"() <{level = 10 : i32, message = "hqd,hkd->hqk"}> : () -> ()
    %cst_40 = arith.constant dense<0.000000e+00> : vector<4x5x5xf32>
    %60 = tpu.matmul %58, %59, %cst_40 {dimension_numbers = #tpu.dot_dimension_numbers<[2], [2], [1], [1], [0, 0, 0, 1, 1, 1], [0], [0]>} : vector<4x5x8xbf16>, vector<4x5x8xbf16>, vector<4x5x5xf32> -> vector<4x5x5xf32>
    "tpu.trace_stop"() : () -> ()
    %cst_41 = arith.constant 0.353553385 : f32
    %61 = vector.broadcast %cst_41 : f32 to vector<4x5x5xf32>
    %62 = arith.mulf %60, %61 : vector<4x5x5xf32>
    %cst_42 = arith.constant dense<0xFF800000> : vector<4x5xf32>
    %63 = vector.multi_reduction <maximumf>, %62, %cst_42 [2] : vector<4x5x5xf32> to vector<4x5xf32>
    %64 = vector.shape_cast %63 : vector<4x5xf32> to vector<4x5x1xf32>
    %65 = vector.broadcast %64 : vector<4x5x1xf32> to vector<4x5x5xf32>
    %66 = arith.subf %62, %65 : vector<4x5x5xf32>
    %67 = math.exp %66 : vector<4x5x5xf32>
    %cst_43 = arith.constant dense<0.000000e+00> : vector<4x5xf32>
    %68 = vector.multi_reduction <add>, %67, %cst_43 [2] : vector<4x5x5xf32> to vector<4x5xf32>
    %69 = vector.shape_cast %68 : vector<4x5xf32> to vector<4x5x1xf32>
    %70 = tpu.reciprocal %69 {approx = true} : vector<4x5x1xf32> -> vector<4x5x1xf32>
    %71 = vector.broadcast %70 : vector<4x5x1xf32> to vector<4x5x5xf32>
    %72 = arith.mulf %67, %71 : vector<4x5x5xf32>
    %73 = arith.truncf %72 : vector<4x5x5xf32> to vector<4x5x5xbf16>
    %74 = arith.truncf %57 : vector<4x5x8xf32> to vector<4x5x8xbf16>
    "tpu.trace_start"() <{level = 10 : i32, message = "hqk,hkd->hqd"}> : () -> ()
    %cst_44 = arith.constant dense<0.000000e+00> : vector<4x5x8xf32>
    %75 = tpu.matmul %73, %74, %cst_44 {dimension_numbers = #tpu.dot_dimension_numbers<[2], [1], [1], [2], [0, 0, 0, 1, 1, 2], [0], [0]>} : vector<4x5x5xbf16>, vector<4x5x8xbf16>, vector<4x5x8xf32> -> vector<4x5x8xf32>
    "tpu.trace_stop"() : () -> ()
    %76 = arith.truncf %75 : vector<4x5x8xf32> to vector<4x5x8xbf16>
    %c0_45 = arith.constant 0 : index
    %c0_46 = arith.constant 0 : index
    %c0_47 = arith.constant 0 : index
    %c0_48 = arith.constant 0 : index
    %77 = vector.load %arg11[%c0_45, %c0_46, %c0_47, %c0_48] : memref<1x4x8x32xbf16, #tpu.memory_space<vmem>>, vector<1x4x8x32xbf16>
    %78 = vector.shape_cast %77 : vector<1x4x8x32xbf16> to vector<4x8x32xbf16>
    "tpu.trace_start"() <{level = 10 : i32, message = "hqd,hde->hqe"}> : () -> ()
    %cst_49 = arith.constant dense<0.000000e+00> : vector<4x5x32xf32>
    %79 = tpu.matmul %76, %78, %cst_49 {dimension_numbers = #tpu.dot_dimension_numbers<[2], [1], [1], [2], [0, 0, 0, 1, 1, 2], [0], [0]>} : vector<4x5x8xbf16>, vector<4x8x32xbf16>, vector<4x5x32xf32> -> vector<4x5x32xf32>
    "tpu.trace_stop"() : () -> ()
    %cst_50 = arith.constant dense<0.000000e+00> : vector<5x32xf32>
    %80 = vector.multi_reduction <add>, %79, %cst_50 [0] : vector<4x5x32xf32> to vector<5x32xf32>
    %c0_51 = arith.constant 0 : index
    %c0_52 = arith.constant 0 : index
    %c0_53 = arith.constant 0 : index
    %81 = vector.load %arg12[%c0_51, %c0_52, %c0_53] : memref<1x1x32xf32, #tpu.memory_space<vmem>>, vector<1x1x32xf32>
    %82 = vector.shape_cast %81 : vector<1x1x32xf32> to vector<1x32xf32>
    %83 = vector.broadcast %82 : vector<1x32xf32> to vector<5x32xf32>
    %84 = arith.addf %80, %83 : vector<5x32xf32>
    %85 = arith.addf %4, %84 : vector<5x32xf32>
    %c0_54 = arith.constant 0 : index
    %c0_55 = arith.constant 0 : index
    %c0_56 = arith.constant 0 : index
    %86 = vector.load %arg13[%c0_54, %c0_55, %c0_56] : memref<1x1x32xf32, #tpu.memory_space<vmem>>, vector<1x1x32xf32>
    %87 = vector.shape_cast %86 : vector<1x1x32xf32> to vector<1x32xf32>
    %c0_57 = arith.constant 0 : index
    %c0_58 = arith.constant 0 : index
    %c0_59 = arith.constant 0 : index
    %88 = vector.load %arg14[%c0_57, %c0_58, %c0_59] : memref<1x1x32xf32, #tpu.memory_space<vmem>>, vector<1x1x32xf32>
    %89 = vector.shape_cast %88 : vector<1x1x32xf32> to vector<1x32xf32>
    %cst_60 = arith.constant dense<0.000000e+00> : vector<5xf32>
    %90 = vector.multi_reduction <add>, %85, %cst_60 [1] : vector<5x32xf32> to vector<5xf32>
    %91 = vector.shape_cast %90 : vector<5xf32> to vector<5x1xf32>
    %cst_61 = arith.constant 3.200000e+01 : f32
    %92 = vector.broadcast %cst_61 : f32 to vector<5x1xf32>
    %93 = arith.divf %91, %92 : vector<5x1xf32>
    %94 = vector.broadcast %93 : vector<5x1xf32> to vector<5x32xf32>
    %95 = arith.subf %85, %94 : vector<5x32xf32>
    %96 = vector.broadcast %93 : vector<5x1xf32> to vector<5x32xf32>
    %97 = arith.subf %85, %96 : vector<5x32xf32>
    %98 = arith.mulf %95, %97 : vector<5x32xf32>
    %cst_62 = arith.constant dense<0.000000e+00> : vector<5xf32>
    %99 = vector.multi_reduction <add>, %98, %cst_62 [1] : vector<5x32xf32> to vector<5xf32>
    %100 = vector.shape_cast %99 : vector<5xf32> to vector<5x1xf32>
    %cst_63 = arith.constant 3.200000e+01 : f32
    %101 = vector.broadcast %cst_63 : f32 to vector<5x1xf32>
    %102 = arith.divf %100, %101 : vector<5x1xf32>
    %103 = vector.broadcast %93 : vector<5x1xf32> to vector<5x32xf32>
    %104 = arith.subf %85, %103 : vector<5x32xf32>
    %cst_64 = arith.constant 9.99999974E-6 : f32
    %105 = vector.broadcast %cst_64 : f32 to vector<5x1xf32>
    %106 = arith.addf %102, %105 : vector<5x1xf32>
    %107 = math.rsqrt %106 : vector<5x1xf32>
    %108 = vector.broadcast %107 : vector<5x1xf32> to vector<5x32xf32>
    %109 = arith.mulf %104, %108 : vector<5x32xf32>
    %110 = vector.broadcast %87 : vector<1x32xf32> to vector<5x32xf32>
    %111 = arith.mulf %109, %110 : vector<5x32xf32>
    %112 = vector.broadcast %89 : vector<1x32xf32> to vector<5x32xf32>
    %113 = arith.addf %111, %112 : vector<5x32xf32>
    %c0_65 = arith.constant 0 : index
    %c0_66 = arith.constant 0 : index
    %c0_67 = arith.constant 0 : index
    %114 = vector.load %arg15[%c0_65, %c0_66, %c0_67] : memref<1x32x128xbf16, #tpu.memory_space<vmem>>, vector<1x32x128xbf16>
    %115 = vector.shape_cast %114 : vector<1x32x128xbf16> to vector<32x128xbf16>
    %c0_68 = arith.constant 0 : index
    %c0_69 = arith.constant 0 : index
    %c0_70 = arith.constant 0 : index
    %116 = vector.load %arg16[%c0_68, %c0_69, %c0_70] : memref<1x1x128xf32, #tpu.memory_space<vmem>>, vector<1x1x128xf32>
    %117 = vector.shape_cast %116 : vector<1x1x128xf32> to vector<1x128xf32>
    %118 = arith.truncf %113 : vector<5x32xf32> to vector<5x32xbf16>
    %cst_71 = arith.constant dense<0.000000e+00> : vector<5x128xf32>
    %119 = tpu.matmul %118, %115, %cst_71 {dimension_numbers = #tpu.dot_dimension_numbers<[1], [0], [0], [1], [0, 0, 1, 1], [], []>} : vector<5x32xbf16>, vector<32x128xbf16>, vector<5x128xf32> -> vector<5x128xf32>
    %120 = vector.broadcast %117 : vector<1x128xf32> to vector<5x128xf32>
    %121 = arith.addf %119, %120 : vector<5x128xf32>
    %cst_72 = arith.constant 1.702000e+00 : f32
    %122 = vector.broadcast %cst_72 : f32 to vector<5x128xf32>
    %123 = arith.mulf %122, %121 : vector<5x128xf32>
    %124 = arith.negf %123 : vector<5x128xf32>
    %125 = math.exp %124 : vector<5x128xf32>
    %cst_73 = arith.constant 1.000000e+00 : f32
    %126 = vector.broadcast %cst_73 : f32 to vector<5x128xf32>
    %127 = arith.addf %126, %125 : vector<5x128xf32>
    %128 = arith.divf %126, %127 : vector<5x128xf32>
    %129 = arith.mulf %121, %128 : vector<5x128xf32>
    %c0_74 = arith.constant 0 : index
    %c0_75 = arith.constant 0 : index
    %c0_76 = arith.constant 0 : index
    %130 = vector.load %arg17[%c0_74, %c0_75, %c0_76] : memref<1x128x32xbf16, #tpu.memory_space<vmem>>, vector<1x128x32xbf16>
    %131 = vector.shape_cast %130 : vector<1x128x32xbf16> to vector<128x32xbf16>
    %c0_77 = arith.constant 0 : index
    %c0_78 = arith.constant 0 : index
    %c0_79 = arith.constant 0 : index
    %132 = vector.load %arg18[%c0_77, %c0_78, %c0_79] : memref<1x1x32xf32, #tpu.memory_space<vmem>>, vector<1x1x32xf32>
    %133 = vector.shape_cast %132 : vector<1x1x32xf32> to vector<1x32xf32>
    %134 = arith.truncf %129 : vector<5x128xf32> to vector<5x128xbf16>
    %cst_80 = arith.constant dense<0.000000e+00> : vector<5x32xf32>
    %135 = tpu.matmul %134, %131, %cst_80 {dimension_numbers = #tpu.dot_dimension_numbers<[1], [0], [0], [1], [0, 0, 1, 1], [], []>} : vector<5x128xbf16>, vector<128x32xbf16>, vector<5x32xf32> -> vector<5x32xf32>
    %136 = vector.broadcast %133 : vector<1x32xf32> to vector<5x32xf32>
    %137 = arith.addf %135, %136 : vector<5x32xf32>
    %138 = arith.addf %85, %137 : vector<5x32xf32>
    %c0_81 = arith.constant 0 : index
    %c0_82 = arith.constant 0 : index
    %c0_83 = arith.constant 0 : index
    %139 = vector.load %arg19[%c0_81, %c0_82, %c0_83] : memref<1x32x8xbf16, #tpu.memory_space<vmem>>, vector<1x32x8xbf16>
    %140 = vector.shape_cast %139 : vector<1x32x8xbf16> to vector<32x8xbf16>
    %c0_84 = arith.constant 0 : index
    %c0_85 = arith.constant 0 : index
    %c0_86 = arith.constant 0 : index
    %141 = vector.load %arg20[%c0_84, %c0_85, %c0_86] : memref<1x1x8xf32, #tpu.memory_space<vmem>>, vector<1x1x8xf32>
    %142 = vector.shape_cast %141 : vector<1x1x8xf32> to vector<1x8xf32>
    %143 = arith.truncf %138 : vector<5x32xf32> to vector<5x32xbf16>
    %cst_87 = arith.constant dense<0.000000e+00> : vector<5x8xf32>
    %144 = tpu.matmul %143, %140, %cst_87 {dimension_numbers = #tpu.dot_dimension_numbers<[1], [0], [0], [1], [0, 0, 1, 1], [], []>} : vector<5x32xbf16>, vector<32x8xbf16>, vector<5x8xf32> -> vector<5x8xf32>
    %145 = vector.broadcast %142 : vector<1x8xf32> to vector<5x8xf32>
    %146 = arith.addf %144, %145 : vector<5x8xf32>
    %cst_88 = arith.constant 0.000000e+00 : f32
    %147 = vector.broadcast %cst_88 : f32 to vector<5x8xf32>
    %148 = arith.maximumf %146, %147 : vector<5x8xf32>
    %c0_89 = arith.constant 0 : index
    %c0_90 = arith.constant 0 : index
    %c0_91 = arith.constant 0 : index
    %149 = vector.load %arg21[%c0_89, %c0_90, %c0_91] : memref<1x8x8xbf16, #tpu.memory_space<vmem>>, vector<1x8x8xbf16>
    %150 = vector.shape_cast %149 : vector<1x8x8xbf16> to vector<8x8xbf16>
    %c0_92 = arith.constant 0 : index
    %c0_93 = arith.constant 0 : index
    %c0_94 = arith.constant 0 : index
    %151 = vector.load %arg22[%c0_92, %c0_93, %c0_94] : memref<1x1x8xf32, #tpu.memory_space<vmem>>, vector<1x1x8xf32>
    %152 = vector.shape_cast %151 : vector<1x1x8xf32> to vector<1x8xf32>
    %153 = arith.truncf %148 : vector<5x8xf32> to vector<5x8xbf16>
    %cst_95 = arith.constant dense<0.000000e+00> : vector<5x8xf32>
    %154 = tpu.matmul %153, %150, %cst_95 {dimension_numbers = #tpu.dot_dimension_numbers<[1], [0], [0], [1], [0, 0, 1, 1], [], []>} : vector<5x8xbf16>, vector<8x8xbf16>, vector<5x8xf32> -> vector<5x8xf32>
    %155 = vector.broadcast %152 : vector<1x8xf32> to vector<5x8xf32>
    %156 = arith.addf %154, %155 : vector<5x8xf32>
    %cst_96 = arith.constant 0.000000e+00 : f32
    %157 = vector.broadcast %cst_96 : f32 to vector<5x8xf32>
    %158 = arith.maximumf %156, %157 : vector<5x8xf32>
    %c0_97 = arith.constant 0 : index
    %c0_98 = arith.constant 0 : index
    %c0_99 = arith.constant 0 : index
    %159 = vector.load %arg23[%c0_97, %c0_98, %c0_99] : memref<1x8x32xbf16, #tpu.memory_space<vmem>>, vector<1x8x32xbf16>
    %160 = vector.shape_cast %159 : vector<1x8x32xbf16> to vector<8x32xbf16>
    %c0_100 = arith.constant 0 : index
    %c0_101 = arith.constant 0 : index
    %c0_102 = arith.constant 0 : index
    %161 = vector.load %arg24[%c0_100, %c0_101, %c0_102] : memref<1x1x32xf32, #tpu.memory_space<vmem>>, vector<1x1x32xf32>
    %162 = vector.shape_cast %161 : vector<1x1x32xf32> to vector<1x32xf32>
    %163 = arith.truncf %158 : vector<5x8xf32> to vector<5x8xbf16>
    %cst_103 = arith.constant dense<0.000000e+00> : vector<5x32xf32>
    %164 = tpu.matmul %163, %160, %cst_103 {dimension_numbers = #tpu.dot_dimension_numbers<[1], [0], [0], [1], [0, 0, 1, 1], [], []>} : vector<5x8xbf16>, vector<8x32xbf16>, vector<5x32xf32> -> vector<5x32xf32>
    %165 = vector.broadcast %162 : vector<1x32xf32> to vector<5x32xf32>
    %166 = arith.addf %164, %165 : vector<5x32xf32>
    %cst_104 = arith.constant 1.000000e-01 : f32
    %167 = vector.broadcast %cst_104 : f32 to vector<5x32xf32>
    %168 = arith.mulf %167, %166 : vector<5x32xf32>
    %169 = arith.addf %138, %168 : vector<5x32xf32>
    %c0_105 = arith.constant 0 : index
    %c0_106 = arith.constant 0 : index
    %c0_107 = arith.constant 0 : index
    %170 = vector.load %arg25[%c0_105, %c0_106, %c0_107] : memref<1x5x32xf32, #tpu.memory_space<vmem>>, vector<1x5x32xf32>
    %171 = vector.shape_cast %170 : vector<1x5x32xf32> to vector<5x32xf32>
    %172 = vector.shape_cast %169 : vector<5x32xf32> to vector<1x5x32xf32>
    tpu.vector_store %arg25[%c0_105, %c0_106, %c0_107], %172 {strides = array<i32>} : memref<1x5x32xf32, #tpu.memory_space<vmem>>, vector<1x5x32xf32>,
    return
  }
  func.func @transform_0(%arg0: i32, %arg1: i32) -> (i32, i32, i32) {
    %c0_i32 = arith.constant 0 : i32
    %c0_i32_0 = arith.constant 0 : i32
    %c0_i32_1 = arith.constant 0 : i32
    return %arg0, %c0_i32, %c0_i32_0 : i32, i32, i32
  }
  func.func @transform_1(%arg0: i32, %arg1: i32) -> (i32, i32, i32) {
    %c0_i32 = arith.constant 0 : i32
    %c0_i32_0 = arith.constant 0 : i32
    %c0_i32_1 = arith.constant 0 : i32
    return %arg1, %c0_i32, %c0_i32_0 : i32, i32, i32
  }
  func.func @transform_2(%arg0: i32, %arg1: i32) -> (i32, i32, i32) {
    %c0_i32 = arith.constant 0 : i32
    %c0_i32_0 = arith.constant 0 : i32
    %c0_i32_1 = arith.constant 0 : i32
    return %arg1, %c0_i32, %c0_i32_0 : i32, i32, i32
  }
  func.func @transform_3(%arg0: i32, %arg1: i32) -> (i32, i32, i32, i32) {
    %c0_i32 = arith.constant 0 : i32
    %c0_i32_0 = arith.constant 0 : i32
    %c0_i32_1 = arith.constant 0 : i32
    %c0_i32_2 = arith.constant 0 : i32
    return %arg1, %c0_i32, %c0_i32_0, %c0_i32_1 : i32, i32, i32, i32
  }
  func.func @transform_4(%arg0: i32, %arg1: i32) -> (i32, i32, i32, i32) {
    %c0_i32 = arith.constant 0 : i32
    %c0_i32_0 = arith.constant 0 : i32
    %c0_i32_1 = arith.constant 0 : i32
    %c0_i32_2 = arith.constant 0 : i32
    return %arg1, %c0_i32, %c0_i32_0, %c0_i32_1 : i32, i32, i32, i32
  }
  func.func @transform_5(%arg0: i32, %arg1: i32) -> (i32, i32, i32, i32) {
    %c0_i32 = arith.constant 0 : i32
    %c0_i32_0 = arith.constant 0 : i32
    %c0_i32_1 = arith.constant 0 : i32
    %c0_i32_2 = arith.constant 0 : i32
    return %arg1, %c0_i32, %c0_i32_0, %c0_i32_1 : i32, i32, i32, i32
  }
  func.func @transform_6(%arg0: i32, %arg1: i32) -> (i32, i32, i32, i32) {
    %c0_i32 = arith.constant 0 : i32
    %c0_i32_0 = arith.constant 0 : i32
    %c0_i32_1 = arith.constant 0 : i32
    %c0_i32_2 = arith.constant 0 : i32
    return %arg1, %c0_i32, %c0_i32_0, %c0_i32_1 : i32, i32, i32, i32
  }
  func.func @transform_7(%arg0: i32, %arg1: i32) -> (i32, i32, i32, i32) {
    %c0_i32 = arith.constant 0 : i32
    %c0_i32_0 = arith.constant 0 : i32
    %c0_i32_1 = arith.constant 0 : i32
    %c0_i32_2 = arith.constant 0 : i32
    return %arg1, %c0_i32, %c0_i32_0, %c0_i32_1 : i32, i32, i32, i32
  }
  func.func @transform_8(%arg0: i32, %arg1: i32) -> (i32, i32, i32, i32) {
    %c0_i32 = arith.constant 0 : i32
    %c0_i32_0 = arith.constant 0 : i32
    %c0_i32_1 = arith.constant 0 : i32
    %c0_i32_2 = arith.constant 0 : i32
    return %arg1, %c0_i32, %c0_i32_0, %c0_i32_1 : i32, i32, i32, i32
  }
  func.func @transform_9(%arg0: i32, %arg1: i32) -> (i32, i32, i32, i32) {
    %c0_i32 = arith.constant 0 : i32
    %c0_i32_0 = arith.constant 0 : i32
    %c0_i32_1 = arith.constant 0 : i32
    %c0_i32_2 = arith.constant 0 : i32
    return %arg1, %c0_i32, %c0_i32_0, %c0_i32_1 : i32, i32, i32, i32
  }
  func.func @transform_10(%arg0: i32, %arg1: i32) -> (i32, i32, i32) {
    %c0_i32 = arith.constant 0 : i32
    %c0_i32_0 = arith.constant 0 : i32
    %c0_i32_1 = arith.constant 0 : i32
    return %arg1, %c0_i32, %c0_i32_0 : i32, i32, i32
  }
  func.func @transform_11(%arg0: i32, %arg1: i32) -> (i32, i32, i32) {
    %c0_i32 = arith.constant 0 : i32
    %c0_i32_0 = arith.constant 0 : i32
    %c0_i32_1 = arith.constant 0 : i32
    return %arg1, %c0_i32, %c0_i32_0 : i32, i32, i32
  }
  func.func @transform_12(%arg0: i32, %arg1: i32) -> (i32, i32, i32) {
    %c0_i32 = arith.constant 0 : i32
    %c0_i32_0 = arith.constant 0 : i32
    %c0_i32_1 = arith.constant 0 : i32
    return %arg1, %c0_i32, %c0_i32_0 : i32, i32, i32
  }
  func.func @transform_13(%arg0: i32, %arg1: i32) -> (i32, i32, i32) {
    %c0_i32 = arith.constant 0 : i32
    %c0_i32_0 = arith.constant 0 : i32
    %c0_i32_1 = arith.constant 0 : i32
    return %arg1, %c0_i32, %c0_i32_0 : i32, i32, i32
  }
  func.func @transform_14(%arg0: i32, %arg1: i32) -> (i32, i32, i32) {
    %c0_i32 = arith.constant 0 : i32
    %c0_i32_0 = arith.constant 0 : i32
    %c0_i32_1 = arith.constant 0 : i32
    return %arg1, %c0_i32, %c0_i32_0 : i32, i32, i32
  }
  func.func @transform_15(%arg0: i32, %arg1: i32) -> (i32, i32, i32) {
    %c0_i32 = arith.constant 0 : i32
    %c0_i32_0 = arith.constant 0 : i32
    %c0_i32_1 = arith.constant 0 : i32
    return %arg1, %c0_i32, %c0_i32_0 : i32, i32, i32
  }
  func.func @transform_16(%arg0: i32, %arg1: i32) -> (i32, i32, i32) {
    %c0_i32 = arith.constant 0 : i32
    %c0_i32_0 = arith.constant 0 : i32
    %c0_i32_1 = arith.constant 0 : i32
    return %arg1, %c0_i32, %c0_i32_0 : i32, i32, i32
  }
  func.func @transform_17(%arg0: i32, %arg1: i32) -> (i32, i32, i32) {
    %c0_i32 = arith.constant 0 : i32
    %c0_i32_0 = arith.constant 0 : i32
    %c0_i32_1 = arith.constant 0 : i32
    return %arg1, %c0_i32, %c0_i32_0 : i32, i32, i32
  }
  func.func @transform_18(%arg0: i32, %arg1: i32) -> (i32, i32, i32) {
    %c0_i32 = arith.constant 0 : i32
    %c0_i32_0 = arith.constant 0 : i32
    %c0_i32_1 = arith.constant 0 : i32
    return %arg1, %c0_i32, %c0_i32_0 : i32, i32, i32
  }
  func.func @transform_19(%arg0: i32, %arg1: i32) -> (i32, i32, i32) {
    %c0_i32 = arith.constant 0 : i32
    %c0_i32_0 = arith.constant 0 : i32
    %c0_i32_1 = arith.constant 0 : i32
    return %arg1, %c0_i32, %c0_i32_0 : i32, i32, i32
  }
  func.func @transform_20(%arg0: i32, %arg1: i32) -> (i32, i32, i32) {
    %c0_i32 = arith.constant 0 : i32
    %c0_i32_0 = arith.constant 0 : i32
    %c0_i32_1 = arith.constant 0 : i32
    return %arg1, %c0_i32, %c0_i32_0 : i32, i32, i32
  }
  func.func @transform_21(%arg0: i32, %arg1: i32) -> (i32, i32, i32) {
    %c0_i32 = arith.constant 0 : i32
    %c0_i32_0 = arith.constant 0 : i32
    %c0_i32_1 = arith.constant 0 : i32
    return %arg1, %c0_i32, %c0_i32_0 : i32, i32, i32
  }
  func.func @transform_22(%arg0: i32, %arg1: i32) -> (i32, i32, i32) {
    %c0_i32 = arith.constant 0 : i32
    %c0_i32_0 = arith.constant 0 : i32
    %c0_i32_1 = arith.constant 0 : i32
    return %arg1, %c0_i32, %c0_i32_0 : i32, i32, i32
  }
  func.func @transform_23(%arg0: i32, %arg1: i32) -> (i32, i32, i32) {
    %c0_i32 = arith.constant 0 : i32
    %c0_i32_0 = arith.constant 0 : i32
    %c0_i32_1 = arith.constant 0 : i32
    return %arg0, %c0_i32, %c0_i32_0 : i32, i32, i32
  }
}

module attributes {stable_mosaic.version = 11 : i64} {
  func.func @_text_head_kernel(%arg0: i32, %arg1: memref<4x32xf32, #tpu.memory_space<vmem>>, %arg2: memref<1x32xf32, #tpu.memory_space<vmem>>, %arg3: memref<1x32xf32, #tpu.memory_space<vmem>>, %arg4: memref<32x32xbf16, #tpu.memory_space<vmem>>, %arg5: memref<2x32xf32, #tpu.memory_space<vmem>>, %arg6: memref<1x1xf32, #tpu.memory_space<smem>>, %arg7: memref<4x32xf32, #tpu.memory_space<vmem>>, %arg8: memref<2x4xf32, #tpu.memory_space<vmem>>) attributes {dimension_semantics = [#tpu.dimension_semantics<arbitrary>], iteration_bounds = array<i64: 1>, scalar_prefetch = 0 : i64, scratch_operands = 0 : i64, tpu.core_type = #tpu.core_type<tc>, window_params = [{pipeline_mode = #tpu.pipeline_mode<synchronous>, transform_indices = @transform_0, window_bounds = array<i64: 4, 32>}, {pipeline_mode = #tpu.pipeline_mode<synchronous>, transform_indices = @transform_1, window_bounds = array<i64: 1, 32>}, {pipeline_mode = #tpu.pipeline_mode<synchronous>, transform_indices = @transform_2, window_bounds = array<i64: 1, 32>}, {pipeline_mode = #tpu.pipeline_mode<synchronous>, transform_indices = @transform_3, window_bounds = array<i64: 32, 32>}, {pipeline_mode = #tpu.pipeline_mode<synchronous>, transform_indices = @transform_4, window_bounds = array<i64: 2, 32>}, {transform_indices = @transform_5, window_bounds = array<i64: 1, 1>}, {pipeline_mode = #tpu.pipeline_mode<synchronous>, transform_indices = @transform_6, window_bounds = array<i64: 4, 32>}, {pipeline_mode = #tpu.pipeline_mode<synchronous>, transform_indices = @transform_7, window_bounds = array<i64: 2, 4>}]} {
    %c0 = arith.constant 0 : index
    %c0_0 = arith.constant 0 : index
    %0 = vector.load %arg1[%c0, %c0_0] : memref<4x32xf32, #tpu.memory_space<vmem>>, vector<4x32xf32>
    %c0_1 = arith.constant 0 : index
    %c0_2 = arith.constant 0 : index
    %1 = vector.load %arg2[%c0_1, %c0_2] : memref<1x32xf32, #tpu.memory_space<vmem>>, vector<1x32xf32>
    %c0_3 = arith.constant 0 : index
    %c0_4 = arith.constant 0 : index
    %2 = vector.load %arg3[%c0_3, %c0_4] : memref<1x32xf32, #tpu.memory_space<vmem>>, vector<1x32xf32>
    %cst = arith.constant dense<0.000000e+00> : vector<4xf32>
    %3 = vector.multi_reduction <add>, %0, %cst [1] : vector<4x32xf32> to vector<4xf32>
    %4 = vector.shape_cast %3 : vector<4xf32> to vector<4x1xf32>
    %cst_5 = arith.constant 3.200000e+01 : f32
    %5 = vector.broadcast %cst_5 : f32 to vector<4x1xf32>
    %6 = arith.divf %4, %5 : vector<4x1xf32>
    %7 = vector.broadcast %6 : vector<4x1xf32> to vector<4x32xf32>
    %8 = arith.subf %0, %7 : vector<4x32xf32>
    %9 = vector.broadcast %6 : vector<4x1xf32> to vector<4x32xf32>
    %10 = arith.subf %0, %9 : vector<4x32xf32>
    %11 = arith.mulf %8, %10 : vector<4x32xf32>
    %cst_6 = arith.constant dense<0.000000e+00> : vector<4xf32>
    %12 = vector.multi_reduction <add>, %11, %cst_6 [1] : vector<4x32xf32> to vector<4xf32>
    %13 = vector.shape_cast %12 : vector<4xf32> to vector<4x1xf32>
    %cst_7 = arith.constant 3.200000e+01 : f32
    %14 = vector.broadcast %cst_7 : f32 to vector<4x1xf32>
    %15 = arith.divf %13, %14 : vector<4x1xf32>
    %16 = vector.broadcast %6 : vector<4x1xf32> to vector<4x32xf32>
    %17 = arith.subf %0, %16 : vector<4x32xf32>
    %cst_8 = arith.constant 9.99999974E-6 : f32
    %18 = vector.broadcast %cst_8 : f32 to vector<4x1xf32>
    %19 = arith.addf %15, %18 : vector<4x1xf32>
    %20 = math.rsqrt %19 : vector<4x1xf32>
    %21 = vector.broadcast %20 : vector<4x1xf32> to vector<4x32xf32>
    %22 = arith.mulf %17, %21 : vector<4x32xf32>
    %23 = vector.broadcast %1 : vector<1x32xf32> to vector<4x32xf32>
    %24 = arith.mulf %22, %23 : vector<4x32xf32>
    %25 = vector.broadcast %2 : vector<1x32xf32> to vector<4x32xf32>
    %26 = arith.addf %24, %25 : vector<4x32xf32>
    %c0_9 = arith.constant 0 : index
    %c0_10 = arith.constant 0 : index
    %27 = vector.load %arg4[%c0_9, %c0_10] : memref<32x32xbf16, #tpu.memory_space<vmem>>, vector<32x32xbf16>
    %28 = arith.truncf %26 : vector<4x32xf32> to vector<4x32xbf16>
    %cst_11 = arith.constant dense<0.000000e+00> : vector<4x32xf32>
    %29 = tpu.matmul %28, %27, %cst_11 {dimension_numbers = #tpu.dot_dimension_numbers<[1], [0], [0], [1], [0, 0, 1, 1], [], []>} : vector<4x32xbf16>, vector<32x32xbf16>, vector<4x32xf32> -> vector<4x32xf32>
    %30 = arith.mulf %29, %29 : vector<4x32xf32>
    %cst_12 = arith.constant dense<0.000000e+00> : vector<4xf32>
    %31 = vector.multi_reduction <add>, %30, %cst_12 [1] : vector<4x32xf32> to vector<4xf32>
    %32 = vector.shape_cast %31 : vector<4xf32> to vector<4x1xf32>
    %33 = math.rsqrt %32 : vector<4x1xf32>
    %34 = vector.broadcast %33 : vector<4x1xf32> to vector<4x32xf32>
    %35 = arith.mulf %29, %34 : vector<4x32xf32>
    %c0_13 = arith.constant 0 : index
    %c0_14 = arith.constant 0 : index
    %36 = vector.load %arg7[%c0_13, %c0_14] : memref<4x32xf32, #tpu.memory_space<vmem>>, vector<4x32xf32>
    tpu.vector_store %arg7[%c0_13, %c0_14], %35 {strides = array<i32>} : memref<4x32xf32, #tpu.memory_space<vmem>>, vector<4x32xf32>,
    %c0_15 = arith.constant 0 : index
    %c0_16 = arith.constant 0 : index
    %37 = vector.load %arg5[%c0_15, %c0_16] : memref<2x32xf32, #tpu.memory_space<vmem>>, vector<2x32xf32>
    %cst_17 = arith.constant dense<0.000000e+00> : vector<2x4xf32>
    %38 = tpu.matmul %37, %35, %cst_17 {dimension_numbers = #tpu.dot_dimension_numbers<[1], [1], [0], [0], [0, 0, 1, 0], [], []>} : vector<2x32xf32>, vector<4x32xf32>, vector<2x4xf32> -> vector<2x4xf32>
    %c0_18 = arith.constant 0 : index
    %c0_19 = arith.constant 0 : index
    %39 = memref.load %arg6[%c0_18, %c0_19] : memref<1x1xf32, #tpu.memory_space<smem>>
    %40 = vector.broadcast %39 : f32 to vector<2x4xf32>
    %41 = arith.mulf %40, %38 : vector<2x4xf32>
    %c0_20 = arith.constant 0 : index
    %c0_21 = arith.constant 0 : index
    %42 = vector.load %arg8[%c0_20, %c0_21] : memref<2x4xf32, #tpu.memory_space<vmem>>, vector<2x4xf32>
    tpu.vector_store %arg8[%c0_20, %c0_21], %41 {strides = array<i32>} : memref<2x4xf32, #tpu.memory_space<vmem>>, vector<2x4xf32>,
    return
  }
  func.func @transform_0(%arg0: i32) -> (i32, i32) {
    %c0_i32 = arith.constant 0 : i32
    %c0_i32_0 = arith.constant 0 : i32
    %c0_i32_1 = arith.constant 0 : i32
    return %c0_i32, %c0_i32_0 : i32, i32
  }
  func.func @transform_1(%arg0: i32) -> (i32, i32) {
    %c0_i32 = arith.constant 0 : i32
    %c0_i32_0 = arith.constant 0 : i32
    %c0_i32_1 = arith.constant 0 : i32
    return %c0_i32, %c0_i32_0 : i32, i32
  }
  func.func @transform_2(%arg0: i32) -> (i32, i32) {
    %c0_i32 = arith.constant 0 : i32
    %c0_i32_0 = arith.constant 0 : i32
    %c0_i32_1 = arith.constant 0 : i32
    return %c0_i32, %c0_i32_0 : i32, i32
  }
  func.func @transform_3(%arg0: i32) -> (i32, i32) {
    %c0_i32 = arith.constant 0 : i32
    %c0_i32_0 = arith.constant 0 : i32
    %c0_i32_1 = arith.constant 0 : i32
    return %c0_i32, %c0_i32_0 : i32, i32
  }
  func.func @transform_4(%arg0: i32) -> (i32, i32) {
    %c0_i32 = arith.constant 0 : i32
    %c0_i32_0 = arith.constant 0 : i32
    %c0_i32_1 = arith.constant 0 : i32
    return %c0_i32, %c0_i32_0 : i32, i32
  }
  func.func @transform_5(%arg0: i32) -> (i32, i32) {
    %c0_i32 = arith.constant 0 : i32
    %c0_i32_0 = arith.constant 0 : i32
    %c0_i32_1 = arith.constant 0 : i32
    return %c0_i32, %c0_i32_0 : i32, i32
  }
  func.func @transform_6(%arg0: i32) -> (i32, i32) {
    %c0_i32 = arith.constant 0 : i32
    %c0_i32_0 = arith.constant 0 : i32
    %c0_i32_1 = arith.constant 0 : i32
    return %c0_i32, %c0_i32_0 : i32, i32
  }
  func.func @transform_7(%arg0: i32) -> (i32, i32) {
    %c0_i32 = arith.constant 0 : i32
    %c0_i32_0 = arith.constant 0 : i32
    %c0_i32_1 = arith.constant 0 : i32
    return %c0_i32, %c0_i32_0 : i32, i32
  }
}

</mosaic_0001>

<llo_original>
// kernel: _lambda_.7
$region0: #{_lambda_.7}
  #allocation0 [shape = 'u32[]', space=smem, size = 0x4, offset = 0x4, fixed_abs, tag = 'smem constant byte address 0x4 - core index']
  #allocation1 [shape = 'u32[144,128]{1,0:T(1,128)}', space=vmem, size = 0x12000, scoped, tag = 'internal scratch']
  %s0 = inlined_call_operand.vmem [shape: f32[2,32], index: 0, kind: input, shape index: {}]
  %s1 = inlined_call_operand.vmem [shape: f32[1,32], index: 1, kind: input, shape index: {}]
  %s2 = inlined_call_operand.vmem [shape: f32[1,32], index: 2, kind: input, shape index: {}]
  %s3 = inlined_call_operand.vmem [shape: bf16[32,32], index: 3, kind: input, shape index: {}]
  %s4 = inlined_call_operand.vmem [shape: f32[2,32], index: 4, kind: output, shape index: {}]
  %s5 = sld [smem:[#allocation0]]
  $region26: #{_lambda_.7} parent=0
    _
  %s7 = ssub.s32 1, %s5
  %s8 = scalar_select 0, %s7, %s5
  // Predicated region
  $region2: #{_lambda_.7} parent=0 // pred_check
    _
  $region3: #{_lambda_.7} parent=0 // pred_check_branch
    %10 = sbr.rel (0) target = $region5
  $region4: #{_lambda_.7} parent=0 // pred_region
    _
  $region5: #{_lambda_.7} parent=0 // pred_fallthru
    _
  // Predicated region
  $region6: #{_lambda_.7} parent=0 // pred_check
    _
  $region7: #{_lambda_.7} parent=0 // pred_check_branch
    %12 = sbr.rel (0) target = $region9
  $region8: #{_lambda_.7} parent=0 // pred_region
    _
  $region9: #{_lambda_.7} parent=0 // pred_fallthru
    _
  // Predicated region
  $region10: #{_lambda_.7} parent=0 // pred_check
    _
  $region11: #{_lambda_.7} parent=0 // pred_check_branch
    %14 = sbr.rel (0) target = $region13
  $region12: #{_lambda_.7} parent=0 // pred_region
    _
  $region13: #{_lambda_.7} parent=0 // pred_fallthru
    _
  // Predicated region
  $region14: #{_lambda_.7} parent=0 // pred_check
    _
  $region15: #{_lambda_.7} parent=0 // pred_check_branch
    %16 = sbr.rel (0) target = $region17
  $region16: #{_lambda_.7} parent=0 // pred_region
    _
  $region17: #{_lambda_.7} parent=0 // pred_fallthru
    _
  %v18 = vld [vmem:[%s0] sm:$0x3]
  %v19 = vld [vmem:[%s1] sm:$0x1]
  %v20 = vld [vmem:[%s2] sm:$0x1]
  %vm21 = vcmask 254976
  %v22 = vsel %vm21, %v18, 0.0
  %23 = vadd.xlane.f32.xlu0 %v22
  %v24 = vpop.xlane.xlu0 %23
  %v25 = vrcp.pop 32.0
  %v26 = vmul.f32 %v24, %v25
  %v27 = vsub.f32 %v18, %v26
  %v28 = vmul.f32 %v27, %v27
  %v29 = vsel %vm21, %v28, 0.0
  %30 = vadd.xlane.f32.xlu0 %v29
  %v31 = vpop.xlane.xlu0 %30
  %v32 = vmul.f32 %v31, %v25
  %v33 = vadd.f32 %v32, 1e-05
  %v34 = vrsqrt.pop %v33
  %v35 = vmul.f32 %v27, %v34
  %v37 = vlaneseq
  %v38 = vshrl.u32 %v37, 7
  %v39 = vsub.s32 0, %v38
  %v40 = vrot.slane %v19, %v39
  %v42 = vmul.f32 %v35, %v40
  %v44 = vlaneseq
  %v45 = vshrl.u32 %v44, 7
  %v46 = vsub.s32 0, %v45
  %v47 = vrot.slane %v20, %v46
  %v49 = vadd.f32 %v42, %v47
  %v50 = vld [vmem:[%s3] sm:$0xf]
  %v51 = vld [vmem:[%s3 + $0x4] sm:$0xf]
  %v52 = vld [vmem:[%s3 + $0x8] sm:$0xf]
  %v53 = vld [vmem:[%s3 + $0xc] sm:$0xf]
  %v54 = vpack.c.bf16 %v49, %v49
  %v59 = vunpack.c.l.b16 %v50
  %v60 = vunpack.c.l.b16 %v51
  %v61 = vunpack.c.l.b16 %v52
  %v62 = vunpack.c.l.b16 %v53
  %v63 = vpack.c.b16 %v60, %v59
  %v64 = vpack.c.b16 %v62, %v61
  %vm67 = vcmask 261120
  %v69 = vsel %vm67, %v54, 0
  %71 = vmatprep.subr.bf16.mxu0 0
  %72 = vmatpush1.bf16.msra.mxu0 %v63
  %73 = vmatprep.subr.bf16.mxu0 0
  %74 = vmatpush1.bf16.msra.mxu0 %v64
  %75 = vmatprep.subr.bf16.mxu0 0
  %76 = vmatpush1.bf16.msra.mxu0 0
  %77 = vmatprep.subr.bf16.mxu0 0
  %78 = vmatpush1.bf16.msra.mxu0 0
  %79 = vmatprep.subr.bf16.mxu0 0
  %80 = vmatpush1.bf16.msra.mxu0 0
  %81 = vmatprep.subr.bf16.mxu0 0
  %82 = vmatpush1.bf16.msra.mxu0 0
  %83 = vmatprep.subr.bf16.mxu0 0
  %84 = vmatpush1.bf16.msra.mxu0 0
  %85 = vmatprep.subr.bf16.mxu0 0
  %86 = vmatpush1.bf16.msra.mxu0 0
  %87 = vmatprep.subr.bf16.mxu0 0
  %88 = vmatpush1.bf16.msra.mxu0 0
  %89 = vmatprep.subr.bf16.mxu0 0
  %90 = vmatpush1.bf16.msra.mxu0 0
  %91 = vmatprep.subr.bf16.mxu0 0
  %92 = vmatpush1.bf16.msra.mxu0 0
  %93 = vmatprep.subr.bf16.mxu0 0
  %94 = vmatpush1.bf16.msra.mxu0 0
  %95 = vmatprep.subr.bf16.mxu0 0
  %96 = vmatpush1.bf16.msra.mxu0 0
  %97 = vmatprep.subr.bf16.mxu0 0
  %98 = vmatpush1.bf16.msra.mxu0 0
  %99 = vmatprep.subr.bf16.mxu0 0
  %100 = vmatpush1.bf16.msra.mxu0 0
  %101 = vmatprep.subr.bf16.mxu0 0
  %102 = vmatpush1.bf16.msra.mxu0 0
  %103 = vmatprep.mubr.bf16.mxu0 0
  %104 = vmatmul.mubr.bf16.gmra.mrb[0].mxu0 %v69
  %v105 = vpop.f32.mrb[0].mxu0
  %v106 = vadd.f32 0.0, %v105
  %v107 = vpop.f32.mrb[0].mxu0
  %v108 = vpop.f32.mrb[0].mxu0
  %v109 = vpop.f32.mrb[0].mxu0
  %110 = vdwg.mxu0
  %v111 = vmul.f32 %v106, %v106
  %v112 = vsel %vm21, %v111, 0.0
  %113 = vadd.xlane.f32.xlu0 %v112
  %v114 = vpop.xlane.xlu0 %113
  %v115 = vrsqrt.pop %v114
  %v116 = vmul.f32 %v106, %v115
  %117 = vst.msk [vmem:[%s4] sm:$0x3] %vm21, %v116
  // Predicated region
  $region18: #{_lambda_.7} parent=0 // pred_check
    _
  $region19: #{_lambda_.7} parent=0 // pred_check_branch
    %119 = sbr.rel (0) target = $region21
  $region20: #{_lambda_.7} parent=0 // pred_region
    _
  $region21: #{_lambda_.7} parent=0 // pred_fallthru
    _
  // Predicated region
  $region22: #{_lambda_.7} parent=0 // pred_check
    _
  $region23: #{_lambda_.7} parent=0 // pred_check_branch
    %121 = sbr.rel (0) target = $region25
  $region24: #{_lambda_.7} parent=0 // pred_region
    _
  $region25: #{_lambda_.7} parent=0 // pred_fallthru
    _

// kernel: _lambda_.5
$region0: #{_lambda_.5}
  #allocation0 [shape = 'u32[]', space=smem, size = 0x4, offset = 0x4, fixed_abs, tag = 'smem constant byte address 0x4 - core index']
  #allocation1 [shape = 'u32[144,128]{1,0:T(1,128)}', space=vmem, size = 0x12000, scoped, tag = 'internal scratch']
  %s0 = inlined_call_operand.vmem [shape: f32[2,4,192], index: 0, kind: input, shape index: {}]
  %s1 = inlined_call_operand.vmem [shape: bf16[192,32], index: 1, kind: input, shape index: {}]
  %s2 = inlined_call_operand.vmem [shape: f32[1,32], index: 2, kind: input, shape index: {}]
  %s3 = inlined_call_operand.vmem [shape: f32[5,32], index: 3, kind: input, shape index: {}]
  %s4 = inlined_call_operand.vmem [shape: f32[1,32], index: 4, kind: input, shape index: {}]
  %s5 = inlined_call_operand.vmem [shape: f32[1,32], index: 5, kind: input, shape index: {}]
  %s6 = inlined_call_operand.vmem [shape: f32[2,5,32], index: 6, kind: output, shape index: {}]
  %s7 = sld [smem:[#allocation0]]
  $region57: #{_lambda_.5} parent=0
    _
  %s9 = ssub.s32 1, %s7
  %s10 = scalar_select 0, %s9, %s7
  loop: start=0, step=1, limit=4
  $region2: #{_lambda_.5} parent=0 // loop_pre_header
    _
  $region3: #{_lambda_.5} parent=0 // loop_header
    %s12 = sphi 0, %s16
    %p13 = scmp.ge.s32.totalorder %s12, 4
    %s22 = sphi 0, %s24
    %s25 = sphi 0, %s22
    %s26 = sphi 0, %s25
    %s42 = sphi 0, %s26
    %s46 = sphi 0, %s46
    %s48 = sphi 0, %s46
    %s49 = sphi 0, %s48
    %s63 = sphi 0, %s49
    %s67 = sphi 0, %s67
    %s69 = sphi 0, %s67
    %s70 = sphi 0, %s69
    %s84 = sphi 0, %s70
    %s88 = sphi 0, %s88
    %s90 = sphi 0, %s88
    %s91 = sphi 0, %s90
    %s105 = sphi 0, %s91
    %s109 = sphi 0, %s109
    %s111 = sphi 0, %s109
    %s112 = sphi 0, %s111
    %s126 = sphi 0, %s112
    %s130 = sphi 0, %s130
    %s132 = sphi 0, %s130
    %s133 = sphi 0, %s132
    %s147 = sphi 0, %s133
    %s153 = sphi 0, %s155
    %s156 = sphi 0, %s153
    %s157 = sphi 0, %s156
    %s173 = sphi 0, %s157
  $region4: #{_lambda_.5} parent=0 // loop_header_branch
    %15 = sbr.rel (%p13) target = $region8
  $region5: #{_lambda_.5} parent=0 // loop_body
    %s17 = ssub.s32 %s12, 1
    %s18 = ssub.s32 %s12, 2
    %s19 = sadd.s32 %s12, 1
    %s20 = ssub.s32 %s12, %s19
    %p21 = scmp.eq.s32.totalorder %s20, 0
    %s23 = sadd.s32 %s22, 1
    %s24 = scalar_select %p21, %s22, %s23
    %p27 = pneg %p21
    %p28 = scmp.eq.s32.totalorder %s12, 1
    %p29 = por %p27, %p28
    %p30 = scmp.ne.s32.totalorder %s22, %s25
    %p31 = scmp.eq.s32.totalorder %s12, 0
    %p32 = por %p30, %p31
    %p33 = scmp.ne.s32.totalorder %s22, %s25
    %p34 = scmp.eq.s32.totalorder %s17, 1
    %p35 = por %p33, %p34
    %p36 = scmp.ne.s32.totalorder %s25, %s26
    %p37 = scmp.eq.s32.totalorder %s17, 0
    %p38 = por %p36, %p37
    %p39 = scmp.ne.s32.totalorder %s25, %s26
    %p40 = scmp.eq.s32.totalorder %s18, 1
    %p41 = por %p39, %p40
    %p43 = scmp.ne.s32.totalorder %s26, %s42
    %p44 = scmp.eq.s32.totalorder %s18, 0
    %p45 = por %p43, %p44
    %s47 = sadd.s32 %s46, 1
    %p50 = scmp.eq.s32.totalorder %s12, 1
    %p51 = scmp.ne.s32.totalorder %s46, %s48
    %p52 = scmp.eq.s32.totalorder %s12, 0
    %p53 = por %p51, %p52
    %p54 = scmp.ne.s32.totalorder %s46, %s48
    %p55 = scmp.eq.s32.totalorder %s17, 1
    %p56 = por %p54, %p55
    %p57 = scmp.ne.s32.totalorder %s48, %s49
    %p58 = scmp.eq.s32.totalorder %s17, 0
    %p59 = por %p57, %p58
    %p60 = scmp.ne.s32.totalorder %s48, %s49
    %p61 = scmp.eq.s32.totalorder %s18, 1
    %p62 = por %p60, %p61
    %p64 = scmp.ne.s32.totalorder %s49, %s63
    %p65 = scmp.eq.s32.totalorder %s18, 0
    %p66 = por %p64, %p65
    %s68 = sadd.s32 %s67, 1
    %p71 = scmp.eq.s32.totalorder %s12, 1
    %p72 = scmp.ne.s32.totalorder %s67, %s69
    %p73 = scmp.eq.s32.totalorder %s12, 0
    %p74 = por %p72, %p73
    %p75 = scmp.ne.s32.totalorder %s67, %s69
    %p76 = scmp.eq.s32.totalorder %s17, 1
    %p77 = por %p75, %p76
    %p78 = scmp.ne.s32.totalorder %s69, %s70
    %p79 = scmp.eq.s32.totalorder %s17, 0
    %p80 = por %p78, %p79
    %p81 = scmp.ne.s32.totalorder %s69, %s70
    %p82 = scmp.eq.s32.totalorder %s18, 1
    %p83 = por %p81, %p82
    %p85 = scmp.ne.s32.totalorder %s70, %s84
    %p86 = scmp.eq.s32.totalorder %s18, 0
    %p87 = por %p85, %p86
    %s89 = sadd.s32 %s88, 1
    %p92 = scmp.eq.s32.totalorder %s12, 1
    %p93 = scmp.ne.s32.totalorder %s88, %s90
    %p94 = scmp.eq.s32.totalorder %s12, 0
    %p95 = por %p93, %p94
    %p96 = scmp.ne.s32.totalorder %s88, %s90
    %p97 = scmp.eq.s32.totalorder %s17, 1
    %p98 = por %p96, %p97
    %p99 = scmp.ne.s32.totalorder %s90, %s91
    %p100 = scmp.eq.s32.totalorder %s17, 0
    %p101 = por %p99, %p100
    %p102 = scmp.ne.s32.totalorder %s90, %s91
    %p103 = scmp.eq.s32.totalorder %s18, 1
    %p104 = por %p102, %p103
    %p106 = scmp.ne.s32.totalorder %s91, %s105
    %p107 = scmp.eq.s32.totalorder %s18, 0
    %p108 = por %p106, %p107
    %s110 = sadd.s32 %s109, 1
    %p113 = scmp.eq.s32.totalorder %s12, 1
    %p114 = scmp.ne.s32.totalorder %s109, %s111
    %p115 = scmp.eq.s32.totalorder %s12, 0
    %p116 = por %p114, %p115
    %p117 = scmp.ne.s32.totalorder %s109, %s111
    %p118 = scmp.eq.s32.totalorder %s17, 1
    %p119 = por %p117, %p118
    %p120 = scmp.ne.s32.totalorder %s111, %s112
    %p121 = scmp.eq.s32.totalorder %s17, 0
    %p122 = por %p120, %p121
    %p123 = scmp.ne.s32.totalorder %s111, %s112
    %p124 = scmp.eq.s32.totalorder %s18, 1
    %p125 = por %p123, %p124
    %p127 = scmp.ne.s32.totalorder %s112, %s126
    %p128 = scmp.eq.s32.totalorder %s18, 0
    %p129 = por %p127, %p128
    %s131 = sadd.s32 %s130, 1
    %p134 = scmp.eq.s32.totalorder %s12, 1
    %p135 = scmp.ne.s32.totalorder %s130, %s132
    %p136 = scmp.eq.s32.totalorder %s12, 0
    %p137 = por %p135, %p136
    %p138 = scmp.ne.s32.totalorder %s130, %s132
    %p139 = scmp.eq.s32.totalorder %s17, 1
    %p140 = por %p138, %p139
    %p141 = scmp.ne.s32.totalorder %s132, %s133
    %p142 = scmp.eq.s32.totalorder %s17, 0
    %p143 = por %p141, %p142
    %p144 = scmp.ne.s32.totalorder %s132, %s133
    %p145 = scmp.eq.s32.totalorder %s18, 1
    %p146 = por %p144, %p145
    %p148 = scmp.ne.s32.totalorder %s133, %s147
    %p149 = scmp.eq.s32.totalorder %s18, 0
    %p150 = por %p148, %p149
    %s151 = ssub.s32 %s12, %s19
    %p152 = scmp.eq.s32.totalorder %s151, 0
    %s154 = sadd.s32 %s153, 1
    %s155 = scalar_select %p152, %s153, %s154
    %p158 = pneg %p152
    %p159 = scmp.eq.s32.totalorder %s12, 1
    %p160 = por %p158, %p159
    %p161 = scmp.ne.s32.totalorder %s153, %s156
    %p162 = scmp.eq.s32.totalorder %s12, 0
    %p163 = por %p161, %p162
    %p164 = scmp.ne.s32.totalorder %s153, %s156
    %p165 = scmp.eq.s32.totalorder %s17, 1
    %p166 = por %p164, %p165
    %p167 = scmp.ne.s32.totalorder %s156, %s157
    %p168 = scmp.eq.s32.totalorder %s17, 0
    %p169 = por %p167, %p168
    %p170 = scmp.ne.s32.totalorder %s156, %s157
    %p171 = scmp.eq.s32.totalorder %s18, 1
    %p172 = por %p170, %p171
    %p174 = scmp.ne.s32.totalorder %s157, %s173
    %p175 = scmp.eq.s32.totalorder %s18, 0
    %p176 = por %p174, %p175
    %p177 = scmp.le.s32.totalorder 1, %s12
    %p178 = scmp.lt.s32.totalorder %s12, 3
    %p179 = pnand %p177, %p178
    %p180 = pneg %p179
    // Predicated region
    $region9: #{_lambda_.5} parent=5 // pred_check
      _
    $region10: #{_lambda_.5} parent=5 // pred_check_branch
      %182 = sbr.rel (%p179) target = $region12
    $region11: #{_lambda_.5} parent=5 // pred_region
      %s183 = ssub.s32 %s12, 1
      // Predicated region
      $region13: #{_lambda_.5} parent=11 // pred_check
        %p184 = pneg %p59
      $region14: #{_lambda_.5} parent=11 // pred_check_branch
        %186 = sbr.rel (%p184) target = $region16
      $region15: #{_lambda_.5} parent=11 // pred_region
        _
      $region16: #{_lambda_.5} parent=11 // pred_fallthru
        _
      // Predicated region
      $region17: #{_lambda_.5} parent=11 // pred_check
        %p187 = pneg %p80
      $region18: #{_lambda_.5} parent=11 // pred_check_branch
        %189 = sbr.rel (%p187) target = $region20
      $region19: #{_lambda_.5} parent=11 // pred_region
        _
      $region20: #{_lambda_.5} parent=11 // pred_fallthru
        _
      // Predicated region
      $region21: #{_lambda_.5} parent=11 // pred_check
        %p190 = pneg %p101
      $region22: #{_lambda_.5} parent=11 // pred_check_branch
        %192 = sbr.rel (%p190) target = $region24
      $region23: #{_lambda_.5} parent=11 // pred_region
        _
      $region24: #{_lambda_.5} parent=11 // pred_fallthru
        _
      // Predicated region
      $region25: #{_lambda_.5} parent=11 // pred_check
        %p193 = pneg %p122
      $region26: #{_lambda_.5} parent=11 // pred_check_branch
        %195 = sbr.rel (%p193) target = $region28
      $region27: #{_lambda_.5} parent=11 // pred_region
        _
      $region28: #{_lambda_.5} parent=11 // pred_fallthru
        _
      // Predicated region
      $region29: #{_lambda_.5} parent=11 // pred_check
        %p196 = pneg %p143
      $region30: #{_lambda_.5} parent=11 // pred_check_branch
        %198 = sbr.rel (%p196) target = $region32
      $region31: #{_lambda_.5} parent=11 // pred_region
        _
      $region32: #{_lambda_.5} parent=11 // pred_fallthru
        _
    $region12: #{_lambda_.5} parent=5 // pred_fallthru
      _
    %p199 = scmp.lt.s32.totalorder %s12, 2
    // Predicated region
    $region33: #{_lambda_.5} parent=5 // pred_check
      %p200 = pneg %p199
    $region34: #{_lambda_.5} parent=5 // pred_check_branch
      %202 = sbr.rel (%p200) target = $region36
    $region35: #{_lambda_.5} parent=5 // pred_region
      // Predicated region
      $region37: #{_lambda_.5} parent=35 // pred_check
        %p203 = pneg %p32
      $region38: #{_lambda_.5} parent=35 // pred_check_branch
        %205 = sbr.rel (%p203) target = $region40
      $region39: #{_lambda_.5} parent=35 // pred_region
        %p206 = scmp.lt.s32.totalorder %s12, 1
        %s207 = scalar_select %p206, %s12, 1
        %s208 = smul.addr %s207, 2
        %s209 = smul.addr %s208, 4
        %s210 = scalar_lea.vmem %s0, %s209
      $region40: #{_lambda_.5} parent=35 // pred_fallthru
        _
    $region36: #{_lambda_.5} parent=5 // pred_fallthru
      _
    %p211 = scmp.le.s32.totalorder 1, %s12
    %p212 = scmp.lt.s32.totalorder %s12, 3
    %p213 = pnand %p211, %p212
    %p214 = pneg %p213
    // Predicated region
    $region41: #{_lambda_.5} parent=5 // pred_check
      _
    $region42: #{_lambda_.5} parent=5 // pred_check_branch
      %216 = sbr.rel (%p213) target = $region44
    $region43: #{_lambda_.5} parent=5 // pred_region
      %s217 = ssub.s32 %s12, 1
      %p218 = scmp.lt.s32.totalorder %s17, 1
      %s219 = scalar_select %p218, %s17, 1
      %s220 = smul.addr %s219, 2
      %s221 = smul.addr %s220, 4
      %s222 = scalar_lea.vmem %s0, %s221
      %p223 = pneg %p38
      %p224 = pneg %p35
      %p225 = pneg %p59
      %p226 = pneg %p56
      %p227 = pneg %p80
      %p228 = pneg %p77
      %p229 = pneg %p101
      %p230 = pneg %p98
      %p231 = pneg %p122
      %p232 = pneg %p119
      %p233 = pneg %p143
      %p234 = pneg %p140
      %p235 = pneg %p169
      %p236 = pneg %p166
      %p237 = scmp.lt.s32.totalorder %s17, 1
      %s238 = scalar_select %p237, %s17, 1
      %s239 = smul.addr %s238, 8
      %s240 = scalar_lea.vmem %s6, %s239
      %p241 = scmp.lt.s32.totalorder %s17, 1
      %s242 = scalar_select %p241, %s17, 1
      %s243 = smul.addr %s242, 2
      %s244 = smul.addr %s243, 4
      %s245 = scalar_lea.vmem %s0, %s244
      %p246 = scmp.lt.s32.totalorder %s17, 1
      %s247 = scalar_select %p246, %s17, 1
      %s248 = smul.addr %s247, 8
      %s249 = scalar_lea.vmem %s6, %s248
      %v251 = vld [vmem:[%s4] sm:$0x1]
      %v252 = vld [vmem:[%s5] sm:$0x1]
      %v253 = vld [vmem:[%s245] sm:$0xff]
      %v254 = vld [vmem:[%s1] sm:$0xf]
      %v255 = vld [vmem:[%s1 + $0x4] sm:$0xf]
      %v256 = vld [vmem:[%s1 + $0x8] sm:$0xf]
      %v257 = vld [vmem:[%s1 + $0xc] sm:$0xf]
      %v258 = vld [vmem:[%s1 + $0x10] sm:$0xf]
      %v259 = vld [vmem:[%s1 + $0x14] sm:$0xf]
      %v260 = vld [vmem:[%s1 + $0x18] sm:$0xf]
      %v261 = vld [vmem:[%s1 + $0x1c] sm:$0xf]
      %v262 = vld [vmem:[%s1 + $0x20] sm:$0xf]
      %v263 = vld [vmem:[%s1 + $0x24] sm:$0xf]
      %v264 = vld [vmem:[%s1 + $0x28] sm:$0xf]
      %v265 = vld [vmem:[%s1 + $0x2c] sm:$0xf]
      %v266 = vld [vmem:[%s1 + $0x30] sm:$0xf]
      %v267 = vld [vmem:[%s1 + $0x34] sm:$0xf]
      %v268 = vld [vmem:[%s1 + $0x38] sm:$0xf]
      %v269 = vld [vmem:[%s1 + $0x3c] sm:$0xf]
      %v270 = vld [vmem:[%s1 + $0x40] sm:$0xf]
      %v271 = vld [vmem:[%s1 + $0x44] sm:$0xf]
      %v272 = vld [vmem:[%s1 + $0x48] sm:$0xf]
      %v273 = vld [vmem:[%s1 + $0x4c] sm:$0xf]
      %v274 = vld [vmem:[%s1 + $0x50] sm:$0xf]
      %v275 = vld [vmem:[%s1 + $0x54] sm:$0xf]
      %v276 = vld [vmem:[%s1 + $0x58] sm:$0xf]
      %v277 = vld [vmem:[%s1 + $0x5c] sm:$0xf]
      %v279 = vcombine.high %v253, %v253
      %v281 = vpack.c.bf16 %v253, %v253
      %v282 = vpack.c.bf16 %v279, %v279
      %v283 = vld [vmem:[%s3 + $0x1] sm:$0xf]
      %v308 = vunpack.c.l.b16 %v254
      %v309 = vunpack.c.l.b16 %v255
      %v310 = vunpack.c.l.b16 %v256
      %v311 = vunpack.c.l.b16 %v257
      %v312 = vunpack.c.l.b16 %v258
      %v313 = vunpack.c.l.b16 %v259
      %v314 = vunpack.c.l.b16 %v260
      %v315 = vunpack.c.l.b16 %v261
      %v316 = vunpack.c.l.b16 %v262
      %v317 = vunpack.c.l.b16 %v263
      %v318 = vunpack.c.l.b16 %v264
      %v319 = vunpack.c.l.b16 %v265
      %v320 = vunpack.c.l.b16 %v266
      %v321 = vunpack.c.l.b16 %v267
      %v322 = vunpack.c.l.b16 %v268
      %v323 = vunpack.c.l.b16 %v269
      %v324 = vunpack.c.l.b16 %v270
      %v325 = vunpack.c.l.b16 %v271
      %v326 = vunpack.c.l.b16 %v272
      %v327 = vunpack.c.l.b16 %v273
      %v328 = vunpack.c.l.b16 %v274
      %v329 = vunpack.c.l.b16 %v275
      %v330 = vunpack.c.l.b16 %v276
      %v331 = vunpack.c.l.b16 %v277
      %v332 = vpack.c.b16 %v309, %v308
      %v333 = vpack.c.b16 %v311, %v310
      %v334 = vpack.c.b16 %v313, %v312
      %v335 = vpack.c.b16 %v315, %v314
      %v336 = vpack.c.b16 %v317, %v316
      %v337 = vpack.c.b16 %v319, %v318
      %v338 = vpack.c.b16 %v321, %v320
      %v339 = vpack.c.b16 %v323, %v322
      %v340 = vpack.c.b16 %v325, %v324
      %v341 = vpack.c.b16 %v327, %v326
      %v342 = vpack.c.b16 %v329, %v328
      %v343 = vpack.c.b16 %v331, %v330
      %vm356 = vcmask 523264
      %v358 = vsel %vm356, %v282, 0
      %360 = vmatprep.subr.bf16.mxu0 0
      %361 = vmatpush1.bf16.msra.mxu0 %v332
      %362 = vmatprep.subr.bf16.mxu0 0
      %363 = vmatpush1.bf16.msra.mxu0 %v333
      %364 = vmatprep.subr.bf16.mxu0 0
      %365 = vmatpush1.bf16.msra.mxu0 %v334
      %366 = vmatprep.subr.bf16.mxu0 0
      %367 = vmatpush1.bf16.msra.mxu0 %v335
      %368 = vmatprep.subr.bf16.mxu0 0
      %369 = vmatpush1.bf16.msra.mxu0 %v336
      %370 = vmatprep.subr.bf16.mxu0 0
      %371 = vmatpush1.bf16.msra.mxu0 %v337
      %372 = vmatprep.subr.bf16.mxu0 0
      %373 = vmatpush1.bf16.msra.mxu0 %v338
      %374 = vmatprep.subr.bf16.mxu0 0
      %375 = vmatpush1.bf16.msra.mxu0 %v339
      %376 = vmatprep.subr.bf16.mxu0 0
      %377 = vmatpush1.bf16.msra.mxu0 %v340
      %378 = vmatprep.subr.bf16.mxu0 0
      %379 = vmatpush1.bf16.msra.mxu0 %v341
      %380 = vmatprep.subr.bf16.mxu0 0
      %381 = vmatpush1.bf16.msra.mxu0 %v342
      %382 = vmatprep.subr.bf16.mxu0 0
      %383 = vmatpush1.bf16.msra.mxu0 %v343
      %384 = vmatprep.subr.bf16.mxu0 0
      %385 = vmatpush1.bf16.msra.mxu0 0
      %386 = vmatprep.subr.bf16.mxu0 0
      %387 = vmatpush1.bf16.msra.mxu0 0
      %388 = vmatprep.subr.bf16.mxu0 0
      %389 = vmatpush1.bf16.msra.mxu0 0
      %390 = vmatprep.subr.bf16.mxu0 0
      %391 = vmatpush1.bf16.msra.mxu0 0
      %392 = vmatprep.mubr.bf16.mxu0 %v358
      %393 = vmatmul.mubr.bf16.gmra.mrb[0].mxu0 %v281
      %v394 = vpop.f32.mrb[0].mxu0
      %v395 = vadd.f32 %v283, %v394
      %v396 = vpop.f32.mrb[0].mxu0
      %v397 = vpop.f32.mrb[0].mxu0
      %v398 = vpop.f32.mrb[0].mxu0
      %399 = vdwg.mxu0
      %vm400 = vcmask 257024
      %v401 = vsel %vm400, %v395, 0.0
      %402 = vadd.xlane.f32.xlu0 %v401
      %v403 = vpop.xlane.xlu0 %402
      %v404 = vrcp.pop 32.0
      %v405 = vmul.f32 %v403, %v404
      %v406 = vsub.f32 %v395, %v405
      %v407 = vmul.f32 %v406, %v406
      %v408 = vsel %vm400, %v407, 0.0
      %409 = vadd.xlane.f32.xlu0 %v408
      %v410 = vpop.xlane.xlu0 %409
      %v411 = vmul.f32 %v410, %v404
      %v412 = vadd.f32 %v411, 1e-05
      %v413 = vrsqrt.pop %v412
      %v414 = vmul.f32 %v406, %v413
      %v416 = vlaneseq
      %v417 = vshrl.u32 %v416, 7
      %v418 = vsub.s32 0, %v417
      %v419 = vrot.slane %v251, %v418
      %v421 = vmul.f32 %v414, %v419
      %v423 = vlaneseq
      %v424 = vshrl.u32 %v423, 7
      %v425 = vsub.s32 0, %v424
      %v426 = vrot.slane %v252, %v425
      %v428 = vadd.f32 %v421, %v426
      %429 = vst.msk [vmem:[%s249 + $0x1] sm:$0xf] %vm400, %v428
      %v430 = vld [vmem:[%s2] sm:$0x1]
      %v431 = vld [vmem:[%s3] sm:$0x1]
      %v432 = vadd.f32 %v430, %v431
      %vm433 = vcmask 253952
      %v434 = vsel %vm433, %v432, 0.0
      %435 = vadd.xlane.f32.xlu0 %v434
      %v436 = vpop.xlane.xlu0 %435
      %v437 = vmul.f32 %v436, %v404
      %v438 = vsub.f32 %v432, %v437
      %v439 = vmul.f32 %v438, %v438
      %v440 = vsel %vm433, %v439, 0.0
      %441 = vadd.xlane.f32.xlu0 %v440
      %v442 = vpop.xlane.xlu0 %441
      %v443 = vmul.f32 %v442, %v404
      %v444 = vadd.f32 %v443, 1e-05
      %v445 = vrsqrt.pop %v444
      %v446 = vmul.f32 %v438, %v445
      %v447 = vmul.f32 %v446, %v251
      %v448 = vadd.f32 %v447, %v252
      %449 = vst.msk [vmem:[%s249] sm:$0x1] %vm433, %v448
      %p450 = scmp.lt.s32.totalorder %s17, 1
      %s451 = scalar_select %p450, %s17, 1
      %s452 = smul.addr %s451, 8
      %s453 = scalar_lea.vmem %s6, %s452
      // Predicated region
      $region45: #{_lambda_.5} parent=43 // pred_check
        %p454 = pneg %p166
      $region46: #{_lambda_.5} parent=43 // pred_check_branch
        %456 = sbr.rel (%p454) target = $region48
      $region47: #{_lambda_.5} parent=43 // pred_region
        _
      $region48: #{_lambda_.5} parent=43 // pred_fallthru
        _
    $region44: #{_lambda_.5} parent=5 // pred_fallthru
      _
    %p457 = scmp.le.s32.totalorder 2, %s12
    // Predicated region
    $region49: #{_lambda_.5} parent=5 // pred_check
      %p458 = pneg %p457
    $region50: #{_lambda_.5} parent=5 // pred_check_branch
      %460 = sbr.rel (%p458) target = $region52
    $region51: #{_lambda_.5} parent=5 // pred_region
      %s461 = ssub.s32 %s12, 2
      // Predicated region
      $region53: #{_lambda_.5} parent=51 // pred_check
        %p462 = pneg %p172
      $region54: #{_lambda_.5} parent=51 // pred_check_branch
        %464 = sbr.rel (%p462) target = $region56
      $region55: #{_lambda_.5} parent=51 // pred_region
        %p465 = scmp.lt.s32.totalorder %s18, 1
        %s466 = scalar_select %p465, %s18, 1
        %s467 = smul.addr %s466, 8
        %s468 = scalar_lea.vmem %s6, %s467
      $region56: #{_lambda_.5} parent=51 // pred_fallthru
        _
    $region52: #{_lambda_.5} parent=5 // pred_fallthru
      _
  $region6: #{_lambda_.5} parent=0 // loop_footer
    %s16 = sadd.s32 1, %s12
  $region7: #{_lambda_.5} parent=0 // loop_footer_branch
    %11 = sbr.rel target = $region3
  $region8: #{_lambda_.5} parent=0 // loop_exit
    _

// kernel: _lambda_.8
$region0: #{_lambda_.8}
  #allocation0 [shape = 'u32[]', space=smem, size = 0x4, offset = 0x4, fixed_abs, tag = 'smem constant byte address 0x4 - core index']
  #allocation1 [shape = 'u32[144,128]{1,0:T(1,128)}', space=vmem, size = 0x12000, scoped, tag = 'internal scratch']
  %s0 = inlined_call_operand.vmem [shape: f32[4,8,32], index: 0, kind: input, shape index: {}]
  %s1 = inlined_call_operand.vmem [shape: f32[2,1,32], index: 1, kind: input, shape index: {}]
  %s2 = inlined_call_operand.vmem [shape: f32[2,1,32], index: 2, kind: input, shape index: {}]
  %s3 = inlined_call_operand.vmem [shape: bf16[2,4,32,8], index: 3, kind: input, shape index: {}]
  %s4 = inlined_call_operand.vmem [shape: bf16[2,4,32,8], index: 4, kind: input, shape index: {}]
  %s5 = inlined_call_operand.vmem [shape: bf16[2,4,32,8], index: 5, kind: input, shape index: {}]
  %s6 = inlined_call_operand.vmem [shape: f32[2,4,1,8], index: 6, kind: input, shape index: {}]
  %s7 = inlined_call_operand.vmem [shape: f32[2,4,1,8], index: 7, kind: input, shape index: {}]
  %s8 = inlined_call_operand.vmem [shape: f32[2,4,1,8], index: 8, kind: input, shape index: {}]
  %s9 = inlined_call_operand.vmem [shape: bf16[2,4,8,32], index: 9, kind: input, shape index: {}]
  %s10 = inlined_call_operand.vmem [shape: f32[2,1,32], index: 10, kind: input, shape index: {}]
  %s11 = inlined_call_operand.vmem [shape: f32[2,1,32], index: 11, kind: input, shape index: {}]
  %s12 = inlined_call_operand.vmem [shape: f32[2,1,32], index: 12, kind: input, shape index: {}]
  %s13 = inlined_call_operand.vmem [shape: bf16[2,32,128], index: 13, kind: input, shape index: {}]
  %s14 = inlined_call_operand.vmem [shape: f32[2,1,128], index: 14, kind: input, shape index: {}]
  %s15 = inlined_call_operand.vmem [shape: bf16[2,128,32], index: 15, kind: input, shape index: {}]
  %s16 = inlined_call_operand.vmem [shape: f32[2,1,32], index: 16, kind: input, shape index: {}]
  %s17 = inlined_call_operand.vmem [shape: bf16[2,32,8], index: 17, kind: input, shape index: {}]
  %s18 = inlined_call_operand.vmem [shape: f32[2,1,8], index: 18, kind: input, shape index: {}]
  %s19 = inlined_call_operand.vmem [shape: bf16[2,8,8], index: 19, kind: input, shape index: {}]
  %s20 = inlined_call_operand.vmem [shape: f32[2,1,8], index: 20, kind: input, shape index: {}]
  %s21 = inlined_call_operand.vmem [shape: bf16[2,8,32], index: 21, kind: input, shape index: {}]
  %s22 = inlined_call_operand.vmem [shape: f32[2,1,32], index: 22, kind: input, shape index: {}]
  %s23 = inlined_call_operand.vmem [shape: f32[4,8,32], index: 23, kind: output, shape index: {}]
  %s24 = sld [smem:[#allocation0]]
  $region129: #{_lambda_.8} parent=0
    _
  %s26 = ssub.s32 1, %s24
  %s27 = scalar_select 0, %s26, %s24
  loop: start=0, step=1, limit=10
  $region2: #{_lambda_.8} parent=0 // loop_pre_header
    _
  $region3: #{_lambda_.8} parent=0 // loop_header
    %s29 = sphi 0, %s33
    %p30 = scmp.ge.s32.totalorder %s29, 10
    %s36 = sphi 0, %s48
    %s37 = sphi 0, %s44
    %s38 = sphi 0, %s36
    %s39 = sphi 0, %s37
    %s40 = sphi 0, %s38
    %s41 = sphi 0, %s39
    %s51 = sphi 0, %s53
    %s54 = sphi 0, %s51
    %s55 = sphi 0, %s54
    %s71 = sphi 0, %s55
    %s77 = sphi 0, %s79
    %s80 = sphi 0, %s77
    %s81 = sphi 0, %s80
    %s97 = sphi 0, %s81
    %s103 = sphi 0, %s105
    %s106 = sphi 0, %s103
    %s107 = sphi 0, %s106
    %s123 = sphi 0, %s107
    %s129 = sphi 0, %s131
    %s132 = sphi 0, %s129
    %s133 = sphi 0, %s132
    %s149 = sphi 0, %s133
    %s155 = sphi 0, %s157
    %s158 = sphi 0, %s155
    %s159 = sphi 0, %s158
    %s175 = sphi 0, %s159
    %s181 = sphi 0, %s183
    %s184 = sphi 0, %s181
    %s185 = sphi 0, %s184
    %s201 = sphi 0, %s185
    %s207 = sphi 0, %s209
    %s210 = sphi 0, %s207
    %s211 = sphi 0, %s210
    %s227 = sphi 0, %s211
    %s233 = sphi 0, %s235
    %s236 = sphi 0, %s233
    %s237 = sphi 0, %s236
    %s253 = sphi 0, %s237
    %s259 = sphi 0, %s261
    %s262 = sphi 0, %s259
    %s263 = sphi 0, %s262
    %s279 = sphi 0, %s263
    %s285 = sphi 0, %s287
    %s288 = sphi 0, %s285
    %s289 = sphi 0, %s288
    %s305 = sphi 0, %s289
    %s311 = sphi 0, %s313
    %s314 = sphi 0, %s311
    %s315 = sphi 0, %s314
    %s331 = sphi 0, %s315
    %s337 = sphi 0, %s339
    %s340 = sphi 0, %s337
    %s341 = sphi 0, %s340
    %s357 = sphi 0, %s341
    %s363 = sphi 0, %s365
    %s366 = sphi 0, %s363
    %s367 = sphi 0, %s366
    %s383 = sphi 0, %s367
    %s389 = sphi 0, %s391
    %s392 = sphi 0, %s389
    %s393 = sphi 0, %s392
    %s409 = sphi 0, %s393
    %s415 = sphi 0, %s417
    %s418 = sphi 0, %s415
    %s419 = sphi 0, %s418
    %s435 = sphi 0, %s419
    %s441 = sphi 0, %s443
    %s444 = sphi 0, %s441
    %s445 = sphi 0, %s444
    %s461 = sphi 0, %s445
    %s467 = sphi 0, %s469
    %s470 = sphi 0, %s467
    %s471 = sphi 0, %s470
    %s487 = sphi 0, %s471
    %s493 = sphi 0, %s495
    %s496 = sphi 0, %s493
    %s497 = sphi 0, %s496
    %s513 = sphi 0, %s497
    %s519 = sphi 0, %s521
    %s522 = sphi 0, %s519
    %s523 = sphi 0, %s522
    %s539 = sphi 0, %s523
    %s545 = sphi 0, %s547
    %s548 = sphi 0, %s545
    %s549 = sphi 0, %s548
    %s565 = sphi 0, %s549
    %s571 = sphi 0, %s573
    %s574 = sphi 0, %s571
    %s575 = sphi 0, %s574
    %s591 = sphi 0, %s575
    %s597 = sphi 0, %s599
    %s600 = sphi 0, %s597
    %s601 = sphi 0, %s600
    %s617 = sphi 0, %s601
    %s623 = sphi 0, %s625
    %s626 = sphi 0, %s623
    %s627 = sphi 0, %s626
    %s643 = sphi 0, %s627
    %s649 = sphi 0, %s651
    %s652 = sphi 0, %s649
    %s653 = sphi 0, %s652
    %s669 = sphi 0, %s653
  $region4: #{_lambda_.8} parent=0 // loop_header_branch
    %32 = sbr.rel (%p30) target = $region8
  $region5: #{_lambda_.8} parent=0 // loop_body
    %s34 = ssub.s32 %s29, 1
    %s35 = ssub.s32 %s29, 2
    %s42 = sadd.s32 1, %s37
    %p43 = scmp.ge.s32.totalorder %s42, 2
    %s44 = scalar_select %p43, 0, %s42
    %s45 = sadd.s32 1, %s36
    %s46 = scalar_select %p43, %s45, %s36
    %p47 = scmp.ge.s32.totalorder %s46, 4
    %s48 = scalar_select %p47, 0, %s46
    %s49 = ssub.s32 %s36, %s48
    %p50 = scmp.eq.s32.totalorder %s49, 0
    %s52 = sadd.s32 %s51, 1
    %s53 = scalar_select %p50, %s51, %s52
    %p56 = pneg %p50
    %p57 = scmp.eq.s32.totalorder %s29, 7
    %p58 = por %p56, %p57
    %p59 = scmp.ne.s32.totalorder %s51, %s54
    %p60 = scmp.eq.s32.totalorder %s29, 0
    %p61 = por %p59, %p60
    %p62 = scmp.ne.s32.totalorder %s51, %s54
    %p63 = scmp.eq.s32.totalorder %s34, 7
    %p64 = por %p62, %p63
    %p65 = scmp.ne.s32.totalorder %s54, %s55
    %p66 = scmp.eq.s32.totalorder %s34, 0
    %p67 = por %p65, %p66
    %p68 = scmp.ne.s32.totalorder %s54, %s55
    %p69 = scmp.eq.s32.totalorder %s35, 7
    %p70 = por %p68, %p69
    %p72 = scmp.ne.s32.totalorder %s55, %s71
    %p73 = scmp.eq.s32.totalorder %s35, 0
    %p74 = por %p72, %p73
    %s75 = ssub.s32 %s37, %s44
    %p76 = scmp.eq.s32.totalorder %s75, 0
    %s78 = sadd.s32 %s77, 1
    %s79 = scalar_select %p76, %s77, %s78
    %p82 = pneg %p76
    %p83 = scmp.eq.s32.totalorder %s29, 7
    %p84 = por %p82, %p83
    %p85 = scmp.ne.s32.totalorder %s77, %s80
    %p86 = scmp.eq.s32.totalorder %s29, 0
    %p87 = por %p85, %p86
    %p88 = scmp.ne.s32.totalorder %s77, %s80
    %p89 = scmp.eq.s32.totalorder %s34, 7
    %p90 = por %p88, %p89
    %p91 = scmp.ne.s32.totalorder %s80, %s81
    %p92 = scmp.eq.s32.totalorder %s34, 0
    %p93 = por %p91, %p92
    %p94 = scmp.ne.s32.totalorder %s80, %s81
    %p95 = scmp.eq.s32.totalorder %s35, 7
    %p96 = por %p94, %p95
    %p98 = scmp.ne.s32.totalorder %s81, %s97
    %p99 = scmp.eq.s32.totalorder %s35, 0
    %p100 = por %p98, %p99
    %s101 = ssub.s32 %s37, %s44
    %p102 = scmp.eq.s32.totalorder %s101, 0
    %s104 = sadd.s32 %s103, 1
    %s105 = scalar_select %p102, %s103, %s104
    %p108 = pneg %p102
    %p109 = scmp.eq.s32.totalorder %s29, 7
    %p110 = por %p108, %p109
    %p111 = scmp.ne.s32.totalorder %s103, %s106
    %p112 = scmp.eq.s32.totalorder %s29, 0
    %p113 = por %p111, %p112
    %p114 = scmp.ne.s32.totalorder %s103, %s106
    %p115 = scmp.eq.s32.totalorder %s34, 7
    %p116 = por %p114, %p115
    %p117 = scmp.ne.s32.totalorder %s106, %s107
    %p118 = scmp.eq.s32.totalorder %s34, 0
    %p119 = por %p117, %p118
    %p120 = scmp.ne.s32.totalorder %s106, %s107
    %p121 = scmp.eq.s32.totalorder %s35, 7
    %p122 = por %p120, %p121
    %p124 = scmp.ne.s32.totalorder %s107, %s123
    %p125 = scmp.eq.s32.totalorder %s35, 0
    %p126 = por %p124, %p125
    %s127 = ssub.s32 %s37, %s44
    %p128 = scmp.eq.s32.totalorder %s127, 0
    %s130 = sadd.s32 %s129, 1
    %s131 = scalar_select %p128, %s129, %s130
    %p134 = pneg %p128
    %p135 = scmp.eq.s32.totalorder %s29, 7
    %p136 = por %p134, %p135
    %p137 = scmp.ne.s32.totalorder %s129, %s132
    %p138 = scmp.eq.s32.totalorder %s29, 0
    %p139 = por %p137, %p138
    %p140 = scmp.ne.s32.totalorder %s129, %s132
    %p141 = scmp.eq.s32.totalorder %s34, 7
    %p142 = por %p140, %p141
    %p143 = scmp.ne.s32.totalorder %s132, %s133
    %p144 = scmp.eq.s32.totalorder %s34, 0
    %p145 = por %p143, %p144
    %p146 = scmp.ne.s32.totalorder %s132, %s133
    %p147 = scmp.eq.s32.totalorder %s35, 7
    %p148 = por %p146, %p147
    %p150 = scmp.ne.s32.totalorder %s133, %s149
    %p151 = scmp.eq.s32.totalorder %s35, 0
    %p152 = por %p150, %p151
    %s153 = ssub.s32 %s37, %s44
    %p154 = scmp.eq.s32.totalorder %s153, 0
    %s156 = sadd.s32 %s155, 1
    %s157 = scalar_select %p154, %s155, %s156
    %p160 = pneg %p154
    %p161 = scmp.eq.s32.totalorder %s29, 7
    %p162 = por %p160, %p161
    %p163 = scmp.ne.s32.totalorder %s155, %s158
    %p164 = scmp.eq.s32.totalorder %s29, 0
    %p165 = por %p163, %p164
    %p166 = scmp.ne.s32.totalorder %s155, %s158
    %p167 = scmp.eq.s32.totalorder %s34, 7
    %p168 = por %p166, %p167
    %p169 = scmp.ne.s32.totalorder %s158, %s159
    %p170 = scmp.eq.s32.totalorder %s34, 0
    %p171 = por %p169, %p170
    %p172 = scmp.ne.s32.totalorder %s158, %s159
    %p173 = scmp.eq.s32.totalorder %s35, 7
    %p174 = por %p172, %p173
    %p176 = scmp.ne.s32.totalorder %s159, %s175
    %p177 = scmp.eq.s32.totalorder %s35, 0
    %p178 = por %p176, %p177
    %s179 = ssub.s32 %s37, %s44
    %p180 = scmp.eq.s32.totalorder %s179, 0
    %s182 = sadd.s32 %s181, 1
    %s183 = scalar_select %p180, %s181, %s182
    %p186 = pneg %p180
    %p187 = scmp.eq.s32.totalorder %s29, 7
    %p188 = por %p186, %p187
    %p189 = scmp.ne.s32.totalorder %s181, %s184
    %p190 = scmp.eq.s32.totalorder %s29, 0
    %p191 = por %p189, %p190
    %p192 = scmp.ne.s32.totalorder %s181, %s184
    %p193 = scmp.eq.s32.totalorder %s34, 7
    %p194 = por %p192, %p193
    %p195 = scmp.ne.s32.totalorder %s184, %s185
    %p196 = scmp.eq.s32.totalorder %s34, 0
    %p197 = por %p195, %p196
    %p198 = scmp.ne.s32.totalorder %s184, %s185
    %p199 = scmp.eq.s32.totalorder %s35, 7
    %p200 = por %p198, %p199
    %p202 = scmp.ne.s32.totalorder %s185, %s201
    %p203 = scmp.eq.s32.totalorder %s35, 0
    %p204 = por %p202, %p203
    %s205 = ssub.s32 %s37, %s44
    %p206 = scmp.eq.s32.totalorder %s205, 0
    %s208 = sadd.s32 %s207, 1
    %s209 = scalar_select %p206, %s207, %s208
    %p212 = pneg %p206
    %p213 = scmp.eq.s32.totalorder %s29, 7
    %p214 = por %p212, %p213
    %p215 = scmp.ne.s32.totalorder %s207, %s210
    %p216 = scmp.eq.s32.totalorder %s29, 0
    %p217 = por %p215, %p216
    %p218 = scmp.ne.s32.totalorder %s207, %s210
    %p219 = scmp.eq.s32.totalorder %s34, 7
    %p220 = por %p218, %p219
    %p221 = scmp.ne.s32.totalorder %s210, %s211
    %p222 = scmp.eq.s32.totalorder %s34, 0
    %p223 = por %p221, %p222
    %p224 = scmp.ne.s32.totalorder %s210, %s211
    %p225 = scmp.eq.s32.totalorder %s35, 7
    %p226 = por %p224, %p225
    %p228 = scmp.ne.s32.totalorder %s211, %s227
    %p229 = scmp.eq.s32.totalorder %s35, 0
    %p230 = por %p228, %p229
    %s231 = ssub.s32 %s37, %s44
    %p232 = scmp.eq.s32.totalorder %s231, 0
    %s234 = sadd.s32 %s233, 1
    %s235 = scalar_select %p232, %s233, %s234
    %p238 = pneg %p232
    %p239 = scmp.eq.s32.totalorder %s29, 7
    %p240 = por %p238, %p239
    %p241 = scmp.ne.s32.totalorder %s233, %s236
    %p242 = scmp.eq.s32.totalorder %s29, 0
    %p243 = por %p241, %p242
    %p244 = scmp.ne.s32.totalorder %s233, %s236
    %p245 = scmp.eq.s32.totalorder %s34, 7
    %p246 = por %p244, %p245
    %p247 = scmp.ne.s32.totalorder %s236, %s237
    %p248 = scmp.eq.s32.totalorder %s34, 0
    %p249 = por %p247, %p248
    %p250 = scmp.ne.s32.totalorder %s236, %s237
    %p251 = scmp.eq.s32.totalorder %s35, 7
    %p252 = por %p250, %p251
    %p254 = scmp.ne.s32.totalorder %s237, %s253
    %p255 = scmp.eq.s32.totalorder %s35, 0
    %p256 = por %p254, %p255
    %s257 = ssub.s32 %s37, %s44
    %p258 = scmp.eq.s32.totalorder %s257, 0
    %s260 = sadd.s32 %s259, 1
    %s261 = scalar_select %p258, %s259, %s260
    %p264 = pneg %p258
    %p265 = scmp.eq.s32.totalorder %s29, 7
    %p266 = por %p264, %p265
    %p267 = scmp.ne.s32.totalorder %s259, %s262
    %p268 = scmp.eq.s32.totalorder %s29, 0
    %p269 = por %p267, %p268
    %p270 = scmp.ne.s32.totalorder %s259, %s262
    %p271 = scmp.eq.s32.totalorder %s34, 7
    %p272 = por %p270, %p271
    %p273 = scmp.ne.s32.totalorder %s262, %s263
    %p274 = scmp.eq.s32.totalorder %s34, 0
    %p275 = por %p273, %p274
    %p276 = scmp.ne.s32.totalorder %s262, %s263
    %p277 = scmp.eq.s32.totalorder %s35, 7
    %p278 = por %p276, %p277
    %p280 = scmp.ne.s32.totalorder %s263, %s279
    %p281 = scmp.eq.s32.totalorder %s35, 0
    %p282 = por %p280, %p281
    %s283 = ssub.s32 %s37, %s44
    %p284 = scmp.eq.s32.totalorder %s283, 0
    %s286 = sadd.s32 %s285, 1
    %s287 = scalar_select %p284, %s285, %s286
    %p290 = pneg %p284
    %p291 = scmp.eq.s32.totalorder %s29, 7
    %p292 = por %p290, %p291
    %p293 = scmp.ne.s32.totalorder %s285, %s288
    %p294 = scmp.eq.s32.totalorder %s29, 0
    %p295 = por %p293, %p294
    %p296 = scmp.ne.s32.totalorder %s285, %s288
    %p297 = scmp.eq.s32.totalorder %s34, 7
    %p298 = por %p296, %p297
    %p299 = scmp.ne.s32.totalorder %s288, %s289
    %p300 = scmp.eq.s32.totalorder %s34, 0
    %p301 = por %p299, %p300
    %p302 = scmp.ne.s32.totalorder %s288, %s289
    %p303 = scmp.eq.s32.totalorder %s35, 7
    %p304 = por %p302, %p303
    %p306 = scmp.ne.s32.totalorder %s289, %s305
    %p307 = scmp.eq.s32.totalorder %s35, 0
    %p308 = por %p306, %p307
    %s309 = ssub.s32 %s37, %s44
    %p310 = scmp.eq.s32.totalorder %s309, 0
    %s312 = sadd.s32 %s311, 1
    %s313 = scalar_select %p310, %s311, %s312
    %p316 = pneg %p310
    %p317 = scmp.eq.s32.totalorder %s29, 7
    %p318 = por %p316, %p317
    %p319 = scmp.ne.s32.totalorder %s311, %s314
    %p320 = scmp.eq.s32.totalorder %s29, 0
    %p321 = por %p319, %p320
    %p322 = scmp.ne.s32.totalorder %s311, %s314
    %p323 = scmp.eq.s32.totalorder %s34, 7
    %p324 = por %p322, %p323
    %p325 = scmp.ne.s32.totalorder %s314, %s315
    %p326 = scmp.eq.s32.totalorder %s34, 0
    %p327 = por %p325, %p326
    %p328 = scmp.ne.s32.totalorder %s314, %s315
    %p329 = scmp.eq.s32.totalorder %s35, 7
    %p330 = por %p328, %p329
    %p332 = scmp.ne.s32.totalorder %s315, %s331
    %p333 = scmp.eq.s32.totalorder %s35, 0
    %p334 = por %p332, %p333
    %s335 = ssub.s32 %s37, %s44
    %p336 = scmp.eq.s32.totalorder %s335, 0
    %s338 = sadd.s32 %s337, 1
    %s339 = scalar_select %p336, %s337, %s338
    %p342 = pneg %p336
    %p343 = scmp.eq.s32.totalorder %s29, 7
    %p344 = por %p342, %p343
    %p345 = scmp.ne.s32.totalorder %s337, %s340
    %p346 = scmp.eq.s32.totalorder %s29, 0
    %p347 = por %p345, %p346
    %p348 = scmp.ne.s32.totalorder %s337, %s340
    %p349 = scmp.eq.s32.totalorder %s34, 7
    %p350 = por %p348, %p349
    %p351 = scmp.ne.s32.totalorder %s340, %s341
    %p352 = scmp.eq.s32.totalorder %s34, 0
    %p353 = por %p351, %p352
    %p354 = scmp.ne.s32.totalorder %s340, %s341
    %p355 = scmp.eq.s32.totalorder %s35, 7
    %p356 = por %p354, %p355
    %p358 = scmp.ne.s32.totalorder %s341, %s357
    %p359 = scmp.eq.s32.totalorder %s35, 0
    %p360 = por %p358, %p359
    %s361 = ssub.s32 %s37, %s44
    %p362 = scmp.eq.s32.totalorder %s361, 0
    %s364 = sadd.s32 %s363, 1
    %s365 = scalar_select %p362, %s363, %s364
    %p368 = pneg %p362
    %p369 = scmp.eq.s32.totalorder %s29, 7
    %p370 = por %p368, %p369
    %p371 = scmp.ne.s32.totalorder %s363, %s366
    %p372 = scmp.eq.s32.totalorder %s29, 0
    %p373 = por %p371, %p372
    %p374 = scmp.ne.s32.totalorder %s363, %s366
    %p375 = scmp.eq.s32.totalorder %s34, 7
    %p376 = por %p374, %p375
    %p377 = scmp.ne.s32.totalorder %s366, %s367
    %p378 = scmp.eq.s32.totalorder %s34, 0
    %p379 = por %p377, %p378
    %p380 = scmp.ne.s32.totalorder %s366, %s367
    %p381 = scmp.eq.s32.totalorder %s35, 7
    %p382 = por %p380, %p381
    %p384 = scmp.ne.s32.totalorder %s367, %s383
    %p385 = scmp.eq.s32.totalorder %s35, 0
    %p386 = por %p384, %p385
    %s387 = ssub.s32 %s37, %s44
    %p388 = scmp.eq.s32.totalorder %s387, 0
    %s390 = sadd.s32 %s389, 1
    %s391 = scalar_select %p388, %s389, %s390
    %p394 = pneg %p388
    %p395 = scmp.eq.s32.totalorder %s29, 7
    %p396 = por %p394, %p395
    %p397 = scmp.ne.s32.totalorder %s389, %s392
    %p398 = scmp.eq.s32.totalorder %s29, 0
    %p399 = por %p397, %p398
    %p400 = scmp.ne.s32.totalorder %s389, %s392
    %p401 = scmp.eq.s32.totalorder %s34, 7
    %p402 = por %p400, %p401
    %p403 = scmp.ne.s32.totalorder %s392, %s393
    %p404 = scmp.eq.s32.totalorder %s34, 0
    %p405 = por %p403, %p404
    %p406 = scmp.ne.s32.totalorder %s392, %s393
    %p407 = scmp.eq.s32.totalorder %s35, 7
    %p408 = por %p406, %p407
    %p410 = scmp.ne.s32.totalorder %s393, %s409
    %p411 = scmp.eq.s32.totalorder %s35, 0
    %p412 = por %p410, %p411
    %s413 = ssub.s32 %s37, %s44
    %p414 = scmp.eq.s32.totalorder %s413, 0
    %s416 = sadd.s32 %s415, 1
    %s417 = scalar_select %p414, %s415, %s416
    %p420 = pneg %p414
    %p421 = scmp.eq.s32.totalorder %s29, 7
    %p422 = por %p420, %p421
    %p423 = scmp.ne.s32.totalorder %s415, %s418
    %p424 = scmp.eq.s32.totalorder %s29, 0
    %p425 = por %p423, %p424
    %p426 = scmp.ne.s32.totalorder %s415, %s418
    %p427 = scmp.eq.s32.totalorder %s34, 7
    %p428 = por %p426, %p427
    %p429 = scmp.ne.s32.totalorder %s418, %s419
    %p430 = scmp.eq.s32.totalorder %s34, 0
    %p431 = por %p429, %p430
    %p432 = scmp.ne.s32.totalorder %s418, %s419
    %p433 = scmp.eq.s32.totalorder %s35, 7
    %p434 = por %p432, %p433
    %p436 = scmp.ne.s32.totalorder %s419, %s435
    %p437 = scmp.eq.s32.totalorder %s35, 0
    %p438 = por %p436, %p437
    %s439 = ssub.s32 %s37, %s44
    %p440 = scmp.eq.s32.totalorder %s439, 0
    %s442 = sadd.s32 %s441, 1
    %s443 = scalar_select %p440, %s441, %s442
    %p446 = pneg %p440
    %p447 = scmp.eq.s32.totalorder %s29, 7
    %p448 = por %p446, %p447
    %p449 = scmp.ne.s32.totalorder %s441, %s444
    %p450 = scmp.eq.s32.totalorder %s29, 0
    %p451 = por %p449, %p450
    %p452 = scmp.ne.s32.totalorder %s441, %s444
    %p453 = scmp.eq.s32.totalorder %s34, 7
    %p454 = por %p452, %p453
    %p455 = scmp.ne.s32.totalorder %s444, %s445
    %p456 = scmp.eq.s32.totalorder %s34, 0
    %p457 = por %p455, %p456
    %p458 = scmp.ne.s32.totalorder %s444, %s445
    %p459 = scmp.eq.s32.totalorder %s35, 7
    %p460 = por %p458, %p459
    %p462 = scmp.ne.s32.totalorder %s445, %s461
    %p463 = scmp.eq.s32.totalorder %s35, 0
    %p464 = por %p462, %p463
    %s465 = ssub.s32 %s37, %s44
    %p466 = scmp.eq.s32.totalorder %s465, 0
    %s468 = sadd.s32 %s467, 1
    %s469 = scalar_select %p466, %s467, %s468
    %p472 = pneg %p466
    %p473 = scmp.eq.s32.totalorder %s29, 7
    %p474 = por %p472, %p473
    %p475 = scmp.ne.s32.totalorder %s467, %s470
    %p476 = scmp.eq.s32.totalorder %s29, 0
    %p477 = por %p475, %p476
    %p478 = scmp.ne.s32.totalorder %s467, %s470
    %p479 = scmp.eq.s32.totalorder %s34, 7
    %p480 = por %p478, %p479
    %p481 = scmp.ne.s32.totalorder %s470, %s471
    %p482 = scmp.eq.s32.totalorder %s34, 0
    %p483 = por %p481, %p482
    %p484 = scmp.ne.s32.totalorder %s470, %s471
    %p485 = scmp.eq.s32.totalorder %s35, 7
    %p486 = por %p484, %p485
    %p488 = scmp.ne.s32.totalorder %s471, %s487
    %p489 = scmp.eq.s32.totalorder %s35, 0
    %p490 = por %p488, %p489
    %s491 = ssub.s32 %s37, %s44
    %p492 = scmp.eq.s32.totalorder %s491, 0
    %s494 = sadd.s32 %s493, 1
    %s495 = scalar_select %p492, %s493, %s494
    %p498 = pneg %p492
    %p499 = scmp.eq.s32.totalorder %s29, 7
    %p500 = por %p498, %p499
    %p501 = scmp.ne.s32.totalorder %s493, %s496
    %p502 = scmp.eq.s32.totalorder %s29, 0
    %p503 = por %p501, %p502
    %p504 = scmp.ne.s32.totalorder %s493, %s496
    %p505 = scmp.eq.s32.totalorder %s34, 7
    %p506 = por %p504, %p505
    %p507 = scmp.ne.s32.totalorder %s496, %s497
    %p508 = scmp.eq.s32.totalorder %s34, 0
    %p509 = por %p507, %p508
    %p510 = scmp.ne.s32.totalorder %s496, %s497
    %p511 = scmp.eq.s32.totalorder %s35, 7
    %p512 = por %p510, %p511
    %p514 = scmp.ne.s32.totalorder %s497, %s513
    %p515 = scmp.eq.s32.totalorder %s35, 0
    %p516 = por %p514, %p515
    %s517 = ssub.s32 %s37, %s44
    %p518 = scmp.eq.s32.totalorder %s517, 0
    %s520 = sadd.s32 %s519, 1
    %s521 = scalar_select %p518, %s519, %s520
    %p524 = pneg %p518
    %p525 = scmp.eq.s32.totalorder %s29, 7
    %p526 = por %p524, %p525
    %p527 = scmp.ne.s32.totalorder %s519, %s522
    %p528 = scmp.eq.s32.totalorder %s29, 0
    %p529 = por %p527, %p528
    %p530 = scmp.ne.s32.totalorder %s519, %s522
    %p531 = scmp.eq.s32.totalorder %s34, 7
    %p532 = por %p530, %p531
    %p533 = scmp.ne.s32.totalorder %s522, %s523
    %p534 = scmp.eq.s32.totalorder %s34, 0
    %p535 = por %p533, %p534
    %p536 = scmp.ne.s32.totalorder %s522, %s523
    %p537 = scmp.eq.s32.totalorder %s35, 7
    %p538 = por %p536, %p537
    %p540 = scmp.ne.s32.totalorder %s523, %s539
    %p541 = scmp.eq.s32.totalorder %s35, 0
    %p542 = por %p540, %p541
    %s543 = ssub.s32 %s37, %s44
    %p544 = scmp.eq.s32.totalorder %s543, 0
    %s546 = sadd.s32 %s545, 1
    %s547 = scalar_select %p544, %s545, %s546
    %p550 = pneg %p544
    %p551 = scmp.eq.s32.totalorder %s29, 7
    %p552 = por %p550, %p551
    %p553 = scmp.ne.s32.totalorder %s545, %s548
    %p554 = scmp.eq.s32.totalorder %s29, 0
    %p555 = por %p553, %p554
    %p556 = scmp.ne.s32.totalorder %s545, %s548
    %p557 = scmp.eq.s32.totalorder %s34, 7
    %p558 = por %p556, %p557
    %p559 = scmp.ne.s32.totalorder %s548, %s549
    %p560 = scmp.eq.s32.totalorder %s34, 0
    %p561 = por %p559, %p560
    %p562 = scmp.ne.s32.totalorder %s548, %s549
    %p563 = scmp.eq.s32.totalorder %s35, 7
    %p564 = por %p562, %p563
    %p566 = scmp.ne.s32.totalorder %s549, %s565
    %p567 = scmp.eq.s32.totalorder %s35, 0
    %p568 = por %p566, %p567
    %s569 = ssub.s32 %s37, %s44
    %p570 = scmp.eq.s32.totalorder %s569, 0
    %s572 = sadd.s32 %s571, 1
    %s573 = scalar_select %p570, %s571, %s572
    %p576 = pneg %p570
    %p577 = scmp.eq.s32.totalorder %s29, 7
    %p578 = por %p576, %p577
    %p579 = scmp.ne.s32.totalorder %s571, %s574
    %p580 = scmp.eq.s32.totalorder %s29, 0
    %p581 = por %p579, %p580
    %p582 = scmp.ne.s32.totalorder %s571, %s574
    %p583 = scmp.eq.s32.totalorder %s34, 7
    %p584 = por %p582, %p583
    %p585 = scmp.ne.s32.totalorder %s574, %s575
    %p586 = scmp.eq.s32.totalorder %s34, 0
    %p587 = por %p585, %p586
    %p588 = scmp.ne.s32.totalorder %s574, %s575
    %p589 = scmp.eq.s32.totalorder %s35, 7
    %p590 = por %p588, %p589
    %p592 = scmp.ne.s32.totalorder %s575, %s591
    %p593 = scmp.eq.s32.totalorder %s35, 0
    %p594 = por %p592, %p593
    %s595 = ssub.s32 %s37, %s44
    %p596 = scmp.eq.s32.totalorder %s595, 0
    %s598 = sadd.s32 %s597, 1
    %s599 = scalar_select %p596, %s597, %s598
    %p602 = pneg %p596
    %p603 = scmp.eq.s32.totalorder %s29, 7
    %p604 = por %p602, %p603
    %p605 = scmp.ne.s32.totalorder %s597, %s600
    %p606 = scmp.eq.s32.totalorder %s29, 0
    %p607 = por %p605, %p606
    %p608 = scmp.ne.s32.totalorder %s597, %s600
    %p609 = scmp.eq.s32.totalorder %s34, 7
    %p610 = por %p608, %p609
    %p611 = scmp.ne.s32.totalorder %s600, %s601
    %p612 = scmp.eq.s32.totalorder %s34, 0
    %p613 = por %p611, %p612
    %p614 = scmp.ne.s32.totalorder %s600, %s601
    %p615 = scmp.eq.s32.totalorder %s35, 7
    %p616 = por %p614, %p615
    %p618 = scmp.ne.s32.totalorder %s601, %s617
    %p619 = scmp.eq.s32.totalorder %s35, 0
    %p620 = por %p618, %p619
    %s621 = ssub.s32 %s37, %s44
    %p622 = scmp.eq.s32.totalorder %s621, 0
    %s624 = sadd.s32 %s623, 1
    %s625 = scalar_select %p622, %s623, %s624
    %p628 = pneg %p622
    %p629 = scmp.eq.s32.totalorder %s29, 7
    %p630 = por %p628, %p629
    %p631 = scmp.ne.s32.totalorder %s623, %s626
    %p632 = scmp.eq.s32.totalorder %s29, 0
    %p633 = por %p631, %p632
    %p634 = scmp.ne.s32.totalorder %s623, %s626
    %p635 = scmp.eq.s32.totalorder %s34, 7
    %p636 = por %p634, %p635
    %p637 = scmp.ne.s32.totalorder %s626, %s627
    %p638 = scmp.eq.s32.totalorder %s34, 0
    %p639 = por %p637, %p638
    %p640 = scmp.ne.s32.totalorder %s626, %s627
    %p641 = scmp.eq.s32.totalorder %s35, 7
    %p642 = por %p640, %p641
    %p644 = scmp.ne.s32.totalorder %s627, %s643
    %p645 = scmp.eq.s32.totalorder %s35, 0
    %p646 = por %p644, %p645
    %s647 = ssub.s32 %s36, %s48
    %p648 = scmp.eq.s32.totalorder %s647, 0
    %s650 = sadd.s32 %s649, 1
    %s651 = scalar_select %p648, %s649, %s650
    %p654 = pneg %p648
    %p655 = scmp.eq.s32.totalorder %s29, 7
    %p656 = por %p654, %p655
    %p657 = scmp.ne.s32.totalorder %s649, %s652
    %p658 = scmp.eq.s32.totalorder %s29, 0
    %p659 = por %p657, %p658
    %p660 = scmp.ne.s32.totalorder %s649, %s652
    %p661 = scmp.eq.s32.totalorder %s34, 7
    %p662 = por %p660, %p661
    %p663 = scmp.ne.s32.totalorder %s652, %s653
    %p664 = scmp.eq.s32.totalorder %s34, 0
    %p665 = por %p663, %p664
    %p666 = scmp.ne.s32.totalorder %s652, %s653
    %p667 = scmp.eq.s32.totalorder %s35, 7
    %p668 = por %p666, %p667
    %p670 = scmp.ne.s32.totalorder %s653, %s669
    %p671 = scmp.eq.s32.totalorder %s35, 0
    %p672 = por %p670, %p671
    %p673 = scmp.le.s32.totalorder 1, %s29
    %p674 = scmp.lt.s32.totalorder %s29, 9
    %p675 = pnand %p673, %p674
    %p676 = pneg %p675
    // Predicated region
    $region9: #{_lambda_.8} parent=5 // pred_check
      _
    $region10: #{_lambda_.8} parent=5 // pred_check_branch
      %678 = sbr.rel (%p675) target = $region12
    $region11: #{_lambda_.8} parent=5 // pred_region
      %s679 = ssub.s32 %s29, 1
    $region12: #{_lambda_.8} parent=5 // pred_fallthru
      _
    %p680 = scmp.lt.s32.totalorder %s29, 8
    // Predicated region
    $region13: #{_lambda_.8} parent=5 // pred_check
      %p681 = pneg %p680
    $region14: #{_lambda_.8} parent=5 // pred_check_branch
      %683 = sbr.rel (%p681) target = $region16
    $region15: #{_lambda_.8} parent=5 // pred_region
      // Predicated region
      $region17: #{_lambda_.8} parent=15 // pred_check
        %p684 = pneg %p61
      $region18: #{_lambda_.8} parent=15 // pred_check_branch
        %686 = sbr.rel (%p684) target = $region20
      $region19: #{_lambda_.8} parent=15 // pred_region
        %p687 = scmp.lt.s32.totalorder %s36, 3
        %s688 = scalar_select %p687, %s36, 3
        %s689 = smul.addr %s688, 8
        %s690 = scalar_lea.vmem %s0, %s689
      $region20: #{_lambda_.8} parent=15 // pred_fallthru
        _
      // Predicated region
      $region21: #{_lambda_.8} parent=15 // pred_check
        %p691 = pneg %p87
      $region22: #{_lambda_.8} parent=15 // pred_check_branch
        %693 = sbr.rel (%p691) target = $region24
      $region23: #{_lambda_.8} parent=15 // pred_region
        %p694 = scmp.lt.s32.totalorder %s37, 1
        %s695 = scalar_select %p694, %s37, 1
        %s696 = scalar_lea.vmem %s1, %s695
      $region24: #{_lambda_.8} parent=15 // pred_fallthru
        _
      // Predicated region
      $region25: #{_lambda_.8} parent=15 // pred_check
        %p697 = pneg %p113
      $region26: #{_lambda_.8} parent=15 // pred_check_branch
        %699 = sbr.rel (%p697) target = $region28
      $region27: #{_lambda_.8} parent=15 // pred_region
        %p700 = scmp.lt.s32.totalorder %s37, 1
        %s701 = scalar_select %p700, %s37, 1
        %s702 = scalar_lea.vmem %s2, %s701
      $region28: #{_lambda_.8} parent=15 // pred_fallthru
        _
      // Predicated region
      $region29: #{_lambda_.8} parent=15 // pred_check
        %p703 = pneg %p139
      $region30: #{_lambda_.8} parent=15 // pred_check_branch
        %705 = sbr.rel (%p703) target = $region32
      $region31: #{_lambda_.8} parent=15 // pred_region
        %p706 = scmp.lt.s32.totalorder %s37, 1
        %s707 = scalar_select %p706, %s37, 1
        %s708 = smul.addr %s707, 16
        %s709 = smul.addr %s708, 4
        %s710 = scalar_lea.vmem %s3, %s709
      $region32: #{_lambda_.8} parent=15 // pred_fallthru
        _
      // Predicated region
      $region33: #{_lambda_.8} parent=15 // pred_check
        %p711 = pneg %p165
      $region34: #{_lambda_.8} parent=15 // pred_check_branch
        %713 = sbr.rel (%p711) target = $region36
      $region35: #{_lambda_.8} parent=15 // pred_region
        %p714 = scmp.lt.s32.totalorder %s37, 1
        %s715 = scalar_select %p714, %s37, 1
        %s716 = smul.addr %s715, 16
        %s717 = smul.addr %s716, 4
        %s718 = scalar_lea.vmem %s4, %s717
      $region36: #{_lambda_.8} parent=15 // pred_fallthru
        _
      // Predicated region
      $region37: #{_lambda_.8} parent=15 // pred_check
        %p719 = pneg %p191
      $region38: #{_lambda_.8} parent=15 // pred_check_branch
        %721 = sbr.rel (%p719) target = $region40
      $region39: #{_lambda_.8} parent=15 // pred_region
        %p722 = scmp.lt.s32.totalorder %s37, 1
        %s723 = scalar_select %p722, %s37, 1
        %s724 = smul.addr %s723, 16
        %s725 = smul.addr %s724, 4
        %s726 = scalar_lea.vmem %s5, %s725
      $region40: #{_lambda_.8} parent=15 // pred_fallthru
        _
      // Predicated region
      $region41: #{_lambda_.8} parent=15 // pred_check
        %p727 = pneg %p217
      $region42: #{_lambda_.8} parent=15 // pred_check_branch
        %729 = sbr.rel (%p727) target = $region44
      $region43: #{_lambda_.8} parent=15 // pred_region
        %p730 = scmp.lt.s32.totalorder %s37, 1
        %s731 = scalar_select %p730, %s37, 1
        %s732 = smul.addr %s731, 4
        %s733 = scalar_lea.vmem %s6, %s732
      $region44: #{_lambda_.8} parent=15 // pred_fallthru
        _
      // Predicated region
      $region45: #{_lambda_.8} parent=15 // pred_check
        %p734 = pneg %p243
      $region46: #{_lambda_.8} parent=15 // pred_check_branch
        %736 = sbr.rel (%p734) target = $region48
      $region47: #{_lambda_.8} parent=15 // pred_region
        %p737 = scmp.lt.s32.totalorder %s37, 1
        %s738 = scalar_select %p737, %s37, 1
        %s739 = smul.addr %s738, 4
        %s740 = scalar_lea.vmem %s7, %s739
      $region48: #{_lambda_.8} parent=15 // pred_fallthru
        _
      // Predicated region
      $region49: #{_lambda_.8} parent=15 // pred_check
        %p741 = pneg %p269
      $region50: #{_lambda_.8} parent=15 // pred_check_branch
        %743 = sbr.rel (%p741) target = $region52
      $region51: #{_lambda_.8} parent=15 // pred_region
        %p744 = scmp.lt.s32.totalorder %s37, 1
        %s745 = scalar_select %p744, %s37, 1
        %s746 = smul.addr %s745, 4
        %s747 = scalar_lea.vmem %s8, %s746
      $region52: #{_lambda_.8} parent=15 // pred_fallthru
        _
      // Predicated region
      $region53: #{_lambda_.8} parent=15 // pred_check
        %p748 = pneg %p295
      $region54: #{_lambda_.8} parent=15 // pred_check_branch
        %750 = sbr.rel (%p748) target = $region56
      $region55: #{_lambda_.8} parent=15 // pred_region
        %p751 = scmp.lt.s32.totalorder %s37, 1
        %s752 = scalar_select %p751, %s37, 1
        %s753 = smul.addr %s752, 4
        %s754 = smul.addr %s753, 4
        %s755 = scalar_lea.vmem %s9, %s754
      $region56: #{_lambda_.8} parent=15 // pred_fallthru
        _
      // Predicated region
      $region57: #{_lambda_.8} parent=15 // pred_check
        %p756 = pneg %p321
      $region58: #{_lambda_.8} parent=15 // pred_check_branch
        %758 = sbr.rel (%p756) target = $region60
      $region59: #{_lambda_.8} parent=15 // pred_region
        %p759 = scmp.lt.s32.totalorder %s37, 1
        %s760 = scalar_select %p759, %s37, 1
        %s761 = scalar_lea.vmem %s10, %s760
      $region60: #{_lambda_.8} parent=15 // pred_fallthru
        _
      // Predicated region
      $region61: #{_lambda_.8} parent=15 // pred_check
        %p762 = pneg %p347
      $region62: #{_lambda_.8} parent=15 // pred_check_branch
        %764 = sbr.rel (%p762) target = $region64
      $region63: #{_lambda_.8} parent=15 // pred_region
        %p765 = scmp.lt.s32.totalorder %s37, 1
        %s766 = scalar_select %p765, %s37, 1
        %s767 = scalar_lea.vmem %s11, %s766
      $region64: #{_lambda_.8} parent=15 // pred_fallthru
        _
      // Predicated region
      $region65: #{_lambda_.8} parent=15 // pred_check
        %p768 = pneg %p373
      $region66: #{_lambda_.8} parent=15 // pred_check_branch
        %770 = sbr.rel (%p768) target = $region68
      $region67: #{_lambda_.8} parent=15 // pred_region
        %p771 = scmp.lt.s32.totalorder %s37, 1
        %s772 = scalar_select %p771, %s37, 1
        %s773 = scalar_lea.vmem %s12, %s772
      $region68: #{_lambda_.8} parent=15 // pred_fallthru
        _
      // Predicated region
      $region69: #{_lambda_.8} parent=15 // pred_check
        %p774 = pneg %p399
      $region70: #{_lambda_.8} parent=15 // pred_check_branch
        %776 = sbr.rel (%p774) target = $region72
      $region71: #{_lambda_.8} parent=15 // pred_region
        %p777 = scmp.lt.s32.totalorder %s37, 1
        %s778 = scalar_select %p777, %s37, 1
        %s779 = smul.addr %s778, 4
        %s780 = smul.addr %s779, 4
        %s781 = scalar_lea.vmem %s13, %s780
      $region72: #{_lambda_.8} parent=15 // pred_fallthru
        _
      // Predicated region
      $region73: #{_lambda_.8} parent=15 // pred_check
        %p782 = pneg %p425
      $region74: #{_lambda_.8} parent=15 // pred_check_branch
        %784 = sbr.rel (%p782) target = $region76
      $region75: #{_lambda_.8} parent=15 // pred_region
        %p785 = scmp.lt.s32.totalorder %s37, 1
        %s786 = scalar_select %p785, %s37, 1
        %s787 = scalar_lea.vmem %s14, %s786
      $region76: #{_lambda_.8} parent=15 // pred_fallthru
        _
      // Predicated region
      $region77: #{_lambda_.8} parent=15 // pred_check
        %p788 = pneg %p451
      $region78: #{_lambda_.8} parent=15 // pred_check_branch
        %790 = sbr.rel (%p788) target = $region80
      $region79: #{_lambda_.8} parent=15 // pred_region
        %p791 = scmp.lt.s32.totalorder %s37, 1
        %s792 = scalar_select %p791, %s37, 1
        %s793 = smul.addr %s792, 16
        %s794 = smul.addr %s793, 4
        %s795 = scalar_lea.vmem %s15, %s794
      $region80: #{_lambda_.8} parent=15 // pred_fallthru
        _
      // Predicated region
      $region81: #{_lambda_.8} parent=15 // pred_check
        %p796 = pneg %p477
      $region82: #{_lambda_.8} parent=15 // pred_check_branch
        %798 = sbr.rel (%p796) target = $region84
      $region83: #{_lambda_.8} parent=15 // pred_region
        %p799 = scmp.lt.s32.totalorder %s37, 1
        %s800 = scalar_select %p799, %s37, 1
        %s801 = scalar_lea.vmem %s16, %s800
      $region84: #{_lambda_.8} parent=15 // pred_fallthru
        _
      // Predicated region
      $region85: #{_lambda_.8} parent=15 // pred_check
        %p802 = pneg %p503
      $region86: #{_lambda_.8} parent=15 // pred_check_branch
        %804 = sbr.rel (%p802) target = $region88
      $region87: #{_lambda_.8} parent=15 // pred_region
        %p805 = scmp.lt.s32.totalorder %s37, 1
        %s806 = scalar_select %p805, %s37, 1
        %s807 = smul.addr %s806, 4
        %s808 = smul.addr %s807, 4
        %s809 = scalar_lea.vmem %s17, %s808
      $region88: #{_lambda_.8} parent=15 // pred_fallthru
        _
      // Predicated region
      $region89: #{_lambda_.8} parent=15 // pred_check
        %p810 = pneg %p529
      $region90: #{_lambda_.8} parent=15 // pred_check_branch
        %812 = sbr.rel (%p810) target = $region92
      $region91: #{_lambda_.8} parent=15 // pred_region
        %p813 = scmp.lt.s32.totalorder %s37, 1
        %s814 = scalar_select %p813, %s37, 1
        %s815 = scalar_lea.vmem %s18, %s814
      $region92: #{_lambda_.8} parent=15 // pred_fallthru
        _
      // Predicated region
      $region93: #{_lambda_.8} parent=15 // pred_check
        %p816 = pneg %p555
      $region94: #{_lambda_.8} parent=15 // pred_check_branch
        %818 = sbr.rel (%p816) target = $region96
      $region95: #{_lambda_.8} parent=15 // pred_region
        %p819 = scmp.lt.s32.totalorder %s37, 1
        %s820 = scalar_select %p819, %s37, 1
        %s821 = smul.addr %s820, 4
        %s822 = scalar_lea.vmem %s19, %s821
      $region96: #{_lambda_.8} parent=15 // pred_fallthru
        _
      // Predicated region
      $region97: #{_lambda_.8} parent=15 // pred_check
        %p823 = pneg %p581
      $region98: #{_lambda_.8} parent=15 // pred_check_branch
        %825 = sbr.rel (%p823) target = $region100
      $region99: #{_lambda_.8} parent=15 // pred_region
        %p826 = scmp.lt.s32.totalorder %s37, 1
        %s827 = scalar_select %p826, %s37, 1
        %s828 = scalar_lea.vmem %s20, %s827
      $region100: #{_lambda_.8} parent=15 // pred_fallthru
        _
      // Predicated region
      $region101: #{_lambda_.8} parent=15 // pred_check
        %p829 = pneg %p607
      $region102: #{_lambda_.8} parent=15 // pred_check_branch
        %831 = sbr.rel (%p829) target = $region104
      $region103: #{_lambda_.8} parent=15 // pred_region
        %p832 = scmp.lt.s32.totalorder %s37, 1
        %s833 = scalar_select %p832, %s37, 1
        %s834 = smul.addr %s833, 4
        %s835 = scalar_lea.vmem %s21, %s834
      $region104: #{_lambda_.8} parent=15 // pred_fallthru
        _
      // Predicated region
      $region105: #{_lambda_.8} parent=15 // pred_check
        %p836 = pneg %p633
      $region106: #{_lambda_.8} parent=15 // pred_check_branch
        %838 = sbr.rel (%p836) target = $region108
      $region107: #{_lambda_.8} parent=15 // pred_region
        %p839 = scmp.lt.s32.totalorder %s37, 1
        %s840 = scalar_select %p839, %s37, 1
        %s841 = scalar_lea.vmem %s22, %s840
      $region108: #{_lambda_.8} parent=15 // pred_fallthru
        _
    $region16: #{_lambda_.8} parent=5 // pred_fallthru
      _
    %p842 = scmp.le.s32.totalorder 1, %s29
    %p843 = scmp.lt.s32.totalorder %s29, 9
    %p844 = pnand %p842, %p843
    %p845 = pneg %p844
    // Predicated region
    $region109: #{_lambda_.8} parent=5 // pred_check
      _
    $region110: #{_lambda_.8} parent=5 // pred_check_branch
      %847 = sbr.rel (%p844) target = $region112
    $region111: #{_lambda_.8} parent=5 // pred_region
      %s848 = ssub.s32 %s29, 1
      %p849 = scmp.lt.s32.totalorder %s38, 3
      %s850 = scalar_select %p849, %s38, 3
      %s851 = smul.addr %s850, 8
      %s852 = scalar_lea.vmem %s0, %s851
      %p853 = pneg %p67
      %p854 = pneg %p64
      %p855 = scmp.lt.s32.totalorder %s39, 1
      %s856 = scalar_select %p855, %s39, 1
      %s857 = scalar_lea.vmem %s1, %s856
      %p858 = pneg %p93
      %p859 = pneg %p90
      %p860 = scmp.lt.s32.totalorder %s39, 1
      %s861 = scalar_select %p860, %s39, 1
      %s862 = scalar_lea.vmem %s2, %s861
      %p863 = pneg %p119
      %p864 = pneg %p116
      %p865 = scmp.lt.s32.totalorder %s39, 1
      %s866 = scalar_select %p865, %s39, 1
      %s867 = smul.addr %s866, 16
      %s868 = smul.addr %s867, 4
      %s869 = scalar_lea.vmem %s3, %s868
      %p870 = pneg %p145
      %p871 = pneg %p142
      %p872 = scmp.lt.s32.totalorder %s39, 1
      %s873 = scalar_select %p872, %s39, 1
      %s874 = smul.addr %s873, 16
      %s875 = smul.addr %s874, 4
      %s876 = scalar_lea.vmem %s4, %s875
      %p877 = pneg %p171
      %p878 = pneg %p168
      %p879 = scmp.lt.s32.totalorder %s39, 1
      %s880 = scalar_select %p879, %s39, 1
      %s881 = smul.addr %s880, 16
      %s882 = smul.addr %s881, 4
      %s883 = scalar_lea.vmem %s5, %s882
      %p884 = pneg %p197
      %p885 = pneg %p194
      %p886 = scmp.lt.s32.totalorder %s39, 1
      %s887 = scalar_select %p886, %s39, 1
      %s888 = smul.addr %s887, 4
      %s889 = scalar_lea.vmem %s6, %s888
      %p890 = pneg %p223
      %p891 = pneg %p220
      %p892 = scmp.lt.s32.totalorder %s39, 1
      %s893 = scalar_select %p892, %s39, 1
      %s894 = smul.addr %s893, 4
      %s895 = scalar_lea.vmem %s7, %s894
      %p896 = pneg %p249
      %p897 = pneg %p246
      %p898 = scmp.lt.s32.totalorder %s39, 1
      %s899 = scalar_select %p898, %s39, 1
      %s900 = smul.addr %s899, 4
      %s901 = scalar_lea.vmem %s8, %s900
      %p902 = pneg %p275
      %p903 = pneg %p272
      %p904 = scmp.lt.s32.totalorder %s39, 1
      %s905 = scalar_select %p904, %s39, 1
      %s906 = smul.addr %s905, 4
      %s907 = smul.addr %s906, 4
      %s908 = scalar_lea.vmem %s9, %s907
      %p909 = pneg %p301
      %p910 = pneg %p298
      %p911 = scmp.lt.s32.totalorder %s39, 1
      %s912 = scalar_select %p911, %s39, 1
      %s913 = scalar_lea.vmem %s10, %s912
      %p914 = pneg %p327
      %p915 = pneg %p324
      %p916 = scmp.lt.s32.totalorder %s39, 1
      %s917 = scalar_select %p916, %s39, 1
      %s918 = scalar_lea.vmem %s11, %s917
      %p919 = pneg %p353
      %p920 = pneg %p350
      %p921 = scmp.lt.s32.totalorder %s39, 1
      %s922 = scalar_select %p921, %s39, 1
      %s923 = scalar_lea.vmem %s12, %s922
      %p924 = pneg %p379
      %p925 = pneg %p376
      %p926 = scmp.lt.s32.totalorder %s39, 1
      %s927 = scalar_select %p926, %s39, 1
      %s928 = smul.addr %s927, 4
      %s929 = smul.addr %s928, 4
      %s930 = scalar_lea.vmem %s13, %s929
      %p931 = pneg %p405
      %p932 = pneg %p402
      %p933 = scmp.lt.s32.totalorder %s39, 1
      %s934 = scalar_select %p933, %s39, 1
      %s935 = scalar_lea.vmem %s14, %s934
      %p936 = pneg %p431
      %p937 = pneg %p428
      %p938 = scmp.lt.s32.totalorder %s39, 1
      %s939 = scalar_select %p938, %s39, 1
      %s940 = smul.addr %s939, 16
      %s941 = smul.addr %s940, 4
      %s942 = scalar_lea.vmem %s15, %s941
      %p943 = pneg %p457
      %p944 = pneg %p454
      %p945 = scmp.lt.s32.totalorder %s39, 1
      %s946 = scalar_select %p945, %s39, 1
      %s947 = scalar_lea.vmem %s16, %s946
      %p948 = pneg %p483
      %p949 = pneg %p480
      %p950 = scmp.lt.s32.totalorder %s39, 1
      %s951 = scalar_select %p950, %s39, 1
      %s952 = smul.addr %s951, 4
      %s953 = smul.addr %s952, 4
      %s954 = scalar_lea.vmem %s17, %s953
      %p955 = pneg %p509
      %p956 = pneg %p506
      %p957 = scmp.lt.s32.totalorder %s39, 1
      %s958 = scalar_select %p957, %s39, 1
      %s959 = scalar_lea.vmem %s18, %s958
      %p960 = pneg %p535
      %p961 = pneg %p532
      %p962 = scmp.lt.s32.totalorder %s39, 1
      %s963 = scalar_select %p962, %s39, 1
      %s964 = smul.addr %s963, 4
      %s965 = scalar_lea.vmem %s19, %s964
      %p966 = pneg %p561
      %p967 = pneg %p558
      %p968 = scmp.lt.s32.totalorder %s39, 1
      %s969 = scalar_select %p968, %s39, 1
      %s970 = scalar_lea.vmem %s20, %s969
      %p971 = pneg %p587
      %p972 = pneg %p584
      %p973 = scmp.lt.s32.totalorder %s39, 1
      %s974 = scalar_select %p973, %s39, 1
      %s975 = smul.addr %s974, 4
      %s976 = scalar_lea.vmem %s21, %s975
      %p977 = pneg %p613
      %p978 = pneg %p610
      %p979 = scmp.lt.s32.totalorder %s39, 1
      %s980 = scalar_select %p979, %s39, 1
      %s981 = scalar_lea.vmem %s22, %s980
      %p982 = pneg %p639
      %p983 = pneg %p636
      %p984 = pneg %p665
      %p985 = pneg %p662
      %p986 = scmp.lt.s32.totalorder %s38, 3
      %s987 = scalar_select %p986, %s38, 3
      %s988 = smul.addr %s987, 8
      %s989 = scalar_lea.vmem %s23, %s988
      %p990 = scmp.lt.s32.totalorder %s38, 3
      %s991 = scalar_select %p990, %s38, 3
      %s992 = smul.addr %s991, 8
      %s993 = scalar_lea.vmem %s0, %s992
      %p994 = scmp.lt.s32.totalorder %s39, 1
      %s995 = scalar_select %p994, %s39, 1
      %s996 = scalar_lea.vmem %s1, %s995
      %p997 = scmp.lt.s32.totalorder %s39, 1
      %s998 = scalar_select %p997, %s39, 1
      %s999 = scalar_lea.vmem %s2, %s998
      %p1000 = scmp.lt.s32.totalorder %s39, 1
      %s1001 = scalar_select %p1000, %s39, 1
      %s1002 = smul.addr %s1001, 16
      %s1003 = smul.addr %s1002, 4
      %s1004 = scalar_lea.vmem %s3, %s1003
      %p1005 = scmp.lt.s32.totalorder %s39, 1
      %s1006 = scalar_select %p1005, %s39, 1
      %s1007 = smul.addr %s1006, 16
      %s1008 = smul.addr %s1007, 4
      %s1009 = scalar_lea.vmem %s4, %s1008
      %p1010 = scmp.lt.s32.totalorder %s39, 1
      %s1011 = scalar_select %p1010, %s39, 1
      %s1012 = smul.addr %s1011, 16
      %s1013 = smul.addr %s1012, 4
      %s1014 = scalar_lea.vmem %s5, %s1013
      %p1015 = scmp.lt.s32.totalorder %s39, 1
      %s1016 = scalar_select %p1015, %s39, 1
      %s1017 = smul.addr %s1016, 4
      %s1018 = scalar_lea.vmem %s6, %s1017
      %p1019 = scmp.lt.s32.totalorder %s39, 1
      %s1020 = scalar_select %p1019, %s39, 1
      %s1021 = smul.addr %s1020, 4
      %s1022 = scalar_lea.vmem %s7, %s1021
      %p1023 = scmp.lt.s32.totalorder %s39, 1
      %s1024 = scalar_select %p1023, %s39, 1
      %s1025 = smul.addr %s1024, 4
      %s1026 = scalar_lea.vmem %s8, %s1025
      %p1027 = scmp.lt.s32.totalorder %s39, 1
      %s1028 = scalar_select %p1027, %s39, 1
      %s1029 = smul.addr %s1028, 4
      %s1030 = smul.addr %s1029, 4
      %s1031 = scalar_lea.vmem %s9, %s1030
      %p1032 = scmp.lt.s32.totalorder %s39, 1
      %s1033 = scalar_select %p1032, %s39, 1
      %s1034 = scalar_lea.vmem %s10, %s1033
      %p1035 = scmp.lt.s32.totalorder %s39, 1
      %s1036 = scalar_select %p1035, %s39, 1
      %s1037 = scalar_lea.vmem %s11, %s1036
      %p1038 = scmp.lt.s32.totalorder %s39, 1
      %s1039 = scalar_select %p1038, %s39, 1
      %s1040 = scalar_lea.vmem %s12, %s1039
      %p1041 = scmp.lt.s32.totalorder %s39, 1
      %s1042 = scalar_select %p1041, %s39, 1
      %s1043 = smul.addr %s1042, 4
      %s1044 = smul.addr %s1043, 4
      %s1045 = scalar_lea.vmem %s13, %s1044
      %p1046 = scmp.lt.s32.totalorder %s39, 1
      %s1047 = scalar_select %p1046, %s39, 1
      %s1048 = scalar_lea.vmem %s14, %s1047
      %p1049 = scmp.lt.s32.totalorder %s39, 1
      %s1050 = scalar_select %p1049, %s39, 1
      %s1051 = smul.addr %s1050, 16
      %s1052 = smul.addr %s1051, 4
      %s1053 = scalar_lea.vmem %s15, %s1052
      %p1054 = scmp.lt.s32.totalorder %s39, 1
      %s1055 = scalar_select %p1054, %s39, 1
      %s1056 = scalar_lea.vmem %s16, %s1055
      %p1057 = scmp.lt.s32.totalorder %s39, 1
      %s1058 = scalar_select %p1057, %s39, 1
      %s1059 = smul.addr %s1058, 4
      %s1060 = smul.addr %s1059, 4
      %s1061 = scalar_lea.vmem %s17, %s1060
      %p1062 = scmp.lt.s32.totalorder %s39, 1
      %s1063 = scalar_select %p1062, %s39, 1
      %s1064 = scalar_lea.vmem %s18, %s1063
      %p1065 = scmp.lt.s32.totalorder %s39, 1
      %s1066 = scalar_select %p1065, %s39, 1
      %s1067 = smul.addr %s1066, 4
      %s1068 = scalar_lea.vmem %s19, %s1067
      %p1069 = scmp.lt.s32.totalorder %s39, 1
      %s1070 = scalar_select %p1069, %s39, 1
      %s1071 = scalar_lea.vmem %s20, %s1070
      %p1072 = scmp.lt.s32.totalorder %s39, 1
      %s1073 = scalar_select %p1072, %s39, 1
      %s1074 = smul.addr %s1073, 4
      %s1075 = scalar_lea.vmem %s21, %s1074
      %p1076 = scmp.lt.s32.totalorder %s39, 1
      %s1077 = scalar_select %p1076, %s39, 1
      %s1078 = scalar_lea.vmem %s22, %s1077
      %p1079 = scmp.lt.s32.totalorder %s38, 3
      %s1080 = scalar_select %p1079, %s38, 3
      %s1081 = smul.addr %s1080, 8
      %s1082 = scalar_lea.vmem %s23, %s1081
      %p1084 = scmp.eq.s32.totalorder %s39, 0
      // Predicated region
      $region113: #{_lambda_.8} parent=111 // pred_check
        %p1085 = pneg %p1084
      $region114: #{_lambda_.8} parent=111 // pred_check_branch
        %1087 = sbr.rel (%p1085) target = $region116
      $region115: #{_lambda_.8} parent=111 // pred_region
        %v1088 = vld [vmem:[%s993] sm:$0xff]
        %vm1089 = vcmask 261120
        %1090 = vst.msk [vmem:[%s1082] sm:$0xff] %vm1089, %v1088
      $region116: #{_lambda_.8} parent=111 // pred_fallthru
        _
      %v1091 = vld [vmem:[%s1082] sm:$0xff]
      %v1092 = vld [vmem:[%s996] sm:$0x1]
      %v1093 = vld [vmem:[%s999] sm:$0x1]
      %vm1094 = vcmask 261120
      %v1095 = vsel %vm1094, %v1091, 0.0
      %1096 = vadd.xlane.f32.xlu0 %v1095
      %v1097 = vpop.xlane.xlu0 %1096
      %v1098 = vrcp.pop 32.0
      %v1099 = vmul.f32 %v1097, %v1098
      %v1100 = vsub.f32 %v1091, %v1099
      %v1101 = vmul.f32 %v1100, %v1100
      %v1102 = vsel %vm1094, %v1101, 0.0
      %1103 = vadd.xlane.f32.xlu0 %v1102
      %v1104 = vpop.xlane.xlu0 %1103
      %v1105 = vmul.f32 %v1104, %v1098
      %v1106 = vadd.f32 %v1105, 1e-05
      %v1107 = vrsqrt.pop %v1106
      %v1108 = vmul.f32 %v1100, %v1107
      %v1110 = vlaneseq
      %v1111 = vshrl.u32 %v1110, 7
      %v1112 = vsub.s32 0, %v1111
      %v1113 = vrot.slane %v1092, %v1112
      %v1115 = vmul.f32 %v1108, %v1113
      %v1117 = vlaneseq
      %v1118 = vshrl.u32 %v1117, 7
      %v1119 = vsub.s32 0, %v1118
      %v1120 = vrot.slane %v1093, %v1119
      %v1122 = vadd.f32 %v1115, %v1120
      %v1123 = vpack.c.bf16 %v1122, %v1122
      %v1124 = vld [vmem:[%s1004] sm:$0xf]
      %v1125 = vld [vmem:[%s1004 + $0x4] sm:$0xf]
      %v1126 = vld [vmem:[%s1004 + $0x8] sm:$0xf]
      %v1127 = vld [vmem:[%s1004 + $0xc] sm:$0xf]
      %v1128 = vld [vmem:[%s1004 + $0x10] sm:$0xf]
      %v1129 = vld [vmem:[%s1004 + $0x14] sm:$0xf]
      %v1130 = vld [vmem:[%s1004 + $0x18] sm:$0xf]
      %v1131 = vld [vmem:[%s1004 + $0x1c] sm:$0xf]
      %v1132 = vld [vmem:[%s1004 + $0x20] sm:$0xf]
      %v1133 = vld [vmem:[%s1004 + $0x24] sm:$0xf]
      %v1134 = vld [vmem:[%s1004 + $0x28] sm:$0xf]
      %v1135 = vld [vmem:[%s1004 + $0x2c] sm:$0xf]
      %v1136 = vld [vmem:[%s1004 + $0x30] sm:$0xf]
      %v1137 = vld [vmem:[%s1004 + $0x34] sm:$0xf]
      %v1138 = vld [vmem:[%s1004 + $0x38] sm:$0xf]
      %v1139 = vld [vmem:[%s1004 + $0x3c] sm:$0xf]
      %v1140 = vld [vmem:[%s1018] sm:$0x1]
      %v1141 = vld [vmem:[%s1018 + $0x1] sm:$0x1]
      %v1142 = vld [vmem:[%s1018 + $0x2] sm:$0x1]
      %v1143 = vld [vmem:[%s1018 + $0x3] sm:$0x1]
      %v1148 = vlaneseq
      %v1149 = vshrl.u32 %v1148, 7
      %v1150 = vsub.s32 0, %v1149
      %v1151 = vrot.slane %v1140, %v1150
      %v1152 = vlaneseq
      %v1153 = vshrl.u32 %v1152, 7
      %v1154 = vsub.s32 0, %v1153
      %v1155 = vrot.slane %v1141, %v1154
      %v1156 = vlaneseq
      %v1157 = vshrl.u32 %v1156, 7
      %v1158 = vsub.s32 0, %v1157
      %v1159 = vrot.slane %v1142, %v1158
      %v1160 = vlaneseq
      %v1161 = vshrl.u32 %v1160, 7
      %v1162 = vsub.s32 0, %v1161
      %v1163 = vrot.slane %v1143, %v1162
      %v1172 = vunpack.c.l.b16 %v1124
      %v1173 = vunpack.c.l.b16 %v1125
      %v1174 = vunpack.c.l.b16 %v1126
      %v1175 = vunpack.c.l.b16 %v1127
      %v1176 = vpack.c.b16 %v1173, %v1172
      %v1177 = vpack.c.b16 %v1175, %v1174
      %v1181 = vsel %vm1094, %v1123, 0
      %1183 = vmatprep.subr.bf16.mxu0 0
      %1184 = vmatpush1.bf16.msra.mxu0 %v1176
      %1185 = vmatprep.subr.bf16.mxu0 0
      %1186 = vmatpush1.bf16.msra.mxu0 %v1177
      %1187 = vmatprep.subr.bf16.mxu0 0
      %1188 = vmatpush1.bf16.msra.mxu0 0
      %1189 = vmatprep.subr.bf16.mxu0 0
      %1190 = vmatpush1.bf16.msra.mxu0 0
      %1191 = vmatprep.subr.bf16.mxu0 0
      %1192 = vmatpush1.bf16.msra.mxu0 0
      %1193 = vmatprep.subr.bf16.mxu0 0
      %1194 = vmatpush1.bf16.msra.mxu0 0
      %1195 = vmatprep.subr.bf16.mxu0 0
      %1196 = vmatpush1.bf16.msra.mxu0 0
      %1197 = vmatprep.subr.bf16.mxu0 0
      %1198 = vmatpush1.bf16.msra.mxu0 0
      %1199 = vmatprep.subr.bf16.mxu0 0
      %1200 = vmatpush1.bf16.msra.mxu0 0
      %1201 = vmatprep.subr.bf16.mxu0 0
      %1202 = vmatpush1.bf16.msra.mxu0 0
      %1203 = vmatprep.subr.bf16.mxu0 0
      %1204 = vmatpush1.bf16.msra.mxu0 0
      %1205 = vmatprep.subr.bf16.mxu0 0
      %1206 = vmatpush1.bf16.msra.mxu0 0
      %1207 = vmatprep.subr.bf16.mxu0 0
      %1208 = vmatpush1.bf16.msra.mxu0 0
      %1209 = vmatprep.subr.bf16.mxu0 0
      %1210 = vmatpush1.bf16.msra.mxu0 0
      %1211 = vmatprep.subr.bf16.mxu0 0
      %1212 = vmatpush1.bf16.msra.mxu0 0
      %1213 = vmatprep.subr.bf16.mxu0 0
      %1214 = vmatpush1.bf16.msra.mxu0 0
      %1215 = vmatprep.mubr.bf16.mxu0 0
      %1216 = vmatmul.mubr.bf16.gmra.mrb[0].mxu0 %v1181
      %v1217 = vpop.f32.mrb[0].mxu0
      %v1218 = vadd.f32 %v1151, %v1217
      %v1219 = vpop.f32.mrb[0].mxu0
      %v1220 = vpop.f32.mrb[0].mxu0
      %v1221 = vpop.f32.mrb[0].mxu0
      %1222 = vdwg.mxu0
      %v1227 = vunpack.c.l.b16 %v1128
      %v1228 = vunpack.c.l.b16 %v1129
      %v1229 = vunpack.c.l.b16 %v1130
      %v1230 = vunpack.c.l.b16 %v1131
      %v1231 = vpack.c.b16 %v1228, %v1227
      %v1232 = vpack.c.b16 %v1230, %v1229
      %1235 = vmatprep.subr.bf16.mxu0 0
      %1236 = vmatpush1.bf16.msra.mxu0 %v1231
      %1237 = vmatprep.subr.bf16.mxu0 0
      %1238 = vmatpush1.bf16.msra.mxu0 %v1232
      %1239 = vmatprep.subr.bf16.mxu0 0
      %1240 = vmatpush1.bf16.msra.mxu0 0
      %1241 = vmatprep.subr.bf16.mxu0 0
      %1242 = vmatpush1.bf16.msra.mxu0 0
      %1243 = vmatprep.subr.bf16.mxu0 0
      %1244 = vmatpush1.bf16.msra.mxu0 0
      %1245 = vmatprep.subr.bf16.mxu0 0
      %1246 = vmatpush1.bf16.msra.mxu0 0
      %1247 = vmatprep.subr.bf16.mxu0 0
      %1248 = vmatpush1.bf16.msra.mxu0 0
      %1249 = vmatprep.subr.bf16.mxu0 0
      %1250 = vmatpush1.bf16.msra.mxu0 0
      %1251 = vmatprep.subr.bf16.mxu0 0
      %1252 = vmatpush1.bf16.msra.mxu0 0
      %1253 = vmatprep.subr.bf16.mxu0 0
      %1254 = vmatpush1.bf16.msra.mxu0 0
      %1255 = vmatprep.subr.bf16.mxu0 0
      %1256 = vmatpush1.bf16.msra.mxu0 0
      %1257 = vmatprep.subr.bf16.mxu0 0
      %1258 = vmatpush1.bf16.msra.mxu0 0
      %1259 = vmatprep.subr.bf16.mxu0 0
      %1260 = vmatpush1.bf16.msra.mxu0 0
      %1261 = vmatprep.subr.bf16.mxu0 0
      %1262 = vmatpush1.bf16.msra.mxu0 0
      %1263 = vmatprep.subr.bf16.mxu0 0
      %1264 = vmatpush1.bf16.msra.mxu0 0
      %1265 = vmatprep.subr.bf16.mxu0 0
      %1266 = vmatpush1.bf16.msra.mxu0 0
      %1267 = vmatprep.mubr.bf16.mxu0 0
      %1268 = vmatmul.mubr.bf16.gmra.mrb[0].mxu0 %v1181
      %v1269 = vpop.f32.mrb[0].mxu0
      %v1270 = vadd.f32 %v1155, %v1269
      %v1271 = vpop.f32.mrb[0].mxu0
      %v1272 = vpop.f32.mrb[0].mxu0
      %v1273 = vpop.f32.mrb[0].mxu0
      %1274 = vdwg.mxu0
      %v1279 = vunpack.c.l.b16 %v1132
      %v1280 = vunpack.c.l.b16 %v1133
      %v1281 = vunpack.c.l.b16 %v1134
      %v1282 = vunpack.c.l.b16 %v1135
      %v1283 = vpack.c.b16 %v1280, %v1279
      %v1284 = vpack.c.b16 %v1282, %v1281
      %1287 = vmatprep.subr.bf16.mxu0 0
      %1288 = vmatpush1.bf16.msra.mxu0 %v1283
      %1289 = vmatprep.subr.bf16.mxu0 0
      %1290 = vmatpush1.bf16.msra.mxu0 %v1284
      %1291 = vmatprep.subr.bf16.mxu0 0
      %1292 = vmatpush1.bf16.msra.mxu0 0
      %1293 = vmatprep.subr.bf16.mxu0 0
      %1294 = vmatpush1.bf16.msra.mxu0 0
      %1295 = vmatprep.subr.bf16.mxu0 0
      %1296 = vmatpush1.bf16.msra.mxu0 0
      %1297 = vmatprep.subr.bf16.mxu0 0
      %1298 = vmatpush1.bf16.msra.mxu0 0
      %1299 = vmatprep.subr.bf16.mxu0 0
      %1300 = vmatpush1.bf16.msra.mxu0 0
      %1301 = vmatprep.subr.bf16.mxu0 0
      %1302 = vmatpush1.bf16.msra.mxu0 0
      %1303 = vmatprep.subr.bf16.mxu0 0
      %1304 = vmatpush1.bf16.msra.mxu0 0
      %1305 = vmatprep.subr.bf16.mxu0 0
      %1306 = vmatpush1.bf16.msra.mxu0 0
      %1307 = vmatprep.subr.bf16.mxu0 0
      %1308 = vmatpush1.bf16.msra.mxu0 0
      %1309 = vmatprep.subr.bf16.mxu0 0
      %1310 = vmatpush1.bf16.msra.mxu0 0
      %1311 = vmatprep.subr.bf16.mxu0 0
      %1312 = vmatpush1.bf16.msra.mxu0 0
      %1313 = vmatprep.subr.bf16.mxu0 0
      %1314 = vmatpush1.bf16.msra.mxu0 0
      %1315 = vmatprep.subr.bf16.mxu0 0
      %1316 = vmatpush1.bf16.msra.mxu0 0
      %1317 = vmatprep.subr.bf16.mxu0 0
      %1318 = vmatpush1.bf16.msra.mxu0 0
      %1319 = vmatprep.mubr.bf16.mxu0 0
      %1320 = vmatmul.mubr.bf16.gmra.mrb[0].mxu0 %v1181
      %v1321 = vpop.f32.mrb[0].mxu0
      %v1322 = vadd.f32 %v1159, %v1321
      %v1323 = vpop.f32.mrb[0].mxu0
      %v1324 = vpop.f32.mrb[0].mxu0
      %v1325 = vpop.f32.mrb[0].mxu0
      %1326 = vdwg.mxu0
      %v1331 = vunpack.c.l.b16 %v1136
      %v1332 = vunpack.c.l.b16 %v1137
      %v1333 = vunpack.c.l.b16 %v1138
      %v1334 = vunpack.c.l.b16 %v1139
      %v1335 = vpack.c.b16 %v1332, %v1331
      %v1336 = vpack.c.b16 %v1334, %v1333
      %1339 = vmatprep.subr.bf16.mxu0 0
      %1340 = vmatpush1.bf16.msra.mxu0 %v1335
      %1341 = vmatprep.subr.bf16.mxu0 0
      %1342 = vmatpush1.bf16.msra.mxu0 %v1336
      %1343 = vmatprep.subr.bf16.mxu0 0
      %1344 = vmatpush1.bf16.msra.mxu0 0
      %1345 = vmatprep.subr.bf16.mxu0 0
      %1346 = vmatpush1.bf16.msra.mxu0 0
      %1347 = vmatprep.subr.bf16.mxu0 0
      %1348 = vmatpush1.bf16.msra.mxu0 0
      %1349 = vmatprep.subr.bf16.mxu0 0
      %1350 = vmatpush1.bf16.msra.mxu0 0
      %1351 = vmatprep.subr.bf16.mxu0 0
      %1352 = vmatpush1.bf16.msra.mxu0 0
      %1353 = vmatprep.subr.bf16.mxu0 0
      %1354 = vmatpush1.bf16.msra.mxu0 0
      %1355 = vmatprep.subr.bf16.mxu0 0
      %1356 = vmatpush1.bf16.msra.mxu0 0
      %1357 = vmatprep.subr.bf16.mxu0 0
      %1358 = vmatpush1.bf16.msra.mxu0 0
      %1359 = vmatprep.subr.bf16.mxu0 0
      %1360 = vmatpush1.bf16.msra.mxu0 0
      %1361 = vmatprep.subr.bf16.mxu0 0
      %1362 = vmatpush1.bf16.msra.mxu0 0
      %1363 = vmatprep.subr.bf16.mxu0 0
      %1364 = vmatpush1.bf16.msra.mxu0 0
      %1365 = vmatprep.subr.bf16.mxu0 0
      %1366 = vmatpush1.bf16.msra.mxu0 0
      %1367 = vmatprep.subr.bf16.mxu0 0
      %1368 = vmatpush1.bf16.msra.mxu0 0
      %1369 = vmatprep.subr.bf16.mxu0 0
      %1370 = vmatpush1.bf16.msra.mxu0 0
      %1371 = vmatprep.mubr.bf16.mxu0 0
      %1372 = vmatmul.mubr.bf16.gmra.mrb[0].mxu0 %v1181
      %v1373 = vpop.f32.mrb[0].mxu0
      %v1374 = vadd.f32 %v1163, %v1373
      %v1375 = vpop.f32.mrb[0].mxu0
      %v1376 = vpop.f32.mrb[0].mxu0
      %v1377 = vpop.f32.mrb[0].mxu0
      %1378 = vdwg.mxu0
      %v1379 = vld [vmem:[%s1009] sm:$0xf]
      %v1380 = vld [vmem:[%s1009 + $0x4] sm:$0xf]
      %v1381 = vld [vmem:[%s1009 + $0x8] sm:$0xf]
      %v1382 = vld [vmem:[%s1009 + $0xc] sm:$0xf]
      %v1383 = vld [vmem:[%s1009 + $0x10] sm:$0xf]
      %v1384 = vld [vmem:[%s1009 + $0x14] sm:$0xf]
      %v1385 = vld [vmem:[%s1009 + $0x18] sm:$0xf]
      %v1386 = vld [vmem:[%s1009 + $0x1c] sm:$0xf]
      %v1387 = vld [vmem:[%s1009 + $0x20] sm:$0xf]
      %v1388 = vld [vmem:[%s1009 + $0x24] sm:$0xf]
      %v1389 = vld [vmem:[%s1009 + $0x28] sm:$0xf]
      %v1390 = vld [vmem:[%s1009 + $0x2c] sm:$0xf]
      %v1391 = vld [vmem:[%s1009 + $0x30] sm:$0xf]
      %v1392 = vld [vmem:[%s1009 + $0x34] sm:$0xf]
      %v1393 = vld [vmem:[%s1009 + $0x38] sm:$0xf]
      %v1394 = vld [vmem:[%s1009 + $0x3c] sm:$0xf]
      %v1395 = vld [vmem:[%s1022] sm:$0x1]
      %v1396 = vld [vmem:[%s1022 + $0x1] sm:$0x1]
      %v1397 = vld [vmem:[%s1022 + $0x2] sm:$0x1]
      %v1398 = vld [vmem:[%s1022 + $0x3] sm:$0x1]
      %v1403 = vlaneseq
      %v1404 = vshrl.u32 %v1403, 7
      %v1405 = vsub.s32 0, %v1404
      %v1406 = vrot.slane %v1395, %v1405
      %v1407 = vlaneseq
      %v1408 = vshrl.u32 %v1407, 7
      %v1409 = vsub.s32 0, %v1408
      %v1410 = vrot.slane %v1396, %v1409
      %v1411 = vlaneseq
      %v1412 = vshrl.u32 %v1411, 7
      %v1413 = vsub.s32 0, %v1412
      %v1414 = vrot.slane %v1397, %v1413
      %v1415 = vlaneseq
      %v1416 = vshrl.u32 %v1415, 7
      %v1417 = vsub.s32 0, %v1416
      %v1418 = vrot.slane %v1398, %v1417
      %v1427 = vunpack.c.l.b16 %v1379
      %v1428 = vunpack.c.l.b16 %v1380
      %v1429 = vunpack.c.l.b16 %v1381
      %v1430 = vunpack.c.l.b16 %v1382
      %v1431 = vpack.c.b16 %v1428, %v1427
      %v1432 = vpack.c.b16 %v1430, %v1429
      %1435 = vmatprep.subr.bf16.mxu0 0
      %1436 = vmatpush1.bf16.msra.mxu0 %v1431
      %1437 = vmatprep.subr.bf16.mxu0 0
      %1438 = vmatpush1.bf16.msra.mxu0 %v1432
      %1439 = vmatprep.subr.bf16.mxu0 0
      %1440 = vmatpush1.bf16.msra.mxu0 0
      %1441 = vmatprep.subr.bf16.mxu0 0
      %1442 = vmatpush1.bf16.msra.mxu0 0
      %1443 = vmatprep.subr.bf16.mxu0 0
      %1444 = vmatpush1.bf16.msra.mxu0 0
      %1445 = vmatprep.subr.bf16.mxu0 0
      %1446 = vmatpush1.bf16.msra.mxu0 0
      %1447 = vmatprep.subr.bf16.mxu0 0
      %1448 = vmatpush1.bf16.msra.mxu0 0
      %1449 = vmatprep.subr.bf16.mxu0 0
      %1450 = vmatpush1.bf16.msra.mxu0 0
      %1451 = vmatprep.subr.bf16.mxu0 0
      %1452 = vmatpush1.bf16.msra.mxu0 0
      %1453 = vmatprep.subr.bf16.mxu0 0
      %1454 = vmatpush1.bf16.msra.mxu0 0
      %1455 = vmatprep.subr.bf16.mxu0 0
      %1456 = vmatpush1.bf16.msra.mxu0 0
      %1457 = vmatprep.subr.bf16.mxu0 0
      %1458 = vmatpush1.bf16.msra.mxu0 0
      %1459 = vmatprep.subr.bf16.mxu0 0
      %1460 = vmatpush1.bf16.msra.mxu0 0
      %1461 = vmatprep.subr.bf16.mxu0 0
      %1462 = vmatpush1.bf16.msra.mxu0 0
      %1463 = vmatprep.subr.bf16.mxu0 0
      %1464 = vmatpush1.bf16.msra.mxu0 0
      %1465 = vmatprep.subr.bf16.mxu0 0
      %1466 = vmatpush1.bf16.msra.mxu0 0
      %1467 = vmatprep.mubr.bf16.mxu0 0
      %1468 = vmatmul.mubr.bf16.gmra.mrb[0].mxu0 %v1181
      %v1469 = vpop.f32.mrb[0].mxu0
      %v1470 = vadd.f32 %v1406, %v1469
      %v1471 = vpop.f32.mrb[0].mxu0
      %v1472 = vpop.f32.mrb[0].mxu0
      %v1473 = vpop.f32.mrb[0].mxu0
      %1474 = vdwg.mxu0
      %v1479 = vunpack.c.l.b16 %v1383
      %v1480 = vunpack.c.l.b16 %v1384
      %v1481 = vunpack.c.l.b16 %v1385
      %v1482 = vunpack.c.l.b16 %v1386
      %v1483 = vpack.c.b16 %v1480, %v1479
      %v1484 = vpack.c.b16 %v1482, %v1481
      %1487 = vmatprep.subr.bf16.mxu0 0
      %1488 = vmatpush1.bf16.msra.mxu0 %v1483
      %1489 = vmatprep.subr.bf16.mxu0 0
      %1490 = vmatpush1.bf16.msra.mxu0 %v1484
      %1491 = vmatprep.subr.bf16.mxu0 0
      %1492 = vmatpush1.bf16.msra.mxu0 0
      %1493 = vmatprep.subr.bf16.mxu0 0
      %1494 = vmatpush1.bf16.msra.mxu0 0
      %1495 = vmatprep.subr.bf16.mxu0 0
      %1496 = vmatpush1.bf16.msra.mxu0 0
      %1497 = vmatprep.subr.bf16.mxu0 0
      %1498 = vmatpush1.bf16.msra.mxu0 0
      %1499 = vmatprep.subr.bf16.mxu0 0
      %1500 = vmatpush1.bf16.msra.mxu0 0
      %1501 = vmatprep.subr.bf16.mxu0 0
      %1502 = vmatpush1.bf16.msra.mxu0 0
      %1503 = vmatprep.subr.bf16.mxu0 0
      %1504 = vmatpush1.bf16.msra.mxu0 0
      %1505 = vmatprep.subr.bf16.mxu0 0
      %1506 = vmatpush1.bf16.msra.mxu0 0
      %1507 = vmatprep.subr.bf16.mxu0 0
      %1508 = vmatpush1.bf16.msra.mxu0 0
      %1509 = vmatprep.subr.bf16.mxu0 0
      %1510 = vmatpush1.bf16.msra.mxu0 0
      %1511 = vmatprep.subr.bf16.mxu0 0
      %1512 = vmatpush1.bf16.msra.mxu0 0
      %1513 = vmatprep.subr.bf16.mxu0 0
      %1514 = vmatpush1.bf16.msra.mxu0 0
      %1515 = vmatprep.subr.bf16.mxu0 0
      %1516 = vmatpush1.bf16.msra.mxu0 0
      %1517 = vmatprep.subr.bf16.mxu0 0
      %1518 = vmatpush1.bf16.msra.mxu0 0
      %1519 = vmatprep.mubr.bf16.mxu0 0
      %1520 = vmatmul.mubr.bf16.gmra.mrb[0].mxu0 %v1181
      %v1521 = vpop.f32.mrb[0].mxu0
      %v1522 = vadd.f32 %v1410, %v1521
      %v1523 = vpop.f32.mrb[0].mxu0
      %v1524 = vpop.f32.mrb[0].mxu0
      %v1525 = vpop.f32.mrb[0].mxu0
      %1526 = vdwg.mxu0
      %v1531 = vunpack.c.l.b16 %v1387
      %v1532 = vunpack.c.l.b16 %v1388
      %v1533 = vunpack.c.l.b16 %v1389
      %v1534 = vunpack.c.l.b16 %v1390
      %v1535 = vpack.c.b16 %v1532, %v1531
      %v1536 = vpack.c.b16 %v1534, %v1533
      %1539 = vmatprep.subr.bf16.mxu0 0
      %1540 = vmatpush1.bf16.msra.mxu0 %v1535
      %1541 = vmatprep.subr.bf16.mxu0 0
      %1542 = vmatpush1.bf16.msra.mxu0 %v1536
      %1543 = vmatprep.subr.bf16.mxu0 0
      %1544 = vmatpush1.bf16.msra.mxu0 0
      %1545 = vmatprep.subr.bf16.mxu0 0
      %1546 = vmatpush1.bf16.msra.mxu0 0
      %1547 = vmatprep.subr.bf16.mxu0 0
      %1548 = vmatpush1.bf16.msra.mxu0 0
      %1549 = vmatprep.subr.bf16.mxu0 0
      %1550 = vmatpush1.bf16.msra.mxu0 0
      %1551 = vmatprep.subr.bf16.mxu0 0
      %1552 = vmatpush1.bf16.msra.mxu0 0
      %1553 = vmatprep.subr.bf16.mxu0 0
      %1554 = vmatpush1.bf16.msra.mxu0 0
      %1555 = vmatprep.subr.bf16.mxu0 0
      %1556 = vmatpush1.bf16.msra.mxu0 0
      %1557 = vmatprep.subr.bf16.mxu0 0
      %1558 = vmatpush1.bf16.msra.mxu0 0
      %1559 = vmatprep.subr.bf16.mxu0 0
      %1560 = vmatpush1.bf16.msra.mxu0 0
      %1561 = vmatprep.subr.bf16.mxu0 0
      %1562 = vmatpush1.bf16.msra.mxu0 0
      %1563 = vmatprep.subr.bf16.mxu0 0
      %1564 = vmatpush1.bf16.msra.mxu0 0
      %1565 = vmatprep.subr.bf16.mxu0 0
      %1566 = vmatpush1.bf16.msra.mxu0 0
      %1567 = vmatprep.subr.bf16.mxu0 0
      %1568 = vmatpush1.bf16.msra.mxu0 0
      %1569 = vmatprep.subr.bf16.mxu0 0
      %1570 = vmatpush1.bf16.msra.mxu0 0
      %1571 = vmatprep.mubr.bf16.mxu0 0
      %1572 = vmatmul.mubr.bf16.gmra.mrb[0].mxu0 %v1181
      %v1573 = vpop.f32.mrb[0].mxu0
      %v1574 = vadd.f32 %v1414, %v1573
      %v1575 = vpop.f32.mrb[0].mxu0
      %v1576 = vpop.f32.mrb[0].mxu0
      %v1577 = vpop.f32.mrb[0].mxu0
      %1578 = vdwg.mxu0
      %v1583 = vunpack.c.l.b16 %v1391
      %v1584 = vunpack.c.l.b16 %v1392
      %v1585 = vunpack.c.l.b16 %v1393
      %v1586 = vunpack.c.l.b16 %v1394
      %v1587 = vpack.c.b16 %v1584, %v1583
      %v1588 = vpack.c.b16 %v1586, %v1585
      %1591 = vmatprep.subr.bf16.mxu0 0
      %1592 = vmatpush1.bf16.msra.mxu0 %v1587
      %1593 = vmatprep.subr.bf16.mxu0 0
      %1594 = vmatpush1.bf16.msra.mxu0 %v1588
      %1595 = vmatprep.subr.bf16.mxu0 0
      %1596 = vmatpush1.bf16.msra.mxu0 0
      %1597 = vmatprep.subr.bf16.mxu0 0
      %1598 = vmatpush1.bf16.msra.mxu0 0
      %1599 = vmatprep.subr.bf16.mxu0 0
      %1600 = vmatpush1.bf16.msra.mxu0 0
      %1601 = vmatprep.subr.bf16.mxu0 0
      %1602 = vmatpush1.bf16.msra.mxu0 0
      %1603 = vmatprep.subr.bf16.mxu0 0
      %1604 = vmatpush1.bf16.msra.mxu0 0
      %1605 = vmatprep.subr.bf16.mxu0 0
      %1606 = vmatpush1.bf16.msra.mxu0 0
      %1607 = vmatprep.subr.bf16.mxu0 0
      %1608 = vmatpush1.bf16.msra.mxu0 0
      %1609 = vmatprep.subr.bf16.mxu0 0
      %1610 = vmatpush1.bf16.msra.mxu0 0
      %1611 = vmatprep.subr.bf16.mxu0 0
      %1612 = vmatpush1.bf16.msra.mxu0 0
      %1613 = vmatprep.subr.bf16.mxu0 0
      %1614 = vmatpush1.bf16.msra.mxu0 0
      %1615 = vmatprep.subr.bf16.mxu0 0
      %1616 = vmatpush1.bf16.msra.mxu0 0
      %1617 = vmatprep.subr.bf16.mxu0 0
      %1618 = vmatpush1.bf16.msra.mxu0 0
      %1619 = vmatprep.subr.bf16.mxu0 0
      %1620 = vmatpush1.bf16.msra.mxu0 0
      %1621 = vmatprep.subr.bf16.mxu0 0
      %1622 = vmatpush1.bf16.msra.mxu0 0
      %1623 = vmatprep.mubr.bf16.mxu0 0
      %1624 = vmatmul.mubr.bf16.gmra.mrb[0].mxu0 %v1181
      %v1625 = vpop.f32.mrb[0].mxu0
      %v1626 = vadd.f32 %v1418, %v1625
      %v1627 = vpop.f32.mrb[0].mxu0
      %v1628 = vpop.f32.mrb[0].mxu0
      %v1629 = vpop.f32.mrb[0].mxu0
      %1630 = vdwg.mxu0
      %v1631 = vld [vmem:[%s1014] sm:$0xf]
      %v1632 = vld [vmem:[%s1014 + $0x4] sm:$0xf]
      %v1633 = vld [vmem:[%s1014 + $0x8] sm:$0xf]
      %v1634 = vld [vmem:[%s1014 + $0xc] sm:$0xf]
      %v1635 = vld [vmem:[%s1014 + $0x10] sm:$0xf]
      %v1636 = vld [vmem:[%s1014 + $0x14] sm:$0xf]
      %v1637 = vld [vmem:[%s1014 + $0x18] sm:$0xf]
      %v1638 = vld [vmem:[%s1014 + $0x1c] sm:$0xf]
      %v1639 = vld [vmem:[%s1014 + $0x20] sm:$0xf]
      %v1640 = vld [vmem:[%s1014 + $0x24] sm:$0xf]
      %v1641 = vld [vmem:[%s1014 + $0x28] sm:$0xf]
      %v1642 = vld [vmem:[%s1014 + $0x2c] sm:$0xf]
      %v1643 = vld [vmem:[%s1014 + $0x30] sm:$0xf]
      %v1644 = vld [vmem:[%s1014 + $0x34] sm:$0xf]
      %v1645 = vld [vmem:[%s1014 + $0x38] sm:$0xf]
      %v1646 = vld [vmem:[%s1014 + $0x3c] sm:$0xf]
      %v1647 = vld [vmem:[%s1026] sm:$0x1]
      %v1648 = vld [vmem:[%s1026 + $0x1] sm:$0x1]
      %v1649 = vld [vmem:[%s1026 + $0x2] sm:$0x1]
      %v1650 = vld [vmem:[%s1026 + $0x3] sm:$0x1]
      %v1655 = vlaneseq
      %v1656 = vshrl.u32 %v1655, 7
      %v1657 = vsub.s32 0, %v1656
      %v1658 = vrot.slane %v1647, %v1657
      %v1659 = vlaneseq
      %v1660 = vshrl.u32 %v1659, 7
      %v1661 = vsub.s32 0, %v1660
      %v1662 = vrot.slane %v1648, %v1661
      %v1663 = vlaneseq
      %v1664 = vshrl.u32 %v1663, 7
      %v1665 = vsub.s32 0, %v1664
      %v1666 = vrot.slane %v1649, %v1665
      %v1667 = vlaneseq
      %v1668 = vshrl.u32 %v1667, 7
      %v1669 = vsub.s32 0, %v1668
      %v1670 = vrot.slane %v1650, %v1669
      %v1679 = vunpack.c.l.b16 %v1631
      %v1680 = vunpack.c.l.b16 %v1632
      %v1681 = vunpack.c.l.b16 %v1633
      %v1682 = vunpack.c.l.b16 %v1634
      %v1683 = vpack.c.b16 %v1680, %v1679
      %v1684 = vpack.c.b16 %v1682, %v1681
      %1687 = vmatprep.subr.bf16.mxu0 0
      %1688 = vmatpush1.bf16.msra.mxu0 %v1683
      %1689 = vmatprep.subr.bf16.mxu0 0
      %1690 = vmatpush1.bf16.msra.mxu0 %v1684
      %1691 = vmatprep.subr.bf16.mxu0 0
      %1692 = vmatpush1.bf16.msra.mxu0 0
      %1693 = vmatprep.subr.bf16.mxu0 0
      %1694 = vmatpush1.bf16.msra.mxu0 0
      %1695 = vmatprep.subr.bf16.mxu0 0
      %1696 = vmatpush1.bf16.msra.mxu0 0
      %1697 = vmatprep.subr.bf16.mxu0 0
      %1698 = vmatpush1.bf16.msra.mxu0 0
      %1699 = vmatprep.subr.bf16.mxu0 0
      %1700 = vmatpush1.bf16.msra.mxu0 0
      %1701 = vmatprep.subr.bf16.mxu0 0
      %1702 = vmatpush1.bf16.msra.mxu0 0
      %1703 = vmatprep.subr.bf16.mxu0 0
      %1704 = vmatpush1.bf16.msra.mxu0 0
      %1705 = vmatprep.subr.bf16.mxu0 0
      %1706 = vmatpush1.bf16.msra.mxu0 0
      %1707 = vmatprep.subr.bf16.mxu0 0
      %1708 = vmatpush1.bf16.msra.mxu0 0
      %1709 = vmatprep.subr.bf16.mxu0 0
      %1710 = vmatpush1.bf16.msra.mxu0 0
      %1711 = vmatprep.subr.bf16.mxu0 0
      %1712 = vmatpush1.bf16.msra.mxu0 0
      %1713 = vmatprep.subr.bf16.mxu0 0
      %1714 = vmatpush1.bf16.msra.mxu0 0
      %1715 = vmatprep.subr.bf16.mxu0 0
      %1716 = vmatpush1.bf16.msra.mxu0 0
      %1717 = vmatprep.subr.bf16.mxu0 0
      %1718 = vmatpush1.bf16.msra.mxu0 0
      %1719 = vmatprep.mubr.bf16.mxu0 0
      %1720 = vmatmul.mubr.bf16.gmra.mrb[0].mxu0 %v1181
      %v1721 = vpop.f32.mrb[0].mxu0
      %v1722 = vadd.f32 %v1658, %v1721
      %v1723 = vpop.f32.mrb[0].mxu0
      %v1724 = vpop.f32.mrb[0].mxu0
      %v1725 = vpop.f32.mrb[0].mxu0
      %1726 = vdwg.mxu0
      %v1731 = vunpack.c.l.b16 %v1635
      %v1732 = vunpack.c.l.b16 %v1636
      %v1733 = vunpack.c.l.b16 %v1637
      %v1734 = vunpack.c.l.b16 %v1638
      %v1735 = vpack.c.b16 %v1732, %v1731
      %v1736 = vpack.c.b16 %v1734, %v1733
      %1739 = vmatprep.subr.bf16.mxu0 0
      %1740 = vmatpush1.bf16.msra.mxu0 %v1735
      %1741 = vmatprep.subr.bf16.mxu0 0
      %1742 = vmatpush1.bf16.msra.mxu0 %v1736
      %1743 = vmatprep.subr.bf16.mxu0 0
      %1744 = vmatpush1.bf16.msra.mxu0 0
      %1745 = vmatprep.subr.bf16.mxu0 0
      %1746 = vmatpush1.bf16.msra.mxu0 0
      %1747 = vmatprep.subr.bf16.mxu0 0
      %1748 = vmatpush1.bf16.msra.mxu0 0
      %1749 = vmatprep.subr.bf16.mxu0 0
      %1750 = vmatpush1.bf16.msra.mxu0 0
      %1751 = vmatprep.subr.bf16.mxu0 0
      %1752 = vmatpush1.bf16.msra.mxu0 0
      %1753 = vmatprep.subr.bf16.mxu0 0
      %1754 = vmatpush1.bf16.msra.mxu0 0
      %1755 = vmatprep.subr.bf16.mxu0 0
      %1756 = vmatpush1.bf16.msra.mxu0 0
      %1757 = vmatprep.subr.bf16.mxu0 0
      %1758 = vmatpush1.bf16.msra.mxu0 0
      %1759 = vmatprep.subr.bf16.mxu0 0
      %1760 = vmatpush1.bf16.msra.mxu0 0
      %1761 = vmatprep.subr.bf16.mxu0 0
      %1762 = vmatpush1.bf16.msra.mxu0 0
      %1763 = vmatprep.subr.bf16.mxu0 0
      %1764 = vmatpush1.bf16.msra.mxu0 0
      %1765 = vmatprep.subr.bf16.mxu0 0
      %1766 = vmatpush1.bf16.msra.mxu0 0
      %1767 = vmatprep.subr.bf16.mxu0 0
      %1768 = vmatpush1.bf16.msra.mxu0 0
      %1769 = vmatprep.subr.bf16.mxu0 0
      %1770 = vmatpush1.bf16.msra.mxu0 0
      %1771 = vmatprep.mubr.bf16.mxu0 0
      %1772 = vmatmul.mubr.bf16.gmra.mrb[0].mxu0 %v1181
      %v1773 = vpop.f32.mrb[0].mxu0
      %v1774 = vadd.f32 %v1662, %v1773
      %v1775 = vpop.f32.mrb[0].mxu0
      %v1776 = vpop.f32.mrb[0].mxu0
      %v1777 = vpop.f32.mrb[0].mxu0
      %1778 = vdwg.mxu0
      %v1783 = vunpack.c.l.b16 %v1639
      %v1784 = vunpack.c.l.b16 %v1640
      %v1785 = vunpack.c.l.b16 %v1641
      %v1786 = vunpack.c.l.b16 %v1642
      %v1787 = vpack.c.b16 %v1784, %v1783
      %v1788 = vpack.c.b16 %v1786, %v1785
      %1791 = vmatprep.subr.bf16.mxu0 0
      %1792 = vmatpush1.bf16.msra.mxu0 %v1787
      %1793 = vmatprep.subr.bf16.mxu0 0
      %1794 = vmatpush1.bf16.msra.mxu0 %v1788
      %1795 = vmatprep.subr.bf16.mxu0 0
      %1796 = vmatpush1.bf16.msra.mxu0 0
      %1797 = vmatprep.subr.bf16.mxu0 0
      %1798 = vmatpush1.bf16.msra.mxu0 0
      %1799 = vmatprep.subr.bf16.mxu0 0
      %1800 = vmatpush1.bf16.msra.mxu0 0
      %1801 = vmatprep.subr.bf16.mxu0 0
      %1802 = vmatpush1.bf16.msra.mxu0 0
      %1803 = vmatprep.subr.bf16.mxu0 0
      %1804 = vmatpush1.bf16.msra.mxu0 0
      %1805 = vmatprep.subr.bf16.mxu0 0
      %1806 = vmatpush1.bf16.msra.mxu0 0
      %1807 = vmatprep.subr.bf16.mxu0 0
      %1808 = vmatpush1.bf16.msra.mxu0 0
      %1809 = vmatprep.subr.bf16.mxu0 0
      %1810 = vmatpush1.bf16.msra.mxu0 0
      %1811 = vmatprep.subr.bf16.mxu0 0
      %1812 = vmatpush1.bf16.msra.mxu0 0
      %1813 = vmatprep.subr.bf16.mxu0 0
      %1814 = vmatpush1.bf16.msra.mxu0 0
      %1815 = vmatprep.subr.bf16.mxu0 0
      %1816 = vmatpush1.bf16.msra.mxu0 0
      %1817 = vmatprep.subr.bf16.mxu0 0
      %1818 = vmatpush1.bf16.msra.mxu0 0
      %1819 = vmatprep.subr.bf16.mxu0 0
      %1820 = vmatpush1.bf16.msra.mxu0 0
      %1821 = vmatprep.subr.bf16.mxu0 0
      %1822 = vmatpush1.bf16.msra.mxu0 0
      %1823 = vmatprep.mubr.bf16.mxu0 0
      %1824 = vmatmul.mubr.bf16.gmra.mrb[0].mxu0 %v1181
      %v1825 = vpop.f32.mrb[0].mxu0
      %v1826 = vadd.f32 %v1666, %v1825
      %v1827 = vpop.f32.mrb[0].mxu0
      %v1828 = vpop.f32.mrb[0].mxu0
      %v1829 = vpop.f32.mrb[0].mxu0
      %1830 = vdwg.mxu0
      %v1835 = vunpack.c.l.b16 %v1643
      %v1836 = vunpack.c.l.b16 %v1644
      %v1837 = vunpack.c.l.b16 %v1645
      %v1838 = vunpack.c.l.b16 %v1646
      %v1839 = vpack.c.b16 %v1836, %v1835
      %v1840 = vpack.c.b16 %v1838, %v1837
      %1843 = vmatprep.subr.bf16.mxu0 0
      %1844 = vmatpush1.bf16.msra.mxu0 %v1839
      %1845 = vmatprep.subr.bf16.mxu0 0
      %1846 = vmatpush1.bf16.msra.mxu0 %v1840
      %1847 = vmatprep.subr.bf16.mxu0 0
      %1848 = vmatpush1.bf16.msra.mxu0 0
      %1849 = vmatprep.subr.bf16.mxu0 0
      %1850 = vmatpush1.bf16.msra.mxu0 0
      %1851 = vmatprep.subr.bf16.mxu0 0
      %1852 = vmatpush1.bf16.msra.mxu0 0
      %1853 = vmatprep.subr.bf16.mxu0 0
      %1854 = vmatpush1.bf16.msra.mxu0 0
      %1855 = vmatprep.subr.bf16.mxu0 0
      %1856 = vmatpush1.bf16.msra.mxu0 0
      %1857 = vmatprep.subr.bf16.mxu0 0
      %1858 = vmatpush1.bf16.msra.mxu0 0
      %1859 = vmatprep.subr.bf16.mxu0 0
      %1860 = vmatpush1.bf16.msra.mxu0 0
      %1861 = vmatprep.subr.bf16.mxu0 0
      %1862 = vmatpush1.bf16.msra.mxu0 0
      %1863 = vmatprep.subr.bf16.mxu0 0
      %1864 = vmatpush1.bf16.msra.mxu0 0
      %1865 = vmatprep.subr.bf16.mxu0 0
      %1866 = vmatpush1.bf16.msra.mxu0 0
      %1867 = vmatprep.subr.bf16.mxu0 0
      %1868 = vmatpush1.bf16.msra.mxu0 0
      %1869 = vmatprep.subr.bf16.mxu0 0
      %1870 = vmatpush1.bf16.msra.mxu0 0
      %1871 = vmatprep.subr.bf16.mxu0 0
      %1872 = vmatpush1.bf16.msra.mxu0 0
      %1873 = vmatprep.subr.bf16.mxu0 0
      %1874 = vmatpush1.bf16.msra.mxu0 0
      %1875 = vmatprep.mubr.bf16.mxu0 0
      %1876 = vmatmul.mubr.bf16.gmra.mrb[0].mxu0 %v1181
      %v1877 = vpop.f32.mrb[0].mxu0
      %v1878 = vadd.f32 %v1670, %v1877
      %v1879 = vpop.f32.mrb[0].mxu0
      %v1880 = vpop.f32.mrb[0].mxu0
      %v1881 = vpop.f32.mrb[0].mxu0
      %1882 = vdwg.mxu0
      %v1883 = vpack.c.bf16 %v1218, %v1218
      %v1884 = vpack.c.bf16 %v1270, %v1270
      %v1885 = vpack.c.bf16 %v1322, %v1322
      %v1886 = vpack.c.bf16 %v1374, %v1374
      %v1887 = vpack.c.bf16 %v1470, %v1470
      %v1888 = vpack.c.bf16 %v1522, %v1522
      %v1889 = vpack.c.bf16 %v1574, %v1574
      %v1890 = vpack.c.bf16 %v1626, %v1626
      %vm1891 = vcmask 64512
      %v1893 = vsel %vm1891, %v1883, 0
      %v1896 = vsel %vm1891, %v1887, 0
      %1898 = vmatprep.subr.bf16.mxu0 0
      %1899 = vmatpush1.bf16.xpose.msra.mxu0 %v1896
      %1900 = vmatprep.subr.bf16.mxu0 0
      %1901 = vmatpush1.bf16.xpose.msra.mxu0 0
      %1902 = vmatprep.subr.bf16.mxu0 0
      %1903 = vmatpush1.bf16.xpose.msra.mxu0 0
      %1904 = vmatprep.subr.bf16.mxu0 0
      %1905 = vmatpush1.bf16.xpose.msra.mxu0 0
      %1906 = vmatprep.subr.bf16.mxu0 0
      %1907 = vmatpush1.bf16.xpose.msra.mxu0 0
      %1908 = vmatprep.subr.bf16.mxu0 0
      %1909 = vmatpush1.bf16.xpose.msra.mxu0 0
      %1910 = vmatprep.subr.bf16.mxu0 0
      %1911 = vmatpush1.bf16.xpose.msra.mxu0 0
      %1912 = vmatprep.subr.bf16.mxu0 0
      %1913 = vmatpush1.bf16.xpose.msra.mxu0 0
      %1914 = vmatprep.subr.bf16.mxu0 0
      %1915 = vmatpush1.bf16.xpose.msra.mxu0 0
      %1916 = vmatprep.subr.bf16.mxu0 0
      %1917 = vmatpush1.bf16.xpose.msra.mxu0 0
      %1918 = vmatprep.subr.bf16.mxu0 0
      %1919 = vmatpush1.bf16.xpose.msra.mxu0 0
      %1920 = vmatprep.subr.bf16.mxu0 0
      %1921 = vmatpush1.bf16.xpose.msra.mxu0 0
      %1922 = vmatprep.subr.bf16.mxu0 0
      %1923 = vmatpush1.bf16.xpose.msra.mxu0 0
      %1924 = vmatprep.subr.bf16.mxu0 0
      %1925 = vmatpush1.bf16.xpose.msra.mxu0 0
      %1926 = vmatprep.subr.bf16.mxu0 0
      %1927 = vmatpush1.bf16.xpose.msra.mxu0 0
      %1928 = vmatprep.subr.bf16.mxu0 0
      %1929 = vmatpush1.bf16.xpose.msra.mxu0 0
      %1930 = vmatprep.mubr.bf16.mxu0 0
      %1931 = vmatmul.mubr.bf16.gmra.mrb[0].mxu0 %v1893
      %v1932 = vpop.f32.mrb[0].mxu0
      %v1933 = vadd.f32 0.0, %v1932
      %v1934 = vpop.f32.mrb[0].mxu0
      %v1935 = vpop.f32.mrb[0].mxu0
      %v1936 = vpop.f32.mrb[0].mxu0
      %1937 = vdwg.mxu0
      %v1939 = vsel %vm1891, %v1884, 0
      %v1942 = vsel %vm1891, %v1888, 0
      %1944 = vmatprep.subr.bf16.mxu0 0
      %1945 = vmatpush1.bf16.xpose.msra.mxu0 %v1942
      %1946 = vmatprep.subr.bf16.mxu0 0
      %1947 = vmatpush1.bf16.xpose.msra.mxu0 0
      %1948 = vmatprep.subr.bf16.mxu0 0
      %1949 = vmatpush1.bf16.xpose.msra.mxu0 0
      %1950 = vmatprep.subr.bf16.mxu0 0
      %1951 = vmatpush1.bf16.xpose.msra.mxu0 0
      %1952 = vmatprep.subr.bf16.mxu0 0
      %1953 = vmatpush1.bf16.xpose.msra.mxu0 0
      %1954 = vmatprep.subr.bf16.mxu0 0
      %1955 = vmatpush1.bf16.xpose.msra.mxu0 0
      %1956 = vmatprep.subr.bf16.mxu0 0
      %1957 = vmatpush1.bf16.xpose.msra.mxu0 0
      %1958 = vmatprep.subr.bf16.mxu0 0
      %1959 = vmatpush1.bf16.xpose.msra.mxu0 0
      %1960 = vmatprep.subr.bf16.mxu0 0
      %1961 = vmatpush1.bf16.xpose.msra.mxu0 0
      %1962 = vmatprep.subr.bf16.mxu0 0
      %1963 = vmatpush1.bf16.xpose.msra.mxu0 0
      %1964 = vmatprep.subr.bf16.mxu0 0
      %1965 = vmatpush1.bf16.xpose.msra.mxu0 0
      %1966 = vmatprep.subr.bf16.mxu0 0
      %1967 = vmatpush1.bf16.xpose.msra.mxu0 0
      %1968 = vmatprep.subr.bf16.mxu0 0
      %1969 = vmatpush1.bf16.xpose.msra.mxu0 0
      %1970 = vmatprep.subr.bf16.mxu0 0
      %1971 = vmatpush1.bf16.xpose.msra.mxu0 0
      %1972 = vmatprep.subr.bf16.mxu0 0
      %1973 = vmatpush1.bf16.xpose.msra.mxu0 0
      %1974 = vmatprep.subr.bf16.mxu0 0
      %1975 = vmatpush1.bf16.xpose.msra.mxu0 0
      %1976 = vmatprep.mubr.bf16.mxu0 0
      %1977 = vmatmul.mubr.bf16.gmra.mrb[0].mxu0 %v1939
      %v1978 = vpop.f32.mrb[0].mxu0
      %v1979 = vadd.f32 0.0, %v1978
      %v1980 = vpop.f32.mrb[0].mxu0
      %v1981 = vpop.f32.mrb[0].mxu0
      %v1982 = vpop.f32.mrb[0].mxu0
      %1983 = vdwg.mxu0
      %v1985 = vsel %vm1891, %v1885, 0
      %v1988 = vsel %vm1891, %v1889, 0
      %1990 = vmatprep.subr.bf16.mxu0 0
      %1991 = vmatpush1.bf16.xpose.msra.mxu0 %v1988
      %1992 = vmatprep.subr.bf16.mxu0 0
      %1993 = vmatpush1.bf16.xpose.msra.mxu0 0
      %1994 = vmatprep.subr.bf16.mxu0 0
      %1995 = vmatpush1.bf16.xpose.msra.mxu0 0
      %1996 = vmatprep.subr.bf16.mxu0 0
      %1997 = vmatpush1.bf16.xpose.msra.mxu0 0
      %1998 = vmatprep.subr.bf16.mxu0 0
      %1999 = vmatpush1.bf16.xpose.msra.mxu0 0
      %2000 = vmatprep.subr.bf16.mxu0 0
      %2001 = vmatpush1.bf16.xpose.msra.mxu0 0
      %2002 = vmatprep.subr.bf16.mxu0 0
      %2003 = vmatpush1.bf16.xpose.msra.mxu0 0
      %2004 = vmatprep.subr.bf16.mxu0 0
      %2005 = vmatpush1.bf16.xpose.msra.mxu0 0
      %2006 = vmatprep.subr.bf16.mxu0 0
      %2007 = vmatpush1.bf16.xpose.msra.mxu0 0
      %2008 = vmatprep.subr.bf16.mxu0 0
      %2009 = vmatpush1.bf16.xpose.msra.mxu0 0
      %2010 = vmatprep.subr.bf16.mxu0 0
      %2011 = vmatpush1.bf16.xpose.msra.mxu0 0
      %2012 = vmatprep.subr.bf16.mxu0 0
      %2013 = vmatpush1.bf16.xpose.msra.mxu0 0
      %2014 = vmatprep.subr.bf16.mxu0 0
      %2015 = vmatpush1.bf16.xpose.msra.mxu0 0
      %2016 = vmatprep.subr.bf16.mxu0 0
      %2017 = vmatpush1.bf16.xpose.msra.mxu0 0
      %2018 = vmatprep.subr.bf16.mxu0 0
      %2019 = vmatpush1.bf16.xpose.msra.mxu0 0
      %2020 = vmatprep.subr.bf16.mxu0 0
      %2021 = vmatpush1.bf16.xpose.msra.mxu0 0
      %2022 = vmatprep.mubr.bf16.mxu0 0
      %2023 = vmatmul.mubr.bf16.gmra.mrb[0].mxu0 %v1985
      %v2024 = vpop.f32.mrb[0].mxu0
      %v2025 = vadd.f32 0.0, %v2024
      %v2026 = vpop.f32.mrb[0].mxu0
      %v2027 = vpop.f32.mrb[0].mxu0
      %v2028 = vpop.f32.mrb[0].mxu0
      %2029 = vdwg.mxu0
      %v2031 = vsel %vm1891, %v1886, 0
      %v2034 = vsel %vm1891, %v1890, 0
      %2036 = vmatprep.subr.bf16.mxu0 0
      %2037 = vmatpush1.bf16.xpose.msra.mxu0 %v2034
      %2038 = vmatprep.subr.bf16.mxu0 0
      %2039 = vmatpush1.bf16.xpose.msra.mxu0 0
      %2040 = vmatprep.subr.bf16.mxu0 0
      %2041 = vmatpush1.bf16.xpose.msra.mxu0 0
      %2042 = vmatprep.subr.bf16.mxu0 0
      %2043 = vmatpush1.bf16.xpose.msra.mxu0 0
      %2044 = vmatprep.subr.bf16.mxu0 0
      %2045 = vmatpush1.bf16.xpose.msra.mxu0 0
      %2046 = vmatprep.subr.bf16.mxu0 0
      %2047 = vmatpush1.bf16.xpose.msra.mxu0 0
      %2048 = vmatprep.subr.bf16.mxu0 0
      %2049 = vmatpush1.bf16.xpose.msra.mxu0 0
      %2050 = vmatprep.subr.bf16.mxu0 0
      %2051 = vmatpush1.bf16.xpose.msra.mxu0 0
      %2052 = vmatprep.subr.bf16.mxu0 0
      %2053 = vmatpush1.bf16.xpose.msra.mxu0 0
      %2054 = vmatprep.subr.bf16.mxu0 0
      %2055 = vmatpush1.bf16.xpose.msra.mxu0 0
      %2056 = vmatprep.subr.bf16.mxu0 0
      %2057 = vmatpush1.bf16.xpose.msra.mxu0 0
      %2058 = vmatprep.subr.bf16.mxu0 0
      %2059 = vmatpush1.bf16.xpose.msra.mxu0 0
      %2060 = vmatprep.subr.bf16.mxu0 0
      %2061 = vmatpush1.bf16.xpose.msra.mxu0 0
      %2062 = vmatprep.subr.bf16.mxu0 0
      %2063 = vmatpush1.bf16.xpose.msra.mxu0 0
      %2064 = vmatprep.subr.bf16.mxu0 0
      %2065 = vmatpush1.bf16.xpose.msra.mxu0 0
      %2066 = vmatprep.subr.bf16.mxu0 0
      %2067 = vmatpush1.bf16.xpose.msra.mxu0 0
      %2068 = vmatprep.mubr.bf16.mxu0 0
      %2069 = vmatmul.mubr.bf16.gmra.mrb[0].mxu0 %v2031
      %v2070 = vpop.f32.mrb[0].mxu0
      %v2071 = vadd.f32 0.0, %v2070
      %v2072 = vpop.f32.mrb[0].mxu0
      %v2073 = vpop.f32.mrb[0].mxu0
      %v2074 = vpop.f32.mrb[0].mxu0
      %2075 = vdwg.mxu0
      %v2076 = vmul.f32 %v1933, 0.35355338
      %v2077 = vmul.f32 %v1979, 0.35355338
      %v2078 = vmul.f32 %v2025, 0.35355338
      %v2079 = vmul.f32 %v2071, 0.35355338
      %v2080 = vlaneseq
      %v2081 = vshrl.u32 %v2080, 7
      %v2082 = vlaneseq
      %v2083 = vand.u32 %v2082, 127
      %vm2084 = vcmp.le.s32.totalorder %v2083, %v2081
      %v2085 = vsel %vm2084, 1, 0
      %vm2086 = vcmp.eq.s32.totalorder %v2085, 1
      %v2087 = vsel %vm2086, %v2076, -1e+30
      %v2088 = vsel %vm2086, %v2077, -1e+30
      %v2089 = vsel %vm2086, %v2078, -1e+30
      %v2090 = vsel %vm2086, %v2079, -1e+30
      %v2091 = vsel %vm1891, %v2087, -inf
      %2092 = vmax.xlane.f32.xlu0 %v2091
      %v2093 = vpop.xlane.xlu0 %2092
      %v2094 = vsel %vm1891, %v2088, -inf
      %2095 = vmax.xlane.f32.xlu0 %v2094
      %v2096 = vpop.xlane.xlu0 %2095
      %v2097 = vsel %vm1891, %v2089, -inf
      %2098 = vmax.xlane.f32.xlu0 %v2097
      %v2099 = vpop.xlane.xlu0 %2098
      %v2100 = vsel %vm1891, %v2090, -inf
      %2101 = vmax.xlane.f32.xlu0 %v2100
      %v2102 = vpop.xlane.xlu0 %2101
      %v2103 = vsub.f32 %v2087, %v2093
      %v2104 = vsub.f32 %v2088, %v2096
      %v2105 = vsub.f32 %v2089, %v2099
      %v2106 = vsub.f32 %v2090, %v2102
      %v2107 = vmul.f32 %v2103, 1.442695
      %v2108 = vpow.pop %v2107
      %v2109 = vmul.f32 %v2104, 1.442695
      %v2110 = vpow.pop %v2109
      %v2111 = vmul.f32 %v2105, 1.442695
      %v2112 = vpow.pop %v2111
      %v2113 = vmul.f32 %v2106, 1.442695
      %v2114 = vpow.pop %v2113
      %v2115 = vsel %vm1891, %v2108, 0.0
      %2116 = vadd.xlane.f32.xlu0 %v2115
      %v2117 = vpop.xlane.xlu0 %2116
      %v2118 = vsel %vm1891, %v2110, 0.0
      %2119 = vadd.xlane.f32.xlu0 %v2118
      %v2120 = vpop.xlane.xlu0 %2119
      %v2121 = vsel %vm1891, %v2112, 0.0
      %2122 = vadd.xlane.f32.xlu0 %v2121
      %v2123 = vpop.xlane.xlu0 %2122
      %v2124 = vsel %vm1891, %v2114, 0.0
      %2125 = vadd.xlane.f32.xlu0 %v2124
      %v2126 = vpop.xlane.xlu0 %2125
      %v2127 = vrcp.pop %v2117
      %v2128 = vrcp.pop %v2120
      %v2129 = vrcp.pop %v2123
      %v2130 = vrcp.pop %v2126
      %v2131 = vmul.f32 %v2108, %v2127
      %v2132 = vmul.f32 %v2110, %v2128
      %v2133 = vmul.f32 %v2112, %v2129
      %v2134 = vmul.f32 %v2114, %v2130
      %v2135 = vpack.c.bf16 %v2131, %v2131
      %v2136 = vpack.c.bf16 %v2132, %v2132
      %v2137 = vpack.c.bf16 %v2133, %v2133
      %v2138 = vpack.c.bf16 %v2134, %v2134
      %v2139 = vpack.c.bf16 %v1722, %v1722
      %v2140 = vpack.c.bf16 %v1774, %v1774
      %v2141 = vpack.c.bf16 %v1826, %v1826
      %v2142 = vpack.c.bf16 %v1878, %v1878
      %v2144 = vsel %vm1891, %v2135, 0
      %vm2146 = vcmask 1043456
      %v2148 = vsel %vm2146, %v2139, 0
      %2150 = vmatprep.subr.bf16.mxu0 0
      %2151 = vmatpush1.bf16.msra.mxu0 %v2148
      %2152 = vmatprep.subr.bf16.mxu0 0
      %2153 = vmatpush1.bf16.msra.mxu0 0
      %2154 = vmatprep.subr.bf16.mxu0 0
      %2155 = vmatpush1.bf16.msra.mxu0 0
      %2156 = vmatprep.subr.bf16.mxu0 0
      %2157 = vmatpush1.bf16.msra.mxu0 0
      %2158 = vmatprep.subr.bf16.mxu0 0
      %2159 = vmatpush1.bf16.msra.mxu0 0
      %2160 = vmatprep.subr.bf16.mxu0 0
      %2161 = vmatpush1.bf16.msra.mxu0 0
      %2162 = vmatprep.subr.bf16.mxu0 0
      %2163 = vmatpush1.bf16.msra.mxu0 0
      %2164 = vmatprep.subr.bf16.mxu0 0
      %2165 = vmatpush1.bf16.msra.mxu0 0
      %2166 = vmatprep.subr.bf16.mxu0 0
      %2167 = vmatpush1.bf16.msra.mxu0 0
      %2168 = vmatprep.subr.bf16.mxu0 0
      %2169 = vmatpush1.bf16.msra.mxu0 0
      %2170 = vmatprep.subr.bf16.mxu0 0
      %2171 = vmatpush1.bf16.msra.mxu0 0
      %2172 = vmatprep.subr.bf16.mxu0 0
      %2173 = vmatpush1.bf16.msra.mxu0 0
      %2174 = vmatprep.subr.bf16.mxu0 0
      %2175 = vmatpush1.bf16.msra.mxu0 0
      %2176 = vmatprep.subr.bf16.mxu0 0
      %2177 = vmatpush1.bf16.msra.mxu0 0
      %2178 = vmatprep.subr.bf16.mxu0 0
      %2179 = vmatpush1.bf16.msra.mxu0 0
      %2180 = vmatprep.subr.bf16.mxu0 0
      %2181 = vmatpush1.bf16.msra.mxu0 0
      %2182 = vmatprep.mubr.bf16.mxu0 0
      %2183 = vmatmul.mubr.bf16.gmra.mrb[0].mxu0 %v2144
      %v2184 = vpop.f32.mrb[0].mxu0
      %v2185 = vadd.f32 0.0, %v2184
      %v2186 = vpop.f32.mrb[0].mxu0
      %v2187 = vpop.f32.mrb[0].mxu0
      %v2188 = vpop.f32.mrb[0].mxu0
      %2189 = vdwg.mxu0
      %v2191 = vsel %vm1891, %v2136, 0
      %v2194 = vsel %vm2146, %v2140, 0
      %2196 = vmatprep.subr.bf16.mxu0 0
      %2197 = vmatpush1.bf16.msra.mxu0 %v2194
      %2198 = vmatprep.subr.bf16.mxu0 0
      %2199 = vmatpush1.bf16.msra.mxu0 0
      %2200 = vmatprep.subr.bf16.mxu0 0
      %2201 = vmatpush1.bf16.msra.mxu0 0
      %2202 = vmatprep.subr.bf16.mxu0 0
      %2203 = vmatpush1.bf16.msra.mxu0 0
      %2204 = vmatprep.subr.bf16.mxu0 0
      %2205 = vmatpush1.bf16.msra.mxu0 0
      %2206 = vmatprep.subr.bf16.mxu0 0
      %2207 = vmatpush1.bf16.msra.mxu0 0
      %2208 = vmatprep.subr.bf16.mxu0 0
      %2209 = vmatpush1.bf16.msra.mxu0 0
      %2210 = vmatprep.subr.bf16.mxu0 0
      %2211 = vmatpush1.bf16.msra.mxu0 0
      %2212 = vmatprep.subr.bf16.mxu0 0
      %2213 = vmatpush1.bf16.msra.mxu0 0
      %2214 = vmatprep.subr.bf16.mxu0 0
      %2215 = vmatpush1.bf16.msra.mxu0 0
      %2216 = vmatprep.subr.bf16.mxu0 0
      %2217 = vmatpush1.bf16.msra.mxu0 0
      %2218 = vmatprep.subr.bf16.mxu0 0
      %2219 = vmatpush1.bf16.msra.mxu0 0
      %2220 = vmatprep.subr.bf16.mxu0 0
      %2221 = vmatpush1.bf16.msra.mxu0 0
      %2222 = vmatprep.subr.bf16.mxu0 0
      %2223 = vmatpush1.bf16.msra.mxu0 0
      %2224 = vmatprep.subr.bf16.mxu0 0
      %2225 = vmatpush1.bf16.msra.mxu0 0
      %2226 = vmatprep.subr.bf16.mxu0 0
      %2227 = vmatpush1.bf16.msra.mxu0 0
      %2228 = vmatprep.mubr.bf16.mxu0 0
      %2229 = vmatmul.mubr.bf16.gmra.mrb[0].mxu0 %v2191
      %v2230 = vpop.f32.mrb[0].mxu0
      %v2231 = vadd.f32 0.0, %v2230
      %v2232 = vpop.f32.mrb[0].mxu0
      %v2233 = vpop.f32.mrb[0].mxu0
      %v2234 = vpop.f32.mrb[0].mxu0
      %2235 = vdwg.mxu0
      %v2237 = vsel %vm1891, %v2137, 0
      %v2240 = vsel %vm2146, %v2141, 0
      %2242 = vmatprep.subr.bf16.mxu0 0
      %2243 = vmatpush1.bf16.msra.mxu0 %v2240
      %2244 = vmatprep.subr.bf16.mxu0 0
      %2245 = vmatpush1.bf16.msra.mxu0 0
      %2246 = vmatprep.subr.bf16.mxu0 0
      %2247 = vmatpush1.bf16.msra.mxu0 0
      %2248 = vmatprep.subr.bf16.mxu0 0
      %2249 = vmatpush1.bf16.msra.mxu0 0
      %2250 = vmatprep.subr.bf16.mxu0 0
      %2251 = vmatpush1.bf16.msra.mxu0 0
      %2252 = vmatprep.subr.bf16.mxu0 0
      %2253 = vmatpush1.bf16.msra.mxu0 0
      %2254 = vmatprep.subr.bf16.mxu0 0
      %2255 = vmatpush1.bf16.msra.mxu0 0
      %2256 = vmatprep.subr.bf16.mxu0 0
      %2257 = vmatpush1.bf16.msra.mxu0 0
      %2258 = vmatprep.subr.bf16.mxu0 0
      %2259 = vmatpush1.bf16.msra.mxu0 0
      %2260 = vmatprep.subr.bf16.mxu0 0
      %2261 = vmatpush1.bf16.msra.mxu0 0
      %2262 = vmatprep.subr.bf16.mxu0 0
      %2263 = vmatpush1.bf16.msra.mxu0 0
      %2264 = vmatprep.subr.bf16.mxu0 0
      %2265 = vmatpush1.bf16.msra.mxu0 0
      %2266 = vmatprep.subr.bf16.mxu0 0
      %2267 = vmatpush1.bf16.msra.mxu0 0
      %2268 = vmatprep.subr.bf16.mxu0 0
      %2269 = vmatpush1.bf16.msra.mxu0 0
      %2270 = vmatprep.subr.bf16.mxu0 0
      %2271 = vmatpush1.bf16.msra.mxu0 0
      %2272 = vmatprep.subr.bf16.mxu0 0
      %2273 = vmatpush1.bf16.msra.mxu0 0
      %2274 = vmatprep.mubr.bf16.mxu0 0
      %2275 = vmatmul.mubr.bf16.gmra.mrb[0].mxu0 %v2237
      %v2276 = vpop.f32.mrb[0].mxu0
      %v2277 = vadd.f32 0.0, %v2276
      %v2278 = vpop.f32.mrb[0].mxu0
      %v2279 = vpop.f32.mrb[0].mxu0
      %v2280 = vpop.f32.mrb[0].mxu0
      %2281 = vdwg.mxu0
      %v2283 = vsel %vm1891, %v2138, 0
      %v2286 = vsel %vm2146, %v2142, 0
      %2288 = vmatprep.subr.bf16.mxu0 0
      %2289 = vmatpush1.bf16.msra.mxu0 %v2286
      %2290 = vmatprep.subr.bf16.mxu0 0
      %2291 = vmatpush1.bf16.msra.mxu0 0
      %2292 = vmatprep.subr.bf16.mxu0 0
      %2293 = vmatpush1.bf16.msra.mxu0 0
      %2294 = vmatprep.subr.bf16.mxu0 0
      %2295 = vmatpush1.bf16.msra.mxu0 0
      %2296 = vmatprep.subr.bf16.mxu0 0
      %2297 = vmatpush1.bf16.msra.mxu0 0
      %2298 = vmatprep.subr.bf16.mxu0 0
      %2299 = vmatpush1.bf16.msra.mxu0 0
      %2300 = vmatprep.subr.bf16.mxu0 0
      %2301 = vmatpush1.bf16.msra.mxu0 0
      %2302 = vmatprep.subr.bf16.mxu0 0
      %2303 = vmatpush1.bf16.msra.mxu0 0
      %2304 = vmatprep.subr.bf16.mxu0 0
      %2305 = vmatpush1.bf16.msra.mxu0 0
      %2306 = vmatprep.subr.bf16.mxu0 0
      %2307 = vmatpush1.bf16.msra.mxu0 0
      %2308 = vmatprep.subr.bf16.mxu0 0
      %2309 = vmatpush1.bf16.msra.mxu0 0
      %2310 = vmatprep.subr.bf16.mxu0 0
      %2311 = vmatpush1.bf16.msra.mxu0 0
      %2312 = vmatprep.subr.bf16.mxu0 0
      %2313 = vmatpush1.bf16.msra.mxu0 0
      %2314 = vmatprep.subr.bf16.mxu0 0
      %2315 = vmatpush1.bf16.msra.mxu0 0
      %2316 = vmatprep.subr.bf16.mxu0 0
      %2317 = vmatpush1.bf16.msra.mxu0 0
      %2318 = vmatprep.subr.bf16.mxu0 0
      %2319 = vmatpush1.bf16.msra.mxu0 0
      %2320 = vmatprep.mubr.bf16.mxu0 0
      %2321 = vmatmul.mubr.bf16.gmra.mrb[0].mxu0 %v2283
      %v2322 = vpop.f32.mrb[0].mxu0
      %v2323 = vadd.f32 0.0, %v2322
      %v2324 = vpop.f32.mrb[0].mxu0
      %v2325 = vpop.f32.mrb[0].mxu0
      %v2326 = vpop.f32.mrb[0].mxu0
      %2327 = vdwg.mxu0
      %v2328 = vpack.c.bf16 %v2185, %v2185
      %v2329 = vpack.c.bf16 %v2231, %v2231
      %v2330 = vpack.c.bf16 %v2277, %v2277
      %v2331 = vpack.c.bf16 %v2323, %v2323
      %v2332 = vld [vmem:[%s1031] sm:$0xf]
      %v2333 = vld [vmem:[%s1031 + $0x4] sm:$0xf]
      %v2334 = vld [vmem:[%s1031 + $0x8] sm:$0xf]
      %v2335 = vld [vmem:[%s1031 + $0xc] sm:$0xf]
      %v2337 = vsel %vm1891, %v2328, 0
      %v2340 = vsel %vm2146, %v2332, 0
      %2342 = vmatprep.subr.bf16.mxu0 0
      %2343 = vmatpush1.bf16.msra.mxu0 %v2340
      %2344 = vmatprep.subr.bf16.mxu0 0
      %2345 = vmatpush1.bf16.msra.mxu0 0
      %2346 = vmatprep.subr.bf16.mxu0 0
      %2347 = vmatpush1.bf16.msra.mxu0 0
      %2348 = vmatprep.subr.bf16.mxu0 0
      %2349 = vmatpush1.bf16.msra.mxu0 0
      %2350 = vmatprep.subr.bf16.mxu0 0
      %2351 = vmatpush1.bf16.msra.mxu0 0
      %2352 = vmatprep.subr.bf16.mxu0 0
      %2353 = vmatpush1.bf16.msra.mxu0 0
      %2354 = vmatprep.subr.bf16.mxu0 0
      %2355 = vmatpush1.bf16.msra.mxu0 0
      %2356 = vmatprep.subr.bf16.mxu0 0
      %2357 = vmatpush1.bf16.msra.mxu0 0
      %2358 = vmatprep.subr.bf16.mxu0 0
      %2359 = vmatpush1.bf16.msra.mxu0 0
      %2360 = vmatprep.subr.bf16.mxu0 0
      %2361 = vmatpush1.bf16.msra.mxu0 0
      %2362 = vmatprep.subr.bf16.mxu0 0
      %2363 = vmatpush1.bf16.msra.mxu0 0
      %2364 = vmatprep.subr.bf16.mxu0 0
      %2365 = vmatpush1.bf16.msra.mxu0 0
      %2366 = vmatprep.subr.bf16.mxu0 0
      %2367 = vmatpush1.bf16.msra.mxu0 0
      %2368 = vmatprep.subr.bf16.mxu0 0
      %2369 = vmatpush1.bf16.msra.mxu0 0
      %2370 = vmatprep.subr.bf16.mxu0 0
      %2371 = vmatpush1.bf16.msra.mxu0 0
      %2372 = vmatprep.subr.bf16.mxu0 0
      %2373 = vmatpush1.bf16.msra.mxu0 0
      %2374 = vmatprep.mubr.bf16.mxu0 0
      %2375 = vmatmul.mubr.bf16.gmra.mrb[0].mxu0 %v2337
      %v2376 = vpop.f32.mrb[0].mxu0
      %v2377 = vadd.f32 0.0, %v2376
      %v2378 = vpop.f32.mrb[0].mxu0
      %v2379 = vpop.f32.mrb[0].mxu0
      %v2380 = vpop.f32.mrb[0].mxu0
      %2381 = vdwg.mxu0
      %v2383 = vsel %vm1891, %v2329, 0
      %v2386 = vsel %vm2146, %v2333, 0
      %2388 = vmatprep.subr.bf16.mxu0 0
      %2389 = vmatpush1.bf16.msra.mxu0 %v2386
      %2390 = vmatprep.subr.bf16.mxu0 0
      %2391 = vmatpush1.bf16.msra.mxu0 0
      %2392 = vmatprep.subr.bf16.mxu0 0
      %2393 = vmatpush1.bf16.msra.mxu0 0
      %2394 = vmatprep.subr.bf16.mxu0 0
      %2395 = vmatpush1.bf16.msra.mxu0 0
      %2396 = vmatprep.subr.bf16.mxu0 0
      %2397 = vmatpush1.bf16.msra.mxu0 0
      %2398 = vmatprep.subr.bf16.mxu0 0
      %2399 = vmatpush1.bf16.msra.mxu0 0
      %2400 = vmatprep.subr.bf16.mxu0 0
      %2401 = vmatpush1.bf16.msra.mxu0 0
      %2402 = vmatprep.subr.bf16.mxu0 0
      %2403 = vmatpush1.bf16.msra.mxu0 0
      %2404 = vmatprep.subr.bf16.mxu0 0
      %2405 = vmatpush1.bf16.msra.mxu0 0
      %2406 = vmatprep.subr.bf16.mxu0 0
      %2407 = vmatpush1.bf16.msra.mxu0 0
      %2408 = vmatprep.subr.bf16.mxu0 0
      %2409 = vmatpush1.bf16.msra.mxu0 0
      %2410 = vmatprep.subr.bf16.mxu0 0
      %2411 = vmatpush1.bf16.msra.mxu0 0
      %2412 = vmatprep.subr.bf16.mxu0 0
      %2413 = vmatpush1.bf16.msra.mxu0 0
      %2414 = vmatprep.subr.bf16.mxu0 0
      %2415 = vmatpush1.bf16.msra.mxu0 0
      %2416 = vmatprep.subr.bf16.mxu0 0
      %2417 = vmatpush1.bf16.msra.mxu0 0
      %2418 = vmatprep.subr.bf16.mxu0 0
      %2419 = vmatpush1.bf16.msra.mxu0 0
      %2420 = vmatprep.mubr.bf16.mxu0 0
      %2421 = vmatmul.mubr.bf16.gmra.mrb[0].mxu0 %v2383
      %v2422 = vpop.f32.mrb[0].mxu0
      %v2423 = vadd.f32 0.0, %v2422
      %v2424 = vpop.f32.mrb[0].mxu0
      %v2425 = vpop.f32.mrb[0].mxu0
      %v2426 = vpop.f32.mrb[0].mxu0
      %2427 = vdwg.mxu0
      %v2429 = vsel %vm1891, %v2330, 0
      %v2432 = vsel %vm2146, %v2334, 0
      %2434 = vmatprep.subr.bf16.mxu0 0
      %2435 = vmatpush1.bf16.msra.mxu0 %v2432
      %2436 = vmatprep.subr.bf16.mxu0 0
      %2437 = vmatpush1.bf16.msra.mxu0 0
      %2438 = vmatprep.subr.bf16.mxu0 0
      %2439 = vmatpush1.bf16.msra.mxu0 0
      %2440 = vmatprep.subr.bf16.mxu0 0
      %2441 = vmatpush1.bf16.msra.mxu0 0
      %2442 = vmatprep.subr.bf16.mxu0 0
      %2443 = vmatpush1.bf16.msra.mxu0 0
      %2444 = vmatprep.subr.bf16.mxu0 0
      %2445 = vmatpush1.bf16.msra.mxu0 0
      %2446 = vmatprep.subr.bf16.mxu0 0
      %2447 = vmatpush1.bf16.msra.mxu0 0
      %2448 = vmatprep.subr.bf16.mxu0 0
      %2449 = vmatpush1.bf16.msra.mxu0 0
      %2450 = vmatprep.subr.bf16.mxu0 0
      %2451 = vmatpush1.bf16.msra.mxu0 0
      %2452 = vmatprep.subr.bf16.mxu0 0
      %2453 = vmatpush1.bf16.msra.mxu0 0
      %2454 = vmatprep.subr.bf16.mxu0 0
      %2455 = vmatpush1.bf16.msra.mxu0 0
      %2456 = vmatprep.subr.bf16.mxu0 0
      %2457 = vmatpush1.bf16.msra.mxu0 0
      %2458 = vmatprep.subr.bf16.mxu0 0
      %2459 = vmatpush1.bf16.msra.mxu0 0
      %2460 = vmatprep.subr.bf16.mxu0 0
      %2461 = vmatpush1.bf16.msra.mxu0 0
      %2462 = vmatprep.subr.bf16.mxu0 0
      %2463 = vmatpush1.bf16.msra.mxu0 0
      %2464 = vmatprep.subr.bf16.mxu0 0
      %2465 = vmatpush1.bf16.msra.mxu0 0
      %2466 = vmatprep.mubr.bf16.mxu0 0
      %2467 = vmatmul.mubr.bf16.gmra.mrb[0].mxu0 %v2429
      %v2468 = vpop.f32.mrb[0].mxu0
      %v2469 = vadd.f32 0.0, %v2468
      %v2470 = vpop.f32.mrb[0].mxu0
      %v2471 = vpop.f32.mrb[0].mxu0
      %v2472 = vpop.f32.mrb[0].mxu0
      %2473 = vdwg.mxu0
      %v2475 = vsel %vm1891, %v2331, 0
      %v2478 = vsel %vm2146, %v2335, 0
      %2480 = vmatprep.subr.bf16.mxu0 0
      %2481 = vmatpush1.bf16.msra.mxu0 %v2478
      %2482 = vmatprep.subr.bf16.mxu0 0
      %2483 = vmatpush1.bf16.msra.mxu0 0
      %2484 = vmatprep.subr.bf16.mxu0 0
      %2485 = vmatpush1.bf16.msra.mxu0 0
      %2486 = vmatprep.subr.bf16.mxu0 0
      %2487 = vmatpush1.bf16.msra.mxu0 0
      %2488 = vmatprep.subr.bf16.mxu0 0
      %2489 = vmatpush1.bf16.msra.mxu0 0
      %2490 = vmatprep.subr.bf16.mxu0 0
      %2491 = vmatpush1.bf16.msra.mxu0 0
      %2492 = vmatprep.subr.bf16.mxu0 0
      %2493 = vmatpush1.bf16.msra.mxu0 0
      %2494 = vmatprep.subr.bf16.mxu0 0
      %2495 = vmatpush1.bf16.msra.mxu0 0
      %2496 = vmatprep.subr.bf16.mxu0 0
      %2497 = vmatpush1.bf16.msra.mxu0 0
      %2498 = vmatprep.subr.bf16.mxu0 0
      %2499 = vmatpush1.bf16.msra.mxu0 0
      %2500 = vmatprep.subr.bf16.mxu0 0
      %2501 = vmatpush1.bf16.msra.mxu0 0
      %2502 = vmatprep.subr.bf16.mxu0 0
      %2503 = vmatpush1.bf16.msra.mxu0 0
      %2504 = vmatprep.subr.bf16.mxu0 0
      %2505 = vmatpush1.bf16.msra.mxu0 0
      %2506 = vmatprep.subr.bf16.mxu0 0
      %2507 = vmatpush1.bf16.msra.mxu0 0
      %2508 = vmatprep.subr.bf16.mxu0 0
      %2509 = vmatpush1.bf16.msra.mxu0 0
      %2510 = vmatprep.subr.bf16.mxu0 0
      %2511 = vmatpush1.bf16.msra.mxu0 0
      %2512 = vmatprep.mubr.bf16.mxu0 0
      %2513 = vmatmul.mubr.bf16.gmra.mrb[0].mxu0 %v2475
      %v2514 = vpop.f32.mrb[0].mxu0
      %v2515 = vadd.f32 0.0, %v2514
      %v2516 = vpop.f32.mrb[0].mxu0
      %v2517 = vpop.f32.mrb[0].mxu0
      %v2518 = vpop.f32.mrb[0].mxu0
      %2519 = vdwg.mxu0
      %v2520 = vsel %vm1094, %v2377, 0.0
      %v2521 = vsel %vm1094, %v2423, 0.0
      %v2522 = vadd.f32 %v2520, %v2521
      %v2523 = vsel %vm1094, %v2469, 0.0
      %v2524 = vadd.f32 %v2522, %v2523
      %v2525 = vsel %vm1094, %v2515, 0.0
      %v2526 = vadd.f32 %v2524, %v2525
      %v2527 = vld [vmem:[%s1034] sm:$0x1]
      %v2529 = vlaneseq
      %v2530 = vshrl.u32 %v2529, 7
      %v2531 = vsub.s32 0, %v2530
      %v2532 = vrot.slane %v2527, %v2531
      %v2534 = vadd.f32 %v2526, %v2532
      %v2535 = vadd.f32 %v1091, %v2534
      %v2536 = vld [vmem:[%s1037] sm:$0x1]
      %v2537 = vld [vmem:[%s1040] sm:$0x1]
      %v2538 = vsel %vm1094, %v2535, 0.0
      %2539 = vadd.xlane.f32.xlu0 %v2538
      %v2540 = vpop.xlane.xlu0 %2539
      %v2541 = vmul.f32 %v2540, %v1098
      %v2542 = vsub.f32 %v2535, %v2541
      %v2543 = vmul.f32 %v2542, %v2542
      %v2544 = vsel %vm1094, %v2543, 0.0
      %2545 = vadd.xlane.f32.xlu0 %v2544
      %v2546 = vpop.xlane.xlu0 %2545
      %v2547 = vmul.f32 %v2546, %v1098
      %v2548 = vadd.f32 %v2547, 1e-05
      %v2549 = vrsqrt.pop %v2548
      %v2550 = vmul.f32 %v2542, %v2549
      %v2552 = vlaneseq
      %v2553 = vshrl.u32 %v2552, 7
      %v2554 = vsub.s32 0, %v2553
      %v2555 = vrot.slane %v2536, %v2554
      %v2557 = vmul.f32 %v2550, %v2555
      %v2559 = vlaneseq
      %v2560 = vshrl.u32 %v2559, 7
      %v2561 = vsub.s32 0, %v2560
      %v2562 = vrot.slane %v2537, %v2561
      %v2564 = vadd.f32 %v2557, %v2562
      %v2565 = vld [vmem:[%s1045] sm:$0xf]
      %v2566 = vld [vmem:[%s1045 + $0x4] sm:$0xf]
      %v2567 = vld [vmem:[%s1045 + $0x8] sm:$0xf]
      %v2568 = vld [vmem:[%s1045 + $0xc] sm:$0xf]
      %v2569 = vld [vmem:[%s1048] sm:$0x1]
      %v2570 = vpack.c.bf16 %v2564, %v2564
      %v2572 = vlaneseq
      %v2573 = vshrl.u32 %v2572, 7
      %v2574 = vsub.s32 0, %v2573
      %v2575 = vrot.slane %v2569, %v2574
      %v2581 = vunpack.c.l.b16 %v2565
      %v2582 = vunpack.c.l.b16 %v2566
      %v2583 = vunpack.c.l.b16 %v2567
      %v2584 = vunpack.c.l.b16 %v2568
      %v2585 = vpack.c.b16 %v2582, %v2581
      %v2586 = vpack.c.b16 %v2584, %v2583
      %v2590 = vsel %vm1094, %v2570, 0
      %2592 = vmatprep.subr.bf16.mxu0 0
      %2593 = vmatpush1.bf16.msra.mxu0 %v2585
      %2594 = vmatprep.subr.bf16.mxu0 0
      %2595 = vmatpush1.bf16.msra.mxu0 %v2586
      %2596 = vmatprep.subr.bf16.mxu0 0
      %2597 = vmatpush1.bf16.msra.mxu0 0
      %2598 = vmatprep.subr.bf16.mxu0 0
      %2599 = vmatpush1.bf16.msra.mxu0 0
      %2600 = vmatprep.subr.bf16.mxu0 0
      %2601 = vmatpush1.bf16.msra.mxu0 0
      %2602 = vmatprep.subr.bf16.mxu0 0
      %2603 = vmatpush1.bf16.msra.mxu0 0
      %2604 = vmatprep.subr.bf16.mxu0 0
      %2605 = vmatpush1.bf16.msra.mxu0 0
      %2606 = vmatprep.subr.bf16.mxu0 0
      %2607 = vmatpush1.bf16.msra.mxu0 0
      %2608 = vmatprep.subr.bf16.mxu0 0
      %2609 = vmatpush1.bf16.msra.mxu0 0
      %2610 = vmatprep.subr.bf16.mxu0 0
      %2611 = vmatpush1.bf16.msra.mxu0 0
      %2612 = vmatprep.subr.bf16.mxu0 0
      %2613 = vmatpush1.bf16.msra.mxu0 0
      %2614 = vmatprep.subr.bf16.mxu0 0
      %2615 = vmatpush1.bf16.msra.mxu0 0
      %2616 = vmatprep.subr.bf16.mxu0 0
      %2617 = vmatpush1.bf16.msra.mxu0 0
      %2618 = vmatprep.subr.bf16.mxu0 0
      %2619 = vmatpush1.bf16.msra.mxu0 0
      %2620 = vmatprep.subr.bf16.mxu0 0
      %2621 = vmatpush1.bf16.msra.mxu0 0
      %2622 = vmatprep.subr.bf16.mxu0 0
      %2623 = vmatpush1.bf16.msra.mxu0 0
      %2624 = vmatprep.mubr.bf16.mxu0 0
      %2625 = vmatmul.mubr.bf16.gmra.mrb[0].mxu0 %v2590
      %v2626 = vpop.f32.mrb[0].mxu0
      %v2627 = vadd.f32 %v2575, %v2626
      %v2628 = vpop.f32.mrb[0].mxu0
      %v2629 = vpop.f32.mrb[0].mxu0
      %v2630 = vpop.f32.mrb[0].mxu0
      %2631 = vdwg.mxu0
      %v2632 = vmul.f32 %v2627, 1.702
      %v2633 = vxor.u32 %v2632, 2147483648
      %v2634 = vmul.f32 %v2633, 1.442695
      %v2635 = vpow.pop %v2634
      %v2636 = vadd.f32 %v2635, 1.0
      %v2637 = vrcp.pop %v2636
      %v2638 = vmul.f32 1.0, %v2637
      %v2639 = vmul.f32 %v2627, %v2638
      %v2640 = vld [vmem:[%s1053] sm:$0xf]
      %v2641 = vld [vmem:[%s1053 + $0x4] sm:$0xf]
      %v2642 = vld [vmem:[%s1053 + $0x8] sm:$0xf]
      %v2643 = vld [vmem:[%s1053 + $0xc] sm:$0xf]
      %v2644 = vld [vmem:[%s1053 + $0x10] sm:$0xf]
      %v2645 = vld [vmem:[%s1053 + $0x14] sm:$0xf]
      %v2646 = vld [vmem:[%s1053 + $0x18] sm:$0xf]
      %v2647 = vld [vmem:[%s1053 + $0x1c] sm:$0xf]
      %v2648 = vld [vmem:[%s1053 + $0x20] sm:$0xf]
      %v2649 = vld [vmem:[%s1053 + $0x24] sm:$0xf]
      %v2650 = vld [vmem:[%s1053 + $0x28] sm:$0xf]
      %v2651 = vld [vmem:[%s1053 + $0x2c] sm:$0xf]
      %v2652 = vld [vmem:[%s1053 + $0x30] sm:$0xf]
      %v2653 = vld [vmem:[%s1053 + $0x34] sm:$0xf]
      %v2654 = vld [vmem:[%s1053 + $0x38] sm:$0xf]
      %v2655 = vld [vmem:[%s1053 + $0x3c] sm:$0xf]
      %v2656 = vld [vmem:[%s1056] sm:$0x1]
      %v2657 = vpack.c.bf16 %v2639, %v2639
      %v2659 = vlaneseq
      %v2660 = vshrl.u32 %v2659, 7
      %v2661 = vsub.s32 0, %v2660
      %v2662 = vrot.slane %v2656, %v2661
      %v2680 = vunpack.c.l.b16 %v2640
      %v2681 = vunpack.c.l.b16 %v2641
      %v2682 = vunpack.c.l.b16 %v2642
      %v2683 = vunpack.c.l.b16 %v2643
      %v2684 = vunpack.c.l.b16 %v2644
      %v2685 = vunpack.c.l.b16 %v2645
      %v2686 = vunpack.c.l.b16 %v2646
      %v2687 = vunpack.c.l.b16 %v2647
      %v2688 = vunpack.c.l.b16 %v2648
      %v2689 = vunpack.c.l.b16 %v2649
      %v2690 = vunpack.c.l.b16 %v2650
      %v2691 = vunpack.c.l.b16 %v2651
      %v2692 = vunpack.c.l.b16 %v2652
      %v2693 = vunpack.c.l.b16 %v2653
      %v2694 = vunpack.c.l.b16 %v2654
      %v2695 = vunpack.c.l.b16 %v2655
      %v2696 = vpack.c.b16 %v2681, %v2680
      %v2697 = vpack.c.b16 %v2683, %v2682
      %v2698 = vpack.c.b16 %v2685, %v2684
      %v2699 = vpack.c.b16 %v2687, %v2686
      %v2700 = vpack.c.b16 %v2689, %v2688
      %v2701 = vpack.c.b16 %v2691, %v2690
      %v2702 = vpack.c.b16 %v2693, %v2692
      %v2703 = vpack.c.b16 %v2695, %v2694
      %2712 = vmatprep.subr.bf16.mxu0 0
      %2713 = vmatpush1.bf16.msra.mxu0 %v2696
      %2714 = vmatprep.subr.bf16.mxu0 0
      %2715 = vmatpush1.bf16.msra.mxu0 %v2697
      %2716 = vmatprep.subr.bf16.mxu0 0
      %2717 = vmatpush1.bf16.msra.mxu0 %v2698
      %2718 = vmatprep.subr.bf16.mxu0 0
      %2719 = vmatpush1.bf16.msra.mxu0 %v2699
      %2720 = vmatprep.subr.bf16.mxu0 0
      %2721 = vmatpush1.bf16.msra.mxu0 %v2700
      %2722 = vmatprep.subr.bf16.mxu0 0
      %2723 = vmatpush1.bf16.msra.mxu0 %v2701
      %2724 = vmatprep.subr.bf16.mxu0 0
      %2725 = vmatpush1.bf16.msra.mxu0 %v2702
      %2726 = vmatprep.subr.bf16.mxu0 0
      %2727 = vmatpush1.bf16.msra.mxu0 %v2703
      %2728 = vmatprep.subr.bf16.mxu0 0
      %2729 = vmatpush1.bf16.msra.mxu0 0
      %2730 = vmatprep.subr.bf16.mxu0 0
      %2731 = vmatpush1.bf16.msra.mxu0 0
      %2732 = vmatprep.subr.bf16.mxu0 0
      %2733 = vmatpush1.bf16.msra.mxu0 0
      %2734 = vmatprep.subr.bf16.mxu0 0
      %2735 = vmatpush1.bf16.msra.mxu0 0
      %2736 = vmatprep.subr.bf16.mxu0 0
      %2737 = vmatpush1.bf16.msra.mxu0 0
      %2738 = vmatprep.subr.bf16.mxu0 0
      %2739 = vmatpush1.bf16.msra.mxu0 0
      %2740 = vmatprep.subr.bf16.mxu0 0
      %2741 = vmatpush1.bf16.msra.mxu0 0
      %2742 = vmatprep.subr.bf16.mxu0 0
      %2743 = vmatpush1.bf16.msra.mxu0 0
      %2744 = vmatprep.mubr.bf16.mxu0 0
      %2745 = vmatmul.mubr.bf16.gmra.mrb[0].mxu0 %v2657
      %v2746 = vpop.f32.mrb[0].mxu0
      %v2747 = vadd.f32 %v2662, %v2746
      %v2748 = vpop.f32.mrb[0].mxu0
      %v2749 = vpop.f32.mrb[0].mxu0
      %v2750 = vpop.f32.mrb[0].mxu0
      %2751 = vdwg.mxu0
      %v2752 = vadd.f32 %v2535, %v2747
      %v2753 = vld [vmem:[%s1061] sm:$0xf]
      %v2754 = vld [vmem:[%s1061 + $0x4] sm:$0xf]
      %v2755 = vld [vmem:[%s1061 + $0x8] sm:$0xf]
      %v2756 = vld [vmem:[%s1061 + $0xc] sm:$0xf]
      %v2757 = vld [vmem:[%s1064] sm:$0x1]
      %v2758 = vpack.c.bf16 %v2752, %v2752
      %v2760 = vlaneseq
      %v2761 = vshrl.u32 %v2760, 7
      %v2762 = vsub.s32 0, %v2761
      %v2763 = vrot.slane %v2757, %v2762
      %v2769 = vunpack.c.l.b16 %v2753
      %v2770 = vunpack.c.l.b16 %v2754
      %v2771 = vunpack.c.l.b16 %v2755
      %v2772 = vunpack.c.l.b16 %v2756
      %v2773 = vpack.c.b16 %v2770, %v2769
      %v2774 = vpack.c.b16 %v2772, %v2771
      %v2778 = vsel %vm1094, %v2758, 0
      %2780 = vmatprep.subr.bf16.mxu0 0
      %2781 = vmatpush1.bf16.msra.mxu0 %v2773
      %2782 = vmatprep.subr.bf16.mxu0 0
      %2783 = vmatpush1.bf16.msra.mxu0 %v2774
      %2784 = vmatprep.subr.bf16.mxu0 0
      %2785 = vmatpush1.bf16.msra.mxu0 0
      %2786 = vmatprep.subr.bf16.mxu0 0
      %2787 = vmatpush1.bf16.msra.mxu0 0
      %2788 = vmatprep.subr.bf16.mxu0 0
      %2789 = vmatpush1.bf16.msra.mxu0 0
      %2790 = vmatprep.subr.bf16.mxu0 0
      %2791 = vmatpush1.bf16.msra.mxu0 0
      %2792 = vmatprep.subr.bf16.mxu0 0
      %2793 = vmatpush1.bf16.msra.mxu0 0
      %2794 = vmatprep.subr.bf16.mxu0 0
      %2795 = vmatpush1.bf16.msra.mxu0 0
      %2796 = vmatprep.subr.bf16.mxu0 0
      %2797 = vmatpush1.bf16.msra.mxu0 0
      %2798 = vmatprep.subr.bf16.mxu0 0
      %2799 = vmatpush1.bf16.msra.mxu0 0
      %2800 = vmatprep.subr.bf16.mxu0 0
      %2801 = vmatpush1.bf16.msra.mxu0 0
      %2802 = vmatprep.subr.bf16.mxu0 0
      %2803 = vmatpush1.bf16.msra.mxu0 0
      %2804 = vmatprep.subr.bf16.mxu0 0
      %2805 = vmatpush1.bf16.msra.mxu0 0
      %2806 = vmatprep.subr.bf16.mxu0 0
      %2807 = vmatpush1.bf16.msra.mxu0 0
      %2808 = vmatprep.subr.bf16.mxu0 0
      %2809 = vmatpush1.bf16.msra.mxu0 0
      %2810 = vmatprep.subr.bf16.mxu0 0
      %2811 = vmatpush1.bf16.msra.mxu0 0
      %2812 = vmatprep.mubr.bf16.mxu0 0
      %2813 = vmatmul.mubr.bf16.gmra.mrb[0].mxu0 %v2778
      %v2814 = vpop.f32.mrb[0].mxu0
      %v2815 = vadd.f32 %v2763, %v2814
      %v2816 = vpop.f32.mrb[0].mxu0
      %v2817 = vpop.f32.mrb[0].mxu0
      %v2818 = vpop.f32.mrb[0].mxu0
      %2819 = vdwg.mxu0
      %v2820 = vmax.f32 %v2815, 0.0
      %v2821 = vld [vmem:[%s1068] sm:$0xf]
      %v2822 = vld [vmem:[%s1071] sm:$0x1]
      %v2823 = vpack.c.bf16 %v2820, %v2820
      %v2825 = vlaneseq
      %v2826 = vshrl.u32 %v2825, 7
      %v2827 = vsub.s32 0, %v2826
      %v2828 = vrot.slane %v2822, %v2827
      %v2831 = vsel %vm1891, %v2823, 0
      %v2834 = vsel %vm2146, %v2821, 0
      %2836 = vmatprep.subr.bf16.mxu0 0
      %2837 = vmatpush1.bf16.msra.mxu0 %v2834
      %2838 = vmatprep.subr.bf16.mxu0 0
      %2839 = vmatpush1.bf16.msra.mxu0 0
      %2840 = vmatprep.subr.bf16.mxu0 0
      %2841 = vmatpush1.bf16.msra.mxu0 0
      %2842 = vmatprep.subr.bf16.mxu0 0
      %2843 = vmatpush1.bf16.msra.mxu0 0
      %2844 = vmatprep.subr.bf16.mxu0 0
      %2845 = vmatpush1.bf16.msra.mxu0 0
      %2846 = vmatprep.subr.bf16.mxu0 0
      %2847 = vmatpush1.bf16.msra.mxu0 0
      %2848 = vmatprep.subr.bf16.mxu0 0
      %2849 = vmatpush1.bf16.msra.mxu0 0
      %2850 = vmatprep.subr.bf16.mxu0 0
      %2851 = vmatpush1.bf16.msra.mxu0 0
      %2852 = vmatprep.subr.bf16.mxu0 0
      %2853 = vmatpush1.bf16.msra.mxu0 0
      %2854 = vmatprep.subr.bf16.mxu0 0
      %2855 = vmatpush1.bf16.msra.mxu0 0
      %2856 = vmatprep.subr.bf16.mxu0 0
      %2857 = vmatpush1.bf16.msra.mxu0 0
      %2858 = vmatprep.subr.bf16.mxu0 0
      %2859 = vmatpush1.bf16.msra.mxu0 0
      %2860 = vmatprep.subr.bf16.mxu0 0
      %2861 = vmatpush1.bf16.msra.mxu0 0
      %2862 = vmatprep.subr.bf16.mxu0 0
      %2863 = vmatpush1.bf16.msra.mxu0 0
      %2864 = vmatprep.subr.bf16.mxu0 0
      %2865 = vmatpush1.bf16.msra.mxu0 0
      %2866 = vmatprep.subr.bf16.mxu0 0
      %2867 = vmatpush1.bf16.msra.mxu0 0
      %2868 = vmatprep.mubr.bf16.mxu0 0
      %2869 = vmatmul.mubr.bf16.gmra.mrb[0].mxu0 %v2831
      %v2870 = vpop.f32.mrb[0].mxu0
      %v2871 = vadd.f32 %v2828, %v2870
      %v2872 = vpop.f32.mrb[0].mxu0
      %v2873 = vpop.f32.mrb[0].mxu0
      %v2874 = vpop.f32.mrb[0].mxu0
      %2875 = vdwg.mxu0
      %v2876 = vmax.f32 %v2871, 0.0
      %v2877 = vld [vmem:[%s1075] sm:$0xf]
      %v2878 = vld [vmem:[%s1078] sm:$0x1]
      %v2879 = vpack.c.bf16 %v2876, %v2876
      %v2881 = vlaneseq
      %v2882 = vshrl.u32 %v2881, 7
      %v2883 = vsub.s32 0, %v2882
      %v2884 = vrot.slane %v2878, %v2883
      %v2887 = vsel %vm1891, %v2879, 0
      %v2890 = vsel %vm2146, %v2877, 0
      %2892 = vmatprep.subr.bf16.mxu0 0
      %2893 = vmatpush1.bf16.msra.mxu0 %v2890
      %2894 = vmatprep.subr.bf16.mxu0 0
      %2895 = vmatpush1.bf16.msra.mxu0 0
      %2896 = vmatprep.subr.bf16.mxu0 0
      %2897 = vmatpush1.bf16.msra.mxu0 0
      %2898 = vmatprep.subr.bf16.mxu0 0
      %2899 = vmatpush1.bf16.msra.mxu0 0
      %2900 = vmatprep.subr.bf16.mxu0 0
      %2901 = vmatpush1.bf16.msra.mxu0 0
      %2902 = vmatprep.subr.bf16.mxu0 0
      %2903 = vmatpush1.bf16.msra.mxu0 0
      %2904 = vmatprep.subr.bf16.mxu0 0
      %2905 = vmatpush1.bf16.msra.mxu0 0
      %2906 = vmatprep.subr.bf16.mxu0 0
      %2907 = vmatpush1.bf16.msra.mxu0 0
      %2908 = vmatprep.subr.bf16.mxu0 0
      %2909 = vmatpush1.bf16.msra.mxu0 0
      %2910 = vmatprep.subr.bf16.mxu0 0
      %2911 = vmatpush1.bf16.msra.mxu0 0
      %2912 = vmatprep.subr.bf16.mxu0 0
      %2913 = vmatpush1.bf16.msra.mxu0 0
      %2914 = vmatprep.subr.bf16.mxu0 0
      %2915 = vmatpush1.bf16.msra.mxu0 0
      %2916 = vmatprep.subr.bf16.mxu0 0
      %2917 = vmatpush1.bf16.msra.mxu0 0
      %2918 = vmatprep.subr.bf16.mxu0 0
      %2919 = vmatpush1.bf16.msra.mxu0 0
      %2920 = vmatprep.subr.bf16.mxu0 0
      %2921 = vmatpush1.bf16.msra.mxu0 0
      %2922 = vmatprep.subr.bf16.mxu0 0
      %2923 = vmatpush1.bf16.msra.mxu0 0
      %2924 = vmatprep.mubr.bf16.mxu0 0
      %2925 = vmatmul.mubr.bf16.gmra.mrb[0].mxu0 %v2887
      %v2926 = vpop.f32.mrb[0].mxu0
      %v2927 = vadd.f32 %v2884, %v2926
      %v2928 = vpop.f32.mrb[0].mxu0
      %v2929 = vpop.f32.mrb[0].mxu0
      %v2930 = vpop.f32.mrb[0].mxu0
      %2931 = vdwg.mxu0
      %v2932 = vmul.f32 %v2927, 0.1
      %v2933 = vadd.f32 %v2752, %v2932
      %2934 = vst.msk [vmem:[%s1082] sm:$0xff] %vm1094, %v2933
      %p2935 = scmp.lt.s32.totalorder %s38, 3
      %s2936 = scalar_select %p2935, %s38, 3
      %s2937 = smul.addr %s2936, 8
      %s2938 = scalar_lea.vmem %s23, %s2937
      // Predicated region
      $region117: #{_lambda_.8} parent=111 // pred_check
        %p2939 = pneg %p662
      $region118: #{_lambda_.8} parent=111 // pred_check_branch
        %2941 = sbr.rel (%p2939) target = $region120
      $region119: #{_lambda_.8} parent=111 // pred_region
        _
      $region120: #{_lambda_.8} parent=111 // pred_fallthru
        _
    $region112: #{_lambda_.8} parent=5 // pred_fallthru
      _
    %p2942 = scmp.le.s32.totalorder 2, %s29
    // Predicated region
    $region121: #{_lambda_.8} parent=5 // pred_check
      %p2943 = pneg %p2942
    $region122: #{_lambda_.8} parent=5 // pred_check_branch
      %2945 = sbr.rel (%p2943) target = $region124
    $region123: #{_lambda_.8} parent=5 // pred_region
      %s2946 = ssub.s32 %s29, 2
      // Predicated region
      $region125: #{_lambda_.8} parent=123 // pred_check
        %p2947 = pneg %p668
      $region126: #{_lambda_.8} parent=123 // pred_check_branch
        %2949 = sbr.rel (%p2947) target = $region128
      $region127: #{_lambda_.8} parent=123 // pred_region
        %p2950 = scmp.lt.s32.totalorder %s40, 3
        %s2951 = scalar_select %p2950, %s40, 3
        %s2952 = smul.addr %s2951, 8
        %s2953 = scalar_lea.vmem %s23, %s2952
      $region128: #{_lambda_.8} parent=123 // pred_fallthru
        _
    $region124: #{_lambda_.8} parent=5 // pred_fallthru
      _
  $region6: #{_lambda_.8} parent=0 // loop_footer
    %s33 = sadd.s32 1, %s29
  $region7: #{_lambda_.8} parent=0 // loop_footer_branch
    %28 = sbr.rel target = $region3
  $region8: #{_lambda_.8} parent=0 // loop_exit
    _

// kernel: _lambda_.9
$region0: #{_lambda_.9}
  #allocation0 [shape = 'u32[]', space=smem, size = 0x4, offset = 0x4, fixed_abs, tag = 'smem constant byte address 0x4 - core index']
  #allocation1 [shape = 'u32[144,128]{1,0:T(1,128)}', space=vmem, size = 0x12000, scoped, tag = 'internal scratch']
  #allocation2 [shape = 'f32[1,1]{1,0:T(1,128)S(6)}', space=smem, size = 0x200, scoped, tag = 'scoped memory for _lambda_.9']
  %s0 = inlined_call_operand.vmem [shape: f32[4,32], index: 0, kind: input, shape index: {}]
  %s1 = inlined_call_operand.vmem [shape: f32[1,32], index: 1, kind: input, shape index: {}]
  %s2 = inlined_call_operand.vmem [shape: f32[1,32], index: 2, kind: input, shape index: {}]
  %s3 = inlined_call_operand.vmem [shape: bf16[32,32], index: 3, kind: input, shape index: {}]
  %s4 = inlined_call_operand.vmem [shape: f32[2,32], index: 4, kind: input, shape index: {}]
  %s5 = inlined_call_operand.<no memory space> [shape: f32[1,1], index: 5, kind: input, shape index: {}]
  %s6 = inlined_call_operand.hbm [shape: f32[4,32], index: 6, kind: output, shape index: {0}]
  %s7 = inlined_call_operand.hbm [shape: f32[2,4], index: 7, kind: output, shape index: {1}]
  %8 = xla_tuple %s6, %s7
  %s9 = sld [smem:[#allocation0]]
  $region42: #{_lambda_.9} parent=0
    _
  %s11 = ssub.s32 1, %s9
  %s12 = scalar_select 0, %s11, %s9
  %13 = sst [smem:[#allocation2]] %s5
  $region1: #{_lambda_.9} parent=0
    #allocation3 [shape = 'u8[2048]{0}', space=vmem, size = 0x800, scoped, tag = 'output window, operand 0, single buffered']
    #allocation4 [shape = 's32[1]{0}', space=sflag, size = 0x4, scoped, tag = 'scoped memory for _lambda_.9']
    #allocation5 [shape = 'u8[1024]{0}', space=vmem, size = 0x400, scoped, tag = 'output window, operand 1, single buffered']
    #allocation6 [shape = 's32[1]{0}', space=sflag, size = 0x4, scoped, tag = 'scoped memory for _lambda_.9']
    %14 = vsyncpa [#allocation4], 0
    %15 = vsyncpa [#allocation6], 0
    // Predicated region
    $region2: #{_lambda_.9} parent=1 // pred_check
      _
    $region3: #{_lambda_.9} parent=1 // pred_check_branch
      %17 = sbr.rel (0) target = $region5
    $region4: #{_lambda_.9} parent=1 // pred_region
      _
    $region5: #{_lambda_.9} parent=1 // pred_fallthru
      _
    // Predicated region
    $region6: #{_lambda_.9} parent=1 // pred_check
      _
    $region7: #{_lambda_.9} parent=1 // pred_check_branch
      %19 = sbr.rel (0) target = $region9
    $region8: #{_lambda_.9} parent=1 // pred_region
      _
    $region9: #{_lambda_.9} parent=1 // pred_fallthru
      _
    // Predicated region
    $region10: #{_lambda_.9} parent=1 // pred_check
      _
    $region11: #{_lambda_.9} parent=1 // pred_check_branch
      %21 = sbr.rel (0) target = $region13
    $region12: #{_lambda_.9} parent=1 // pred_region
      _
    $region13: #{_lambda_.9} parent=1 // pred_fallthru
      _
    // Predicated region
    $region14: #{_lambda_.9} parent=1 // pred_check
      _
    $region15: #{_lambda_.9} parent=1 // pred_check_branch
      %23 = sbr.rel (0) target = $region17
    $region16: #{_lambda_.9} parent=1 // pred_region
      _
    $region17: #{_lambda_.9} parent=1 // pred_fallthru
      _
    // Predicated region
    $region18: #{_lambda_.9} parent=1 // pred_check
      _
    $region19: #{_lambda_.9} parent=1 // pred_check_branch
      %25 = sbr.rel (0) target = $region21
    $region20: #{_lambda_.9} parent=1 // pred_region
      _
    $region21: #{_lambda_.9} parent=1 // pred_fallthru
      _
    // Predicated region
    $region22: #{_lambda_.9} parent=1 // pred_check
      _
    $region23: #{_lambda_.9} parent=1 // pred_check_branch
      %27 = sbr.rel (0) target = $region25
    $region24: #{_lambda_.9} parent=1 // pred_region
      _
    $region25: #{_lambda_.9} parent=1 // pred_fallthru
      _
    %v29 = vld [vmem:[%s0] sm:$0xf]
    %v30 = vld [vmem:[%s1] sm:$0x1]
    %v31 = vld [vmem:[%s2] sm:$0x1]
    %vm32 = vcmask 257024
    %v33 = vsel %vm32, %v29, 0.0
    %34 = vadd.xlane.f32.xlu0 %v33
    %v35 = vpop.xlane.xlu0 %34
    %v36 = vrcp.pop 32.0
    %v37 = vmul.f32 %v35, %v36
    %v38 = vsub.f32 %v29, %v37
    %v39 = vmul.f32 %v38, %v38
    %v40 = vsel %vm32, %v39, 0.0
    %41 = vadd.xlane.f32.xlu0 %v40
    %v42 = vpop.xlane.xlu0 %41
    %v43 = vmul.f32 %v42, %v36
    %v44 = vadd.f32 %v43, 1e-05
    %v45 = vrsqrt.pop %v44
    %v46 = vmul.f32 %v38, %v45
    %v48 = vlaneseq
    %v49 = vshrl.u32 %v48, 7
    %v50 = vsub.s32 0, %v49
    %v51 = vrot.slane %v30, %v50
    %v53 = vmul.f32 %v46, %v51
    %v55 = vlaneseq
    %v56 = vshrl.u32 %v55, 7
    %v57 = vsub.s32 0, %v56
    %v58 = vrot.slane %v31, %v57
    %v60 = vadd.f32 %v53, %v58
    %v61 = vld [vmem:[%s3] sm:$0xf]
    %v62 = vld [vmem:[%s3 + $0x4] sm:$0xf]
    %v63 = vld [vmem:[%s3 + $0x8] sm:$0xf]
    %v64 = vld [vmem:[%s3 + $0xc] sm:$0xf]
    %v65 = vpack.c.bf16 %v60, %v60
    %v70 = vunpack.c.l.b16 %v61
    %v71 = vunpack.c.l.b16 %v62
    %v72 = vunpack.c.l.b16 %v63
    %v73 = vunpack.c.l.b16 %v64
    %v74 = vpack.c.b16 %v71, %v70
    %v75 = vpack.c.b16 %v73, %v72
    %vm78 = vcmask 261120
    %v80 = vsel %vm78, %v65, 0
    %82 = vmatprep.subr.bf16.mxu0 0
    %83 = vmatpush1.bf16.msra.mxu0 %v74
    %84 = vmatprep.subr.bf16.mxu0 0
    %85 = vmatpush1.bf16.msra.mxu0 %v75
    %86 = vmatprep.subr.bf16.mxu0 0
    %87 = vmatpush1.bf16.msra.mxu0 0
    %88 = vmatprep.subr.bf16.mxu0 0
    %89 = vmatpush1.bf16.msra.mxu0 0
    %90 = vmatprep.subr.bf16.mxu0 0
    %91 = vmatpush1.bf16.msra.mxu0 0
    %92 = vmatprep.subr.bf16.mxu0 0
    %93 = vmatpush1.bf16.msra.mxu0 0
    %94 = vmatprep.subr.bf16.mxu0 0
    %95 = vmatpush1.bf16.msra.mxu0 0
    %96 = vmatprep.subr.bf16.mxu0 0
    %97 = vmatpush1.bf16.msra.mxu0 0
    %98 = vmatprep.subr.bf16.mxu0 0
    %99 = vmatpush1.bf16.msra.mxu0 0
    %100 = vmatprep.subr.bf16.mxu0 0
    %101 = vmatpush1.bf16.msra.mxu0 0
    %102 = vmatprep.subr.bf16.mxu0 0
    %103 = vmatpush1.bf16.msra.mxu0 0
    %104 = vmatprep.subr.bf16.mxu0 0
    %105 = vmatpush1.bf16.msra.mxu0 0
    %106 = vmatprep.subr.bf16.mxu0 0
    %107 = vmatpush1.bf16.msra.mxu0 0
    %108 = vmatprep.subr.bf16.mxu0 0
    %109 = vmatpush1.bf16.msra.mxu0 0
    %110 = vmatprep.subr.bf16.mxu0 0
    %111 = vmatpush1.bf16.msra.mxu0 0
    %112 = vmatprep.subr.bf16.mxu0 0
    %113 = vmatpush1.bf16.msra.mxu0 0
    %114 = vmatprep.mubr.bf16.mxu0 0
    %115 = vmatmul.mubr.bf16.gmra.mrb[0].mxu0 %v80
    %v116 = vpop.f32.mrb[0].mxu0
    %v117 = vadd.f32 0.0, %v116
    %v118 = vpop.f32.mrb[0].mxu0
    %v119 = vpop.f32.mrb[0].mxu0
    %v120 = vpop.f32.mrb[0].mxu0
    %121 = vdwg.mxu0
    %v122 = vmul.f32 %v117, %v117
    %v123 = vsel %vm32, %v122, 0.0
    %124 = vadd.xlane.f32.xlu0 %v123
    %v125 = vpop.xlane.xlu0 %124
    %v126 = vrsqrt.pop %v125
    %v127 = vmul.f32 %v117, %v126
    %128 = vst.msk [vmem:[#allocation3] sm:$0xf] %vm32, %v127
    %v129 = vld [vmem:[%s4] sm:$0x3]
    %v131 = vsel %vm78, %v129, 0
    %v134 = vsel %vm78, %v127, 0
    %136 = vmatprep.subr.mxu0 0.0
    %137 = vmatpush1.xpose.msra.mxu0 %v134
    %138 = vmatprep.subr.mxu0 0.0
    %139 = vmatpush1.xpose.msra.mxu0 0.0
    %140 = vmatprep.subr.mxu0 0.0
    %141 = vmatpush1.xpose.msra.mxu0 0.0
    %142 = vmatprep.subr.mxu0 0.0
    %143 = vmatpush1.xpose.msra.mxu0 0.0
    %144 = vmatprep.subr.mxu0 0.0
    %145 = vmatpush1.xpose.msra.mxu0 0.0
    %146 = vmatprep.subr.mxu0 0.0
    %147 = vmatpush1.xpose.msra.mxu0 0.0
    %148 = vmatprep.subr.mxu0 0.0
    %149 = vmatpush1.xpose.msra.mxu0 0.0
    %150 = vmatprep.subr.mxu0 0.0
    %151 = vmatpush1.xpose.msra.mxu0 0.0
    %152 = vmatprep.subr.mxu0 0.0
    %153 = vmatpush1.xpose.msra.mxu0 0.0
    %154 = vmatprep.subr.mxu0 0.0
    %155 = vmatpush1.xpose.msra.mxu0 0.0
    %156 = vmatprep.subr.mxu0 0.0
    %157 = vmatpush1.xpose.msra.mxu0 0.0
    %158 = vmatprep.subr.mxu0 0.0
    %159 = vmatpush1.xpose.msra.mxu0 0.0
    %160 = vmatprep.subr.mxu0 0.0
    %161 = vmatpush1.xpose.msra.mxu0 0.0
    %162 = vmatprep.subr.mxu0 0.0
    %163 = vmatpush1.xpose.msra.mxu0 0.0
    %164 = vmatprep.subr.mxu0 0.0
    %165 = vmatpush1.xpose.msra.mxu0 0.0
    %166 = vmatprep.subr.mxu0 0.0
    %167 = vmatpush1.xpose.msra.mxu0 0.0
    %168 = vmatprep.subr.mxu0 0.0
    %169 = vmatpush1.xpose.msra.mxu0 0.0
    %170 = vmatprep.subr.mxu0 0.0
    %171 = vmatpush1.xpose.msra.mxu0 0.0
    %172 = vmatprep.subr.mxu0 0.0
    %173 = vmatpush1.xpose.msra.mxu0 0.0
    %174 = vmatprep.subr.mxu0 0.0
    %175 = vmatpush1.xpose.msra.mxu0 0.0
    %176 = vmatprep.subr.mxu0 0.0
    %177 = vmatpush1.xpose.msra.mxu0 0.0
    %178 = vmatprep.subr.mxu0 0.0
    %179 = vmatpush1.xpose.msra.mxu0 0.0
    %180 = vmatprep.subr.mxu0 0.0
    %181 = vmatpush1.xpose.msra.mxu0 0.0
    %182 = vmatprep.subr.mxu0 0.0
    %183 = vmatpush1.xpose.msra.mxu0 0.0
    %184 = vmatprep.subr.mxu0 0.0
    %185 = vmatpush1.xpose.msra.mxu0 0.0
    %186 = vmatprep.subr.mxu0 0.0
    %187 = vmatpush1.xpose.msra.mxu0 0.0
    %188 = vmatprep.subr.mxu0 0.0
    %189 = vmatpush1.xpose.msra.mxu0 0.0
    %190 = vmatprep.subr.mxu0 0.0
    %191 = vmatpush1.xpose.msra.mxu0 0.0
    %192 = vmatprep.subr.mxu0 0.0
    %193 = vmatpush1.xpose.msra.mxu0 0.0
    %194 = vmatprep.subr.mxu0 0.0
    %195 = vmatpush1.xpose.msra.mxu0 0.0
    %196 = vmatprep.subr.mxu0 0.0
    %197 = vmatpush1.xpose.msra.mxu0 0.0
    %198 = vmatprep.subr.mxu0 0.0
    %199 = vmatpush1.xpose.msra.mxu0 0.0
    %200 = vmatprep.mubr.f32.mxu0 0.0
    %201 = vmatmul.mubr.f32.gmra.mrb[0].mxu0 %v131
    %v202 = vpop.f32.mrb[0].mxu0
    %v203 = vadd.f32 0.0, %v202
    %v204 = vpop.f32.mrb[0].mxu0
    %205 = vdwg.mxu0
    %s206 = sld [smem:[#allocation2]]
    %v207 = vstv %s206
    %v208 = vmul.f32 %v207, %v203
    %vm209 = vcmask 25600
    %210 = vst.msk [vmem:[#allocation5] sm:$0x3] %vm209, %v208
    // Predicated region
    $region26: #{_lambda_.9} parent=1 // pred_check
      _
    $region27: #{_lambda_.9} parent=1 // pred_check_branch
      %212 = sbr.rel (0) target = $region29
    $region28: #{_lambda_.9} parent=1 // pred_region
      %s214 = ssub.s32 64, 64
      %215 = vsyncadd [#allocation4], %s214
      %s217 = sshll.u32 [#allocation3], 4
      %s218 = int_to_ptr.vmem [resolvable:$true] %s217
      %220 = dma.vmem_to_hbm [thread:$0]  %s218, 64, %s6, [#allocation4]
    $region29: #{_lambda_.9} parent=1 // pred_fallthru
      _
    // Predicated region
    $region30: #{_lambda_.9} parent=1 // pred_check
      _
    $region31: #{_lambda_.9} parent=1 // pred_check_branch
      %222 = sbr.rel (0) target = $region33
    $region32: #{_lambda_.9} parent=1 // pred_region
      %s224 = ssub.s32 32, 32
      %225 = vsyncadd [#allocation6], %s224
      %s227 = sshll.u32 [#allocation5], 4
      %s228 = int_to_ptr.vmem [resolvable:$true] %s227
      %230 = dma.vmem_to_hbm [thread:$0]  %s228, 32, %s7, [#allocation6]
    $region33: #{_lambda_.9} parent=1 // pred_fallthru
      _
    // Predicated region
    $region34: #{_lambda_.9} parent=1 // pred_check
      _
    $region35: #{_lambda_.9} parent=1 // pred_check_branch
      %232 = sbr.rel (0) target = $region37
    $region36: #{_lambda_.9} parent=1 // pred_region
      %233 = dma.done [#allocation4], 64
    $region37: #{_lambda_.9} parent=1 // pred_fallthru
      _
    // Predicated region
    $region38: #{_lambda_.9} parent=1 // pred_check
      _
    $region39: #{_lambda_.9} parent=1 // pred_check_branch
      %235 = sbr.rel (0) target = $region41
    $region40: #{_lambda_.9} parent=1 // pred_region
      %236 = dma.done [#allocation6], 32
    $region41: #{_lambda_.9} parent=1 // pred_fallthru
      _
    %237 = vsyncpa [#allocation4], 1
    %238 = vsyncpa [#allocation6], 1

// kernel: _lambda_.6
$region0: #{_lambda_.6}
  #allocation0 [shape = 'u32[]', space=smem, size = 0x4, offset = 0x4, fixed_abs, tag = 'smem constant byte address 0x4 - core index']
  #allocation1 [shape = 'u32[144,128]{1,0:T(1,128)}', space=vmem, size = 0x12000, scoped, tag = 'internal scratch']
  %s0 = inlined_call_operand.vmem [shape: f32[2,5,32], index: 0, kind: input, shape index: {}]
  %s1 = inlined_call_operand.vmem [shape: f32[2,1,32], index: 1, kind: input, shape index: {}]
  %s2 = inlined_call_operand.vmem [shape: f32[2,1,32], index: 2, kind: input, shape index: {}]
  %s3 = inlined_call_operand.vmem [shape: bf16[2,4,32,8], index: 3, kind: input, shape index: {}]
  %s4 = inlined_call_operand.vmem [shape: bf16[2,4,32,8], index: 4, kind: input, shape index: {}]
  %s5 = inlined_call_operand.vmem [shape: bf16[2,4,32,8], index: 5, kind: input, shape index: {}]
  %s6 = inlined_call_operand.vmem [shape: f32[2,4,1,8], index: 6, kind: input, shape index: {}]
  %s7 = inlined_call_operand.vmem [shape: f32[2,4,1,8], index: 7, kind: input, shape index: {}]
  %s8 = inlined_call_operand.vmem [shape: f32[2,4,1,8], index: 8, kind: input, shape index: {}]
  %s9 = inlined_call_operand.vmem [shape: bf16[2,4,8,32], index: 9, kind: input, shape index: {}]
  %s10 = inlined_call_operand.vmem [shape: f32[2,1,32], index: 10, kind: input, shape index: {}]
  %s11 = inlined_call_operand.vmem [shape: f32[2,1,32], index: 11, kind: input, shape index: {}]
  %s12 = inlined_call_operand.vmem [shape: f32[2,1,32], index: 12, kind: input, shape index: {}]
  %s13 = inlined_call_operand.vmem [shape: bf16[2,32,128], index: 13, kind: input, shape index: {}]
  %s14 = inlined_call_operand.vmem [shape: f32[2,1,128], index: 14, kind: input, shape index: {}]
  %s15 = inlined_call_operand.vmem [shape: bf16[2,128,32], index: 15, kind: input, shape index: {}]
  %s16 = inlined_call_operand.vmem [shape: f32[2,1,32], index: 16, kind: input, shape index: {}]
  %s17 = inlined_call_operand.vmem [shape: bf16[2,32,8], index: 17, kind: input, shape index: {}]
  %s18 = inlined_call_operand.vmem [shape: f32[2,1,8], index: 18, kind: input, shape index: {}]
  %s19 = inlined_call_operand.vmem [shape: bf16[2,8,8], index: 19, kind: input, shape index: {}]
  %s20 = inlined_call_operand.vmem [shape: f32[2,1,8], index: 20, kind: input, shape index: {}]
  %s21 = inlined_call_operand.vmem [shape: bf16[2,8,32], index: 21, kind: input, shape index: {}]
  %s22 = inlined_call_operand.vmem [shape: f32[2,1,32], index: 22, kind: input, shape index: {}]
  %s23 = inlined_call_operand.vmem [shape: f32[2,5,32], index: 23, kind: output, shape index: {}]
  %s24 = sld [smem:[#allocation0]]
  $region129: #{_lambda_.6} parent=0
    _
  %s26 = ssub.s32 1, %s24
  %s27 = scalar_select 0, %s26, %s24
  loop: start=0, step=1, limit=6
  $region2: #{_lambda_.6} parent=0 // loop_pre_header
    _
  $region3: #{_lambda_.6} parent=0 // loop_header
    %s29 = sphi 0, %s33
    %p30 = scmp.ge.s32.totalorder %s29, 6
    %s36 = sphi 0, %s48
    %s37 = sphi 0, %s44
    %s38 = sphi 0, %s36
    %s39 = sphi 0, %s37
    %s40 = sphi 0, %s38
    %s41 = sphi 0, %s39
    %s51 = sphi 0, %s53
    %s54 = sphi 0, %s51
    %s55 = sphi 0, %s54
    %s71 = sphi 0, %s55
    %s77 = sphi 0, %s79
    %s80 = sphi 0, %s77
    %s81 = sphi 0, %s80
    %s97 = sphi 0, %s81
    %s103 = sphi 0, %s105
    %s106 = sphi 0, %s103
    %s107 = sphi 0, %s106
    %s123 = sphi 0, %s107
    %s129 = sphi 0, %s131
    %s132 = sphi 0, %s129
    %s133 = sphi 0, %s132
    %s149 = sphi 0, %s133
    %s155 = sphi 0, %s157
    %s158 = sphi 0, %s155
    %s159 = sphi 0, %s158
    %s175 = sphi 0, %s159
    %s181 = sphi 0, %s183
    %s184 = sphi 0, %s181
    %s185 = sphi 0, %s184
    %s201 = sphi 0, %s185
    %s207 = sphi 0, %s209
    %s210 = sphi 0, %s207
    %s211 = sphi 0, %s210
    %s227 = sphi 0, %s211
    %s233 = sphi 0, %s235
    %s236 = sphi 0, %s233
    %s237 = sphi 0, %s236
    %s253 = sphi 0, %s237
    %s259 = sphi 0, %s261
    %s262 = sphi 0, %s259
    %s263 = sphi 0, %s262
    %s279 = sphi 0, %s263
    %s285 = sphi 0, %s287
    %s288 = sphi 0, %s285
    %s289 = sphi 0, %s288
    %s305 = sphi 0, %s289
    %s311 = sphi 0, %s313
    %s314 = sphi 0, %s311
    %s315 = sphi 0, %s314
    %s331 = sphi 0, %s315
    %s337 = sphi 0, %s339
    %s340 = sphi 0, %s337
    %s341 = sphi 0, %s340
    %s357 = sphi 0, %s341
    %s363 = sphi 0, %s365
    %s366 = sphi 0, %s363
    %s367 = sphi 0, %s366
    %s383 = sphi 0, %s367
    %s389 = sphi 0, %s391
    %s392 = sphi 0, %s389
    %s393 = sphi 0, %s392
    %s409 = sphi 0, %s393
    %s415 = sphi 0, %s417
    %s418 = sphi 0, %s415
    %s419 = sphi 0, %s418
    %s435 = sphi 0, %s419
    %s441 = sphi 0, %s443
    %s444 = sphi 0, %s441
    %s445 = sphi 0, %s444
    %s461 = sphi 0, %s445
    %s467 = sphi 0, %s469
    %s470 = sphi 0, %s467
    %s471 = sphi 0, %s470
    %s487 = sphi 0, %s471
    %s493 = sphi 0, %s495
    %s496 = sphi 0, %s493
    %s497 = sphi 0, %s496
    %s513 = sphi 0, %s497
    %s519 = sphi 0, %s521
    %s522 = sphi 0, %s519
    %s523 = sphi 0, %s522
    %s539 = sphi 0, %s523
    %s545 = sphi 0, %s547
    %s548 = sphi 0, %s545
    %s549 = sphi 0, %s548
    %s565 = sphi 0, %s549
    %s571 = sphi 0, %s573
    %s574 = sphi 0, %s571
    %s575 = sphi 0, %s574
    %s591 = sphi 0, %s575
    %s597 = sphi 0, %s599
    %s600 = sphi 0, %s597
    %s601 = sphi 0, %s600
    %s617 = sphi 0, %s601
    %s623 = sphi 0, %s625
    %s626 = sphi 0, %s623
    %s627 = sphi 0, %s626
    %s643 = sphi 0, %s627
    %s649 = sphi 0, %s651
    %s652 = sphi 0, %s649
    %s653 = sphi 0, %s652
    %s669 = sphi 0, %s653
  $region4: #{_lambda_.6} parent=0 // loop_header_branch
    %32 = sbr.rel (%p30) target = $region8
  $region5: #{_lambda_.6} parent=0 // loop_body
    %s34 = ssub.s32 %s29, 1
    %s35 = ssub.s32 %s29, 2
    %s42 = sadd.s32 1, %s37
    %p43 = scmp.ge.s32.totalorder %s42, 2
    %s44 = scalar_select %p43, 0, %s42
    %s45 = sadd.s32 1, %s36
    %s46 = scalar_select %p43, %s45, %s36
    %p47 = scmp.ge.s32.totalorder %s46, 2
    %s48 = scalar_select %p47, 0, %s46
    %s49 = ssub.s32 %s36, %s48
    %p50 = scmp.eq.s32.totalorder %s49, 0
    %s52 = sadd.s32 %s51, 1
    %s53 = scalar_select %p50, %s51, %s52
    %p56 = pneg %p50
    %p57 = scmp.eq.s32.totalorder %s29, 3
    %p58 = por %p56, %p57
    %p59 = scmp.ne.s32.totalorder %s51, %s54
    %p60 = scmp.eq.s32.totalorder %s29, 0
    %p61 = por %p59, %p60
    %p62 = scmp.ne.s32.totalorder %s51, %s54
    %p63 = scmp.eq.s32.totalorder %s34, 3
    %p64 = por %p62, %p63
    %p65 = scmp.ne.s32.totalorder %s54, %s55
    %p66 = scmp.eq.s32.totalorder %s34, 0
    %p67 = por %p65, %p66
    %p68 = scmp.ne.s32.totalorder %s54, %s55
    %p69 = scmp.eq.s32.totalorder %s35, 3
    %p70 = por %p68, %p69
    %p72 = scmp.ne.s32.totalorder %s55, %s71
    %p73 = scmp.eq.s32.totalorder %s35, 0
    %p74 = por %p72, %p73
    %s75 = ssub.s32 %s37, %s44
    %p76 = scmp.eq.s32.totalorder %s75, 0
    %s78 = sadd.s32 %s77, 1
    %s79 = scalar_select %p76, %s77, %s78
    %p82 = pneg %p76
    %p83 = scmp.eq.s32.totalorder %s29, 3
    %p84 = por %p82, %p83
    %p85 = scmp.ne.s32.totalorder %s77, %s80
    %p86 = scmp.eq.s32.totalorder %s29, 0
    %p87 = por %p85, %p86
    %p88 = scmp.ne.s32.totalorder %s77, %s80
    %p89 = scmp.eq.s32.totalorder %s34, 3
    %p90 = por %p88, %p89
    %p91 = scmp.ne.s32.totalorder %s80, %s81
    %p92 = scmp.eq.s32.totalorder %s34, 0
    %p93 = por %p91, %p92
    %p94 = scmp.ne.s32.totalorder %s80, %s81
    %p95 = scmp.eq.s32.totalorder %s35, 3
    %p96 = por %p94, %p95
    %p98 = scmp.ne.s32.totalorder %s81, %s97
    %p99 = scmp.eq.s32.totalorder %s35, 0
    %p100 = por %p98, %p99
    %s101 = ssub.s32 %s37, %s44
    %p102 = scmp.eq.s32.totalorder %s101, 0
    %s104 = sadd.s32 %s103, 1
    %s105 = scalar_select %p102, %s103, %s104
    %p108 = pneg %p102
    %p109 = scmp.eq.s32.totalorder %s29, 3
    %p110 = por %p108, %p109
    %p111 = scmp.ne.s32.totalorder %s103, %s106
    %p112 = scmp.eq.s32.totalorder %s29, 0
    %p113 = por %p111, %p112
    %p114 = scmp.ne.s32.totalorder %s103, %s106
    %p115 = scmp.eq.s32.totalorder %s34, 3
    %p116 = por %p114, %p115
    %p117 = scmp.ne.s32.totalorder %s106, %s107
    %p118 = scmp.eq.s32.totalorder %s34, 0
    %p119 = por %p117, %p118
    %p120 = scmp.ne.s32.totalorder %s106, %s107
    %p121 = scmp.eq.s32.totalorder %s35, 3
    %p122 = por %p120, %p121
    %p124 = scmp.ne.s32.totalorder %s107, %s123
    %p125 = scmp.eq.s32.totalorder %s35, 0
    %p126 = por %p124, %p125
    %s127 = ssub.s32 %s37, %s44
    %p128 = scmp.eq.s32.totalorder %s127, 0
    %s130 = sadd.s32 %s129, 1
    %s131 = scalar_select %p128, %s129, %s130
    %p134 = pneg %p128
    %p135 = scmp.eq.s32.totalorder %s29, 3
    %p136 = por %p134, %p135
    %p137 = scmp.ne.s32.totalorder %s129, %s132
    %p138 = scmp.eq.s32.totalorder %s29, 0
    %p139 = por %p137, %p138
    %p140 = scmp.ne.s32.totalorder %s129, %s132
    %p141 = scmp.eq.s32.totalorder %s34, 3
    %p142 = por %p140, %p141
    %p143 = scmp.ne.s32.totalorder %s132, %s133
    %p144 = scmp.eq.s32.totalorder %s34, 0
    %p145 = por %p143, %p144
    %p146 = scmp.ne.s32.totalorder %s132, %s133
    %p147 = scmp.eq.s32.totalorder %s35, 3
    %p148 = por %p146, %p147
    %p150 = scmp.ne.s32.totalorder %s133, %s149
    %p151 = scmp.eq.s32.totalorder %s35, 0
    %p152 = por %p150, %p151
    %s153 = ssub.s32 %s37, %s44
    %p154 = scmp.eq.s32.totalorder %s153, 0
    %s156 = sadd.s32 %s155, 1
    %s157 = scalar_select %p154, %s155, %s156
    %p160 = pneg %p154
    %p161 = scmp.eq.s32.totalorder %s29, 3
    %p162 = por %p160, %p161
    %p163 = scmp.ne.s32.totalorder %s155, %s158
    %p164 = scmp.eq.s32.totalorder %s29, 0
    %p165 = por %p163, %p164
    %p166 = scmp.ne.s32.totalorder %s155, %s158
    %p167 = scmp.eq.s32.totalorder %s34, 3
    %p168 = por %p166, %p167
    %p169 = scmp.ne.s32.totalorder %s158, %s159
    %p170 = scmp.eq.s32.totalorder %s34, 0
    %p171 = por %p169, %p170
    %p172 = scmp.ne.s32.totalorder %s158, %s159
    %p173 = scmp.eq.s32.totalorder %s35, 3
    %p174 = por %p172, %p173
    %p176 = scmp.ne.s32.totalorder %s159, %s175
    %p177 = scmp.eq.s32.totalorder %s35, 0
    %p178 = por %p176, %p177
    %s179 = ssub.s32 %s37, %s44
    %p180 = scmp.eq.s32.totalorder %s179, 0
    %s182 = sadd.s32 %s181, 1
    %s183 = scalar_select %p180, %s181, %s182
    %p186 = pneg %p180
    %p187 = scmp.eq.s32.totalorder %s29, 3
    %p188 = por %p186, %p187
    %p189 = scmp.ne.s32.totalorder %s181, %s184
    %p190 = scmp.eq.s32.totalorder %s29, 0
    %p191 = por %p189, %p190
    %p192 = scmp.ne.s32.totalorder %s181, %s184
    %p193 = scmp.eq.s32.totalorder %s34, 3
    %p194 = por %p192, %p193
    %p195 = scmp.ne.s32.totalorder %s184, %s185
    %p196 = scmp.eq.s32.totalorder %s34, 0
    %p197 = por %p195, %p196
    %p198 = scmp.ne.s32.totalorder %s184, %s185
    %p199 = scmp.eq.s32.totalorder %s35, 3
    %p200 = por %p198, %p199
    %p202 = scmp.ne.s32.totalorder %s185, %s201
    %p203 = scmp.eq.s32.totalorder %s35, 0
    %p204 = por %p202, %p203
    %s205 = ssub.s32 %s37, %s44
    %p206 = scmp.eq.s32.totalorder %s205, 0
    %s208 = sadd.s32 %s207, 1
    %s209 = scalar_select %p206, %s207, %s208
    %p212 = pneg %p206
    %p213 = scmp.eq.s32.totalorder %s29, 3
    %p214 = por %p212, %p213
    %p215 = scmp.ne.s32.totalorder %s207, %s210
    %p216 = scmp.eq.s32.totalorder %s29, 0
    %p217 = por %p215, %p216
    %p218 = scmp.ne.s32.totalorder %s207, %s210
    %p219 = scmp.eq.s32.totalorder %s34, 3
    %p220 = por %p218, %p219
    %p221 = scmp.ne.s32.totalorder %s210, %s211
    %p222 = scmp.eq.s32.totalorder %s34, 0
    %p223 = por %p221, %p222
    %p224 = scmp.ne.s32.totalorder %s210, %s211
    %p225 = scmp.eq.s32.totalorder %s35, 3
    %p226 = por %p224, %p225
    %p228 = scmp.ne.s32.totalorder %s211, %s227
    %p229 = scmp.eq.s32.totalorder %s35, 0
    %p230 = por %p228, %p229
    %s231 = ssub.s32 %s37, %s44
    %p232 = scmp.eq.s32.totalorder %s231, 0
    %s234 = sadd.s32 %s233, 1
    %s235 = scalar_select %p232, %s233, %s234
    %p238 = pneg %p232
    %p239 = scmp.eq.s32.totalorder %s29, 3
    %p240 = por %p238, %p239
    %p241 = scmp.ne.s32.totalorder %s233, %s236
    %p242 = scmp.eq.s32.totalorder %s29, 0
    %p243 = por %p241, %p242
    %p244 = scmp.ne.s32.totalorder %s233, %s236
    %p245 = scmp.eq.s32.totalorder %s34, 3
    %p246 = por %p244, %p245
    %p247 = scmp.ne.s32.totalorder %s236, %s237
    %p248 = scmp.eq.s32.totalorder %s34, 0
    %p249 = por %p247, %p248
    %p250 = scmp.ne.s32.totalorder %s236, %s237
    %p251 = scmp.eq.s32.totalorder %s35, 3
    %p252 = por %p250, %p251
    %p254 = scmp.ne.s32.totalorder %s237, %s253
    %p255 = scmp.eq.s32.totalorder %s35, 0
    %p256 = por %p254, %p255
    %s257 = ssub.s32 %s37, %s44
    %p258 = scmp.eq.s32.totalorder %s257, 0
    %s260 = sadd.s32 %s259, 1
    %s261 = scalar_select %p258, %s259, %s260
    %p264 = pneg %p258
    %p265 = scmp.eq.s32.totalorder %s29, 3
    %p266 = por %p264, %p265
    %p267 = scmp.ne.s32.totalorder %s259, %s262
    %p268 = scmp.eq.s32.totalorder %s29, 0
    %p269 = por %p267, %p268
    %p270 = scmp.ne.s32.totalorder %s259, %s262
    %p271 = scmp.eq.s32.totalorder %s34, 3
    %p272 = por %p270, %p271
    %p273 = scmp.ne.s32.totalorder %s262, %s263
    %p274 = scmp.eq.s32.totalorder %s34, 0
    %p275 = por %p273, %p274
    %p276 = scmp.ne.s32.totalorder %s262, %s263
    %p277 = scmp.eq.s32.totalorder %s35, 3
    %p278 = por %p276, %p277
    %p280 = scmp.ne.s32.totalorder %s263, %s279
    %p281 = scmp.eq.s32.totalorder %s35, 0
    %p282 = por %p280, %p281
    %s283 = ssub.s32 %s37, %s44
    %p284 = scmp.eq.s32.totalorder %s283, 0
    %s286 = sadd.s32 %s285, 1
    %s287 = scalar_select %p284, %s285, %s286
    %p290 = pneg %p284
    %p291 = scmp.eq.s32.totalorder %s29, 3
    %p292 = por %p290, %p291
    %p293 = scmp.ne.s32.totalorder %s285, %s288
    %p294 = scmp.eq.s32.totalorder %s29, 0
    %p295 = por %p293, %p294
    %p296 = scmp.ne.s32.totalorder %s285, %s288
    %p297 = scmp.eq.s32.totalorder %s34, 3
    %p298 = por %p296, %p297
    %p299 = scmp.ne.s32.totalorder %s288, %s289
    %p300 = scmp.eq.s32.totalorder %s34, 0
    %p301 = por %p299, %p300
    %p302 = scmp.ne.s32.totalorder %s288, %s289
    %p303 = scmp.eq.s32.totalorder %s35, 3
    %p304 = por %p302, %p303
    %p306 = scmp.ne.s32.totalorder %s289, %s305
    %p307 = scmp.eq.s32.totalorder %s35, 0
    %p308 = por %p306, %p307
    %s309 = ssub.s32 %s37, %s44
    %p310 = scmp.eq.s32.totalorder %s309, 0
    %s312 = sadd.s32 %s311, 1
    %s313 = scalar_select %p310, %s311, %s312
    %p316 = pneg %p310
    %p317 = scmp.eq.s32.totalorder %s29, 3
    %p318 = por %p316, %p317
    %p319 = scmp.ne.s32.totalorder %s311, %s314
    %p320 = scmp.eq.s32.totalorder %s29, 0
    %p321 = por %p319, %p320
    %p322 = scmp.ne.s32.totalorder %s311, %s314
    %p323 = scmp.eq.s32.totalorder %s34, 3
    %p324 = por %p322, %p323
    %p325 = scmp.ne.s32.totalorder %s314, %s315
    %p326 = scmp.eq.s32.totalorder %s34, 0
    %p327 = por %p325, %p326
    %p328 = scmp.ne.s32.totalorder %s314, %s315
    %p329 = scmp.eq.s32.totalorder %s35, 3
    %p330 = por %p328, %p329
    %p332 = scmp.ne.s32.totalorder %s315, %s331
    %p333 = scmp.eq.s32.totalorder %s35, 0
    %p334 = por %p332, %p333
    %s335 = ssub.s32 %s37, %s44
    %p336 = scmp.eq.s32.totalorder %s335, 0
    %s338 = sadd.s32 %s337, 1
    %s339 = scalar_select %p336, %s337, %s338
    %p342 = pneg %p336
    %p343 = scmp.eq.s32.totalorder %s29, 3
    %p344 = por %p342, %p343
    %p345 = scmp.ne.s32.totalorder %s337, %s340
    %p346 = scmp.eq.s32.totalorder %s29, 0
    %p347 = por %p345, %p346
    %p348 = scmp.ne.s32.totalorder %s337, %s340
    %p349 = scmp.eq.s32.totalorder %s34, 3
    %p350 = por %p348, %p349
    %p351 = scmp.ne.s32.totalorder %s340, %s341
    %p352 = scmp.eq.s32.totalorder %s34, 0
    %p353 = por %p351, %p352
    %p354 = scmp.ne.s32.totalorder %s340, %s341
    %p355 = scmp.eq.s32.totalorder %s35, 3
    %p356 = por %p354, %p355
    %p358 = scmp.ne.s32.totalorder %s341, %s357
    %p359 = scmp.eq.s32.totalorder %s35, 0
    %p360 = por %p358, %p359
    %s361 = ssub.s32 %s37, %s44
    %p362 = scmp.eq.s32.totalorder %s361, 0
    %s364 = sadd.s32 %s363, 1
    %s365 = scalar_select %p362, %s363, %s364
    %p368 = pneg %p362
    %p369 = scmp.eq.s32.totalorder %s29, 3
    %p370 = por %p368, %p369
    %p371 = scmp.ne.s32.totalorder %s363, %s366
    %p372 = scmp.eq.s32.totalorder %s29, 0
    %p373 = por %p371, %p372
    %p374 = scmp.ne.s32.totalorder %s363, %s366
    %p375 = scmp.eq.s32.totalorder %s34, 3
    %p376 = por %p374, %p375
    %p377 = scmp.ne.s32.totalorder %s366, %s367
    %p378 = scmp.eq.s32.totalorder %s34, 0
    %p379 = por %p377, %p378
    %p380 = scmp.ne.s32.totalorder %s366, %s367
    %p381 = scmp.eq.s32.totalorder %s35, 3
    %p382 = por %p380, %p381
    %p384 = scmp.ne.s32.totalorder %s367, %s383
    %p385 = scmp.eq.s32.totalorder %s35, 0
    %p386 = por %p384, %p385
    %s387 = ssub.s32 %s37, %s44
    %p388 = scmp.eq.s32.totalorder %s387, 0
    %s390 = sadd.s32 %s389, 1
    %s391 = scalar_select %p388, %s389, %s390
    %p394 = pneg %p388
    %p395 = scmp.eq.s32.totalorder %s29, 3
    %p396 = por %p394, %p395
    %p397 = scmp.ne.s32.totalorder %s389, %s392
    %p398 = scmp.eq.s32.totalorder %s29, 0
    %p399 = por %p397, %p398
    %p400 = scmp.ne.s32.totalorder %s389, %s392
    %p401 = scmp.eq.s32.totalorder %s34, 3
    %p402 = por %p400, %p401
    %p403 = scmp.ne.s32.totalorder %s392, %s393
    %p404 = scmp.eq.s32.totalorder %s34, 0
    %p405 = por %p403, %p404
    %p406 = scmp.ne.s32.totalorder %s392, %s393
    %p407 = scmp.eq.s32.totalorder %s35, 3
    %p408 = por %p406, %p407
    %p410 = scmp.ne.s32.totalorder %s393, %s409
    %p411 = scmp.eq.s32.totalorder %s35, 0
    %p412 = por %p410, %p411
    %s413 = ssub.s32 %s37, %s44
    %p414 = scmp.eq.s32.totalorder %s413, 0
    %s416 = sadd.s32 %s415, 1
    %s417 = scalar_select %p414, %s415, %s416
    %p420 = pneg %p414
    %p421 = scmp.eq.s32.totalorder %s29, 3
    %p422 = por %p420, %p421
    %p423 = scmp.ne.s32.totalorder %s415, %s418
    %p424 = scmp.eq.s32.totalorder %s29, 0
    %p425 = por %p423, %p424
    %p426 = scmp.ne.s32.totalorder %s415, %s418
    %p427 = scmp.eq.s32.totalorder %s34, 3
    %p428 = por %p426, %p427
    %p429 = scmp.ne.s32.totalorder %s418, %s419
    %p430 = scmp.eq.s32.totalorder %s34, 0
    %p431 = por %p429, %p430
    %p432 = scmp.ne.s32.totalorder %s418, %s419
    %p433 = scmp.eq.s32.totalorder %s35, 3
    %p434 = por %p432, %p433
    %p436 = scmp.ne.s32.totalorder %s419, %s435
    %p437 = scmp.eq.s32.totalorder %s35, 0
    %p438 = por %p436, %p437
    %s439 = ssub.s32 %s37, %s44
    %p440 = scmp.eq.s32.totalorder %s439, 0
    %s442 = sadd.s32 %s441, 1
    %s443 = scalar_select %p440, %s441, %s442
    %p446 = pneg %p440
    %p447 = scmp.eq.s32.totalorder %s29, 3
    %p448 = por %p446, %p447
    %p449 = scmp.ne.s32.totalorder %s441, %s444
    %p450 = scmp.eq.s32.totalorder %s29, 0
    %p451 = por %p449, %p450
    %p452 = scmp.ne.s32.totalorder %s441, %s444
    %p453 = scmp.eq.s32.totalorder %s34, 3
    %p454 = por %p452, %p453
    %p455 = scmp.ne.s32.totalorder %s444, %s445
    %p456 = scmp.eq.s32.totalorder %s34, 0
    %p457 = por %p455, %p456
    %p458 = scmp.ne.s32.totalorder %s444, %s445
    %p459 = scmp.eq.s32.totalorder %s35, 3
    %p460 = por %p458, %p459
    %p462 = scmp.ne.s32.totalorder %s445, %s461
    %p463 = scmp.eq.s32.totalorder %s35, 0
    %p464 = por %p462, %p463
    %s465 = ssub.s32 %s37, %s44
    %p466 = scmp.eq.s32.totalorder %s465, 0
    %s468 = sadd.s32 %s467, 1
    %s469 = scalar_select %p466, %s467, %s468
    %p472 = pneg %p466
    %p473 = scmp.eq.s32.totalorder %s29, 3
    %p474 = por %p472, %p473
    %p475 = scmp.ne.s32.totalorder %s467, %s470
    %p476 = scmp.eq.s32.totalorder %s29, 0
    %p477 = por %p475, %p476
    %p478 = scmp.ne.s32.totalorder %s467, %s470
    %p479 = scmp.eq.s32.totalorder %s34, 3
    %p480 = por %p478, %p479
    %p481 = scmp.ne.s32.totalorder %s470, %s471
    %p482 = scmp.eq.s32.totalorder %s34, 0
    %p483 = por %p481, %p482
    %p484 = scmp.ne.s32.totalorder %s470, %s471
    %p485 = scmp.eq.s32.totalorder %s35, 3
    %p486 = por %p484, %p485
    %p488 = scmp.ne.s32.totalorder %s471, %s487
    %p489 = scmp.eq.s32.totalorder %s35, 0
    %p490 = por %p488, %p489
    %s491 = ssub.s32 %s37, %s44
    %p492 = scmp.eq.s32.totalorder %s491, 0
    %s494 = sadd.s32 %s493, 1
    %s495 = scalar_select %p492, %s493, %s494
    %p498 = pneg %p492
    %p499 = scmp.eq.s32.totalorder %s29, 3
    %p500 = por %p498, %p499
    %p501 = scmp.ne.s32.totalorder %s493, %s496
    %p502 = scmp.eq.s32.totalorder %s29, 0
    %p503 = por %p501, %p502
    %p504 = scmp.ne.s32.totalorder %s493, %s496
    %p505 = scmp.eq.s32.totalorder %s34, 3
    %p506 = por %p504, %p505
    %p507 = scmp.ne.s32.totalorder %s496, %s497
    %p508 = scmp.eq.s32.totalorder %s34, 0
    %p509 = por %p507, %p508
    %p510 = scmp.ne.s32.totalorder %s496, %s497
    %p511 = scmp.eq.s32.totalorder %s35, 3
    %p512 = por %p510, %p511
    %p514 = scmp.ne.s32.totalorder %s497, %s513
    %p515 = scmp.eq.s32.totalorder %s35, 0
    %p516 = por %p514, %p515
    %s517 = ssub.s32 %s37, %s44
    %p518 = scmp.eq.s32.totalorder %s517, 0
    %s520 = sadd.s32 %s519, 1
    %s521 = scalar_select %p518, %s519, %s520
    %p524 = pneg %p518
    %p525 = scmp.eq.s32.totalorder %s29, 3
    %p526 = por %p524, %p525
    %p527 = scmp.ne.s32.totalorder %s519, %s522
    %p528 = scmp.eq.s32.totalorder %s29, 0
    %p529 = por %p527, %p528
    %p530 = scmp.ne.s32.totalorder %s519, %s522
    %p531 = scmp.eq.s32.totalorder %s34, 3
    %p532 = por %p530, %p531
    %p533 = scmp.ne.s32.totalorder %s522, %s523
    %p534 = scmp.eq.s32.totalorder %s34, 0
    %p535 = por %p533, %p534
    %p536 = scmp.ne.s32.totalorder %s522, %s523
    %p537 = scmp.eq.s32.totalorder %s35, 3
    %p538 = por %p536, %p537
    %p540 = scmp.ne.s32.totalorder %s523, %s539
    %p541 = scmp.eq.s32.totalorder %s35, 0
    %p542 = por %p540, %p541
    %s543 = ssub.s32 %s37, %s44
    %p544 = scmp.eq.s32.totalorder %s543, 0
    %s546 = sadd.s32 %s545, 1
    %s547 = scalar_select %p544, %s545, %s546
    %p550 = pneg %p544
    %p551 = scmp.eq.s32.totalorder %s29, 3
    %p552 = por %p550, %p551
    %p553 = scmp.ne.s32.totalorder %s545, %s548
    %p554 = scmp.eq.s32.totalorder %s29, 0
    %p555 = por %p553, %p554
    %p556 = scmp.ne.s32.totalorder %s545, %s548
    %p557 = scmp.eq.s32.totalorder %s34, 3
    %p558 = por %p556, %p557
    %p559 = scmp.ne.s32.totalorder %s548, %s549
    %p560 = scmp.eq.s32.totalorder %s34, 0
    %p561 = por %p559, %p560
    %p562 = scmp.ne.s32.totalorder %s548, %s549
    %p563 = scmp.eq.s32.totalorder %s35, 3
    %p564 = por %p562, %p563
    %p566 = scmp.ne.s32.totalorder %s549, %s565
    %p567 = scmp.eq.s32.totalorder %s35, 0
    %p568 = por %p566, %p567
    %s569 = ssub.s32 %s37, %s44
    %p570 = scmp.eq.s32.totalorder %s569, 0
    %s572 = sadd.s32 %s571, 1
    %s573 = scalar_select %p570, %s571, %s572
    %p576 = pneg %p570
    %p577 = scmp.eq.s32.totalorder %s29, 3
    %p578 = por %p576, %p577
    %p579 = scmp.ne.s32.totalorder %s571, %s574
    %p580 = scmp.eq.s32.totalorder %s29, 0
    %p581 = por %p579, %p580
    %p582 = scmp.ne.s32.totalorder %s571, %s574
    %p583 = scmp.eq.s32.totalorder %s34, 3
    %p584 = por %p582, %p583
    %p585 = scmp.ne.s32.totalorder %s574, %s575
    %p586 = scmp.eq.s32.totalorder %s34, 0
    %p587 = por %p585, %p586
    %p588 = scmp.ne.s32.totalorder %s574, %s575
    %p589 = scmp.eq.s32.totalorder %s35, 3
    %p590 = por %p588, %p589
    %p592 = scmp.ne.s32.totalorder %s575, %s591
    %p593 = scmp.eq.s32.totalorder %s35, 0
    %p594 = por %p592, %p593
    %s595 = ssub.s32 %s37, %s44
    %p596 = scmp.eq.s32.totalorder %s595, 0
    %s598 = sadd.s32 %s597, 1
    %s599 = scalar_select %p596, %s597, %s598
    %p602 = pneg %p596
    %p603 = scmp.eq.s32.totalorder %s29, 3
    %p604 = por %p602, %p603
    %p605 = scmp.ne.s32.totalorder %s597, %s600
    %p606 = scmp.eq.s32.totalorder %s29, 0
    %p607 = por %p605, %p606
    %p608 = scmp.ne.s32.totalorder %s597, %s600
    %p609 = scmp.eq.s32.totalorder %s34, 3
    %p610 = por %p608, %p609
    %p611 = scmp.ne.s32.totalorder %s600, %s601
    %p612 = scmp.eq.s32.totalorder %s34, 0
    %p613 = por %p611, %p612
    %p614 = scmp.ne.s32.totalorder %s600, %s601
    %p615 = scmp.eq.s32.totalorder %s35, 3
    %p616 = por %p614, %p615
    %p618 = scmp.ne.s32.totalorder %s601, %s617
    %p619 = scmp.eq.s32.totalorder %s35, 0
    %p620 = por %p618, %p619
    %s621 = ssub.s32 %s37, %s44
    %p622 = scmp.eq.s32.totalorder %s621, 0
    %s624 = sadd.s32 %s623, 1
    %s625 = scalar_select %p622, %s623, %s624
    %p628 = pneg %p622
    %p629 = scmp.eq.s32.totalorder %s29, 3
    %p630 = por %p628, %p629
    %p631 = scmp.ne.s32.totalorder %s623, %s626
    %p632 = scmp.eq.s32.totalorder %s29, 0
    %p633 = por %p631, %p632
    %p634 = scmp.ne.s32.totalorder %s623, %s626
    %p635 = scmp.eq.s32.totalorder %s34, 3
    %p636 = por %p634, %p635
    %p637 = scmp.ne.s32.totalorder %s626, %s627
    %p638 = scmp.eq.s32.totalorder %s34, 0
    %p639 = por %p637, %p638
    %p640 = scmp.ne.s32.totalorder %s626, %s627
    %p641 = scmp.eq.s32.totalorder %s35, 3
    %p642 = por %p640, %p641
    %p644 = scmp.ne.s32.totalorder %s627, %s643
    %p645 = scmp.eq.s32.totalorder %s35, 0
    %p646 = por %p644, %p645
    %s647 = ssub.s32 %s36, %s48
    %p648 = scmp.eq.s32.totalorder %s647, 0
    %s650 = sadd.s32 %s649, 1
    %s651 = scalar_select %p648, %s649, %s650
    %p654 = pneg %p648
    %p655 = scmp.eq.s32.totalorder %s29, 3
    %p656 = por %p654, %p655
    %p657 = scmp.ne.s32.totalorder %s649, %s652
    %p658 = scmp.eq.s32.totalorder %s29, 0
    %p659 = por %p657, %p658
    %p660 = scmp.ne.s32.totalorder %s649, %s652
    %p661 = scmp.eq.s32.totalorder %s34, 3
    %p662 = por %p660, %p661
    %p663 = scmp.ne.s32.totalorder %s652, %s653
    %p664 = scmp.eq.s32.totalorder %s34, 0
    %p665 = por %p663, %p664
    %p666 = scmp.ne.s32.totalorder %s652, %s653
    %p667 = scmp.eq.s32.totalorder %s35, 3
    %p668 = por %p666, %p667
    %p670 = scmp.ne.s32.totalorder %s653, %s669
    %p671 = scmp.eq.s32.totalorder %s35, 0
    %p672 = por %p670, %p671
    %p673 = scmp.le.s32.totalorder 1, %s29
    %p674 = scmp.lt.s32.totalorder %s29, 5
    %p675 = pnand %p673, %p674
    %p676 = pneg %p675
    // Predicated region
    $region9: #{_lambda_.6} parent=5 // pred_check
      _
    $region10: #{_lambda_.6} parent=5 // pred_check_branch
      %678 = sbr.rel (%p675) target = $region12
    $region11: #{_lambda_.6} parent=5 // pred_region
      %s679 = ssub.s32 %s29, 1
    $region12: #{_lambda_.6} parent=5 // pred_fallthru
      _
    %p680 = scmp.lt.s32.totalorder %s29, 4
    // Predicated region
    $region13: #{_lambda_.6} parent=5 // pred_check
      %p681 = pneg %p680
    $region14: #{_lambda_.6} parent=5 // pred_check_branch
      %683 = sbr.rel (%p681) target = $region16
    $region15: #{_lambda_.6} parent=5 // pred_region
      // Predicated region
      $region17: #{_lambda_.6} parent=15 // pred_check
        %p684 = pneg %p61
      $region18: #{_lambda_.6} parent=15 // pred_check_branch
        %686 = sbr.rel (%p684) target = $region20
      $region19: #{_lambda_.6} parent=15 // pred_region
        %p687 = scmp.lt.s32.totalorder %s36, 1
        %s688 = scalar_select %p687, %s36, 1
        %s689 = smul.addr %s688, 8
        %s690 = scalar_lea.vmem %s0, %s689
      $region20: #{_lambda_.6} parent=15 // pred_fallthru
        _
      // Predicated region
      $region21: #{_lambda_.6} parent=15 // pred_check
        %p691 = pneg %p87
      $region22: #{_lambda_.6} parent=15 // pred_check_branch
        %693 = sbr.rel (%p691) target = $region24
      $region23: #{_lambda_.6} parent=15 // pred_region
        %p694 = scmp.lt.s32.totalorder %s37, 1
        %s695 = scalar_select %p694, %s37, 1
        %s696 = scalar_lea.vmem %s1, %s695
      $region24: #{_lambda_.6} parent=15 // pred_fallthru
        _
      // Predicated region
      $region25: #{_lambda_.6} parent=15 // pred_check
        %p697 = pneg %p113
      $region26: #{_lambda_.6} parent=15 // pred_check_branch
        %699 = sbr.rel (%p697) target = $region28
      $region27: #{_lambda_.6} parent=15 // pred_region
        %p700 = scmp.lt.s32.totalorder %s37, 1
        %s701 = scalar_select %p700, %s37, 1
        %s702 = scalar_lea.vmem %s2, %s701
      $region28: #{_lambda_.6} parent=15 // pred_fallthru
        _
      // Predicated region
      $region29: #{_lambda_.6} parent=15 // pred_check
        %p703 = pneg %p139
      $region30: #{_lambda_.6} parent=15 // pred_check_branch
        %705 = sbr.rel (%p703) target = $region32
      $region31: #{_lambda_.6} parent=15 // pred_region
        %p706 = scmp.lt.s32.totalorder %s37, 1
        %s707 = scalar_select %p706, %s37, 1
        %s708 = smul.addr %s707, 16
        %s709 = smul.addr %s708, 4
        %s710 = scalar_lea.vmem %s3, %s709
      $region32: #{_lambda_.6} parent=15 // pred_fallthru
        _
      // Predicated region
      $region33: #{_lambda_.6} parent=15 // pred_check
        %p711 = pneg %p165
      $region34: #{_lambda_.6} parent=15 // pred_check_branch
        %713 = sbr.rel (%p711) target = $region36
      $region35: #{_lambda_.6} parent=15 // pred_region
        %p714 = scmp.lt.s32.totalorder %s37, 1
        %s715 = scalar_select %p714, %s37, 1
        %s716 = smul.addr %s715, 16
        %s717 = smul.addr %s716, 4
        %s718 = scalar_lea.vmem %s4, %s717
      $region36: #{_lambda_.6} parent=15 // pred_fallthru
        _
      // Predicated region
      $region37: #{_lambda_.6} parent=15 // pred_check
        %p719 = pneg %p191
      $region38: #{_lambda_.6} parent=15 // pred_check_branch
        %721 = sbr.rel (%p719) target = $region40
      $region39: #{_lambda_.6} parent=15 // pred_region
        %p722 = scmp.lt.s32.totalorder %s37, 1
        %s723 = scalar_select %p722, %s37, 1
        %s724 = smul.addr %s723, 16
        %s725 = smul.addr %s724, 4
        %s726 = scalar_lea.vmem %s5, %s725
      $region40: #{_lambda_.6} parent=15 // pred_fallthru
        _
      // Predicated region
      $region41: #{_lambda_.6} parent=15 // pred_check
        %p727 = pneg %p217
      $region42: #{_lambda_.6} parent=15 // pred_check_branch
        %729 = sbr.rel (%p727) target = $region44
      $region43: #{_lambda_.6} parent=15 // pred_region
        %p730 = scmp.lt.s32.totalorder %s37, 1
        %s731 = scalar_select %p730, %s37, 1
        %s732 = smul.addr %s731, 4
        %s733 = scalar_lea.vmem %s6, %s732
      $region44: #{_lambda_.6} parent=15 // pred_fallthru
        _
      // Predicated region
      $region45: #{_lambda_.6} parent=15 // pred_check
        %p734 = pneg %p243
      $region46: #{_lambda_.6} parent=15 // pred_check_branch
        %736 = sbr.rel (%p734) target = $region48
      $region47: #{_lambda_.6} parent=15 // pred_region
        %p737 = scmp.lt.s32.totalorder %s37, 1
        %s738 = scalar_select %p737, %s37, 1
        %s739 = smul.addr %s738, 4
        %s740 = scalar_lea.vmem %s7, %s739
      $region48: #{_lambda_.6} parent=15 // pred_fallthru
        _
      // Predicated region
      $region49: #{_lambda_.6} parent=15 // pred_check
        %p741 = pneg %p269
      $region50: #{_lambda_.6} parent=15 // pred_check_branch
        %743 = sbr.rel (%p741) target = $region52
      $region51: #{_lambda_.6} parent=15 // pred_region
        %p744 = scmp.lt.s32.totalorder %s37, 1
        %s745 = scalar_select %p744, %s37, 1
        %s746 = smul.addr %s745, 4
        %s747 = scalar_lea.vmem %s8, %s746
      $region52: #{_lambda_.6} parent=15 // pred_fallthru
        _
      // Predicated region
      $region53: #{_lambda_.6} parent=15 // pred_check
        %p748 = pneg %p295
      $region54: #{_lambda_.6} parent=15 // pred_check_branch
        %750 = sbr.rel (%p748) target = $region56
      $region55: #{_lambda_.6} parent=15 // pred_region
        %p751 = scmp.lt.s32.totalorder %s37, 1
        %s752 = scalar_select %p751, %s37, 1
        %s753 = smul.addr %s752, 4
        %s754 = smul.addr %s753, 4
        %s755 = scalar_lea.vmem %s9, %s754
      $region56: #{_lambda_.6} parent=15 // pred_fallthru
        _
      // Predicated region
      $region57: #{_lambda_.6} parent=15 // pred_check
        %p756 = pneg %p321
      $region58: #{_lambda_.6} parent=15 // pred_check_branch
        %758 = sbr.rel (%p756) target = $region60
      $region59: #{_lambda_.6} parent=15 // pred_region
        %p759 = scmp.lt.s32.totalorder %s37, 1
        %s760 = scalar_select %p759, %s37, 1
        %s761 = scalar_lea.vmem %s10, %s760
      $region60: #{_lambda_.6} parent=15 // pred_fallthru
        _
      // Predicated region
      $region61: #{_lambda_.6} parent=15 // pred_check
        %p762 = pneg %p347
      $region62: #{_lambda_.6} parent=15 // pred_check_branch
        %764 = sbr.rel (%p762) target = $region64
      $region63: #{_lambda_.6} parent=15 // pred_region
        %p765 = scmp.lt.s32.totalorder %s37, 1
        %s766 = scalar_select %p765, %s37, 1
        %s767 = scalar_lea.vmem %s11, %s766
      $region64: #{_lambda_.6} parent=15 // pred_fallthru
        _
      // Predicated region
      $region65: #{_lambda_.6} parent=15 // pred_check
        %p768 = pneg %p373
      $region66: #{_lambda_.6} parent=15 // pred_check_branch
        %770 = sbr.rel (%p768) target = $region68
      $region67: #{_lambda_.6} parent=15 // pred_region
        %p771 = scmp.lt.s32.totalorder %s37, 1
        %s772 = scalar_select %p771, %s37, 1
        %s773 = scalar_lea.vmem %s12, %s772
      $region68: #{_lambda_.6} parent=15 // pred_fallthru
        _
      // Predicated region
      $region69: #{_lambda_.6} parent=15 // pred_check
        %p774 = pneg %p399
      $region70: #{_lambda_.6} parent=15 // pred_check_branch
        %776 = sbr.rel (%p774) target = $region72
      $region71: #{_lambda_.6} parent=15 // pred_region
        %p777 = scmp.lt.s32.totalorder %s37, 1
        %s778 = scalar_select %p777, %s37, 1
        %s779 = smul.addr %s778, 4
        %s780 = smul.addr %s779, 4
        %s781 = scalar_lea.vmem %s13, %s780
      $region72: #{_lambda_.6} parent=15 // pred_fallthru
        _
      // Predicated region
      $region73: #{_lambda_.6} parent=15 // pred_check
        %p782 = pneg %p425
      $region74: #{_lambda_.6} parent=15 // pred_check_branch
        %784 = sbr.rel (%p782) target = $region76
      $region75: #{_lambda_.6} parent=15 // pred_region
        %p785 = scmp.lt.s32.totalorder %s37, 1
        %s786 = scalar_select %p785, %s37, 1
        %s787 = scalar_lea.vmem %s14, %s786
      $region76: #{_lambda_.6} parent=15 // pred_fallthru
        _
      // Predicated region
      $region77: #{_lambda_.6} parent=15 // pred_check
        %p788 = pneg %p451
      $region78: #{_lambda_.6} parent=15 // pred_check_branch
        %790 = sbr.rel (%p788) target = $region80
      $region79: #{_lambda_.6} parent=15 // pred_region
        %p791 = scmp.lt.s32.totalorder %s37, 1
        %s792 = scalar_select %p791, %s37, 1
        %s793 = smul.addr %s792, 16
        %s794 = smul.addr %s793, 4
        %s795 = scalar_lea.vmem %s15, %s794
      $region80: #{_lambda_.6} parent=15 // pred_fallthru
        _
      // Predicated region
      $region81: #{_lambda_.6} parent=15 // pred_check
        %p796 = pneg %p477
      $region82: #{_lambda_.6} parent=15 // pred_check_branch
        %798 = sbr.rel (%p796) target = $region84
      $region83: #{_lambda_.6} parent=15 // pred_region
        %p799 = scmp.lt.s32.totalorder %s37, 1
        %s800 = scalar_select %p799, %s37, 1
        %s801 = scalar_lea.vmem %s16, %s800
      $region84: #{_lambda_.6} parent=15 // pred_fallthru
        _
      // Predicated region
      $region85: #{_lambda_.6} parent=15 // pred_check
        %p802 = pneg %p503
      $region86: #{_lambda_.6} parent=15 // pred_check_branch
        %804 = sbr.rel (%p802) target = $region88
      $region87: #{_lambda_.6} parent=15 // pred_region
        %p805 = scmp.lt.s32.totalorder %s37, 1
        %s806 = scalar_select %p805, %s37, 1
        %s807 = smul.addr %s806, 4
        %s808 = smul.addr %s807, 4
        %s809 = scalar_lea.vmem %s17, %s808
      $region88: #{_lambda_.6} parent=15 // pred_fallthru
        _
      // Predicated region
      $region89: #{_lambda_.6} parent=15 // pred_check
        %p810 = pneg %p529
      $region90: #{_lambda_.6} parent=15 // pred_check_branch
        %812 = sbr.rel (%p810) target = $region92
      $region91: #{_lambda_.6} parent=15 // pred_region
        %p813 = scmp.lt.s32.totalorder %s37, 1
        %s814 = scalar_select %p813, %s37, 1
        %s815 = scalar_lea.vmem %s18, %s814
      $region92: #{_lambda_.6} parent=15 // pred_fallthru
        _
      // Predicated region
      $region93: #{_lambda_.6} parent=15 // pred_check
        %p816 = pneg %p555
      $region94: #{_lambda_.6} parent=15 // pred_check_branch
        %818 = sbr.rel (%p816) target = $region96
      $region95: #{_lambda_.6} parent=15 // pred_region
        %p819 = scmp.lt.s32.totalorder %s37, 1
        %s820 = scalar_select %p819, %s37, 1
        %s821 = smul.addr %s820, 4
        %s822 = scalar_lea.vmem %s19, %s821
      $region96: #{_lambda_.6} parent=15 // pred_fallthru
        _
      // Predicated region
      $region97: #{_lambda_.6} parent=15 // pred_check
        %p823 = pneg %p581
      $region98: #{_lambda_.6} parent=15 // pred_check_branch
        %825 = sbr.rel (%p823) target = $region100
      $region99: #{_lambda_.6} parent=15 // pred_region
        %p826 = scmp.lt.s32.totalorder %s37, 1
        %s827 = scalar_select %p826, %s37, 1
        %s828 = scalar_lea.vmem %s20, %s827
      $region100: #{_lambda_.6} parent=15 // pred_fallthru
        _
      // Predicated region
      $region101: #{_lambda_.6} parent=15 // pred_check
        %p829 = pneg %p607
      $region102: #{_lambda_.6} parent=15 // pred_check_branch
        %831 = sbr.rel (%p829) target = $region104
      $region103: #{_lambda_.6} parent=15 // pred_region
        %p832 = scmp.lt.s32.totalorder %s37, 1
        %s833 = scalar_select %p832, %s37, 1
        %s834 = smul.addr %s833, 4
        %s835 = scalar_lea.vmem %s21, %s834
      $region104: #{_lambda_.6} parent=15 // pred_fallthru
        _
      // Predicated region
      $region105: #{_lambda_.6} parent=15 // pred_check
        %p836 = pneg %p633
      $region106: #{_lambda_.6} parent=15 // pred_check_branch
        %838 = sbr.rel (%p836) target = $region108
      $region107: #{_lambda_.6} parent=15 // pred_region
        %p839 = scmp.lt.s32.totalorder %s37, 1
        %s840 = scalar_select %p839, %s37, 1
        %s841 = scalar_lea.vmem %s22, %s840
      $region108: #{_lambda_.6} parent=15 // pred_fallthru
        _
    $region16: #{_lambda_.6} parent=5 // pred_fallthru
      _
    %p842 = scmp.le.s32.totalorder 1, %s29
    %p843 = scmp.lt.s32.totalorder %s29, 5
    %p844 = pnand %p842, %p843
    %p845 = pneg %p844
    // Predicated region
    $region109: #{_lambda_.6} parent=5 // pred_check
      _
    $region110: #{_lambda_.6} parent=5 // pred_check_branch
      %847 = sbr.rel (%p844) target = $region112
    $region111: #{_lambda_.6} parent=5 // pred_region
      %s848 = ssub.s32 %s29, 1
      %p849 = scmp.lt.s32.totalorder %s38, 1
      %s850 = scalar_select %p849, %s38, 1
      %s851 = smul.addr %s850, 8
      %s852 = scalar_lea.vmem %s0, %s851
      %p853 = pneg %p67
      %p854 = pneg %p64
      %p855 = scmp.lt.s32.totalorder %s39, 1
      %s856 = scalar_select %p855, %s39, 1
      %s857 = scalar_lea.vmem %s1, %s856
      %p858 = pneg %p93
      %p859 = pneg %p90
      %p860 = scmp.lt.s32.totalorder %s39, 1
      %s861 = scalar_select %p860, %s39, 1
      %s862 = scalar_lea.vmem %s2, %s861
      %p863 = pneg %p119
      %p864 = pneg %p116
      %p865 = scmp.lt.s32.totalorder %s39, 1
      %s866 = scalar_select %p865, %s39, 1
      %s867 = smul.addr %s866, 16
      %s868 = smul.addr %s867, 4
      %s869 = scalar_lea.vmem %s3, %s868
      %p870 = pneg %p145
      %p871 = pneg %p142
      %p872 = scmp.lt.s32.totalorder %s39, 1
      %s873 = scalar_select %p872, %s39, 1
      %s874 = smul.addr %s873, 16
      %s875 = smul.addr %s874, 4
      %s876 = scalar_lea.vmem %s4, %s875
      %p877 = pneg %p171
      %p878 = pneg %p168
      %p879 = scmp.lt.s32.totalorder %s39, 1
      %s880 = scalar_select %p879, %s39, 1
      %s881 = smul.addr %s880, 16
      %s882 = smul.addr %s881, 4
      %s883 = scalar_lea.vmem %s5, %s882
      %p884 = pneg %p197
      %p885 = pneg %p194
      %p886 = scmp.lt.s32.totalorder %s39, 1
      %s887 = scalar_select %p886, %s39, 1
      %s888 = smul.addr %s887, 4
      %s889 = scalar_lea.vmem %s6, %s888
      %p890 = pneg %p223
      %p891 = pneg %p220
      %p892 = scmp.lt.s32.totalorder %s39, 1
      %s893 = scalar_select %p892, %s39, 1
      %s894 = smul.addr %s893, 4
      %s895 = scalar_lea.vmem %s7, %s894
      %p896 = pneg %p249
      %p897 = pneg %p246
      %p898 = scmp.lt.s32.totalorder %s39, 1
      %s899 = scalar_select %p898, %s39, 1
      %s900 = smul.addr %s899, 4
      %s901 = scalar_lea.vmem %s8, %s900
      %p902 = pneg %p275
      %p903 = pneg %p272
      %p904 = scmp.lt.s32.totalorder %s39, 1
      %s905 = scalar_select %p904, %s39, 1
      %s906 = smul.addr %s905, 4
      %s907 = smul.addr %s906, 4
      %s908 = scalar_lea.vmem %s9, %s907
      %p909 = pneg %p301
      %p910 = pneg %p298
      %p911 = scmp.lt.s32.totalorder %s39, 1
      %s912 = scalar_select %p911, %s39, 1
      %s913 = scalar_lea.vmem %s10, %s912
      %p914 = pneg %p327
      %p915 = pneg %p324
      %p916 = scmp.lt.s32.totalorder %s39, 1
      %s917 = scalar_select %p916, %s39, 1
      %s918 = scalar_lea.vmem %s11, %s917
      %p919 = pneg %p353
      %p920 = pneg %p350
      %p921 = scmp.lt.s32.totalorder %s39, 1
      %s922 = scalar_select %p921, %s39, 1
      %s923 = scalar_lea.vmem %s12, %s922
      %p924 = pneg %p379
      %p925 = pneg %p376
      %p926 = scmp.lt.s32.totalorder %s39, 1
      %s927 = scalar_select %p926, %s39, 1
      %s928 = smul.addr %s927, 4
      %s929 = smul.addr %s928, 4
      %s930 = scalar_lea.vmem %s13, %s929
      %p931 = pneg %p405
      %p932 = pneg %p402
      %p933 = scmp.lt.s32.totalorder %s39, 1
      %s934 = scalar_select %p933, %s39, 1
      %s935 = scalar_lea.vmem %s14, %s934
      %p936 = pneg %p431
      %p937 = pneg %p428
      %p938 = scmp.lt.s32.totalorder %s39, 1
      %s939 = scalar_select %p938, %s39, 1
      %s940 = smul.addr %s939, 16
      %s941 = smul.addr %s940, 4
      %s942 = scalar_lea.vmem %s15, %s941
      %p943 = pneg %p457
      %p944 = pneg %p454
      %p945 = scmp.lt.s32.totalorder %s39, 1
      %s946 = scalar_select %p945, %s39, 1
      %s947 = scalar_lea.vmem %s16, %s946
      %p948 = pneg %p483
      %p949 = pneg %p480
      %p950 = scmp.lt.s32.totalorder %s39, 1
      %s951 = scalar_select %p950, %s39, 1
      %s952 = smul.addr %s951, 4
      %s953 = smul.addr %s952, 4
      %s954 = scalar_lea.vmem %s17, %s953
      %p955 = pneg %p509
      %p956 = pneg %p506
      %p957 = scmp.lt.s32.totalorder %s39, 1
      %s958 = scalar_select %p957, %s39, 1
      %s959 = scalar_lea.vmem %s18, %s958
      %p960 = pneg %p535
      %p961 = pneg %p532
      %p962 = scmp.lt.s32.totalorder %s39, 1
      %s963 = scalar_select %p962, %s39, 1
      %s964 = smul.addr %s963, 4
      %s965 = scalar_lea.vmem %s19, %s964
      %p966 = pneg %p561
      %p967 = pneg %p558
      %p968 = scmp.lt.s32.totalorder %s39, 1
      %s969 = scalar_select %p968, %s39, 1
      %s970 = scalar_lea.vmem %s20, %s969
      %p971 = pneg %p587
      %p972 = pneg %p584
      %p973 = scmp.lt.s32.totalorder %s39, 1
      %s974 = scalar_select %p973, %s39, 1
      %s975 = smul.addr %s974, 4
      %s976 = scalar_lea.vmem %s21, %s975
      %p977 = pneg %p613
      %p978 = pneg %p610
      %p979 = scmp.lt.s32.totalorder %s39, 1
      %s980 = scalar_select %p979, %s39, 1
      %s981 = scalar_lea.vmem %s22, %s980
      %p982 = pneg %p639
      %p983 = pneg %p636
      %p984 = pneg %p665
      %p985 = pneg %p662
      %p986 = scmp.lt.s32.totalorder %s38, 1
      %s987 = scalar_select %p986, %s38, 1
      %s988 = smul.addr %s987, 8
      %s989 = scalar_lea.vmem %s23, %s988
      %p990 = scmp.lt.s32.totalorder %s38, 1
      %s991 = scalar_select %p990, %s38, 1
      %s992 = smul.addr %s991, 8
      %s993 = scalar_lea.vmem %s0, %s992
      %p994 = scmp.lt.s32.totalorder %s39, 1
      %s995 = scalar_select %p994, %s39, 1
      %s996 = scalar_lea.vmem %s1, %s995
      %p997 = scmp.lt.s32.totalorder %s39, 1
      %s998 = scalar_select %p997, %s39, 1
      %s999 = scalar_lea.vmem %s2, %s998
      %p1000 = scmp.lt.s32.totalorder %s39, 1
      %s1001 = scalar_select %p1000, %s39, 1
      %s1002 = smul.addr %s1001, 16
      %s1003 = smul.addr %s1002, 4
      %s1004 = scalar_lea.vmem %s3, %s1003
      %p1005 = scmp.lt.s32.totalorder %s39, 1
      %s1006 = scalar_select %p1005, %s39, 1
      %s1007 = smul.addr %s1006, 16
      %s1008 = smul.addr %s1007, 4
      %s1009 = scalar_lea.vmem %s4, %s1008
      %p1010 = scmp.lt.s32.totalorder %s39, 1
      %s1011 = scalar_select %p1010, %s39, 1
      %s1012 = smul.addr %s1011, 16
      %s1013 = smul.addr %s1012, 4
      %s1014 = scalar_lea.vmem %s5, %s1013
      %p1015 = scmp.lt.s32.totalorder %s39, 1
      %s1016 = scalar_select %p1015, %s39, 1
      %s1017 = smul.addr %s1016, 4
      %s1018 = scalar_lea.vmem %s6, %s1017
      %p1019 = scmp.lt.s32.totalorder %s39, 1
      %s1020 = scalar_select %p1019, %s39, 1
      %s1021 = smul.addr %s1020, 4
      %s1022 = scalar_lea.vmem %s7, %s1021
      %p1023 = scmp.lt.s32.totalorder %s39, 1
      %s1024 = scalar_select %p1023, %s39, 1
      %s1025 = smul.addr %s1024, 4
      %s1026 = scalar_lea.vmem %s8, %s1025
      %p1027 = scmp.lt.s32.totalorder %s39, 1
      %s1028 = scalar_select %p1027, %s39, 1
      %s1029 = smul.addr %s1028, 4
      %s1030 = smul.addr %s1029, 4
      %s1031 = scalar_lea.vmem %s9, %s1030
      %p1032 = scmp.lt.s32.totalorder %s39, 1
      %s1033 = scalar_select %p1032, %s39, 1
      %s1034 = scalar_lea.vmem %s10, %s1033
      %p1035 = scmp.lt.s32.totalorder %s39, 1
      %s1036 = scalar_select %p1035, %s39, 1
      %s1037 = scalar_lea.vmem %s11, %s1036
      %p1038 = scmp.lt.s32.totalorder %s39, 1
      %s1039 = scalar_select %p1038, %s39, 1
      %s1040 = scalar_lea.vmem %s12, %s1039
      %p1041 = scmp.lt.s32.totalorder %s39, 1
      %s1042 = scalar_select %p1041, %s39, 1
      %s1043 = smul.addr %s1042, 4
      %s1044 = smul.addr %s1043, 4
      %s1045 = scalar_lea.vmem %s13, %s1044
      %p1046 = scmp.lt.s32.totalorder %s39, 1
      %s1047 = scalar_select %p1046, %s39, 1
      %s1048 = scalar_lea.vmem %s14, %s1047
      %p1049 = scmp.lt.s32.totalorder %s39, 1
      %s1050 = scalar_select %p1049, %s39, 1
      %s1051 = smul.addr %s1050, 16
      %s1052 = smul.addr %s1051, 4
      %s1053 = scalar_lea.vmem %s15, %s1052
      %p1054 = scmp.lt.s32.totalorder %s39, 1
      %s1055 = scalar_select %p1054, %s39, 1
      %s1056 = scalar_lea.vmem %s16, %s1055
      %p1057 = scmp.lt.s32.totalorder %s39, 1
      %s1058 = scalar_select %p1057, %s39, 1
      %s1059 = smul.addr %s1058, 4
      %s1060 = smul.addr %s1059, 4
      %s1061 = scalar_lea.vmem %s17, %s1060
      %p1062 = scmp.lt.s32.totalorder %s39, 1
      %s1063 = scalar_select %p1062, %s39, 1
      %s1064 = scalar_lea.vmem %s18, %s1063
      %p1065 = scmp.lt.s32.totalorder %s39, 1
      %s1066 = scalar_select %p1065, %s39, 1
      %s1067 = smul.addr %s1066, 4
      %s1068 = scalar_lea.vmem %s19, %s1067
      %p1069 = scmp.lt.s32.totalorder %s39, 1
      %s1070 = scalar_select %p1069, %s39, 1
      %s1071 = scalar_lea.vmem %s20, %s1070
      %p1072 = scmp.lt.s32.totalorder %s39, 1
      %s1073 = scalar_select %p1072, %s39, 1
      %s1074 = smul.addr %s1073, 4
      %s1075 = scalar_lea.vmem %s21, %s1074
      %p1076 = scmp.lt.s32.totalorder %s39, 1
      %s1077 = scalar_select %p1076, %s39, 1
      %s1078 = scalar_lea.vmem %s22, %s1077
      %p1079 = scmp.lt.s32.totalorder %s38, 1
      %s1080 = scalar_select %p1079, %s38, 1
      %s1081 = smul.addr %s1080, 8
      %s1082 = scalar_lea.vmem %s23, %s1081
      %p1084 = scmp.eq.s32.totalorder %s39, 0
      // Predicated region
      $region113: #{_lambda_.6} parent=111 // pred_check
        %p1085 = pneg %p1084
      $region114: #{_lambda_.6} parent=111 // pred_check_branch
        %1087 = sbr.rel (%p1085) target = $region116
      $region115: #{_lambda_.6} parent=111 // pred_region
        %v1088 = vld [vmem:[%s993] sm:$0x1f]
        %vm1089 = vcmask 258048
        %1090 = vst.msk [vmem:[%s1082] sm:$0x1f] %vm1089, %v1088
      $region116: #{_lambda_.6} parent=111 // pred_fallthru
        _
      %v1091 = vld [vmem:[%s1082] sm:$0x1f]
      %v1092 = vld [vmem:[%s996] sm:$0x1]
      %v1093 = vld [vmem:[%s999] sm:$0x1]
      %vm1094 = vcmask 258048
      %v1095 = vsel %vm1094, %v1091, 0.0
      %1096 = vadd.xlane.f32.xlu0 %v1095
      %v1097 = vpop.xlane.xlu0 %1096
      %v1098 = vrcp.pop 32.0
      %v1099 = vmul.f32 %v1097, %v1098
      %v1100 = vsub.f32 %v1091, %v1099
      %v1101 = vmul.f32 %v1100, %v1100
      %v1102 = vsel %vm1094, %v1101, 0.0
      %1103 = vadd.xlane.f32.xlu0 %v1102
      %v1104 = vpop.xlane.xlu0 %1103
      %v1105 = vmul.f32 %v1104, %v1098
      %v1106 = vadd.f32 %v1105, 1e-05
      %v1107 = vrsqrt.pop %v1106
      %v1108 = vmul.f32 %v1100, %v1107
      %v1110 = vlaneseq
      %v1111 = vshrl.u32 %v1110, 7
      %v1112 = vsub.s32 0, %v1111
      %v1113 = vrot.slane %v1092, %v1112
      %v1115 = vmul.f32 %v1108, %v1113
      %v1117 = vlaneseq
      %v1118 = vshrl.u32 %v1117, 7
      %v1119 = vsub.s32 0, %v1118
      %v1120 = vrot.slane %v1093, %v1119
      %v1122 = vadd.f32 %v1115, %v1120
      %v1123 = vpack.c.bf16 %v1122, %v1122
      %v1124 = vld [vmem:[%s1004] sm:$0xf]
      %v1125 = vld [vmem:[%s1004 + $0x4] sm:$0xf]
      %v1126 = vld [vmem:[%s1004 + $0x8] sm:$0xf]
      %v1127 = vld [vmem:[%s1004 + $0xc] sm:$0xf]
      %v1128 = vld [vmem:[%s1004 + $0x10] sm:$0xf]
      %v1129 = vld [vmem:[%s1004 + $0x14] sm:$0xf]
      %v1130 = vld [vmem:[%s1004 + $0x18] sm:$0xf]
      %v1131 = vld [vmem:[%s1004 + $0x1c] sm:$0xf]
      %v1132 = vld [vmem:[%s1004 + $0x20] sm:$0xf]
      %v1133 = vld [vmem:[%s1004 + $0x24] sm:$0xf]
      %v1134 = vld [vmem:[%s1004 + $0x28] sm:$0xf]
      %v1135 = vld [vmem:[%s1004 + $0x2c] sm:$0xf]
      %v1136 = vld [vmem:[%s1004 + $0x30] sm:$0xf]
      %v1137 = vld [vmem:[%s1004 + $0x34] sm:$0xf]
      %v1138 = vld [vmem:[%s1004 + $0x38] sm:$0xf]
      %v1139 = vld [vmem:[%s1004 + $0x3c] sm:$0xf]
      %v1140 = vld [vmem:[%s1018] sm:$0x1]
      %v1141 = vld [vmem:[%s1018 + $0x1] sm:$0x1]
      %v1142 = vld [vmem:[%s1018 + $0x2] sm:$0x1]
      %v1143 = vld [vmem:[%s1018 + $0x3] sm:$0x1]
      %v1148 = vlaneseq
      %v1149 = vshrl.u32 %v1148, 7
      %v1150 = vsub.s32 0, %v1149
      %v1151 = vrot.slane %v1140, %v1150
      %v1152 = vlaneseq
      %v1153 = vshrl.u32 %v1152, 7
      %v1154 = vsub.s32 0, %v1153
      %v1155 = vrot.slane %v1141, %v1154
      %v1156 = vlaneseq
      %v1157 = vshrl.u32 %v1156, 7
      %v1158 = vsub.s32 0, %v1157
      %v1159 = vrot.slane %v1142, %v1158
      %v1160 = vlaneseq
      %v1161 = vshrl.u32 %v1160, 7
      %v1162 = vsub.s32 0, %v1161
      %v1163 = vrot.slane %v1143, %v1162
      %v1172 = vunpack.c.l.b16 %v1124
      %v1173 = vunpack.c.l.b16 %v1125
      %v1174 = vunpack.c.l.b16 %v1126
      %v1175 = vunpack.c.l.b16 %v1127
      %v1176 = vpack.c.b16 %v1173, %v1172
      %v1177 = vpack.c.b16 %v1175, %v1174
      %vm1180 = vcmask 261120
      %v1182 = vsel %vm1180, %v1123, 0
      %1184 = vmatprep.subr.bf16.mxu0 0
      %1185 = vmatpush1.bf16.msra.mxu0 %v1176
      %1186 = vmatprep.subr.bf16.mxu0 0
      %1187 = vmatpush1.bf16.msra.mxu0 %v1177
      %1188 = vmatprep.subr.bf16.mxu0 0
      %1189 = vmatpush1.bf16.msra.mxu0 0
      %1190 = vmatprep.subr.bf16.mxu0 0
      %1191 = vmatpush1.bf16.msra.mxu0 0
      %1192 = vmatprep.subr.bf16.mxu0 0
      %1193 = vmatpush1.bf16.msra.mxu0 0
      %1194 = vmatprep.subr.bf16.mxu0 0
      %1195 = vmatpush1.bf16.msra.mxu0 0
      %1196 = vmatprep.subr.bf16.mxu0 0
      %1197 = vmatpush1.bf16.msra.mxu0 0
      %1198 = vmatprep.subr.bf16.mxu0 0
      %1199 = vmatpush1.bf16.msra.mxu0 0
      %1200 = vmatprep.subr.bf16.mxu0 0
      %1201 = vmatpush1.bf16.msra.mxu0 0
      %1202 = vmatprep.subr.bf16.mxu0 0
      %1203 = vmatpush1.bf16.msra.mxu0 0
      %1204 = vmatprep.subr.bf16.mxu0 0
      %1205 = vmatpush1.bf16.msra.mxu0 0
      %1206 = vmatprep.subr.bf16.mxu0 0
      %1207 = vmatpush1.bf16.msra.mxu0 0
      %1208 = vmatprep.subr.bf16.mxu0 0
      %1209 = vmatpush1.bf16.msra.mxu0 0
      %1210 = vmatprep.subr.bf16.mxu0 0
      %1211 = vmatpush1.bf16.msra.mxu0 0
      %1212 = vmatprep.subr.bf16.mxu0 0
      %1213 = vmatpush1.bf16.msra.mxu0 0
      %1214 = vmatprep.subr.bf16.mxu0 0
      %1215 = vmatpush1.bf16.msra.mxu0 0
      %1216 = vmatprep.mubr.bf16.mxu0 0
      %1217 = vmatmul.mubr.bf16.gmra.mrb[0].mxu0 %v1182
      %v1218 = vpop.f32.mrb[0].mxu0
      %v1219 = vadd.f32 %v1151, %v1218
      %v1220 = vpop.f32.mrb[0].mxu0
      %v1221 = vpop.f32.mrb[0].mxu0
      %v1222 = vpop.f32.mrb[0].mxu0
      %1223 = vdwg.mxu0
      %v1228 = vunpack.c.l.b16 %v1128
      %v1229 = vunpack.c.l.b16 %v1129
      %v1230 = vunpack.c.l.b16 %v1130
      %v1231 = vunpack.c.l.b16 %v1131
      %v1232 = vpack.c.b16 %v1229, %v1228
      %v1233 = vpack.c.b16 %v1231, %v1230
      %1236 = vmatprep.subr.bf16.mxu0 0
      %1237 = vmatpush1.bf16.msra.mxu0 %v1232
      %1238 = vmatprep.subr.bf16.mxu0 0
      %1239 = vmatpush1.bf16.msra.mxu0 %v1233
      %1240 = vmatprep.subr.bf16.mxu0 0
      %1241 = vmatpush1.bf16.msra.mxu0 0
      %1242 = vmatprep.subr.bf16.mxu0 0
      %1243 = vmatpush1.bf16.msra.mxu0 0
      %1244 = vmatprep.subr.bf16.mxu0 0
      %1245 = vmatpush1.bf16.msra.mxu0 0
      %1246 = vmatprep.subr.bf16.mxu0 0
      %1247 = vmatpush1.bf16.msra.mxu0 0
      %1248 = vmatprep.subr.bf16.mxu0 0
      %1249 = vmatpush1.bf16.msra.mxu0 0
      %1250 = vmatprep.subr.bf16.mxu0 0
      %1251 = vmatpush1.bf16.msra.mxu0 0
      %1252 = vmatprep.subr.bf16.mxu0 0
      %1253 = vmatpush1.bf16.msra.mxu0 0
      %1254 = vmatprep.subr.bf16.mxu0 0
      %1255 = vmatpush1.bf16.msra.mxu0 0
      %1256 = vmatprep.subr.bf16.mxu0 0
      %1257 = vmatpush1.bf16.msra.mxu0 0
      %1258 = vmatprep.subr.bf16.mxu0 0
      %1259 = vmatpush1.bf16.msra.mxu0 0
      %1260 = vmatprep.subr.bf16.mxu0 0
      %1261 = vmatpush1.bf16.msra.mxu0 0
      %1262 = vmatprep.subr.bf16.mxu0 0
      %1263 = vmatpush1.bf16.msra.mxu0 0
      %1264 = vmatprep.subr.bf16.mxu0 0
      %1265 = vmatpush1.bf16.msra.mxu0 0
      %1266 = vmatprep.subr.bf16.mxu0 0
      %1267 = vmatpush1.bf16.msra.mxu0 0
      %1268 = vmatprep.mubr.bf16.mxu0 0
      %1269 = vmatmul.mubr.bf16.gmra.mrb[0].mxu0 %v1182
      %v1270 = vpop.f32.mrb[0].mxu0
      %v1271 = vadd.f32 %v1155, %v1270
      %v1272 = vpop.f32.mrb[0].mxu0
      %v1273 = vpop.f32.mrb[0].mxu0
      %v1274 = vpop.f32.mrb[0].mxu0
      %1275 = vdwg.mxu0
      %v1280 = vunpack.c.l.b16 %v1132
      %v1281 = vunpack.c.l.b16 %v1133
      %v1282 = vunpack.c.l.b16 %v1134
      %v1283 = vunpack.c.l.b16 %v1135
      %v1284 = vpack.c.b16 %v1281, %v1280
      %v1285 = vpack.c.b16 %v1283, %v1282
      %1288 = vmatprep.subr.bf16.mxu0 0
      %1289 = vmatpush1.bf16.msra.mxu0 %v1284
      %1290 = vmatprep.subr.bf16.mxu0 0
      %1291 = vmatpush1.bf16.msra.mxu0 %v1285
      %1292 = vmatprep.subr.bf16.mxu0 0
      %1293 = vmatpush1.bf16.msra.mxu0 0
      %1294 = vmatprep.subr.bf16.mxu0 0
      %1295 = vmatpush1.bf16.msra.mxu0 0
      %1296 = vmatprep.subr.bf16.mxu0 0
      %1297 = vmatpush1.bf16.msra.mxu0 0
      %1298 = vmatprep.subr.bf16.mxu0 0
      %1299 = vmatpush1.bf16.msra.mxu0 0
      %1300 = vmatprep.subr.bf16.mxu0 0
      %1301 = vmatpush1.bf16.msra.mxu0 0
      %1302 = vmatprep.subr.bf16.mxu0 0
      %1303 = vmatpush1.bf16.msra.mxu0 0
      %1304 = vmatprep.subr.bf16.mxu0 0
      %1305 = vmatpush1.bf16.msra.mxu0 0
      %1306 = vmatprep.subr.bf16.mxu0 0
      %1307 = vmatpush1.bf16.msra.mxu0 0
      %1308 = vmatprep.subr.bf16.mxu0 0
      %1309 = vmatpush1.bf16.msra.mxu0 0
      %1310 = vmatprep.subr.bf16.mxu0 0
      %1311 = vmatpush1.bf16.msra.mxu0 0
      %1312 = vmatprep.subr.bf16.mxu0 0
      %1313 = vmatpush1.bf16.msra.mxu0 0
      %1314 = vmatprep.subr.bf16.mxu0 0
      %1315 = vmatpush1.bf16.msra.mxu0 0
      %1316 = vmatprep.subr.bf16.mxu0 0
      %1317 = vmatpush1.bf16.msra.mxu0 0
      %1318 = vmatprep.subr.bf16.mxu0 0
      %1319 = vmatpush1.bf16.msra.mxu0 0
      %1320 = vmatprep.mubr.bf16.mxu0 0
      %1321 = vmatmul.mubr.bf16.gmra.mrb[0].mxu0 %v1182
      %v1322 = vpop.f32.mrb[0].mxu0
      %v1323 = vadd.f32 %v1159, %v1322
      %v1324 = vpop.f32.mrb[0].mxu0
      %v1325 = vpop.f32.mrb[0].mxu0
      %v1326 = vpop.f32.mrb[0].mxu0
      %1327 = vdwg.mxu0
      %v1332 = vunpack.c.l.b16 %v1136
      %v1333 = vunpack.c.l.b16 %v1137
      %v1334 = vunpack.c.l.b16 %v1138
      %v1335 = vunpack.c.l.b16 %v1139
      %v1336 = vpack.c.b16 %v1333, %v1332
      %v1337 = vpack.c.b16 %v1335, %v1334
      %1340 = vmatprep.subr.bf16.mxu0 0
      %1341 = vmatpush1.bf16.msra.mxu0 %v1336
      %1342 = vmatprep.subr.bf16.mxu0 0
      %1343 = vmatpush1.bf16.msra.mxu0 %v1337
      %1344 = vmatprep.subr.bf16.mxu0 0
      %1345 = vmatpush1.bf16.msra.mxu0 0
      %1346 = vmatprep.subr.bf16.mxu0 0
      %1347 = vmatpush1.bf16.msra.mxu0 0
      %1348 = vmatprep.subr.bf16.mxu0 0
      %1349 = vmatpush1.bf16.msra.mxu0 0
      %1350 = vmatprep.subr.bf16.mxu0 0
      %1351 = vmatpush1.bf16.msra.mxu0 0
      %1352 = vmatprep.subr.bf16.mxu0 0
      %1353 = vmatpush1.bf16.msra.mxu0 0
      %1354 = vmatprep.subr.bf16.mxu0 0
      %1355 = vmatpush1.bf16.msra.mxu0 0
      %1356 = vmatprep.subr.bf16.mxu0 0
      %1357 = vmatpush1.bf16.msra.mxu0 0
      %1358 = vmatprep.subr.bf16.mxu0 0
      %1359 = vmatpush1.bf16.msra.mxu0 0
      %1360 = vmatprep.subr.bf16.mxu0 0
      %1361 = vmatpush1.bf16.msra.mxu0 0
      %1362 = vmatprep.subr.bf16.mxu0 0
      %1363 = vmatpush1.bf16.msra.mxu0 0
      %1364 = vmatprep.subr.bf16.mxu0 0
      %1365 = vmatpush1.bf16.msra.mxu0 0
      %1366 = vmatprep.subr.bf16.mxu0 0
      %1367 = vmatpush1.bf16.msra.mxu0 0
      %1368 = vmatprep.subr.bf16.mxu0 0
      %1369 = vmatpush1.bf16.msra.mxu0 0
      %1370 = vmatprep.subr.bf16.mxu0 0
      %1371 = vmatpush1.bf16.msra.mxu0 0
      %1372 = vmatprep.mubr.bf16.mxu0 0
      %1373 = vmatmul.mubr.bf16.gmra.mrb[0].mxu0 %v1182
      %v1374 = vpop.f32.mrb[0].mxu0
      %v1375 = vadd.f32 %v1163, %v1374
      %v1376 = vpop.f32.mrb[0].mxu0
      %v1377 = vpop.f32.mrb[0].mxu0
      %v1378 = vpop.f32.mrb[0].mxu0
      %1379 = vdwg.mxu0
      %v1380 = vld [vmem:[%s1009] sm:$0xf]
      %v1381 = vld [vmem:[%s1009 + $0x4] sm:$0xf]
      %v1382 = vld [vmem:[%s1009 + $0x8] sm:$0xf]
      %v1383 = vld [vmem:[%s1009 + $0xc] sm:$0xf]
      %v1384 = vld [vmem:[%s1009 + $0x10] sm:$0xf]
      %v1385 = vld [vmem:[%s1009 + $0x14] sm:$0xf]
      %v1386 = vld [vmem:[%s1009 + $0x18] sm:$0xf]
      %v1387 = vld [vmem:[%s1009 + $0x1c] sm:$0xf]
      %v1388 = vld [vmem:[%s1009 + $0x20] sm:$0xf]
      %v1389 = vld [vmem:[%s1009 + $0x24] sm:$0xf]
      %v1390 = vld [vmem:[%s1009 + $0x28] sm:$0xf]
      %v1391 = vld [vmem:[%s1009 + $0x2c] sm:$0xf]
      %v1392 = vld [vmem:[%s1009 + $0x30] sm:$0xf]
      %v1393 = vld [vmem:[%s1009 + $0x34] sm:$0xf]
      %v1394 = vld [vmem:[%s1009 + $0x38] sm:$0xf]
      %v1395 = vld [vmem:[%s1009 + $0x3c] sm:$0xf]
      %v1396 = vld [vmem:[%s1022] sm:$0x1]
      %v1397 = vld [vmem:[%s1022 + $0x1] sm:$0x1]
      %v1398 = vld [vmem:[%s1022 + $0x2] sm:$0x1]
      %v1399 = vld [vmem:[%s1022 + $0x3] sm:$0x1]
      %v1404 = vlaneseq
      %v1405 = vshrl.u32 %v1404, 7
      %v1406 = vsub.s32 0, %v1405
      %v1407 = vrot.slane %v1396, %v1406
      %v1408 = vlaneseq
      %v1409 = vshrl.u32 %v1408, 7
      %v1410 = vsub.s32 0, %v1409
      %v1411 = vrot.slane %v1397, %v1410
      %v1412 = vlaneseq
      %v1413 = vshrl.u32 %v1412, 7
      %v1414 = vsub.s32 0, %v1413
      %v1415 = vrot.slane %v1398, %v1414
      %v1416 = vlaneseq
      %v1417 = vshrl.u32 %v1416, 7
      %v1418 = vsub.s32 0, %v1417
      %v1419 = vrot.slane %v1399, %v1418
      %v1428 = vunpack.c.l.b16 %v1380
      %v1429 = vunpack.c.l.b16 %v1381
      %v1430 = vunpack.c.l.b16 %v1382
      %v1431 = vunpack.c.l.b16 %v1383
      %v1432 = vpack.c.b16 %v1429, %v1428
      %v1433 = vpack.c.b16 %v1431, %v1430
      %1436 = vmatprep.subr.bf16.mxu0 0
      %1437 = vmatpush1.bf16.msra.mxu0 %v1432
      %1438 = vmatprep.subr.bf16.mxu0 0
      %1439 = vmatpush1.bf16.msra.mxu0 %v1433
      %1440 = vmatprep.subr.bf16.mxu0 0
      %1441 = vmatpush1.bf16.msra.mxu0 0
      %1442 = vmatprep.subr.bf16.mxu0 0
      %1443 = vmatpush1.bf16.msra.mxu0 0
      %1444 = vmatprep.subr.bf16.mxu0 0
      %1445 = vmatpush1.bf16.msra.mxu0 0
      %1446 = vmatprep.subr.bf16.mxu0 0
      %1447 = vmatpush1.bf16.msra.mxu0 0
      %1448 = vmatprep.subr.bf16.mxu0 0
      %1449 = vmatpush1.bf16.msra.mxu0 0
      %1450 = vmatprep.subr.bf16.mxu0 0
      %1451 = vmatpush1.bf16.msra.mxu0 0
      %1452 = vmatprep.subr.bf16.mxu0 0
      %1453 = vmatpush1.bf16.msra.mxu0 0
      %1454 = vmatprep.subr.bf16.mxu0 0
      %1455 = vmatpush1.bf16.msra.mxu0 0
      %1456 = vmatprep.subr.bf16.mxu0 0
      %1457 = vmatpush1.bf16.msra.mxu0 0
      %1458 = vmatprep.subr.bf16.mxu0 0
      %1459 = vmatpush1.bf16.msra.mxu0 0
      %1460 = vmatprep.subr.bf16.mxu0 0
      %1461 = vmatpush1.bf16.msra.mxu0 0
      %1462 = vmatprep.subr.bf16.mxu0 0
      %1463 = vmatpush1.bf16.msra.mxu0 0
      %1464 = vmatprep.subr.bf16.mxu0 0
      %1465 = vmatpush1.bf16.msra.mxu0 0
      %1466 = vmatprep.subr.bf16.mxu0 0
      %1467 = vmatpush1.bf16.msra.mxu0 0
      %1468 = vmatprep.mubr.bf16.mxu0 0
      %1469 = vmatmul.mubr.bf16.gmra.mrb[0].mxu0 %v1182
      %v1470 = vpop.f32.mrb[0].mxu0
      %v1471 = vadd.f32 %v1407, %v1470
      %v1472 = vpop.f32.mrb[0].mxu0
      %v1473 = vpop.f32.mrb[0].mxu0
      %v1474 = vpop.f32.mrb[0].mxu0
      %1475 = vdwg.mxu0
      %v1480 = vunpack.c.l.b16 %v1384
      %v1481 = vunpack.c.l.b16 %v1385
      %v1482 = vunpack.c.l.b16 %v1386
      %v1483 = vunpack.c.l.b16 %v1387
      %v1484 = vpack.c.b16 %v1481, %v1480
      %v1485 = vpack.c.b16 %v1483, %v1482
      %1488 = vmatprep.subr.bf16.mxu0 0
      %1489 = vmatpush1.bf16.msra.mxu0 %v1484
      %1490 = vmatprep.subr.bf16.mxu0 0
      %1491 = vmatpush1.bf16.msra.mxu0 %v1485
      %1492 = vmatprep.subr.bf16.mxu0 0
      %1493 = vmatpush1.bf16.msra.mxu0 0
      %1494 = vmatprep.subr.bf16.mxu0 0
      %1495 = vmatpush1.bf16.msra.mxu0 0
      %1496 = vmatprep.subr.bf16.mxu0 0
      %1497 = vmatpush1.bf16.msra.mxu0 0
      %1498 = vmatprep.subr.bf16.mxu0 0
      %1499 = vmatpush1.bf16.msra.mxu0 0
      %1500 = vmatprep.subr.bf16.mxu0 0
      %1501 = vmatpush1.bf16.msra.mxu0 0
      %1502 = vmatprep.subr.bf16.mxu0 0
      %1503 = vmatpush1.bf16.msra.mxu0 0
      %1504 = vmatprep.subr.bf16.mxu0 0
      %1505 = vmatpush1.bf16.msra.mxu0 0
      %1506 = vmatprep.subr.bf16.mxu0 0
      %1507 = vmatpush1.bf16.msra.mxu0 0
      %1508 = vmatprep.subr.bf16.mxu0 0
      %1509 = vmatpush1.bf16.msra.mxu0 0
      %1510 = vmatprep.subr.bf16.mxu0 0
      %1511 = vmatpush1.bf16.msra.mxu0 0
      %1512 = vmatprep.subr.bf16.mxu0 0
      %1513 = vmatpush1.bf16.msra.mxu0 0
      %1514 = vmatprep.subr.bf16.mxu0 0
      %1515 = vmatpush1.bf16.msra.mxu0 0
      %1516 = vmatprep.subr.bf16.mxu0 0
      %1517 = vmatpush1.bf16.msra.mxu0 0
      %1518 = vmatprep.subr.bf16.mxu0 0
      %1519 = vmatpush1.bf16.msra.mxu0 0
      %1520 = vmatprep.mubr.bf16.mxu0 0
      %1521 = vmatmul.mubr.bf16.gmra.mrb[0].mxu0 %v1182
      %v1522 = vpop.f32.mrb[0].mxu0
      %v1523 = vadd.f32 %v1411, %v1522
      %v1524 = vpop.f32.mrb[0].mxu0
      %v1525 = vpop.f32.mrb[0].mxu0
      %v1526 = vpop.f32.mrb[0].mxu0
      %1527 = vdwg.mxu0
      %v1532 = vunpack.c.l.b16 %v1388
      %v1533 = vunpack.c.l.b16 %v1389
      %v1534 = vunpack.c.l.b16 %v1390
      %v1535 = vunpack.c.l.b16 %v1391
      %v1536 = vpack.c.b16 %v1533, %v1532
      %v1537 = vpack.c.b16 %v1535, %v1534
      %1540 = vmatprep.subr.bf16.mxu0 0
      %1541 = vmatpush1.bf16.msra.mxu0 %v1536
      %1542 = vmatprep.subr.bf16.mxu0 0
      %1543 = vmatpush1.bf16.msra.mxu0 %v1537
      %1544 = vmatprep.subr.bf16.mxu0 0
      %1545 = vmatpush1.bf16.msra.mxu0 0
      %1546 = vmatprep.subr.bf16.mxu0 0
      %1547 = vmatpush1.bf16.msra.mxu0 0
      %1548 = vmatprep.subr.bf16.mxu0 0
      %1549 = vmatpush1.bf16.msra.mxu0 0
      %1550 = vmatprep.subr.bf16.mxu0 0
      %1551 = vmatpush1.bf16.msra.mxu0 0
      %1552 = vmatprep.subr.bf16.mxu0 0
      %1553 = vmatpush1.bf16.msra.mxu0 0
      %1554 = vmatprep.subr.bf16.mxu0 0
      %1555 = vmatpush1.bf16.msra.mxu0 0
      %1556 = vmatprep.subr.bf16.mxu0 0
      %1557 = vmatpush1.bf16.msra.mxu0 0
      %1558 = vmatprep.subr.bf16.mxu0 0
      %1559 = vmatpush1.bf16.msra.mxu0 0
      %1560 = vmatprep.subr.bf16.mxu0 0
      %1561 = vmatpush1.bf16.msra.mxu0 0
      %1562 = vmatprep.subr.bf16.mxu0 0
      %1563 = vmatpush1.bf16.msra.mxu0 0
      %1564 = vmatprep.subr.bf16.mxu0 0
      %1565 = vmatpush1.bf16.msra.mxu0 0
      %1566 = vmatprep.subr.bf16.mxu0 0
      %1567 = vmatpush1.bf16.msra.mxu0 0
      %1568 = vmatprep.subr.bf16.mxu0 0
      %1569 = vmatpush1.bf16.msra.mxu0 0
      %1570 = vmatprep.subr.bf16.mxu0 0
      %1571 = vmatpush1.bf16.msra.mxu0 0
      %1572 = vmatprep.mubr.bf16.mxu0 0
      %1573 = vmatmul.mubr.bf16.gmra.mrb[0].mxu0 %v1182
      %v1574 = vpop.f32.mrb[0].mxu0
      %v1575 = vadd.f32 %v1415, %v1574
      %v1576 = vpop.f32.mrb[0].mxu0
      %v1577 = vpop.f32.mrb[0].mxu0
      %v1578 = vpop.f32.mrb[0].mxu0
      %1579 = vdwg.mxu0
      %v1584 = vunpack.c.l.b16 %v1392
      %v1585 = vunpack.c.l.b16 %v1393
      %v1586 = vunpack.c.l.b16 %v1394
      %v1587 = vunpack.c.l.b16 %v1395
      %v1588 = vpack.c.b16 %v1585, %v1584
      %v1589 = vpack.c.b16 %v1587, %v1586
      %1592 = vmatprep.subr.bf16.mxu0 0
      %1593 = vmatpush1.bf16.msra.mxu0 %v1588
      %1594 = vmatprep.subr.bf16.mxu0 0
      %1595 = vmatpush1.bf16.msra.mxu0 %v1589
      %1596 = vmatprep.subr.bf16.mxu0 0
      %1597 = vmatpush1.bf16.msra.mxu0 0
      %1598 = vmatprep.subr.bf16.mxu0 0
      %1599 = vmatpush1.bf16.msra.mxu0 0
      %1600 = vmatprep.subr.bf16.mxu0 0
      %1601 = vmatpush1.bf16.msra.mxu0 0
      %1602 = vmatprep.subr.bf16.mxu0 0
      %1603 = vmatpush1.bf16.msra.mxu0 0
      %1604 = vmatprep.subr.bf16.mxu0 0
      %1605 = vmatpush1.bf16.msra.mxu0 0
      %1606 = vmatprep.subr.bf16.mxu0 0
      %1607 = vmatpush1.bf16.msra.mxu0 0
      %1608 = vmatprep.subr.bf16.mxu0 0
      %1609 = vmatpush1.bf16.msra.mxu0 0
      %1610 = vmatprep.subr.bf16.mxu0 0
      %1611 = vmatpush1.bf16.msra.mxu0 0
      %1612 = vmatprep.subr.bf16.mxu0 0
      %1613 = vmatpush1.bf16.msra.mxu0 0
      %1614 = vmatprep.subr.bf16.mxu0 0
      %1615 = vmatpush1.bf16.msra.mxu0 0
      %1616 = vmatprep.subr.bf16.mxu0 0
      %1617 = vmatpush1.bf16.msra.mxu0 0
      %1618 = vmatprep.subr.bf16.mxu0 0
      %1619 = vmatpush1.bf16.msra.mxu0 0
      %1620 = vmatprep.subr.bf16.mxu0 0
      %1621 = vmatpush1.bf16.msra.mxu0 0
      %1622 = vmatprep.subr.bf16.mxu0 0
      %1623 = vmatpush1.bf16.msra.mxu0 0
      %1624 = vmatprep.mubr.bf16.mxu0 0
      %1625 = vmatmul.mubr.bf16.gmra.mrb[0].mxu0 %v1182
      %v1626 = vpop.f32.mrb[0].mxu0
      %v1627 = vadd.f32 %v1419, %v1626
      %v1628 = vpop.f32.mrb[0].mxu0
      %v1629 = vpop.f32.mrb[0].mxu0
      %v1630 = vpop.f32.mrb[0].mxu0
      %1631 = vdwg.mxu0
      %v1632 = vld [vmem:[%s1014] sm:$0xf]
      %v1633 = vld [vmem:[%s1014 + $0x4] sm:$0xf]
      %v1634 = vld [vmem:[%s1014 + $0x8] sm:$0xf]
      %v1635 = vld [vmem:[%s1014 + $0xc] sm:$0xf]
      %v1636 = vld [vmem:[%s1014 + $0x10] sm:$0xf]
      %v1637 = vld [vmem:[%s1014 + $0x14] sm:$0xf]
      %v1638 = vld [vmem:[%s1014 + $0x18] sm:$0xf]
      %v1639 = vld [vmem:[%s1014 + $0x1c] sm:$0xf]
      %v1640 = vld [vmem:[%s1014 + $0x20] sm:$0xf]
      %v1641 = vld [vmem:[%s1014 + $0x24] sm:$0xf]
      %v1642 = vld [vmem:[%s1014 + $0x28] sm:$0xf]
      %v1643 = vld [vmem:[%s1014 + $0x2c] sm:$0xf]
      %v1644 = vld [vmem:[%s1014 + $0x30] sm:$0xf]
      %v1645 = vld [vmem:[%s1014 + $0x34] sm:$0xf]
      %v1646 = vld [vmem:[%s1014 + $0x38] sm:$0xf]
      %v1647 = vld [vmem:[%s1014 + $0x3c] sm:$0xf]
      %v1648 = vld [vmem:[%s1026] sm:$0x1]
      %v1649 = vld [vmem:[%s1026 + $0x1] sm:$0x1]
      %v1650 = vld [vmem:[%s1026 + $0x2] sm:$0x1]
      %v1651 = vld [vmem:[%s1026 + $0x3] sm:$0x1]
      %v1656 = vlaneseq
      %v1657 = vshrl.u32 %v1656, 7
      %v1658 = vsub.s32 0, %v1657
      %v1659 = vrot.slane %v1648, %v1658
      %v1660 = vlaneseq
      %v1661 = vshrl.u32 %v1660, 7
      %v1662 = vsub.s32 0, %v1661
      %v1663 = vrot.slane %v1649, %v1662
      %v1664 = vlaneseq
      %v1665 = vshrl.u32 %v1664, 7
      %v1666 = vsub.s32 0, %v1665
      %v1667 = vrot.slane %v1650, %v1666
      %v1668 = vlaneseq
      %v1669 = vshrl.u32 %v1668, 7
      %v1670 = vsub.s32 0, %v1669
      %v1671 = vrot.slane %v1651, %v1670
      %v1680 = vunpack.c.l.b16 %v1632
      %v1681 = vunpack.c.l.b16 %v1633
      %v1682 = vunpack.c.l.b16 %v1634
      %v1683 = vunpack.c.l.b16 %v1635
      %v1684 = vpack.c.b16 %v1681, %v1680
      %v1685 = vpack.c.b16 %v1683, %v1682
      %1688 = vmatprep.subr.bf16.mxu0 0
      %1689 = vmatpush1.bf16.msra.mxu0 %v1684
      %1690 = vmatprep.subr.bf16.mxu0 0
      %1691 = vmatpush1.bf16.msra.mxu0 %v1685
      %1692 = vmatprep.subr.bf16.mxu0 0
      %1693 = vmatpush1.bf16.msra.mxu0 0
      %1694 = vmatprep.subr.bf16.mxu0 0
      %1695 = vmatpush1.bf16.msra.mxu0 0
      %1696 = vmatprep.subr.bf16.mxu0 0
      %1697 = vmatpush1.bf16.msra.mxu0 0
      %1698 = vmatprep.subr.bf16.mxu0 0
      %1699 = vmatpush1.bf16.msra.mxu0 0
      %1700 = vmatprep.subr.bf16.mxu0 0
      %1701 = vmatpush1.bf16.msra.mxu0 0
      %1702 = vmatprep.subr.bf16.mxu0 0
      %1703 = vmatpush1.bf16.msra.mxu0 0
      %1704 = vmatprep.subr.bf16.mxu0 0
      %1705 = vmatpush1.bf16.msra.mxu0 0
      %1706 = vmatprep.subr.bf16.mxu0 0
      %1707 = vmatpush1.bf16.msra.mxu0 0
      %1708 = vmatprep.subr.bf16.mxu0 0
      %1709 = vmatpush1.bf16.msra.mxu0 0
      %1710 = vmatprep.subr.bf16.mxu0 0
      %1711 = vmatpush1.bf16.msra.mxu0 0
      %1712 = vmatprep.subr.bf16.mxu0 0
      %1713 = vmatpush1.bf16.msra.mxu0 0
      %1714 = vmatprep.subr.bf16.mxu0 0
      %1715 = vmatpush1.bf16.msra.mxu0 0
      %1716 = vmatprep.subr.bf16.mxu0 0
      %1717 = vmatpush1.bf16.msra.mxu0 0
      %1718 = vmatprep.subr.bf16.mxu0 0
      %1719 = vmatpush1.bf16.msra.mxu0 0
      %1720 = vmatprep.mubr.bf16.mxu0 0
      %1721 = vmatmul.mubr.bf16.gmra.mrb[0].mxu0 %v1182
      %v1722 = vpop.f32.mrb[0].mxu0
      %v1723 = vadd.f32 %v1659, %v1722
      %v1724 = vpop.f32.mrb[0].mxu0
      %v1725 = vpop.f32.mrb[0].mxu0
      %v1726 = vpop.f32.mrb[0].mxu0
      %1727 = vdwg.mxu0
      %v1732 = vunpack.c.l.b16 %v1636
      %v1733 = vunpack.c.l.b16 %v1637
      %v1734 = vunpack.c.l.b16 %v1638
      %v1735 = vunpack.c.l.b16 %v1639
      %v1736 = vpack.c.b16 %v1733, %v1732
      %v1737 = vpack.c.b16 %v1735, %v1734
      %1740 = vmatprep.subr.bf16.mxu0 0
      %1741 = vmatpush1.bf16.msra.mxu0 %v1736
      %1742 = vmatprep.subr.bf16.mxu0 0
      %1743 = vmatpush1.bf16.msra.mxu0 %v1737
      %1744 = vmatprep.subr.bf16.mxu0 0
      %1745 = vmatpush1.bf16.msra.mxu0 0
      %1746 = vmatprep.subr.bf16.mxu0 0
      %1747 = vmatpush1.bf16.msra.mxu0 0
      %1748 = vmatprep.subr.bf16.mxu0 0
      %1749 = vmatpush1.bf16.msra.mxu0 0
      %1750 = vmatprep.subr.bf16.mxu0 0
      %1751 = vmatpush1.bf16.msra.mxu0 0
      %1752 = vmatprep.subr.bf16.mxu0 0
      %1753 = vmatpush1.bf16.msra.mxu0 0
      %1754 = vmatprep.subr.bf16.mxu0 0
      %1755 = vmatpush1.bf16.msra.mxu0 0
      %1756 = vmatprep.subr.bf16.mxu0 0
      %1757 = vmatpush1.bf16.msra.mxu0 0
      %1758 = vmatprep.subr.bf16.mxu0 0
      %1759 = vmatpush1.bf16.msra.mxu0 0
      %1760 = vmatprep.subr.bf16.mxu0 0
      %1761 = vmatpush1.bf16.msra.mxu0 0
      %1762 = vmatprep.subr.bf16.mxu0 0
      %1763 = vmatpush1.bf16.msra.mxu0 0
      %1764 = vmatprep.subr.bf16.mxu0 0
      %1765 = vmatpush1.bf16.msra.mxu0 0
      %1766 = vmatprep.subr.bf16.mxu0 0
      %1767 = vmatpush1.bf16.msra.mxu0 0
      %1768 = vmatprep.subr.bf16.mxu0 0
      %1769 = vmatpush1.bf16.msra.mxu0 0
      %1770 = vmatprep.subr.bf16.mxu0 0
      %1771 = vmatpush1.bf16.msra.mxu0 0
      %1772 = vmatprep.mubr.bf16.mxu0 0
      %1773 = vmatmul.mubr.bf16.gmra.mrb[0].mxu0 %v1182
      %v1774 = vpop.f32.mrb[0].mxu0
      %v1775 = vadd.f32 %v1663, %v1774
      %v1776 = vpop.f32.mrb[0].mxu0
      %v1777 = vpop.f32.mrb[0].mxu0
      %v1778 = vpop.f32.mrb[0].mxu0
      %1779 = vdwg.mxu0
      %v1784 = vunpack.c.l.b16 %v1640
      %v1785 = vunpack.c.l.b16 %v1641
      %v1786 = vunpack.c.l.b16 %v1642
      %v1787 = vunpack.c.l.b16 %v1643
      %v1788 = vpack.c.b16 %v1785, %v1784
      %v1789 = vpack.c.b16 %v1787, %v1786
      %1792 = vmatprep.subr.bf16.mxu0 0
      %1793 = vmatpush1.bf16.msra.mxu0 %v1788
      %1794 = vmatprep.subr.bf16.mxu0 0
      %1795 = vmatpush1.bf16.msra.mxu0 %v1789
      %1796 = vmatprep.subr.bf16.mxu0 0
      %1797 = vmatpush1.bf16.msra.mxu0 0
      %1798 = vmatprep.subr.bf16.mxu0 0
      %1799 = vmatpush1.bf16.msra.mxu0 0
      %1800 = vmatprep.subr.bf16.mxu0 0
      %1801 = vmatpush1.bf16.msra.mxu0 0
      %1802 = vmatprep.subr.bf16.mxu0 0
      %1803 = vmatpush1.bf16.msra.mxu0 0
      %1804 = vmatprep.subr.bf16.mxu0 0
      %1805 = vmatpush1.bf16.msra.mxu0 0
      %1806 = vmatprep.subr.bf16.mxu0 0
      %1807 = vmatpush1.bf16.msra.mxu0 0
      %1808 = vmatprep.subr.bf16.mxu0 0
      %1809 = vmatpush1.bf16.msra.mxu0 0
      %1810 = vmatprep.subr.bf16.mxu0 0
      %1811 = vmatpush1.bf16.msra.mxu0 0
      %1812 = vmatprep.subr.bf16.mxu0 0
      %1813 = vmatpush1.bf16.msra.mxu0 0
      %1814 = vmatprep.subr.bf16.mxu0 0
      %1815 = vmatpush1.bf16.msra.mxu0 0
      %1816 = vmatprep.subr.bf16.mxu0 0
      %1817 = vmatpush1.bf16.msra.mxu0 0
      %1818 = vmatprep.subr.bf16.mxu0 0
      %1819 = vmatpush1.bf16.msra.mxu0 0
      %1820 = vmatprep.subr.bf16.mxu0 0
      %1821 = vmatpush1.bf16.msra.mxu0 0
      %1822 = vmatprep.subr.bf16.mxu0 0
      %1823 = vmatpush1.bf16.msra.mxu0 0
      %1824 = vmatprep.mubr.bf16.mxu0 0
      %1825 = vmatmul.mubr.bf16.gmra.mrb[0].mxu0 %v1182
      %v1826 = vpop.f32.mrb[0].mxu0
      %v1827 = vadd.f32 %v1667, %v1826
      %v1828 = vpop.f32.mrb[0].mxu0
      %v1829 = vpop.f32.mrb[0].mxu0
      %v1830 = vpop.f32.mrb[0].mxu0
      %1831 = vdwg.mxu0
      %v1836 = vunpack.c.l.b16 %v1644
      %v1837 = vunpack.c.l.b16 %v1645
      %v1838 = vunpack.c.l.b16 %v1646
      %v1839 = vunpack.c.l.b16 %v1647
      %v1840 = vpack.c.b16 %v1837, %v1836
      %v1841 = vpack.c.b16 %v1839, %v1838
      %1844 = vmatprep.subr.bf16.mxu0 0
      %1845 = vmatpush1.bf16.msra.mxu0 %v1840
      %1846 = vmatprep.subr.bf16.mxu0 0
      %1847 = vmatpush1.bf16.msra.mxu0 %v1841
      %1848 = vmatprep.subr.bf16.mxu0 0
      %1849 = vmatpush1.bf16.msra.mxu0 0
      %1850 = vmatprep.subr.bf16.mxu0 0
      %1851 = vmatpush1.bf16.msra.mxu0 0
      %1852 = vmatprep.subr.bf16.mxu0 0
      %1853 = vmatpush1.bf16.msra.mxu0 0
      %1854 = vmatprep.subr.bf16.mxu0 0
      %1855 = vmatpush1.bf16.msra.mxu0 0
      %1856 = vmatprep.subr.bf16.mxu0 0
      %1857 = vmatpush1.bf16.msra.mxu0 0
      %1858 = vmatprep.subr.bf16.mxu0 0
      %1859 = vmatpush1.bf16.msra.mxu0 0
      %1860 = vmatprep.subr.bf16.mxu0 0
      %1861 = vmatpush1.bf16.msra.mxu0 0
      %1862 = vmatprep.subr.bf16.mxu0 0
      %1863 = vmatpush1.bf16.msra.mxu0 0
      %1864 = vmatprep.subr.bf16.mxu0 0
      %1865 = vmatpush1.bf16.msra.mxu0 0
      %1866 = vmatprep.subr.bf16.mxu0 0
      %1867 = vmatpush1.bf16.msra.mxu0 0
      %1868 = vmatprep.subr.bf16.mxu0 0
      %1869 = vmatpush1.bf16.msra.mxu0 0
      %1870 = vmatprep.subr.bf16.mxu0 0
      %1871 = vmatpush1.bf16.msra.mxu0 0
      %1872 = vmatprep.subr.bf16.mxu0 0
      %1873 = vmatpush1.bf16.msra.mxu0 0
      %1874 = vmatprep.subr.bf16.mxu0 0
      %1875 = vmatpush1.bf16.msra.mxu0 0
      %1876 = vmatprep.mubr.bf16.mxu0 0
      %1877 = vmatmul.mubr.bf16.gmra.mrb[0].mxu0 %v1182
      %v1878 = vpop.f32.mrb[0].mxu0
      %v1879 = vadd.f32 %v1671, %v1878
      %v1880 = vpop.f32.mrb[0].mxu0
      %v1881 = vpop.f32.mrb[0].mxu0
      %v1882 = vpop.f32.mrb[0].mxu0
      %1883 = vdwg.mxu0
      %v1884 = vpack.c.bf16 %v1219, %v1219
      %v1885 = vpack.c.bf16 %v1271, %v1271
      %v1886 = vpack.c.bf16 %v1323, %v1323
      %v1887 = vpack.c.bf16 %v1375, %v1375
      %v1888 = vpack.c.bf16 %v1471, %v1471
      %v1889 = vpack.c.bf16 %v1523, %v1523
      %v1890 = vpack.c.bf16 %v1575, %v1575
      %v1891 = vpack.c.bf16 %v1627, %v1627
      %vm1892 = vcmask 64512
      %v1894 = vsel %vm1892, %v1884, 0
      %v1897 = vsel %vm1892, %v1888, 0
      %1899 = vmatprep.subr.bf16.mxu0 0
      %1900 = vmatpush1.bf16.xpose.msra.mxu0 %v1897
      %1901 = vmatprep.subr.bf16.mxu0 0
      %1902 = vmatpush1.bf16.xpose.msra.mxu0 0
      %1903 = vmatprep.subr.bf16.mxu0 0
      %1904 = vmatpush1.bf16.xpose.msra.mxu0 0
      %1905 = vmatprep.subr.bf16.mxu0 0
      %1906 = vmatpush1.bf16.xpose.msra.mxu0 0
      %1907 = vmatprep.subr.bf16.mxu0 0
      %1908 = vmatpush1.bf16.xpose.msra.mxu0 0
      %1909 = vmatprep.subr.bf16.mxu0 0
      %1910 = vmatpush1.bf16.xpose.msra.mxu0 0
      %1911 = vmatprep.subr.bf16.mxu0 0
      %1912 = vmatpush1.bf16.xpose.msra.mxu0 0
      %1913 = vmatprep.subr.bf16.mxu0 0
      %1914 = vmatpush1.bf16.xpose.msra.mxu0 0
      %1915 = vmatprep.subr.bf16.mxu0 0
      %1916 = vmatpush1.bf16.xpose.msra.mxu0 0
      %1917 = vmatprep.subr.bf16.mxu0 0
      %1918 = vmatpush1.bf16.xpose.msra.mxu0 0
      %1919 = vmatprep.subr.bf16.mxu0 0
      %1920 = vmatpush1.bf16.xpose.msra.mxu0 0
      %1921 = vmatprep.subr.bf16.mxu0 0
      %1922 = vmatpush1.bf16.xpose.msra.mxu0 0
      %1923 = vmatprep.subr.bf16.mxu0 0
      %1924 = vmatpush1.bf16.xpose.msra.mxu0 0
      %1925 = vmatprep.subr.bf16.mxu0 0
      %1926 = vmatpush1.bf16.xpose.msra.mxu0 0
      %1927 = vmatprep.subr.bf16.mxu0 0
      %1928 = vmatpush1.bf16.xpose.msra.mxu0 0
      %1929 = vmatprep.subr.bf16.mxu0 0
      %1930 = vmatpush1.bf16.xpose.msra.mxu0 0
      %1931 = vmatprep.mubr.bf16.mxu0 0
      %1932 = vmatmul.mubr.bf16.gmra.mrb[0].mxu0 %v1894
      %v1933 = vpop.f32.mrb[0].mxu0
      %v1934 = vadd.f32 0.0, %v1933
      %v1935 = vpop.f32.mrb[0].mxu0
      %v1936 = vpop.f32.mrb[0].mxu0
      %v1937 = vpop.f32.mrb[0].mxu0
      %1938 = vdwg.mxu0
      %v1940 = vsel %vm1892, %v1885, 0
      %v1943 = vsel %vm1892, %v1889, 0
      %1945 = vmatprep.subr.bf16.mxu0 0
      %1946 = vmatpush1.bf16.xpose.msra.mxu0 %v1943
      %1947 = vmatprep.subr.bf16.mxu0 0
      %1948 = vmatpush1.bf16.xpose.msra.mxu0 0
      %1949 = vmatprep.subr.bf16.mxu0 0
      %1950 = vmatpush1.bf16.xpose.msra.mxu0 0
      %1951 = vmatprep.subr.bf16.mxu0 0
      %1952 = vmatpush1.bf16.xpose.msra.mxu0 0
      %1953 = vmatprep.subr.bf16.mxu0 0
      %1954 = vmatpush1.bf16.xpose.msra.mxu0 0
      %1955 = vmatprep.subr.bf16.mxu0 0
      %1956 = vmatpush1.bf16.xpose.msra.mxu0 0
      %1957 = vmatprep.subr.bf16.mxu0 0
      %1958 = vmatpush1.bf16.xpose.msra.mxu0 0
      %1959 = vmatprep.subr.bf16.mxu0 0
      %1960 = vmatpush1.bf16.xpose.msra.mxu0 0
      %1961 = vmatprep.subr.bf16.mxu0 0
      %1962 = vmatpush1.bf16.xpose.msra.mxu0 0
      %1963 = vmatprep.subr.bf16.mxu0 0
      %1964 = vmatpush1.bf16.xpose.msra.mxu0 0
      %1965 = vmatprep.subr.bf16.mxu0 0
      %1966 = vmatpush1.bf16.xpose.msra.mxu0 0
      %1967 = vmatprep.subr.bf16.mxu0 0
      %1968 = vmatpush1.bf16.xpose.msra.mxu0 0
      %1969 = vmatprep.subr.bf16.mxu0 0
      %1970 = vmatpush1.bf16.xpose.msra.mxu0 0
      %1971 = vmatprep.subr.bf16.mxu0 0
      %1972 = vmatpush1.bf16.xpose.msra.mxu0 0
      %1973 = vmatprep.subr.bf16.mxu0 0
      %1974 = vmatpush1.bf16.xpose.msra.mxu0 0
      %1975 = vmatprep.subr.bf16.mxu0 0
      %1976 = vmatpush1.bf16.xpose.msra.mxu0 0
      %1977 = vmatprep.mubr.bf16.mxu0 0
      %1978 = vmatmul.mubr.bf16.gmra.mrb[0].mxu0 %v1940
      %v1979 = vpop.f32.mrb[0].mxu0
      %v1980 = vadd.f32 0.0, %v1979
      %v1981 = vpop.f32.mrb[0].mxu0
      %v1982 = vpop.f32.mrb[0].mxu0
      %v1983 = vpop.f32.mrb[0].mxu0
      %1984 = vdwg.mxu0
      %v1986 = vsel %vm1892, %v1886, 0
      %v1989 = vsel %vm1892, %v1890, 0
      %1991 = vmatprep.subr.bf16.mxu0 0
      %1992 = vmatpush1.bf16.xpose.msra.mxu0 %v1989
      %1993 = vmatprep.subr.bf16.mxu0 0
      %1994 = vmatpush1.bf16.xpose.msra.mxu0 0
      %1995 = vmatprep.subr.bf16.mxu0 0
      %1996 = vmatpush1.bf16.xpose.msra.mxu0 0
      %1997 = vmatprep.subr.bf16.mxu0 0
      %1998 = vmatpush1.bf16.xpose.msra.mxu0 0
      %1999 = vmatprep.subr.bf16.mxu0 0
      %2000 = vmatpush1.bf16.xpose.msra.mxu0 0
      %2001 = vmatprep.subr.bf16.mxu0 0
      %2002 = vmatpush1.bf16.xpose.msra.mxu0 0
      %2003 = vmatprep.subr.bf16.mxu0 0
      %2004 = vmatpush1.bf16.xpose.msra.mxu0 0
      %2005 = vmatprep.subr.bf16.mxu0 0
      %2006 = vmatpush1.bf16.xpose.msra.mxu0 0
      %2007 = vmatprep.subr.bf16.mxu0 0
      %2008 = vmatpush1.bf16.xpose.msra.mxu0 0
      %2009 = vmatprep.subr.bf16.mxu0 0
      %2010 = vmatpush1.bf16.xpose.msra.mxu0 0
      %2011 = vmatprep.subr.bf16.mxu0 0
      %2012 = vmatpush1.bf16.xpose.msra.mxu0 0
      %2013 = vmatprep.subr.bf16.mxu0 0
      %2014 = vmatpush1.bf16.xpose.msra.mxu0 0
      %2015 = vmatprep.subr.bf16.mxu0 0
      %2016 = vmatpush1.bf16.xpose.msra.mxu0 0
      %2017 = vmatprep.subr.bf16.mxu0 0
      %2018 = vmatpush1.bf16.xpose.msra.mxu0 0
      %2019 = vmatprep.subr.bf16.mxu0 0
      %2020 = vmatpush1.bf16.xpose.msra.mxu0 0
      %2021 = vmatprep.subr.bf16.mxu0 0
      %2022 = vmatpush1.bf16.xpose.msra.mxu0 0
      %2023 = vmatprep.mubr.bf16.mxu0 0
      %2024 = vmatmul.mubr.bf16.gmra.mrb[0].mxu0 %v1986
      %v2025 = vpop.f32.mrb[0].mxu0
      %v2026 = vadd.f32 0.0, %v2025
      %v2027 = vpop.f32.mrb[0].mxu0
      %v2028 = vpop.f32.mrb[0].mxu0
      %v2029 = vpop.f32.mrb[0].mxu0
      %2030 = vdwg.mxu0
      %v2032 = vsel %vm1892, %v1887, 0
      %v2035 = vsel %vm1892, %v1891, 0
      %2037 = vmatprep.subr.bf16.mxu0 0
      %2038 = vmatpush1.bf16.xpose.msra.mxu0 %v2035
      %2039 = vmatprep.subr.bf16.mxu0 0
      %2040 = vmatpush1.bf16.xpose.msra.mxu0 0
      %2041 = vmatprep.subr.bf16.mxu0 0
      %2042 = vmatpush1.bf16.xpose.msra.mxu0 0
      %2043 = vmatprep.subr.bf16.mxu0 0
      %2044 = vmatpush1.bf16.xpose.msra.mxu0 0
      %2045 = vmatprep.subr.bf16.mxu0 0
      %2046 = vmatpush1.bf16.xpose.msra.mxu0 0
      %2047 = vmatprep.subr.bf16.mxu0 0
      %2048 = vmatpush1.bf16.xpose.msra.mxu0 0
      %2049 = vmatprep.subr.bf16.mxu0 0
      %2050 = vmatpush1.bf16.xpose.msra.mxu0 0
      %2051 = vmatprep.subr.bf16.mxu0 0
      %2052 = vmatpush1.bf16.xpose.msra.mxu0 0
      %2053 = vmatprep.subr.bf16.mxu0 0
      %2054 = vmatpush1.bf16.xpose.msra.mxu0 0
      %2055 = vmatprep.subr.bf16.mxu0 0
      %2056 = vmatpush1.bf16.xpose.msra.mxu0 0
      %2057 = vmatprep.subr.bf16.mxu0 0
      %2058 = vmatpush1.bf16.xpose.msra.mxu0 0
      %2059 = vmatprep.subr.bf16.mxu0 0
      %2060 = vmatpush1.bf16.xpose.msra.mxu0 0
      %2061 = vmatprep.subr.bf16.mxu0 0
      %2062 = vmatpush1.bf16.xpose.msra.mxu0 0
      %2063 = vmatprep.subr.bf16.mxu0 0
      %2064 = vmatpush1.bf16.xpose.msra.mxu0 0
      %2065 = vmatprep.subr.bf16.mxu0 0
      %2066 = vmatpush1.bf16.xpose.msra.mxu0 0
      %2067 = vmatprep.subr.bf16.mxu0 0
      %2068 = vmatpush1.bf16.xpose.msra.mxu0 0
      %2069 = vmatprep.mubr.bf16.mxu0 0
      %2070 = vmatmul.mubr.bf16.gmra.mrb[0].mxu0 %v2032
      %v2071 = vpop.f32.mrb[0].mxu0
      %v2072 = vadd.f32 0.0, %v2071
      %v2073 = vpop.f32.mrb[0].mxu0
      %v2074 = vpop.f32.mrb[0].mxu0
      %v2075 = vpop.f32.mrb[0].mxu0
      %2076 = vdwg.mxu0
      %v2077 = vmul.f32 %v1934, 0.35355338
      %v2078 = vmul.f32 %v1980, 0.35355338
      %v2079 = vmul.f32 %v2026, 0.35355338
      %v2080 = vmul.f32 %v2072, 0.35355338
      %vm2081 = vcmask 36864
      %v2082 = vsel %vm2081, %v2077, -inf
      %2083 = vmax.xlane.f32.xlu0 %v2082
      %v2084 = vpop.xlane.xlu0 %2083
      %v2085 = vsel %vm2081, %v2078, -inf
      %2086 = vmax.xlane.f32.xlu0 %v2085
      %v2087 = vpop.xlane.xlu0 %2086
      %v2088 = vsel %vm2081, %v2079, -inf
      %2089 = vmax.xlane.f32.xlu0 %v2088
      %v2090 = vpop.xlane.xlu0 %2089
      %v2091 = vsel %vm2081, %v2080, -inf
      %2092 = vmax.xlane.f32.xlu0 %v2091
      %v2093 = vpop.xlane.xlu0 %2092
      %v2094 = vsub.f32 %v2077, %v2084
      %v2095 = vsub.f32 %v2078, %v2087
      %v2096 = vsub.f32 %v2079, %v2090
      %v2097 = vsub.f32 %v2080, %v2093
      %v2098 = vmul.f32 %v2094, 1.442695
      %v2099 = vpow.pop %v2098
      %v2100 = vmul.f32 %v2095, 1.442695
      %v2101 = vpow.pop %v2100
      %v2102 = vmul.f32 %v2096, 1.442695
      %v2103 = vpow.pop %v2102
      %v2104 = vmul.f32 %v2097, 1.442695
      %v2105 = vpow.pop %v2104
      %v2106 = vsel %vm2081, %v2099, 0.0
      %2107 = vadd.xlane.f32.xlu0 %v2106
      %v2108 = vpop.xlane.xlu0 %2107
      %v2109 = vsel %vm2081, %v2101, 0.0
      %2110 = vadd.xlane.f32.xlu0 %v2109
      %v2111 = vpop.xlane.xlu0 %2110
      %v2112 = vsel %vm2081, %v2103, 0.0
      %2113 = vadd.xlane.f32.xlu0 %v2112
      %v2114 = vpop.xlane.xlu0 %2113
      %v2115 = vsel %vm2081, %v2105, 0.0
      %2116 = vadd.xlane.f32.xlu0 %v2115
      %v2117 = vpop.xlane.xlu0 %2116
      %v2118 = vrcp.pop %v2108
      %v2119 = vrcp.pop %v2111
      %v2120 = vrcp.pop %v2114
      %v2121 = vrcp.pop %v2117
      %v2122 = vmul.f32 %v2099, %v2118
      %v2123 = vmul.f32 %v2101, %v2119
      %v2124 = vmul.f32 %v2103, %v2120
      %v2125 = vmul.f32 %v2105, %v2121
      %v2126 = vpack.c.bf16 %v2122, %v2122
      %v2127 = vpack.c.bf16 %v2123, %v2123
      %v2128 = vpack.c.bf16 %v2124, %v2124
      %v2129 = vpack.c.bf16 %v2125, %v2125
      %v2130 = vpack.c.bf16 %v1723, %v1723
      %v2131 = vpack.c.bf16 %v1775, %v1775
      %v2132 = vpack.c.bf16 %v1827, %v1827
      %v2133 = vpack.c.bf16 %v1879, %v1879
      %vm2134 = vcmask 39936
      %v2136 = vsel %vm2134, %v2126, 0
      %vm2138 = vcmask 1041408
      %vm2139 = vcmask 1042432
      %v2140 = vsel %vm2138, 4294967295, 65535
      %v2141 = vsel %vm2139, %v2140, 0
      %v2143 = vand.u32 %v2130, %v2141
      %2145 = vmatprep.subr.bf16.mxu0 0
      %2146 = vmatpush1.bf16.msra.mxu0 %v2143
      %2147 = vmatprep.subr.bf16.mxu0 0
      %2148 = vmatpush1.bf16.msra.mxu0 0
      %2149 = vmatprep.subr.bf16.mxu0 0
      %2150 = vmatpush1.bf16.msra.mxu0 0
      %2151 = vmatprep.subr.bf16.mxu0 0
      %2152 = vmatpush1.bf16.msra.mxu0 0
      %2153 = vmatprep.subr.bf16.mxu0 0
      %2154 = vmatpush1.bf16.msra.mxu0 0
      %2155 = vmatprep.subr.bf16.mxu0 0
      %2156 = vmatpush1.bf16.msra.mxu0 0
      %2157 = vmatprep.subr.bf16.mxu0 0
      %2158 = vmatpush1.bf16.msra.mxu0 0
      %2159 = vmatprep.subr.bf16.mxu0 0
      %2160 = vmatpush1.bf16.msra.mxu0 0
      %2161 = vmatprep.subr.bf16.mxu0 0
      %2162 = vmatpush1.bf16.msra.mxu0 0
      %2163 = vmatprep.subr.bf16.mxu0 0
      %2164 = vmatpush1.bf16.msra.mxu0 0
      %2165 = vmatprep.subr.bf16.mxu0 0
      %2166 = vmatpush1.bf16.msra.mxu0 0
      %2167 = vmatprep.subr.bf16.mxu0 0
      %2168 = vmatpush1.bf16.msra.mxu0 0
      %2169 = vmatprep.subr.bf16.mxu0 0
      %2170 = vmatpush1.bf16.msra.mxu0 0
      %2171 = vmatprep.subr.bf16.mxu0 0
      %2172 = vmatpush1.bf16.msra.mxu0 0
      %2173 = vmatprep.subr.bf16.mxu0 0
      %2174 = vmatpush1.bf16.msra.mxu0 0
      %2175 = vmatprep.subr.bf16.mxu0 0
      %2176 = vmatpush1.bf16.msra.mxu0 0
      %2177 = vmatprep.mubr.bf16.mxu0 0
      %2178 = vmatmul.mubr.bf16.gmra.mrb[0].mxu0 %v2136
      %v2179 = vpop.f32.mrb[0].mxu0
      %v2180 = vadd.f32 0.0, %v2179
      %v2181 = vpop.f32.mrb[0].mxu0
      %v2182 = vpop.f32.mrb[0].mxu0
      %v2183 = vpop.f32.mrb[0].mxu0
      %2184 = vdwg.mxu0
      %v2186 = vsel %vm2134, %v2127, 0
      %v2189 = vand.u32 %v2131, %v2141
      %2191 = vmatprep.subr.bf16.mxu0 0
      %2192 = vmatpush1.bf16.msra.mxu0 %v2189
      %2193 = vmatprep.subr.bf16.mxu0 0
      %2194 = vmatpush1.bf16.msra.mxu0 0
      %2195 = vmatprep.subr.bf16.mxu0 0
      %2196 = vmatpush1.bf16.msra.mxu0 0
      %2197 = vmatprep.subr.bf16.mxu0 0
      %2198 = vmatpush1.bf16.msra.mxu0 0
      %2199 = vmatprep.subr.bf16.mxu0 0
      %2200 = vmatpush1.bf16.msra.mxu0 0
      %2201 = vmatprep.subr.bf16.mxu0 0
      %2202 = vmatpush1.bf16.msra.mxu0 0
      %2203 = vmatprep.subr.bf16.mxu0 0
      %2204 = vmatpush1.bf16.msra.mxu0 0
      %2205 = vmatprep.subr.bf16.mxu0 0
      %2206 = vmatpush1.bf16.msra.mxu0 0
      %2207 = vmatprep.subr.bf16.mxu0 0
      %2208 = vmatpush1.bf16.msra.mxu0 0
      %2209 = vmatprep.subr.bf16.mxu0 0
      %2210 = vmatpush1.bf16.msra.mxu0 0
      %2211 = vmatprep.subr.bf16.mxu0 0
      %2212 = vmatpush1.bf16.msra.mxu0 0
      %2213 = vmatprep.subr.bf16.mxu0 0
      %2214 = vmatpush1.bf16.msra.mxu0 0
      %2215 = vmatprep.subr.bf16.mxu0 0
      %2216 = vmatpush1.bf16.msra.mxu0 0
      %2217 = vmatprep.subr.bf16.mxu0 0
      %2218 = vmatpush1.bf16.msra.mxu0 0
      %2219 = vmatprep.subr.bf16.mxu0 0
      %2220 = vmatpush1.bf16.msra.mxu0 0
      %2221 = vmatprep.subr.bf16.mxu0 0
      %2222 = vmatpush1.bf16.msra.mxu0 0
      %2223 = vmatprep.mubr.bf16.mxu0 0
      %2224 = vmatmul.mubr.bf16.gmra.mrb[0].mxu0 %v2186
      %v2225 = vpop.f32.mrb[0].mxu0
      %v2226 = vadd.f32 0.0, %v2225
      %v2227 = vpop.f32.mrb[0].mxu0
      %v2228 = vpop.f32.mrb[0].mxu0
      %v2229 = vpop.f32.mrb[0].mxu0
      %2230 = vdwg.mxu0
      %v2232 = vsel %vm2134, %v2128, 0
      %v2235 = vand.u32 %v2132, %v2141
      %2237 = vmatprep.subr.bf16.mxu0 0
      %2238 = vmatpush1.bf16.msra.mxu0 %v2235
      %2239 = vmatprep.subr.bf16.mxu0 0
      %2240 = vmatpush1.bf16.msra.mxu0 0
      %2241 = vmatprep.subr.bf16.mxu0 0
      %2242 = vmatpush1.bf16.msra.mxu0 0
      %2243 = vmatprep.subr.bf16.mxu0 0
      %2244 = vmatpush1.bf16.msra.mxu0 0
      %2245 = vmatprep.subr.bf16.mxu0 0
      %2246 = vmatpush1.bf16.msra.mxu0 0
      %2247 = vmatprep.subr.bf16.mxu0 0
      %2248 = vmatpush1.bf16.msra.mxu0 0
      %2249 = vmatprep.subr.bf16.mxu0 0
      %2250 = vmatpush1.bf16.msra.mxu0 0
      %2251 = vmatprep.subr.bf16.mxu0 0
      %2252 = vmatpush1.bf16.msra.mxu0 0
      %2253 = vmatprep.subr.bf16.mxu0 0
      %2254 = vmatpush1.bf16.msra.mxu0 0
      %2255 = vmatprep.subr.bf16.mxu0 0
      %2256 = vmatpush1.bf16.msra.mxu0 0
      %2257 = vmatprep.subr.bf16.mxu0 0
      %2258 = vmatpush1.bf16.msra.mxu0 0
      %2259 = vmatprep.subr.bf16.mxu0 0
      %2260 = vmatpush1.bf16.msra.mxu0 0
      %2261 = vmatprep.subr.bf16.mxu0 0
      %2262 = vmatpush1.bf16.msra.mxu0 0
      %2263 = vmatprep.subr.bf16.mxu0 0
      %2264 = vmatpush1.bf16.msra.mxu0 0
      %2265 = vmatprep.subr.bf16.mxu0 0
      %2266 = vmatpush1.bf16.msra.mxu0 0
      %2267 = vmatprep.subr.bf16.mxu0 0
      %2268 = vmatpush1.bf16.msra.mxu0 0
      %2269 = vmatprep.mubr.bf16.mxu0 0
      %2270 = vmatmul.mubr.bf16.gmra.mrb[0].mxu0 %v2232
      %v2271 = vpop.f32.mrb[0].mxu0
      %v2272 = vadd.f32 0.0, %v2271
      %v2273 = vpop.f32.mrb[0].mxu0
      %v2274 = vpop.f32.mrb[0].mxu0
      %v2275 = vpop.f32.mrb[0].mxu0
      %2276 = vdwg.mxu0
      %v2278 = vsel %vm2134, %v2129, 0
      %v2281 = vand.u32 %v2133, %v2141
      %2283 = vmatprep.subr.bf16.mxu0 0
      %2284 = vmatpush1.bf16.msra.mxu0 %v2281
      %2285 = vmatprep.subr.bf16.mxu0 0
      %2286 = vmatpush1.bf16.msra.mxu0 0
      %2287 = vmatprep.subr.bf16.mxu0 0
      %2288 = vmatpush1.bf16.msra.mxu0 0
      %2289 = vmatprep.subr.bf16.mxu0 0
      %2290 = vmatpush1.bf16.msra.mxu0 0
      %2291 = vmatprep.subr.bf16.mxu0 0
      %2292 = vmatpush1.bf16.msra.mxu0 0
      %2293 = vmatprep.subr.bf16.mxu0 0
      %2294 = vmatpush1.bf16.msra.mxu0 0
      %2295 = vmatprep.subr.bf16.mxu0 0
      %2296 = vmatpush1.bf16.msra.mxu0 0
      %2297 = vmatprep.subr.bf16.mxu0 0
      %2298 = vmatpush1.bf16.msra.mxu0 0
      %2299 = vmatprep.subr.bf16.mxu0 0
      %2300 = vmatpush1.bf16.msra.mxu0 0
      %2301 = vmatprep.subr.bf16.mxu0 0
      %2302 = vmatpush1.bf16.msra.mxu0 0
      %2303 = vmatprep.subr.bf16.mxu0 0
      %2304 = vmatpush1.bf16.msra.mxu0 0
      %2305 = vmatprep.subr.bf16.mxu0 0
      %2306 = vmatpush1.bf16.msra.mxu0 0
      %2307 = vmatprep.subr.bf16.mxu0 0
      %2308 = vmatpush1.bf16.msra.mxu0 0
      %2309 = vmatprep.subr.bf16.mxu0 0
      %2310 = vmatpush1.bf16.msra.mxu0 0
      %2311 = vmatprep.subr.bf16.mxu0 0
      %2312 = vmatpush1.bf16.msra.mxu0 0
      %2313 = vmatprep.subr.bf16.mxu0 0
      %2314 = vmatpush1.bf16.msra.mxu0 0
      %2315 = vmatprep.mubr.bf16.mxu0 0
      %2316 = vmatmul.mubr.bf16.gmra.mrb[0].mxu0 %v2278
      %v2317 = vpop.f32.mrb[0].mxu0
      %v2318 = vadd.f32 0.0, %v2317
      %v2319 = vpop.f32.mrb[0].mxu0
      %v2320 = vpop.f32.mrb[0].mxu0
      %v2321 = vpop.f32.mrb[0].mxu0
      %2322 = vdwg.mxu0
      %v2323 = vpack.c.bf16 %v2180, %v2180
      %v2324 = vpack.c.bf16 %v2226, %v2226
      %v2325 = vpack.c.bf16 %v2272, %v2272
      %v2326 = vpack.c.bf16 %v2318, %v2318
      %v2327 = vld [vmem:[%s1031] sm:$0xf]
      %v2328 = vld [vmem:[%s1031 + $0x4] sm:$0xf]
      %v2329 = vld [vmem:[%s1031 + $0x8] sm:$0xf]
      %v2330 = vld [vmem:[%s1031 + $0xc] sm:$0xf]
      %v2332 = vsel %vm1892, %v2323, 0
      %vm2334 = vcmask 1043456
      %v2336 = vsel %vm2334, %v2327, 0
      %2338 = vmatprep.subr.bf16.mxu0 0
      %2339 = vmatpush1.bf16.msra.mxu0 %v2336
      %2340 = vmatprep.subr.bf16.mxu0 0
      %2341 = vmatpush1.bf16.msra.mxu0 0
      %2342 = vmatprep.subr.bf16.mxu0 0
      %2343 = vmatpush1.bf16.msra.mxu0 0
      %2344 = vmatprep.subr.bf16.mxu0 0
      %2345 = vmatpush1.bf16.msra.mxu0 0
      %2346 = vmatprep.subr.bf16.mxu0 0
      %2347 = vmatpush1.bf16.msra.mxu0 0
      %2348 = vmatprep.subr.bf16.mxu0 0
      %2349 = vmatpush1.bf16.msra.mxu0 0
      %2350 = vmatprep.subr.bf16.mxu0 0
      %2351 = vmatpush1.bf16.msra.mxu0 0
      %2352 = vmatprep.subr.bf16.mxu0 0
      %2353 = vmatpush1.bf16.msra.mxu0 0
      %2354 = vmatprep.subr.bf16.mxu0 0
      %2355 = vmatpush1.bf16.msra.mxu0 0
      %2356 = vmatprep.subr.bf16.mxu0 0
      %2357 = vmatpush1.bf16.msra.mxu0 0
      %2358 = vmatprep.subr.bf16.mxu0 0
      %2359 = vmatpush1.bf16.msra.mxu0 0
      %2360 = vmatprep.subr.bf16.mxu0 0
      %2361 = vmatpush1.bf16.msra.mxu0 0
      %2362 = vmatprep.subr.bf16.mxu0 0
      %2363 = vmatpush1.bf16.msra.mxu0 0
      %2364 = vmatprep.subr.bf16.mxu0 0
      %2365 = vmatpush1.bf16.msra.mxu0 0
      %2366 = vmatprep.subr.bf16.mxu0 0
      %2367 = vmatpush1.bf16.msra.mxu0 0
      %2368 = vmatprep.subr.bf16.mxu0 0
      %2369 = vmatpush1.bf16.msra.mxu0 0
      %2370 = vmatprep.mubr.bf16.mxu0 0
      %2371 = vmatmul.mubr.bf16.gmra.mrb[0].mxu0 %v2332
      %v2372 = vpop.f32.mrb[0].mxu0
      %v2373 = vadd.f32 0.0, %v2372
      %v2374 = vpop.f32.mrb[0].mxu0
      %v2375 = vpop.f32.mrb[0].mxu0
      %v2376 = vpop.f32.mrb[0].mxu0
      %2377 = vdwg.mxu0
      %v2379 = vsel %vm1892, %v2324, 0
      %v2382 = vsel %vm2334, %v2328, 0
      %2384 = vmatprep.subr.bf16.mxu0 0
      %2385 = vmatpush1.bf16.msra.mxu0 %v2382
      %2386 = vmatprep.subr.bf16.mxu0 0
      %2387 = vmatpush1.bf16.msra.mxu0 0
      %2388 = vmatprep.subr.bf16.mxu0 0
      %2389 = vmatpush1.bf16.msra.mxu0 0
      %2390 = vmatprep.subr.bf16.mxu0 0
      %2391 = vmatpush1.bf16.msra.mxu0 0
      %2392 = vmatprep.subr.bf16.mxu0 0
      %2393 = vmatpush1.bf16.msra.mxu0 0
      %2394 = vmatprep.subr.bf16.mxu0 0
      %2395 = vmatpush1.bf16.msra.mxu0 0
      %2396 = vmatprep.subr.bf16.mxu0 0
      %2397 = vmatpush1.bf16.msra.mxu0 0
      %2398 = vmatprep.subr.bf16.mxu0 0
      %2399 = vmatpush1.bf16.msra.mxu0 0
      %2400 = vmatprep.subr.bf16.mxu0 0
      %2401 = vmatpush1.bf16.msra.mxu0 0
      %2402 = vmatprep.subr.bf16.mxu0 0
      %2403 = vmatpush1.bf16.msra.mxu0 0
      %2404 = vmatprep.subr.bf16.mxu0 0
      %2405 = vmatpush1.bf16.msra.mxu0 0
      %2406 = vmatprep.subr.bf16.mxu0 0
      %2407 = vmatpush1.bf16.msra.mxu0 0
      %2408 = vmatprep.subr.bf16.mxu0 0
      %2409 = vmatpush1.bf16.msra.mxu0 0
      %2410 = vmatprep.subr.bf16.mxu0 0
      %2411 = vmatpush1.bf16.msra.mxu0 0
      %2412 = vmatprep.subr.bf16.mxu0 0
      %2413 = vmatpush1.bf16.msra.mxu0 0
      %2414 = vmatprep.subr.bf16.mxu0 0
      %2415 = vmatpush1.bf16.msra.mxu0 0
      %2416 = vmatprep.mubr.bf16.mxu0 0
      %2417 = vmatmul.mubr.bf16.gmra.mrb[0].mxu0 %v2379
      %v2418 = vpop.f32.mrb[0].mxu0
      %v2419 = vadd.f32 0.0, %v2418
      %v2420 = vpop.f32.mrb[0].mxu0
      %v2421 = vpop.f32.mrb[0].mxu0
      %v2422 = vpop.f32.mrb[0].mxu0
      %2423 = vdwg.mxu0
      %v2425 = vsel %vm1892, %v2325, 0
      %v2428 = vsel %vm2334, %v2329, 0
      %2430 = vmatprep.subr.bf16.mxu0 0
      %2431 = vmatpush1.bf16.msra.mxu0 %v2428
      %2432 = vmatprep.subr.bf16.mxu0 0
      %2433 = vmatpush1.bf16.msra.mxu0 0
      %2434 = vmatprep.subr.bf16.mxu0 0
      %2435 = vmatpush1.bf16.msra.mxu0 0
      %2436 = vmatprep.subr.bf16.mxu0 0
      %2437 = vmatpush1.bf16.msra.mxu0 0
      %2438 = vmatprep.subr.bf16.mxu0 0
      %2439 = vmatpush1.bf16.msra.mxu0 0
      %2440 = vmatprep.subr.bf16.mxu0 0
      %2441 = vmatpush1.bf16.msra.mxu0 0
      %2442 = vmatprep.subr.bf16.mxu0 0
      %2443 = vmatpush1.bf16.msra.mxu0 0
      %2444 = vmatprep.subr.bf16.mxu0 0
      %2445 = vmatpush1.bf16.msra.mxu0 0
      %2446 = vmatprep.subr.bf16.mxu0 0
      %2447 = vmatpush1.bf16.msra.mxu0 0
      %2448 = vmatprep.subr.bf16.mxu0 0
      %2449 = vmatpush1.bf16.msra.mxu0 0
      %2450 = vmatprep.subr.bf16.mxu0 0
      %2451 = vmatpush1.bf16.msra.mxu0 0
      %2452 = vmatprep.subr.bf16.mxu0 0
      %2453 = vmatpush1.bf16.msra.mxu0 0
      %2454 = vmatprep.subr.bf16.mxu0 0
      %2455 = vmatpush1.bf16.msra.mxu0 0
      %2456 = vmatprep.subr.bf16.mxu0 0
      %2457 = vmatpush1.bf16.msra.mxu0 0
      %2458 = vmatprep.subr.bf16.mxu0 0
      %2459 = vmatpush1.bf16.msra.mxu0 0
      %2460 = vmatprep.subr.bf16.mxu0 0
      %2461 = vmatpush1.bf16.msra.mxu0 0
      %2462 = vmatprep.mubr.bf16.mxu0 0
      %2463 = vmatmul.mubr.bf16.gmra.mrb[0].mxu0 %v2425
      %v2464 = vpop.f32.mrb[0].mxu0
      %v2465 = vadd.f32 0.0, %v2464
      %v2466 = vpop.f32.mrb[0].mxu0
      %v2467 = vpop.f32.mrb[0].mxu0
      %v2468 = vpop.f32.mrb[0].mxu0
      %2469 = vdwg.mxu0
      %v2471 = vsel %vm1892, %v2326, 0
      %v2474 = vsel %vm2334, %v2330, 0
      %2476 = vmatprep.subr.bf16.mxu0 0
      %2477 = vmatpush1.bf16.msra.mxu0 %v2474
      %2478 = vmatprep.subr.bf16.mxu0 0
      %2479 = vmatpush1.bf16.msra.mxu0 0
      %2480 = vmatprep.subr.bf16.mxu0 0
      %2481 = vmatpush1.bf16.msra.mxu0 0
      %2482 = vmatprep.subr.bf16.mxu0 0
      %2483 = vmatpush1.bf16.msra.mxu0 0
      %2484 = vmatprep.subr.bf16.mxu0 0
      %2485 = vmatpush1.bf16.msra.mxu0 0
      %2486 = vmatprep.subr.bf16.mxu0 0
      %2487 = vmatpush1.bf16.msra.mxu0 0
      %2488 = vmatprep.subr.bf16.mxu0 0
      %2489 = vmatpush1.bf16.msra.mxu0 0
      %2490 = vmatprep.subr.bf16.mxu0 0
      %2491 = vmatpush1.bf16.msra.mxu0 0
      %2492 = vmatprep.subr.bf16.mxu0 0
      %2493 = vmatpush1.bf16.msra.mxu0 0
      %2494 = vmatprep.subr.bf16.mxu0 0
      %2495 = vmatpush1.bf16.msra.mxu0 0
      %2496 = vmatprep.subr.bf16.mxu0 0
      %2497 = vmatpush1.bf16.msra.mxu0 0
      %2498 = vmatprep.subr.bf16.mxu0 0
      %2499 = vmatpush1.bf16.msra.mxu0 0
      %2500 = vmatprep.subr.bf16.mxu0 0
      %2501 = vmatpush1.bf16.msra.mxu0 0
      %2502 = vmatprep.subr.bf16.mxu0 0
      %2503 = vmatpush1.bf16.msra.mxu0 0
      %2504 = vmatprep.subr.bf16.mxu0 0
      %2505 = vmatpush1.bf16.msra.mxu0 0
      %2506 = vmatprep.subr.bf16.mxu0 0
      %2507 = vmatpush1.bf16.msra.mxu0 0
      %2508 = vmatprep.mubr.bf16.mxu0 0
      %2509 = vmatmul.mubr.bf16.gmra.mrb[0].mxu0 %v2471
      %v2510 = vpop.f32.mrb[0].mxu0
      %v2511 = vadd.f32 0.0, %v2510
      %v2512 = vpop.f32.mrb[0].mxu0
      %v2513 = vpop.f32.mrb[0].mxu0
      %v2514 = vpop.f32.mrb[0].mxu0
      %2515 = vdwg.mxu0
      %v2516 = vsel %vm1094, %v2373, 0.0
      %v2517 = vsel %vm1094, %v2419, 0.0
      %v2518 = vadd.f32 %v2516, %v2517
      %v2519 = vsel %vm1094, %v2465, 0.0
      %v2520 = vadd.f32 %v2518, %v2519
      %v2521 = vsel %vm1094, %v2511, 0.0
      %v2522 = vadd.f32 %v2520, %v2521
      %v2523 = vld [vmem:[%s1034] sm:$0x1]
      %v2525 = vlaneseq
      %v2526 = vshrl.u32 %v2525, 7
      %v2527 = vsub.s32 0, %v2526
      %v2528 = vrot.slane %v2523, %v2527
      %v2530 = vadd.f32 %v2522, %v2528
      %v2531 = vadd.f32 %v1091, %v2530
      %v2532 = vld [vmem:[%s1037] sm:$0x1]
      %v2533 = vld [vmem:[%s1040] sm:$0x1]
      %v2534 = vsel %vm1094, %v2531, 0.0
      %2535 = vadd.xlane.f32.xlu0 %v2534
      %v2536 = vpop.xlane.xlu0 %2535
      %v2537 = vmul.f32 %v2536, %v1098
      %v2538 = vsub.f32 %v2531, %v2537
      %v2539 = vmul.f32 %v2538, %v2538
      %v2540 = vsel %vm1094, %v2539, 0.0
      %2541 = vadd.xlane.f32.xlu0 %v2540
      %v2542 = vpop.xlane.xlu0 %2541
      %v2543 = vmul.f32 %v2542, %v1098
      %v2544 = vadd.f32 %v2543, 1e-05
      %v2545 = vrsqrt.pop %v2544
      %v2546 = vmul.f32 %v2538, %v2545
      %v2548 = vlaneseq
      %v2549 = vshrl.u32 %v2548, 7
      %v2550 = vsub.s32 0, %v2549
      %v2551 = vrot.slane %v2532, %v2550
      %v2553 = vmul.f32 %v2546, %v2551
      %v2555 = vlaneseq
      %v2556 = vshrl.u32 %v2555, 7
      %v2557 = vsub.s32 0, %v2556
      %v2558 = vrot.slane %v2533, %v2557
      %v2560 = vadd.f32 %v2553, %v2558
      %v2561 = vld [vmem:[%s1045] sm:$0xf]
      %v2562 = vld [vmem:[%s1045 + $0x4] sm:$0xf]
      %v2563 = vld [vmem:[%s1045 + $0x8] sm:$0xf]
      %v2564 = vld [vmem:[%s1045 + $0xc] sm:$0xf]
      %v2565 = vld [vmem:[%s1048] sm:$0x1]
      %v2566 = vpack.c.bf16 %v2560, %v2560
      %v2568 = vlaneseq
      %v2569 = vshrl.u32 %v2568, 7
      %v2570 = vsub.s32 0, %v2569
      %v2571 = vrot.slane %v2565, %v2570
      %v2577 = vunpack.c.l.b16 %v2561
      %v2578 = vunpack.c.l.b16 %v2562
      %v2579 = vunpack.c.l.b16 %v2563
      %v2580 = vunpack.c.l.b16 %v2564
      %v2581 = vpack.c.b16 %v2578, %v2577
      %v2582 = vpack.c.b16 %v2580, %v2579
      %v2586 = vsel %vm1180, %v2566, 0
      %2588 = vmatprep.subr.bf16.mxu0 0
      %2589 = vmatpush1.bf16.msra.mxu0 %v2581
      %2590 = vmatprep.subr.bf16.mxu0 0
      %2591 = vmatpush1.bf16.msra.mxu0 %v2582
      %2592 = vmatprep.subr.bf16.mxu0 0
      %2593 = vmatpush1.bf16.msra.mxu0 0
      %2594 = vmatprep.subr.bf16.mxu0 0
      %2595 = vmatpush1.bf16.msra.mxu0 0
      %2596 = vmatprep.subr.bf16.mxu0 0
      %2597 = vmatpush1.bf16.msra.mxu0 0
      %2598 = vmatprep.subr.bf16.mxu0 0
      %2599 = vmatpush1.bf16.msra.mxu0 0
      %2600 = vmatprep.subr.bf16.mxu0 0
      %2601 = vmatpush1.bf16.msra.mxu0 0
      %2602 = vmatprep.subr.bf16.mxu0 0
      %2603 = vmatpush1.bf16.msra.mxu0 0
      %2604 = vmatprep.subr.bf16.mxu0 0
      %2605 = vmatpush1.bf16.msra.mxu0 0
      %2606 = vmatprep.subr.bf16.mxu0 0
      %2607 = vmatpush1.bf16.msra.mxu0 0
      %2608 = vmatprep.subr.bf16.mxu0 0
      %2609 = vmatpush1.bf16.msra.mxu0 0
      %2610 = vmatprep.subr.bf16.mxu0 0
      %2611 = vmatpush1.bf16.msra.mxu0 0
      %2612 = vmatprep.subr.bf16.mxu0 0
      %2613 = vmatpush1.bf16.msra.mxu0 0
      %2614 = vmatprep.subr.bf16.mxu0 0
      %2615 = vmatpush1.bf16.msra.mxu0 0
      %2616 = vmatprep.subr.bf16.mxu0 0
      %2617 = vmatpush1.bf16.msra.mxu0 0
      %2618 = vmatprep.subr.bf16.mxu0 0
      %2619 = vmatpush1.bf16.msra.mxu0 0
      %2620 = vmatprep.mubr.bf16.mxu0 0
      %2621 = vmatmul.mubr.bf16.gmra.mrb[0].mxu0 %v2586
      %v2622 = vpop.f32.mrb[0].mxu0
      %v2623 = vadd.f32 %v2571, %v2622
      %v2624 = vpop.f32.mrb[0].mxu0
      %v2625 = vpop.f32.mrb[0].mxu0
      %v2626 = vpop.f32.mrb[0].mxu0
      %2627 = vdwg.mxu0
      %v2628 = vmul.f32 %v2623, 1.702
      %v2629 = vxor.u32 %v2628, 2147483648
      %v2630 = vmul.f32 %v2629, 1.442695
      %v2631 = vpow.pop %v2630
      %v2632 = vadd.f32 %v2631, 1.0
      %v2633 = vrcp.pop %v2632
      %v2634 = vmul.f32 1.0, %v2633
      %v2635 = vmul.f32 %v2623, %v2634
      %v2636 = vld [vmem:[%s1053] sm:$0xf]
      %v2637 = vld [vmem:[%s1053 + $0x4] sm:$0xf]
      %v2638 = vld [vmem:[%s1053 + $0x8] sm:$0xf]
      %v2639 = vld [vmem:[%s1053 + $0xc] sm:$0xf]
      %v2640 = vld [vmem:[%s1053 + $0x10] sm:$0xf]
      %v2641 = vld [vmem:[%s1053 + $0x14] sm:$0xf]
      %v2642 = vld [vmem:[%s1053 + $0x18] sm:$0xf]
      %v2643 = vld [vmem:[%s1053 + $0x1c] sm:$0xf]
      %v2644 = vld [vmem:[%s1053 + $0x20] sm:$0xf]
      %v2645 = vld [vmem:[%s1053 + $0x24] sm:$0xf]
      %v2646 = vld [vmem:[%s1053 + $0x28] sm:$0xf]
      %v2647 = vld [vmem:[%s1053 + $0x2c] sm:$0xf]
      %v2648 = vld [vmem:[%s1053 + $0x30] sm:$0xf]
      %v2649 = vld [vmem:[%s1053 + $0x34] sm:$0xf]
      %v2650 = vld [vmem:[%s1053 + $0x38] sm:$0xf]
      %v2651 = vld [vmem:[%s1053 + $0x3c] sm:$0xf]
      %v2652 = vld [vmem:[%s1056] sm:$0x1]
      %v2653 = vpack.c.bf16 %v2635, %v2635
      %v2655 = vlaneseq
      %v2656 = vshrl.u32 %v2655, 7
      %v2657 = vsub.s32 0, %v2656
      %v2658 = vrot.slane %v2652, %v2657
      %v2676 = vunpack.c.l.b16 %v2636
      %v2677 = vunpack.c.l.b16 %v2637
      %v2678 = vunpack.c.l.b16 %v2638
      %v2679 = vunpack.c.l.b16 %v2639
      %v2680 = vunpack.c.l.b16 %v2640
      %v2681 = vunpack.c.l.b16 %v2641
      %v2682 = vunpack.c.l.b16 %v2642
      %v2683 = vunpack.c.l.b16 %v2643
      %v2684 = vunpack.c.l.b16 %v2644
      %v2685 = vunpack.c.l.b16 %v2645
      %v2686 = vunpack.c.l.b16 %v2646
      %v2687 = vunpack.c.l.b16 %v2647
      %v2688 = vunpack.c.l.b16 %v2648
      %v2689 = vunpack.c.l.b16 %v2649
      %v2690 = vunpack.c.l.b16 %v2650
      %v2691 = vunpack.c.l.b16 %v2651
      %v2692 = vpack.c.b16 %v2677, %v2676
      %v2693 = vpack.c.b16 %v2679, %v2678
      %v2694 = vpack.c.b16 %v2681, %v2680
      %v2695 = vpack.c.b16 %v2683, %v2682
      %v2696 = vpack.c.b16 %v2685, %v2684
      %v2697 = vpack.c.b16 %v2687, %v2686
      %v2698 = vpack.c.b16 %v2689, %v2688
      %v2699 = vpack.c.b16 %v2691, %v2690
      %2708 = vmatprep.subr.bf16.mxu0 0
      %2709 = vmatpush1.bf16.msra.mxu0 %v2692
      %2710 = vmatprep.subr.bf16.mxu0 0
      %2711 = vmatpush1.bf16.msra.mxu0 %v2693
      %2712 = vmatprep.subr.bf16.mxu0 0
      %2713 = vmatpush1.bf16.msra.mxu0 %v2694
      %2714 = vmatprep.subr.bf16.mxu0 0
      %2715 = vmatpush1.bf16.msra.mxu0 %v2695
      %2716 = vmatprep.subr.bf16.mxu0 0
      %2717 = vmatpush1.bf16.msra.mxu0 %v2696
      %2718 = vmatprep.subr.bf16.mxu0 0
      %2719 = vmatpush1.bf16.msra.mxu0 %v2697
      %2720 = vmatprep.subr.bf16.mxu0 0
      %2721 = vmatpush1.bf16.msra.mxu0 %v2698
      %2722 = vmatprep.subr.bf16.mxu0 0
      %2723 = vmatpush1.bf16.msra.mxu0 %v2699
      %2724 = vmatprep.subr.bf16.mxu0 0
      %2725 = vmatpush1.bf16.msra.mxu0 0
      %2726 = vmatprep.subr.bf16.mxu0 0
      %2727 = vmatpush1.bf16.msra.mxu0 0
      %2728 = vmatprep.subr.bf16.mxu0 0
      %2729 = vmatpush1.bf16.msra.mxu0 0
      %2730 = vmatprep.subr.bf16.mxu0 0
      %2731 = vmatpush1.bf16.msra.mxu0 0
      %2732 = vmatprep.subr.bf16.mxu0 0
      %2733 = vmatpush1.bf16.msra.mxu0 0
      %2734 = vmatprep.subr.bf16.mxu0 0
      %2735 = vmatpush1.bf16.msra.mxu0 0
      %2736 = vmatprep.subr.bf16.mxu0 0
      %2737 = vmatpush1.bf16.msra.mxu0 0
      %2738 = vmatprep.subr.bf16.mxu0 0
      %2739 = vmatpush1.bf16.msra.mxu0 0
      %2740 = vmatprep.mubr.bf16.mxu0 0
      %2741 = vmatmul.mubr.bf16.gmra.mrb[0].mxu0 %v2653
      %v2742 = vpop.f32.mrb[0].mxu0
      %v2743 = vadd.f32 %v2658, %v2742
      %v2744 = vpop.f32.mrb[0].mxu0
      %v2745 = vpop.f32.mrb[0].mxu0
      %v2746 = vpop.f32.mrb[0].mxu0
      %2747 = vdwg.mxu0
      %v2748 = vadd.f32 %v2531, %v2743
      %v2749 = vld [vmem:[%s1061] sm:$0xf]
      %v2750 = vld [vmem:[%s1061 + $0x4] sm:$0xf]
      %v2751 = vld [vmem:[%s1061 + $0x8] sm:$0xf]
      %v2752 = vld [vmem:[%s1061 + $0xc] sm:$0xf]
      %v2753 = vld [vmem:[%s1064] sm:$0x1]
      %v2754 = vpack.c.bf16 %v2748, %v2748
      %v2756 = vlaneseq
      %v2757 = vshrl.u32 %v2756, 7
      %v2758 = vsub.s32 0, %v2757
      %v2759 = vrot.slane %v2753, %v2758
      %v2765 = vunpack.c.l.b16 %v2749
      %v2766 = vunpack.c.l.b16 %v2750
      %v2767 = vunpack.c.l.b16 %v2751
      %v2768 = vunpack.c.l.b16 %v2752
      %v2769 = vpack.c.b16 %v2766, %v2765
      %v2770 = vpack.c.b16 %v2768, %v2767
      %v2774 = vsel %vm1180, %v2754, 0
      %2776 = vmatprep.subr.bf16.mxu0 0
      %2777 = vmatpush1.bf16.msra.mxu0 %v2769
      %2778 = vmatprep.subr.bf16.mxu0 0
      %2779 = vmatpush1.bf16.msra.mxu0 %v2770
      %2780 = vmatprep.subr.bf16.mxu0 0
      %2781 = vmatpush1.bf16.msra.mxu0 0
      %2782 = vmatprep.subr.bf16.mxu0 0
      %2783 = vmatpush1.bf16.msra.mxu0 0
      %2784 = vmatprep.subr.bf16.mxu0 0
      %2785 = vmatpush1.bf16.msra.mxu0 0
      %2786 = vmatprep.subr.bf16.mxu0 0
      %2787 = vmatpush1.bf16.msra.mxu0 0
      %2788 = vmatprep.subr.bf16.mxu0 0
      %2789 = vmatpush1.bf16.msra.mxu0 0
      %2790 = vmatprep.subr.bf16.mxu0 0
      %2791 = vmatpush1.bf16.msra.mxu0 0
      %2792 = vmatprep.subr.bf16.mxu0 0
      %2793 = vmatpush1.bf16.msra.mxu0 0
      %2794 = vmatprep.subr.bf16.mxu0 0
      %2795 = vmatpush1.bf16.msra.mxu0 0
      %2796 = vmatprep.subr.bf16.mxu0 0
      %2797 = vmatpush1.bf16.msra.mxu0 0
      %2798 = vmatprep.subr.bf16.mxu0 0
      %2799 = vmatpush1.bf16.msra.mxu0 0
      %2800 = vmatprep.subr.bf16.mxu0 0
      %2801 = vmatpush1.bf16.msra.mxu0 0
      %2802 = vmatprep.subr.bf16.mxu0 0
      %2803 = vmatpush1.bf16.msra.mxu0 0
      %2804 = vmatprep.subr.bf16.mxu0 0
      %2805 = vmatpush1.bf16.msra.mxu0 0
      %2806 = vmatprep.subr.bf16.mxu0 0
      %2807 = vmatpush1.bf16.msra.mxu0 0
      %2808 = vmatprep.mubr.bf16.mxu0 0
      %2809 = vmatmul.mubr.bf16.gmra.mrb[0].mxu0 %v2774
      %v2810 = vpop.f32.mrb[0].mxu0
      %v2811 = vadd.f32 %v2759, %v2810
      %v2812 = vpop.f32.mrb[0].mxu0
      %v2813 = vpop.f32.mrb[0].mxu0
      %v2814 = vpop.f32.mrb[0].mxu0
      %2815 = vdwg.mxu0
      %v2816 = vmax.f32 %v2811, 0.0
      %v2817 = vld [vmem:[%s1068] sm:$0xf]
      %v2818 = vld [vmem:[%s1071] sm:$0x1]
      %v2819 = vpack.c.bf16 %v2816, %v2816
      %v2821 = vlaneseq
      %v2822 = vshrl.u32 %v2821, 7
      %v2823 = vsub.s32 0, %v2822
      %v2824 = vrot.slane %v2818, %v2823
      %v2827 = vsel %vm1892, %v2819, 0
      %v2830 = vsel %vm2334, %v2817, 0
      %2832 = vmatprep.subr.bf16.mxu0 0
      %2833 = vmatpush1.bf16.msra.mxu0 %v2830
      %2834 = vmatprep.subr.bf16.mxu0 0
      %2835 = vmatpush1.bf16.msra.mxu0 0
      %2836 = vmatprep.subr.bf16.mxu0 0
      %2837 = vmatpush1.bf16.msra.mxu0 0
      %2838 = vmatprep.subr.bf16.mxu0 0
      %2839 = vmatpush1.bf16.msra.mxu0 0
      %2840 = vmatprep.subr.bf16.mxu0 0
      %2841 = vmatpush1.bf16.msra.mxu0 0
      %2842 = vmatprep.subr.bf16.mxu0 0
      %2843 = vmatpush1.bf16.msra.mxu0 0
      %2844 = vmatprep.subr.bf16.mxu0 0
      %2845 = vmatpush1.bf16.msra.mxu0 0
      %2846 = vmatprep.subr.bf16.mxu0 0
      %2847 = vmatpush1.bf16.msra.mxu0 0
      %2848 = vmatprep.subr.bf16.mxu0 0
      %2849 = vmatpush1.bf16.msra.mxu0 0
      %2850 = vmatprep.subr.bf16.mxu0 0
      %2851 = vmatpush1.bf16.msra.mxu0 0
      %2852 = vmatprep.subr.bf16.mxu0 0
      %2853 = vmatpush1.bf16.msra.mxu0 0
      %2854 = vmatprep.subr.bf16.mxu0 0
      %2855 = vmatpush1.bf16.msra.mxu0 0
      %2856 = vmatprep.subr.bf16.mxu0 0
      %2857 = vmatpush1.bf16.msra.mxu0 0
      %2858 = vmatprep.subr.bf16.mxu0 0
      %2859 = vmatpush1.bf16.msra.mxu0 0
      %2860 = vmatprep.subr.bf16.mxu0 0
      %2861 = vmatpush1.bf16.msra.mxu0 0
      %2862 = vmatprep.subr.bf16.mxu0 0
      %2863 = vmatpush1.bf16.msra.mxu0 0
      %2864 = vmatprep.mubr.bf16.mxu0 0
      %2865 = vmatmul.mubr.bf16.gmra.mrb[0].mxu0 %v2827
      %v2866 = vpop.f32.mrb[0].mxu0
      %v2867 = vadd.f32 %v2824, %v2866
      %v2868 = vpop.f32.mrb[0].mxu0
      %v2869 = vpop.f32.mrb[0].mxu0
      %v2870 = vpop.f32.mrb[0].mxu0
      %2871 = vdwg.mxu0
      %v2872 = vmax.f32 %v2867, 0.0
      %v2873 = vld [vmem:[%s1075] sm:$0xf]
      %v2874 = vld [vmem:[%s1078] sm:$0x1]
      %v2875 = vpack.c.bf16 %v2872, %v2872
      %v2877 = vlaneseq
      %v2878 = vshrl.u32 %v2877, 7
      %v2879 = vsub.s32 0, %v2878
      %v2880 = vrot.slane %v2874, %v2879
      %v2883 = vsel %vm1892, %v2875, 0
      %v2886 = vsel %vm2334, %v2873, 0
      %2888 = vmatprep.subr.bf16.mxu0 0
      %2889 = vmatpush1.bf16.msra.mxu0 %v2886
      %2890 = vmatprep.subr.bf16.mxu0 0
      %2891 = vmatpush1.bf16.msra.mxu0 0
      %2892 = vmatprep.subr.bf16.mxu0 0
      %2893 = vmatpush1.bf16.msra.mxu0 0
      %2894 = vmatprep.subr.bf16.mxu0 0
      %2895 = vmatpush1.bf16.msra.mxu0 0
      %2896 = vmatprep.subr.bf16.mxu0 0
      %2897 = vmatpush1.bf16.msra.mxu0 0
      %2898 = vmatprep.subr.bf16.mxu0 0
      %2899 = vmatpush1.bf16.msra.mxu0 0
      %2900 = vmatprep.subr.bf16.mxu0 0
      %2901 = vmatpush1.bf16.msra.mxu0 0
      %2902 = vmatprep.subr.bf16.mxu0 0
      %2903 = vmatpush1.bf16.msra.mxu0 0
      %2904 = vmatprep.subr.bf16.mxu0 0
      %2905 = vmatpush1.bf16.msra.mxu0 0
      %2906 = vmatprep.subr.bf16.mxu0 0
      %2907 = vmatpush1.bf16.msra.mxu0 0
      %2908 = vmatprep.subr.bf16.mxu0 0
      %2909 = vmatpush1.bf16.msra.mxu0 0
      %2910 = vmatprep.subr.bf16.mxu0 0
      %2911 = vmatpush1.bf16.msra.mxu0 0
      %2912 = vmatprep.subr.bf16.mxu0 0
      %2913 = vmatpush1.bf16.msra.mxu0 0
      %2914 = vmatprep.subr.bf16.mxu0 0
      %2915 = vmatpush1.bf16.msra.mxu0 0
      %2916 = vmatprep.subr.bf16.mxu0 0
      %2917 = vmatpush1.bf16.msra.mxu0 0
      %2918 = vmatprep.subr.bf16.mxu0 0
      %2919 = vmatpush1.bf16.msra.mxu0 0
      %2920 = vmatprep.mubr.bf16.mxu0 0
      %2921 = vmatmul.mubr.bf16.gmra.mrb[0].mxu0 %v2883
      %v2922 = vpop.f32.mrb[0].mxu0
      %v2923 = vadd.f32 %v2880, %v2922
      %v2924 = vpop.f32.mrb[0].mxu0
      %v2925 = vpop.f32.mrb[0].mxu0
      %v2926 = vpop.f32.mrb[0].mxu0
      %2927 = vdwg.mxu0
      %v2928 = vmul.f32 %v2923, 0.1
      %v2929 = vadd.f32 %v2748, %v2928
      %2930 = vst.msk [vmem:[%s1082] sm:$0x1f] %vm1094, %v2929
      %p2931 = scmp.lt.s32.totalorder %s38, 1
      %s2932 = scalar_select %p2931, %s38, 1
      %s2933 = smul.addr %s2932, 8
      %s2934 = scalar_lea.vmem %s23, %s2933
      // Predicated region
      $region117: #{_lambda_.6} parent=111 // pred_check
        %p2935 = pneg %p662
      $region118: #{_lambda_.6} parent=111 // pred_check_branch
        %2937 = sbr.rel (%p2935) target = $region120
      $region119: #{_lambda_.6} parent=111 // pred_region
        _
      $region120: #{_lambda_.6} parent=111 // pred_fallthru
        _
    $region112: #{_lambda_.6} parent=5 // pred_fallthru
      _
    %p2938 = scmp.le.s32.totalorder 2, %s29
    // Predicated region
    $region121: #{_lambda_.6} parent=5 // pred_check
      %p2939 = pneg %p2938
    $region122: #{_lambda_.6} parent=5 // pred_check_branch
      %2941 = sbr.rel (%p2939) target = $region124
    $region123: #{_lambda_.6} parent=5 // pred_region
      %s2942 = ssub.s32 %s29, 2
      // Predicated region
      $region125: #{_lambda_.6} parent=123 // pred_check
        %p2943 = pneg %p668
      $region126: #{_lambda_.6} parent=123 // pred_check_branch
        %2945 = sbr.rel (%p2943) target = $region128
      $region127: #{_lambda_.6} parent=123 // pred_region
        %p2946 = scmp.lt.s32.totalorder %s40, 1
        %s2947 = scalar_select %p2946, %s40, 1
        %s2948 = smul.addr %s2947, 8
        %s2949 = scalar_lea.vmem %s23, %s2948
      $region128: #{_lambda_.6} parent=123 // pred_fallthru
        _
    $region124: #{_lambda_.6} parent=5 // pred_fallthru
      _
  $region6: #{_lambda_.6} parent=0 // loop_footer
    %s33 = sadd.s32 1, %s29
  $region7: #{_lambda_.6} parent=0 // loop_footer_branch
    %28 = sbr.rel target = $region3
  $region8: #{_lambda_.6} parent=0 // loop_exit
    _

</llo_original>
